<compile_context>
chip_gen: v6e
topology: v6e:2x2x1
jax: 0.10.0
libtpu: 0.0.40
codegen_flags: <defaults>
</compile_context>

<pallas_src>
import functools

import jax
import jax.numpy as jnp
from jax.experimental import pallas as pl
from jax.experimental.pallas import tpu as pltpu


def prior_kernel(xp_ref, w1_ref, b1_ref, w2_ref, b2_ref, mask_ref, out_ref,
                 *, H, W, C, Q, Bt):
    """Processes one batch block of Bt images.

    xp_ref  : [Bt, (H+4)*(W+2), C]  flattened zero-padded NHWC slabs
    w1_ref  : [3, 3, C, C]          3x3 conv weight (kh, kw, cin, cout)
    b1_ref  : [1, C]
    w2_ref  : [Q, C]                1x1 conv weight, pre-transposed to (cout, cin)
    b2_ref  : [Q, 1]
    mask_ref: [1, H*(W+2)]          0 at real columns, -1e30 at pad columns
    out_ref : [Bt, Q, C]
    """
    Wp = W + 2
    Nacc = H * Wp       # conv rows kept per image (real rows x all padded cols)

    # Hoist shared parameters / broadcasts out of the per-image loop
    # (broadcast_in_dim is not CSE'd by JAX, so do it exactly once).
    w1_taps = [[w1_ref[ky, kx] for kx in range(3)] for ky in range(3)]  # 9x[C,C]
    acc_init = jnp.broadcast_to(b1_ref[...].astype(jnp.float32), (Nacc, C))
    w2 = w2_ref[...]                                                    # [Q, C]
    bias_qn = b2_ref[...].astype(jnp.float32) + mask_ref[...]           # [Q, Nacc]

    for b in range(Bt):                     # static, unrolled batch-block loop
        # --- 3x3 conv (pad=1) as 9 contiguous shifted-slice matmuls ---------
        acc = acc_init                               # conv bias folded into init
        for dy in (-1, 0, 1):
            for dx in (-1, 0, 1):
                s0 = (2 + dy) * Wp + dx     # always in-bounds of the padded slab
                patch = xp_ref[b, pl.ds(s0, Nacc), :]                   # [Nacc, C]
                acc = acc + jnp.dot(patch, w1_taps[dy + 1][dx + 1],
                                    preferred_element_type=jnp.float32)
        h1 = jnp.maximum(acc, 0.0)                                      # ReLU

        # --- 1x1 conv straight into the lane-dense [Q, Nacc] layout ---------
        logit = jnp.einsum("qc,nc->qn", w2, h1,
                           preferred_element_type=jnp.float32)          # [Q, Nacc]
        logit = logit + bias_qn       # conv bias (softmax-invariant) + pad mask

        # --- softmax over spatial positions (lane reduce), kept unnormalized -
        m = jnp.max(logit, axis=-1, keepdims=True)                      # [Q, 1]
        e = jnp.exp(logit - m)        # masked pad columns underflow to exactly 0
        denom = jnp.sum(e, axis=-1, keepdims=True)                      # [Q, 1]

        # --- prior = softmax(logit) @ x : scale Q rows, not the attn map -----
        x_rows = xp_ref[b, pl.ds(2 * Wp, Nacc), :]   # original rows, pad cols = 0
        p = jnp.dot(e, x_rows, preferred_element_type=jnp.float32)      # [Q, C]
        # pl.reciprocal(..., approx=True) is available when tolerances allow.
        prior = p * pl.reciprocal(denom, approx=False)
        out_ref[b] = prior.astype(out_ref.dtype)


def prior_module_pallas(x_nchw, w1, b1, w2, b2, *, batch_block=None):
    """x_nchw: [B, C, H, W]; returns prior [B, Q, C] (matches PyTorch output)."""
    B, C, H, W = x_nchw.shape
    Q = w2.shape[-1]
    Wp, Hp2 = W + 2, H + 4
    Npad, Nacc = Hp2 * Wp, H * Wp

    if batch_block is None:   # amortize per-step pipeline overhead over Bt images
        batch_block = next(bt for bt in (8, 4, 2, 1) if B % bt == 0)
    Bt = batch_block
    assert B % Bt == 0, "batch_block must divide the batch size"

    # NCHW -> NHWC (channels on lanes); pad 2 rows / 1 col of zeros per side and
    # flatten the spatial dims so every 3x3 tap is one contiguous row-slice.
    x_nhwc = jnp.transpose(x_nchw, (0, 2, 3, 1))
    xp = jnp.pad(x_nhwc, ((0, 0), (2, 2), (1, 1), (0, 0))).reshape(B, Npad, C)

    # Additive softmax mask: the two pad columns of every flattened row -> -1e30.
    col = jnp.arange(Nacc, dtype=jnp.int32) % Wp
    neg_mask = jnp.where((col == 0) | (col == Wp - 1), -1e30, 0.0)
    neg_mask = neg_mask.astype(jnp.float32).reshape(1, Nacc)

    kernel = functools.partial(prior_kernel, H=H, W=W, C=C, Q=Q, Bt=Bt)

    # TODO(synk): for production-scale H/W/C on v7x (64 MiB VMEM) tile H into
    # strips with a 1-row halo and a two-pass softmax instead of whole images.
    return pl.pallas_call(
        kernel,
        out_shape=jax.ShapeDtypeStruct((B, Q, C), x_nchw.dtype),
        grid=(B // Bt,),
        in_specs=[
            pl.BlockSpec((Bt, Npad, C), lambda g: (g, 0, 0)),
            pl.BlockSpec((3, 3, C, C), lambda g: (0, 0, 0, 0)),
            pl.BlockSpec((1, C), lambda g: (0, 0)),
            pl.BlockSpec((Q, C), lambda g: (0, 0)),
            pl.BlockSpec((Q, 1), lambda g: (0, 0)),
            pl.BlockSpec((1, Nacc), lambda g: (0, 0)),
        ],
        out_specs=pl.BlockSpec((Bt, Q, C), lambda g: (g, 0, 0)),
        compiler_params=pltpu.CompilerParams(dimension_semantics=("parallel",)),
    )(xp, w1, b1.reshape(1, C), jnp.transpose(w2), b2.reshape(Q, 1), neg_mask)


def prior_module_ref(x, w1, b1, w2, b2):
    """Pure-JAX reference (mirrors the PyTorch forward exactly), NCHW."""
    w1_oihw = jnp.transpose(w1, (3, 2, 0, 1))                     # [Cout,Cin,3,3]
    h = jax.lax.conv_general_dilated(
        x, w1_oihw, (1, 1), ((1, 1), (1, 1)),
        dimension_numbers=("NCHW", "OIHW", "NCHW"))
    h = jnp.maximum(h + b1[None, :, None, None], 0.0)
    w2_oihw = jnp.transpose(w2, (1, 0))[:, :, None, None]         # [Q,C,1,1]
    logit = jax.lax.conv_general_dilated(
        h, w2_oihw, (1, 1), ((0, 0), (0, 0)),
        dimension_numbers=("NCHW", "OIHW", "NCHW"))
    logit = logit + b2[None, :, None, None]
    B, Q, H, W = logit.shape
    attn = jax.nn.softmax(logit.reshape(B, Q, H * W), axis=-1)
    xf = jnp.transpose(x.reshape(B, x.shape[1], H * W), (0, 2, 1))
    return jnp.einsum("bqn,bnc->bqc", attn, xf)


if __name__ == "__main__":
    num_features = 32   # C
    num_queries = 8     # Q
    B, H, W = 2, 16, 16

    key = jax.random.PRNGKey(0)
    kx, kw1, kb1, kw2, kb2 = jax.random.split(key, 5)

    x = jax.random.normal(kx, (B, num_features, H, W), dtype=jnp.float32)

    # Deterministic synthetic parameters (shapes from the module's __init__).
    w1 = 0.1 * jax.random.normal(kw1, (3, 3, num_features, num_features), jnp.float32)
    b1 = 0.1 * jax.random.normal(kb1, (num_features,), jnp.float32)
    w2 = 0.1 * jax.random.normal(kw2, (num_features, num_queries), jnp.float32)
    b2 = 0.1 * jax.random.normal(kb2, (num_queries,), jnp.float32)

    prior = prior_module_pallas(x, w1, b1, w2, b2)
    jax.block_until_ready(prior)

    ref = prior_module_ref(x, w1, b1, w2, b2)
    assert prior.shape == (B, num_queries, num_features)
    assert jnp.allclose(prior, ref, atol=1e-4, rtol=1e-4), "mismatch vs JAX reference"

    print("KERNEL_OK")
</pallas_src>

<mosaic_0001>
module attributes {stable_mosaic.version = 11 : i64} {
  func.func @prior_kernel(%arg0: i32, %arg1: memref<2x360x32xf32, #tpu.memory_space<vmem>>, %arg2: memref<3x3x32x32xf32, #tpu.memory_space<vmem>>, %arg3: memref<1x32xf32, #tpu.memory_space<vmem>>, %arg4: memref<8x32xf32, #tpu.memory_space<vmem>>, %arg5: memref<8x1xf32, #tpu.memory_space<vmem>>, %arg6: memref<1x288xf32, #tpu.memory_space<vmem>>, %arg7: memref<2x8x32xf32, #tpu.memory_space<vmem>>) attributes {dimension_semantics = [#tpu.dimension_semantics<parallel>], iteration_bounds = array<i64: 1>, scalar_prefetch = 0 : i64, scratch_operands = 0 : i64, tpu.core_type = #tpu.core_type<tc>, window_params = [{transform_indices = @transform_0, window_bounds = array<i64: 2, 360, 32>}, {pipeline_mode = #tpu.pipeline_mode<synchronous>, transform_indices = @transform_1, window_bounds = array<i64: 3, 3, 32, 32>}, {pipeline_mode = #tpu.pipeline_mode<synchronous>, transform_indices = @transform_2, window_bounds = array<i64: 1, 32>}, {pipeline_mode = #tpu.pipeline_mode<synchronous>, transform_indices = @transform_3, window_bounds = array<i64: 8, 32>}, {pipeline_mode = #tpu.pipeline_mode<synchronous>, transform_indices = @transform_4, window_bounds = array<i64: 8, 1>}, {pipeline_mode = #tpu.pipeline_mode<synchronous>, transform_indices = @transform_5, window_bounds = array<i64: 1, 288>}, {transform_indices = @transform_6, window_bounds = array<i64: 2, 8, 32>}]} {
    %c0 = arith.constant 0 : index
    %c0_0 = arith.constant 0 : index
    %c0_1 = arith.constant 0 : index
    %c0_2 = arith.constant 0 : index
    %0 = vector.load %arg2[%c0, %c0_0, %c0_1, %c0_2] : memref<3x3x32x32xf32, #tpu.memory_space<vmem>>, vector<1x1x32x32xf32>
    %1 = vector.shape_cast %0 : vector<1x1x32x32xf32> to vector<32x32xf32>
    %c0_3 = arith.constant 0 : index
    %c1 = arith.constant 1 : index
    %c0_4 = arith.constant 0 : index
    %c0_5 = arith.constant 0 : index
    %2 = vector.load %arg2[%c0_3, %c1, %c0_4, %c0_5] : memref<3x3x32x32xf32, #tpu.memory_space<vmem>>, vector<1x1x32x32xf32>
    %3 = vector.shape_cast %2 : vector<1x1x32x32xf32> to vector<32x32xf32>
    %c0_6 = arith.constant 0 : index
    %c2 = arith.constant 2 : index
    %c0_7 = arith.constant 0 : index
    %c0_8 = arith.constant 0 : index
    %4 = vector.load %arg2[%c0_6, %c2, %c0_7, %c0_8] : memref<3x3x32x32xf32, #tpu.memory_space<vmem>>, vector<1x1x32x32xf32>
    %5 = vector.shape_cast %4 : vector<1x1x32x32xf32> to vector<32x32xf32>
    %c1_9 = arith.constant 1 : index
    %c0_10 = arith.constant 0 : index
    %c0_11 = arith.constant 0 : index
    %c0_12 = arith.constant 0 : index
    %6 = vector.load %arg2[%c1_9, %c0_10, %c0_11, %c0_12] : memref<3x3x32x32xf32, #tpu.memory_space<vmem>>, vector<1x1x32x32xf32>
    %7 = vector.shape_cast %6 : vector<1x1x32x32xf32> to vector<32x32xf32>
    %c1_13 = arith.constant 1 : index
    %c1_14 = arith.constant 1 : index
    %c0_15 = arith.constant 0 : index
    %c0_16 = arith.constant 0 : index
    %8 = vector.load %arg2[%c1_13, %c1_14, %c0_15, %c0_16] : memref<3x3x32x32xf32, #tpu.memory_space<vmem>>, vector<1x1x32x32xf32>
    %9 = vector.shape_cast %8 : vector<1x1x32x32xf32> to vector<32x32xf32>
    %c1_17 = arith.constant 1 : index
    %c2_18 = arith.constant 2 : index
    %c0_19 = arith.constant 0 : index
    %c0_20 = arith.constant 0 : index
    %10 = vector.load %arg2[%c1_17, %c2_18, %c0_19, %c0_20] : memref<3x3x32x32xf32, #tpu.memory_space<vmem>>, vector<1x1x32x32xf32>
    %11 = vector.shape_cast %10 : vector<1x1x32x32xf32> to vector<32x32xf32>
    %c2_21 = arith.constant 2 : index
    %c0_22 = arith.constant 0 : index
    %c0_23 = arith.constant 0 : index
    %c0_24 = arith.constant 0 : index
    %12 = vector.load %arg2[%c2_21, %c0_22, %c0_23, %c0_24] : memref<3x3x32x32xf32, #tpu.memory_space<vmem>>, vector<1x1x32x32xf32>
    %13 = vector.shape_cast %12 : vector<1x1x32x32xf32> to vector<32x32xf32>
    %c2_25 = arith.constant 2 : index
    %c1_26 = arith.constant 1 : index
    %c0_27 = arith.constant 0 : index
    %c0_28 = arith.constant 0 : index
    %14 = vector.load %arg2[%c2_25, %c1_26, %c0_27, %c0_28] : memref<3x3x32x32xf32, #tpu.memory_space<vmem>>, vector<1x1x32x32xf32>
    %15 = vector.shape_cast %14 : vector<1x1x32x32xf32> to vector<32x32xf32>
    %c2_29 = arith.constant 2 : index
    %c2_30 = arith.constant 2 : index
    %c0_31 = arith.constant 0 : index
    %c0_32 = arith.constant 0 : index
    %16 = vector.load %arg2[%c2_29, %c2_30, %c0_31, %c0_32] : memref<3x3x32x32xf32, #tpu.memory_space<vmem>>, vector<1x1x32x32xf32>
    %17 = vector.shape_cast %16 : vector<1x1x32x32xf32> to vector<32x32xf32>
    %c0_33 = arith.constant 0 : index
    %c0_34 = arith.constant 0 : index
    %18 = vector.load %arg3[%c0_33, %c0_34] : memref<1x32xf32, #tpu.memory_space<vmem>>, vector<1x32xf32>
    %19 = vector.shape_cast %18 : vector<1x32xf32> to vector<1x32xf32>
    %20 = vector.broadcast %19 : vector<1x32xf32> to vector<288x32xf32>
    %c0_35 = arith.constant 0 : index
    %c0_36 = arith.constant 0 : index
    %21 = vector.load %arg4[%c0_35, %c0_36] : memref<8x32xf32, #tpu.memory_space<vmem>>, vector<8x32xf32>
    %c0_37 = arith.constant 0 : index
    %c0_38 = arith.constant 0 : index
    %22 = vector.load %arg5[%c0_37, %c0_38] : memref<8x1xf32, #tpu.memory_space<vmem>>, vector<8x1xf32>
    %c0_39 = arith.constant 0 : index
    %c0_40 = arith.constant 0 : index
    %23 = vector.load %arg6[%c0_39, %c0_40] : memref<1x288xf32, #tpu.memory_space<vmem>>, vector<1x288xf32>
    %24 = vector.broadcast %22 : vector<8x1xf32> to vector<8x288xf32>
    %25 = vector.broadcast %23 : vector<1x288xf32> to vector<8x288xf32>
    %26 = arith.addf %24, %25 : vector<8x288xf32>
    %c0_41 = arith.constant 0 : index
    %c17 = arith.constant 17 : index
    %c0_42 = arith.constant 0 : index
    %27 = vector.load %arg1[%c0_41, %c17, %c0_42] : memref<2x360x32xf32, #tpu.memory_space<vmem>>, vector<1x288x32xf32>
    %28 = vector.shape_cast %27 : vector<1x288x32xf32> to vector<288x32xf32>
    %cst = arith.constant dense<0.000000e+00> : vector<288x32xf32>
    %29 = tpu.matmul %28, %1, %cst {dimension_numbers = #tpu.dot_dimension_numbers<[1], [0], [0], [1], [0, 0, 1, 1], [], []>} : vector<288x32xf32>, vector<32x32xf32>, vector<288x32xf32> -> vector<288x32xf32>
    %30 = arith.addf %20, %29 : vector<288x32xf32>
    %c0_43 = arith.constant 0 : index
    %c18 = arith.constant 18 : index
    %c0_44 = arith.constant 0 : index
    %31 = vector.load %arg1[%c0_43, %c18, %c0_44] : memref<2x360x32xf32, #tpu.memory_space<vmem>>, vector<1x288x32xf32>
    %32 = vector.shape_cast %31 : vector<1x288x32xf32> to vector<288x32xf32>
    %cst_45 = arith.constant dense<0.000000e+00> : vector<288x32xf32>
    %33 = tpu.matmul %32, %3, %cst_45 {dimension_numbers = #tpu.dot_dimension_numbers<[1], [0], [0], [1], [0, 0, 1, 1], [], []>} : vector<288x32xf32>, vector<32x32xf32>, vector<288x32xf32> -> vector<288x32xf32>
    %34 = arith.addf %30, %33 : vector<288x32xf32>
    %c0_46 = arith.constant 0 : index
    %c19 = arith.constant 19 : index
    %c0_47 = arith.constant 0 : index
    %35 = vector.load %arg1[%c0_46, %c19, %c0_47] : memref<2x360x32xf32, #tpu.memory_space<vmem>>, vector<1x288x32xf32>
    %36 = vector.shape_cast %35 : vector<1x288x32xf32> to vector<288x32xf32>
    %cst_48 = arith.constant dense<0.000000e+00> : vector<288x32xf32>
    %37 = tpu.matmul %36, %5, %cst_48 {dimension_numbers = #tpu.dot_dimension_numbers<[1], [0], [0], [1], [0, 0, 1, 1], [], []>} : vector<288x32xf32>, vector<32x32xf32>, vector<288x32xf32> -> vector<288x32xf32>
    %38 = arith.addf %34, %37 : vector<288x32xf32>
    %c0_49 = arith.constant 0 : index
    %c35 = arith.constant 35 : index
    %c0_50 = arith.constant 0 : index
    %39 = vector.load %arg1[%c0_49, %c35, %c0_50] : memref<2x360x32xf32, #tpu.memory_space<vmem>>, vector<1x288x32xf32>
    %40 = vector.shape_cast %39 : vector<1x288x32xf32> to vector<288x32xf32>
    %cst_51 = arith.constant dense<0.000000e+00> : vector<288x32xf32>
    %41 = tpu.matmul %40, %7, %cst_51 {dimension_numbers = #tpu.dot_dimension_numbers<[1], [0], [0], [1], [0, 0, 1, 1], [], []>} : vector<288x32xf32>, vector<32x32xf32>, vector<288x32xf32> -> vector<288x32xf32>
    %42 = arith.addf %38, %41 : vector<288x32xf32>
    %c0_52 = arith.constant 0 : index
    %c36 = arith.constant 36 : index
    %c0_53 = arith.constant 0 : index
    %43 = vector.load %arg1[%c0_52, %c36, %c0_53] : memref<2x360x32xf32, #tpu.memory_space<vmem>>, vector<1x288x32xf32>
    %44 = vector.shape_cast %43 : vector<1x288x32xf32> to vector<288x32xf32>
    %cst_54 = arith.constant dense<0.000000e+00> : vector<288x32xf32>
    %45 = tpu.matmul %44, %9, %cst_54 {dimension_numbers = #tpu.dot_dimension_numbers<[1], [0], [0], [1], [0, 0, 1, 1], [], []>} : vector<288x32xf32>, vector<32x32xf32>, vector<288x32xf32> -> vector<288x32xf32>
    %46 = arith.addf %42, %45 : vector<288x32xf32>
    %c0_55 = arith.constant 0 : index
    %c37 = arith.constant 37 : index
    %c0_56 = arith.constant 0 : index
    %47 = vector.load %arg1[%c0_55, %c37, %c0_56] : memref<2x360x32xf32, #tpu.memory_space<vmem>>, vector<1x288x32xf32>
    %48 = vector.shape_cast %47 : vector<1x288x32xf32> to vector<288x32xf32>
    %cst_57 = arith.constant dense<0.000000e+00> : vector<288x32xf32>
    %49 = tpu.matmul %48, %11, %cst_57 {dimension_numbers = #tpu.dot_dimension_numbers<[1], [0], [0], [1], [0, 0, 1, 1], [], []>} : vector<288x32xf32>, vector<32x32xf32>, vector<288x32xf32> -> vector<288x32xf32>
    %50 = arith.addf %46, %49 : vector<288x32xf32>
    %c0_58 = arith.constant 0 : index
    %c53 = arith.constant 53 : index
    %c0_59 = arith.constant 0 : index
    %51 = vector.load %arg1[%c0_58, %c53, %c0_59] : memref<2x360x32xf32, #tpu.memory_space<vmem>>, vector<1x288x32xf32>
    %52 = vector.shape_cast %51 : vector<1x288x32xf32> to vector<288x32xf32>
    %cst_60 = arith.constant dense<0.000000e+00> : vector<288x32xf32>
    %53 = tpu.matmul %52, %13, %cst_60 {dimension_numbers = #tpu.dot_dimension_numbers<[1], [0], [0], [1], [0, 0, 1, 1], [], []>} : vector<288x32xf32>, vector<32x32xf32>, vector<288x32xf32> -> vector<288x32xf32>
    %54 = arith.addf %50, %53 : vector<288x32xf32>
    %c0_61 = arith.constant 0 : index
    %c54 = arith.constant 54 : index
    %c0_62 = arith.constant 0 : index
    %55 = vector.load %arg1[%c0_61, %c54, %c0_62] : memref<2x360x32xf32, #tpu.memory_space<vmem>>, vector<1x288x32xf32>
    %56 = vector.shape_cast %55 : vector<1x288x32xf32> to vector<288x32xf32>
    %cst_63 = arith.constant dense<0.000000e+00> : vector<288x32xf32>
    %57 = tpu.matmul %56, %15, %cst_63 {dimension_numbers = #tpu.dot_dimension_numbers<[1], [0], [0], [1], [0, 0, 1, 1], [], []>} : vector<288x32xf32>, vector<32x32xf32>, vector<288x32xf32> -> vector<288x32xf32>
    %58 = arith.addf %54, %57 : vector<288x32xf32>
    %c0_64 = arith.constant 0 : index
    %c55 = arith.constant 55 : index
    %c0_65 = arith.constant 0 : index
    %59 = vector.load %arg1[%c0_64, %c55, %c0_65] : memref<2x360x32xf32, #tpu.memory_space<vmem>>, vector<1x288x32xf32>
    %60 = vector.shape_cast %59 : vector<1x288x32xf32> to vector<288x32xf32>
    %cst_66 = arith.constant dense<0.000000e+00> : vector<288x32xf32>
    %61 = tpu.matmul %60, %17, %cst_66 {dimension_numbers = #tpu.dot_dimension_numbers<[1], [0], [0], [1], [0, 0, 1, 1], [], []>} : vector<288x32xf32>, vector<32x32xf32>, vector<288x32xf32> -> vector<288x32xf32>
    %62 = arith.addf %58, %61 : vector<288x32xf32>
    %cst_67 = arith.constant 0.000000e+00 : f32
    %63 = vector.broadcast %cst_67 : f32 to vector<288x32xf32>
    %64 = arith.maximumf %62, %63 : vector<288x32xf32>
    "tpu.trace_start"() <{level = 10 : i32, message = "qc,nc->qn"}> : () -> ()
    %cst_68 = arith.constant dense<0.000000e+00> : vector<8x288xf32>
    %65 = tpu.matmul %21, %64, %cst_68 {dimension_numbers = #tpu.dot_dimension_numbers<[1], [1], [0], [0], [0, 0, 1, 0], [], []>} : vector<8x32xf32>, vector<288x32xf32>, vector<8x288xf32> -> vector<8x288xf32>
    "tpu.trace_stop"() : () -> ()
    %66 = arith.addf %65, %26 : vector<8x288xf32>
    %cst_69 = arith.constant dense<0xFF800000> : vector<8xf32>
    %67 = vector.multi_reduction <maximumf>, %66, %cst_69 [1] : vector<8x288xf32> to vector<8xf32>
    %68 = vector.shape_cast %67 : vector<8xf32> to vector<8x1xf32>
    %69 = vector.broadcast %68 : vector<8x1xf32> to vector<8x288xf32>
    %70 = arith.subf %66, %69 : vector<8x288xf32>
    %71 = math.exp %70 : vector<8x288xf32>
    %cst_70 = arith.constant dense<0.000000e+00> : vector<8xf32>
    %72 = vector.multi_reduction <add>, %71, %cst_70 [1] : vector<8x288xf32> to vector<8xf32>
    %73 = vector.shape_cast %72 : vector<8xf32> to vector<8x1xf32>
    %c0_71 = arith.constant 0 : index
    %c36_72 = arith.constant 36 : index
    %c0_73 = arith.constant 0 : index
    %74 = vector.load %arg1[%c0_71, %c36_72, %c0_73] : memref<2x360x32xf32, #tpu.memory_space<vmem>>, vector<1x288x32xf32>
    %75 = vector.shape_cast %74 : vector<1x288x32xf32> to vector<288x32xf32>
    %cst_74 = arith.constant dense<0.000000e+00> : vector<8x32xf32>
    %76 = tpu.matmul %71, %75, %cst_74 {dimension_numbers = #tpu.dot_dimension_numbers<[1], [0], [0], [1], [0, 0, 1, 1], [], []>} : vector<8x288xf32>, vector<288x32xf32>, vector<8x32xf32> -> vector<8x32xf32>
    %77 = tpu.reciprocal %73 : vector<8x1xf32> -> vector<8x1xf32>
    %78 = vector.broadcast %77 : vector<8x1xf32> to vector<8x32xf32>
    %79 = arith.mulf %76, %78 : vector<8x32xf32>
    %c0_75 = arith.constant 0 : index
    %c0_76 = arith.constant 0 : index
    %c0_77 = arith.constant 0 : index
    %80 = vector.load %arg7[%c0_75, %c0_76, %c0_77] : memref<2x8x32xf32, #tpu.memory_space<vmem>>, vector<1x8x32xf32>
    %81 = vector.shape_cast %80 : vector<1x8x32xf32> to vector<8x32xf32>
    %82 = vector.shape_cast %79 : vector<8x32xf32> to vector<1x8x32xf32>
    tpu.vector_store %arg7[%c0_75, %c0_76, %c0_77], %82 {strides = array<i32>} : memref<2x8x32xf32, #tpu.memory_space<vmem>>, vector<1x8x32xf32>,
    %c1_78 = arith.constant 1 : index
    %c17_79 = arith.constant 17 : index
    %c0_80 = arith.constant 0 : index
    %83 = vector.load %arg1[%c1_78, %c17_79, %c0_80] : memref<2x360x32xf32, #tpu.memory_space<vmem>>, vector<1x288x32xf32>
    %84 = vector.shape_cast %83 : vector<1x288x32xf32> to vector<288x32xf32>
    %cst_81 = arith.constant dense<0.000000e+00> : vector<288x32xf32>
    %85 = tpu.matmul %84, %1, %cst_81 {dimension_numbers = #tpu.dot_dimension_numbers<[1], [0], [0], [1], [0, 0, 1, 1], [], []>} : vector<288x32xf32>, vector<32x32xf32>, vector<288x32xf32> -> vector<288x32xf32>
    %86 = arith.addf %20, %85 : vector<288x32xf32>
    %c1_82 = arith.constant 1 : index
    %c18_83 = arith.constant 18 : index
    %c0_84 = arith.constant 0 : index
    %87 = vector.load %arg1[%c1_82, %c18_83, %c0_84] : memref<2x360x32xf32, #tpu.memory_space<vmem>>, vector<1x288x32xf32>
    %88 = vector.shape_cast %87 : vector<1x288x32xf32> to vector<288x32xf32>
    %cst_85 = arith.constant dense<0.000000e+00> : vector<288x32xf32>
    %89 = tpu.matmul %88, %3, %cst_85 {dimension_numbers = #tpu.dot_dimension_numbers<[1], [0], [0], [1], [0, 0, 1, 1], [], []>} : vector<288x32xf32>, vector<32x32xf32>, vector<288x32xf32> -> vector<288x32xf32>
    %90 = arith.addf %86, %89 : vector<288x32xf32>
    %c1_86 = arith.constant 1 : index
    %c19_87 = arith.constant 19 : index
    %c0_88 = arith.constant 0 : index
    %91 = vector.load %arg1[%c1_86, %c19_87, %c0_88] : memref<2x360x32xf32, #tpu.memory_space<vmem>>, vector<1x288x32xf32>
    %92 = vector.shape_cast %91 : vector<1x288x32xf32> to vector<288x32xf32>
    %cst_89 = arith.constant dense<0.000000e+00> : vector<288x32xf32>
    %93 = tpu.matmul %92, %5, %cst_89 {dimension_numbers = #tpu.dot_dimension_numbers<[1], [0], [0], [1], [0, 0, 1, 1], [], []>} : vector<288x32xf32>, vector<32x32xf32>, vector<288x32xf32> -> vector<288x32xf32>
    %94 = arith.addf %90, %93 : vector<288x32xf32>
    %c1_90 = arith.constant 1 : index
    %c35_91 = arith.constant 35 : index
    %c0_92 = arith.constant 0 : index
    %95 = vector.load %arg1[%c1_90, %c35_91, %c0_92] : memref<2x360x32xf32, #tpu.memory_space<vmem>>, vector<1x288x32xf32>
    %96 = vector.shape_cast %95 : vector<1x288x32xf32> to vector<288x32xf32>
    %cst_93 = arith.constant dense<0.000000e+00> : vector<288x32xf32>
    %97 = tpu.matmul %96, %7, %cst_93 {dimension_numbers = #tpu.dot_dimension_numbers<[1], [0], [0], [1], [0, 0, 1, 1], [], []>} : vector<288x32xf32>, vector<32x32xf32>, vector<288x32xf32> -> vector<288x32xf32>
    %98 = arith.addf %94, %97 : vector<288x32xf32>
    %c1_94 = arith.constant 1 : index
    %c36_95 = arith.constant 36 : index
    %c0_96 = arith.constant 0 : index
    %99 = vector.load %arg1[%c1_94, %c36_95, %c0_96] : memref<2x360x32xf32, #tpu.memory_space<vmem>>, vector<1x288x32xf32>
    %100 = vector.shape_cast %99 : vector<1x288x32xf32> to vector<288x32xf32>
    %cst_97 = arith.constant dense<0.000000e+00> : vector<288x32xf32>
    %101 = tpu.matmul %100, %9, %cst_97 {dimension_numbers = #tpu.dot_dimension_numbers<[1], [0], [0], [1], [0, 0, 1, 1], [], []>} : vector<288x32xf32>, vector<32x32xf32>, vector<288x32xf32> -> vector<288x32xf32>
    %102 = arith.addf %98, %101 : vector<288x32xf32>
    %c1_98 = arith.constant 1 : index
    %c37_99 = arith.constant 37 : index
    %c0_100 = arith.constant 0 : index
    %103 = vector.load %arg1[%c1_98, %c37_99, %c0_100] : memref<2x360x32xf32, #tpu.memory_space<vmem>>, vector<1x288x32xf32>
    %104 = vector.shape_cast %103 : vector<1x288x32xf32> to vector<288x32xf32>
    %cst_101 = arith.constant dense<0.000000e+00> : vector<288x32xf32>
    %105 = tpu.matmul %104, %11, %cst_101 {dimension_numbers = #tpu.dot_dimension_numbers<[1], [0], [0], [1], [0, 0, 1, 1], [], []>} : vector<288x32xf32>, vector<32x32xf32>, vector<288x32xf32> -> vector<288x32xf32>
    %106 = arith.addf %102, %105 : vector<288x32xf32>
    %c1_102 = arith.constant 1 : index
    %c53_103 = arith.constant 53 : index
    %c0_104 = arith.constant 0 : index
    %107 = vector.load %arg1[%c1_102, %c53_103, %c0_104] : memref<2x360x32xf32, #tpu.memory_space<vmem>>, vector<1x288x32xf32>
    %108 = vector.shape_cast %107 : vector<1x288x32xf32> to vector<288x32xf32>
    %cst_105 = arith.constant dense<0.000000e+00> : vector<288x32xf32>
    %109 = tpu.matmul %108, %13, %cst_105 {dimension_numbers = #tpu.dot_dimension_numbers<[1], [0], [0], [1], [0, 0, 1, 1], [], []>} : vector<288x32xf32>, vector<32x32xf32>, vector<288x32xf32> -> vector<288x32xf32>
    %110 = arith.addf %106, %109 : vector<288x32xf32>
    %c1_106 = arith.constant 1 : index
    %c54_107 = arith.constant 54 : index
    %c0_108 = arith.constant 0 : index
    %111 = vector.load %arg1[%c1_106, %c54_107, %c0_108] : memref<2x360x32xf32, #tpu.memory_space<vmem>>, vector<1x288x32xf32>
    %112 = vector.shape_cast %111 : vector<1x288x32xf32> to vector<288x32xf32>
    %cst_109 = arith.constant dense<0.000000e+00> : vector<288x32xf32>
    %113 = tpu.matmul %112, %15, %cst_109 {dimension_numbers = #tpu.dot_dimension_numbers<[1], [0], [0], [1], [0, 0, 1, 1], [], []>} : vector<288x32xf32>, vector<32x32xf32>, vector<288x32xf32> -> vector<288x32xf32>
    %114 = arith.addf %110, %113 : vector<288x32xf32>
    %c1_110 = arith.constant 1 : index
    %c55_111 = arith.constant 55 : index
    %c0_112 = arith.constant 0 : index
    %115 = vector.load %arg1[%c1_110, %c55_111, %c0_112] : memref<2x360x32xf32, #tpu.memory_space<vmem>>, vector<1x288x32xf32>
    %116 = vector.shape_cast %115 : vector<1x288x32xf32> to vector<288x32xf32>
    %cst_113 = arith.constant dense<0.000000e+00> : vector<288x32xf32>
    %117 = tpu.matmul %116, %17, %cst_113 {dimension_numbers = #tpu.dot_dimension_numbers<[1], [0], [0], [1], [0, 0, 1, 1], [], []>} : vector<288x32xf32>, vector<32x32xf32>, vector<288x32xf32> -> vector<288x32xf32>
    %118 = arith.addf %114, %117 : vector<288x32xf32>
    %cst_114 = arith.constant 0.000000e+00 : f32
    %119 = vector.broadcast %cst_114 : f32 to vector<288x32xf32>
    %120 = arith.maximumf %118, %119 : vector<288x32xf32>
    "tpu.trace_start"() <{level = 10 : i32, message = "qc,nc->qn"}> : () -> ()
    %cst_115 = arith.constant dense<0.000000e+00> : vector<8x288xf32>
    %121 = tpu.matmul %21, %120, %cst_115 {dimension_numbers = #tpu.dot_dimension_numbers<[1], [1], [0], [0], [0, 0, 1, 0], [], []>} : vector<8x32xf32>, vector<288x32xf32>, vector<8x288xf32> -> vector<8x288xf32>
    "tpu.trace_stop"() : () -> ()
    %122 = arith.addf %121, %26 : vector<8x288xf32>
    %cst_116 = arith.constant dense<0xFF800000> : vector<8xf32>
    %123 = vector.multi_reduction <maximumf>, %122, %cst_116 [1] : vector<8x288xf32> to vector<8xf32>
    %124 = vector.shape_cast %123 : vector<8xf32> to vector<8x1xf32>
    %125 = vector.broadcast %124 : vector<8x1xf32> to vector<8x288xf32>
    %126 = arith.subf %122, %125 : vector<8x288xf32>
    %127 = math.exp %126 : vector<8x288xf32>
    %cst_117 = arith.constant dense<0.000000e+00> : vector<8xf32>
    %128 = vector.multi_reduction <add>, %127, %cst_117 [1] : vector<8x288xf32> to vector<8xf32>
    %129 = vector.shape_cast %128 : vector<8xf32> to vector<8x1xf32>
    %c1_118 = arith.constant 1 : index
    %c36_119 = arith.constant 36 : index
    %c0_120 = arith.constant 0 : index
    %130 = vector.load %arg1[%c1_118, %c36_119, %c0_120] : memref<2x360x32xf32, #tpu.memory_space<vmem>>, vector<1x288x32xf32>
    %131 = vector.shape_cast %130 : vector<1x288x32xf32> to vector<288x32xf32>
    %cst_121 = arith.constant dense<0.000000e+00> : vector<8x32xf32>
    %132 = tpu.matmul %127, %131, %cst_121 {dimension_numbers = #tpu.dot_dimension_numbers<[1], [0], [0], [1], [0, 0, 1, 1], [], []>} : vector<8x288xf32>, vector<288x32xf32>, vector<8x32xf32> -> vector<8x32xf32>
    %133 = tpu.reciprocal %129 : vector<8x1xf32> -> vector<8x1xf32>
    %134 = vector.broadcast %133 : vector<8x1xf32> to vector<8x32xf32>
    %135 = arith.mulf %132, %134 : vector<8x32xf32>
    %c1_122 = arith.constant 1 : index
    %c0_123 = arith.constant 0 : index
    %c0_124 = arith.constant 0 : index
    %136 = vector.load %arg7[%c1_122, %c0_123, %c0_124] : memref<2x8x32xf32, #tpu.memory_space<vmem>>, vector<1x8x32xf32>
    %137 = vector.shape_cast %136 : vector<1x8x32xf32> to vector<8x32xf32>
    %138 = vector.shape_cast %135 : vector<8x32xf32> to vector<1x8x32xf32>
    tpu.vector_store %arg7[%c1_122, %c0_123, %c0_124], %138 {strides = array<i32>} : memref<2x8x32xf32, #tpu.memory_space<vmem>>, vector<1x8x32xf32>,
    return
  }
  func.func @transform_0(%arg0: i32) -> (i32, i32, i32) {
    %c0_i32 = arith.constant 0 : i32
    %c0_i32_0 = arith.constant 0 : i32
    %c0_i32_1 = arith.constant 0 : i32
    return %arg0, %c0_i32, %c0_i32_0 : i32, i32, i32
  }
  func.func @transform_1(%arg0: i32) -> (i32, i32, i32, i32) {
    %c0_i32 = arith.constant 0 : i32
    %c0_i32_0 = arith.constant 0 : i32
    %c0_i32_1 = arith.constant 0 : i32
    %c0_i32_2 = arith.constant 0 : i32
    %c0_i32_3 = arith.constant 0 : i32
    return %c0_i32, %c0_i32_0, %c0_i32_1, %c0_i32_2 : i32, i32, i32, i32
  }
  func.func @transform_2(%arg0: i32) -> (i32, i32) {
    %c0_i32 = arith.constant 0 : i32
    %c0_i32_0 = arith.constant 0 : i32
    %c0_i32_1 = arith.constant 0 : i32
    return %c0_i32, %c0_i32_0 : i32, i32
  }
  func.func @transform_3(%arg0: i32) -> (i32, i32) {
    %c0_i32 = arith.constant 0 : i32
    %c0_i32_0 = arith.constant 0 : i32
    %c0_i32_1 = arith.constant 0 : i32
    return %c0_i32, %c0_i32_0 : i32, i32
  }
  func.func @transform_4(%arg0: i32) -> (i32, i32) {
    %c0_i32 = arith.constant 0 : i32
    %c0_i32_0 = arith.constant 0 : i32
    %c0_i32_1 = arith.constant 0 : i32
    return %c0_i32, %c0_i32_0 : i32, i32
  }
  func.func @transform_5(%arg0: i32) -> (i32, i32) {
    %c0_i32 = arith.constant 0 : i32
    %c0_i32_0 = arith.constant 0 : i32
    %c0_i32_1 = arith.constant 0 : i32
    return %c0_i32, %c0_i32_0 : i32, i32
  }
  func.func @transform_6(%arg0: i32) -> (i32, i32, i32) {
    %c0_i32 = arith.constant 0 : i32
    %c0_i32_0 = arith.constant 0 : i32
    %c0_i32_1 = arith.constant 0 : i32
    return %arg0, %c0_i32, %c0_i32_0 : i32, i32, i32
  }
}

</mosaic_0001>

<llo_original>
// kernel: tpu_custom_call.1
$region0: #{tpu_custom_call.1}
  #allocation0 [shape = 'u32[]', space=smem, size = 0x4, offset = 0x4, fixed_abs, tag = 'smem constant byte address 0x4 - core index']
  #allocation1 [shape = 'u32[144,128]{1,0:T(1,128)}', space=vmem, size = 0x12000, scoped, tag = 'internal scratch']
  %s0 = inlined_call_operand.vmem [shape: f32[2,360,32], index: 0, kind: input, shape index: {}]
  %s1 = inlined_call_operand.vmem [shape: f32[3,3,32,32], index: 1, kind: input, shape index: {}]
  %s2 = inlined_call_operand.vmem [shape: f32[1,32], index: 2, kind: input, shape index: {}]
  %s3 = inlined_call_operand.vmem [shape: f32[8,32], index: 3, kind: input, shape index: {}]
  %s4 = inlined_call_operand.vmem [shape: f32[8,1], index: 4, kind: input, shape index: {}]
  %s5 = inlined_call_operand.vmem [shape: f32[1,288], index: 5, kind: input, shape index: {}]
  %s6 = inlined_call_operand.hbm [shape: f32[2,8,32], index: 6, kind: output, shape index: {}]
  %s7 = sld [smem:[#allocation0]]
  $region34: #{tpu_custom_call.1} parent=0
    _
  %s9 = ssub.s32 1, %s7
  %s10 = scalar_select 0, %s9, %s7
  $region1: #{tpu_custom_call.1} parent=0
    #allocation2 [shape = 'u8[8192]{0}', space=vmem, size = 0x2000, scoped, tag = 'output window, operand 0, single buffered']
    #allocation3 [shape = 's32[1]{0}', space=sflag, size = 0x4, scoped, tag = 'scoped memory for tpu_custom_call.1']
    %11 = vsyncpa [#allocation3], 0
    // Predicated region
    $region2: #{tpu_custom_call.1} parent=1 // pred_check
      _
    $region3: #{tpu_custom_call.1} parent=1 // pred_check_branch
      %13 = sbr.rel (0) target = $region5
    $region4: #{tpu_custom_call.1} parent=1 // pred_region
      _
    $region5: #{tpu_custom_call.1} parent=1 // pred_fallthru
      _
    // Predicated region
    $region6: #{tpu_custom_call.1} parent=1 // pred_check
      _
    $region7: #{tpu_custom_call.1} parent=1 // pred_check_branch
      %15 = sbr.rel (0) target = $region9
    $region8: #{tpu_custom_call.1} parent=1 // pred_region
      _
    $region9: #{tpu_custom_call.1} parent=1 // pred_fallthru
      _
    // Predicated region
    $region10: #{tpu_custom_call.1} parent=1 // pred_check
      _
    $region11: #{tpu_custom_call.1} parent=1 // pred_check_branch
      %17 = sbr.rel (0) target = $region13
    $region12: #{tpu_custom_call.1} parent=1 // pred_region
      _
    $region13: #{tpu_custom_call.1} parent=1 // pred_fallthru
      _
    // Predicated region
    $region14: #{tpu_custom_call.1} parent=1 // pred_check
      _
    $region15: #{tpu_custom_call.1} parent=1 // pred_check_branch
      %19 = sbr.rel (0) target = $region17
    $region16: #{tpu_custom_call.1} parent=1 // pred_region
      _
    $region17: #{tpu_custom_call.1} parent=1 // pred_fallthru
      _
    // Predicated region
    $region18: #{tpu_custom_call.1} parent=1 // pred_check
      _
    $region19: #{tpu_custom_call.1} parent=1 // pred_check_branch
      %21 = sbr.rel (0) target = $region21
    $region20: #{tpu_custom_call.1} parent=1 // pred_region
      _
    $region21: #{tpu_custom_call.1} parent=1 // pred_fallthru
      _
    // Predicated region
    $region22: #{tpu_custom_call.1} parent=1 // pred_check
      _
    $region23: #{tpu_custom_call.1} parent=1 // pred_check_branch
      %23 = sbr.rel (0) target = $region25
    $region24: #{tpu_custom_call.1} parent=1 // pred_region
      _
    $region25: #{tpu_custom_call.1} parent=1 // pred_fallthru
      _
    %v24 = vld [vmem:[%s1] sm:$0xff]
    %v25 = vld [vmem:[%s1 + $0x8] sm:$0xff]
    %v26 = vld [vmem:[%s1 + $0x10] sm:$0xff]
    %v27 = vld [vmem:[%s1 + $0x18] sm:$0xff]
    %s28 = scalar_lea.vmem %s1, 32
    %v29 = vld [vmem:[%s28] sm:$0xff]
    %v30 = vld [vmem:[%s28 + $0x8] sm:$0xff]
    %v31 = vld [vmem:[%s28 + $0x10] sm:$0xff]
    %v32 = vld [vmem:[%s28 + $0x18] sm:$0xff]
    %s33 = scalar_lea.vmem %s1, 64
    %v34 = vld [vmem:[%s33] sm:$0xff]
    %v35 = vld [vmem:[%s33 + $0x8] sm:$0xff]
    %v36 = vld [vmem:[%s33 + $0x10] sm:$0xff]
    %v37 = vld [vmem:[%s33 + $0x18] sm:$0xff]
    %s38 = scalar_lea.vmem %s1, 96
    %v39 = vld [vmem:[%s38] sm:$0xff]
    %v40 = vld [vmem:[%s38 + $0x8] sm:$0xff]
    %v41 = vld [vmem:[%s38 + $0x10] sm:$0xff]
    %v42 = vld [vmem:[%s38 + $0x18] sm:$0xff]
    %s43 = scalar_lea.vmem %s1, 128
    %v44 = vld [vmem:[%s43] sm:$0xff]
    %v45 = vld [vmem:[%s43 + $0x8] sm:$0xff]
    %v46 = vld [vmem:[%s43 + $0x10] sm:$0xff]
    %v47 = vld [vmem:[%s43 + $0x18] sm:$0xff]
    %s48 = scalar_lea.vmem %s1, 160
    %v49 = vld [vmem:[%s48] sm:$0xff]
    %v50 = vld [vmem:[%s48 + $0x8] sm:$0xff]
    %v51 = vld [vmem:[%s48 + $0x10] sm:$0xff]
    %v52 = vld [vmem:[%s48 + $0x18] sm:$0xff]
    %s53 = scalar_lea.vmem %s1, 192
    %v54 = vld [vmem:[%s53] sm:$0xff]
    %v55 = vld [vmem:[%s53 + $0x8] sm:$0xff]
    %v56 = vld [vmem:[%s53 + $0x10] sm:$0xff]
    %v57 = vld [vmem:[%s53 + $0x18] sm:$0xff]
    %s58 = scalar_lea.vmem %s1, 224
    %v59 = vld [vmem:[%s58] sm:$0xff]
    %v60 = vld [vmem:[%s58 + $0x8] sm:$0xff]
    %v61 = vld [vmem:[%s58 + $0x10] sm:$0xff]
    %v62 = vld [vmem:[%s58 + $0x18] sm:$0xff]
    %s63 = scalar_lea.vmem %s1, 256
    %v64 = vld [vmem:[%s63] sm:$0xff]
    %v65 = vld [vmem:[%s63 + $0x8] sm:$0xff]
    %v66 = vld [vmem:[%s63 + $0x10] sm:$0xff]
    %v67 = vld [vmem:[%s63 + $0x18] sm:$0xff]
    %v68 = vld [vmem:[%s2] sm:$0x1]
    %v70 = vlaneseq
    %v71 = vshrl.u32 %v70, 7
    %v72 = vsub.s32 0, %v71
    %v73 = vrot.slane %v68, %v72
    %v75 = vld [vmem:[%s3] sm:$0xff]
    %v76 = vld [vmem:[%s4] sm:$0xff]
    %v77 = vld [vmem:[%s5] sm:$0x7]
    %79 = vset.pattern.permute.xlu0 0
    %80 = vperm.xlu0 %79, %v76
    %v81 = vpop.permute.xlu0 %80
    %v84 = vlaneseq
    %v85 = vshrl.u32 %v84, 7
    %v86 = vsub.s32 0, %v85
    %v87 = vrot.slane %v77, %v86
    %v88 = vlaneseq
    %v89 = vshrl.u32 %v88, 7
    %v90 = vsub.s32 1, %v89
    %v91 = vrot.slane %v77, %v90
    %v92 = vlaneseq
    %v93 = vshrl.u32 %v92, 7
    %v94 = vsub.s32 2, %v93
    %v95 = vrot.slane %v77, %v94
    %v99 = vadd.f32 %v81, %v87
    %v100 = vadd.f32 %v81, %v91
    %v101 = vadd.f32 %v81, %v95
    %v102 = vld [vmem:[%s0 + $0x11] sm:$0xff]
    %v103 = vld [vmem:[%s0 + $0x19] sm:$0xff]
    %v104 = vld [vmem:[%s0 + $0x21] sm:$0xff]
    %v105 = vld [vmem:[%s0 + $0x29] sm:$0xff]
    %v106 = vld [vmem:[%s0 + $0x31] sm:$0xff]
    %v107 = vld [vmem:[%s0 + $0x39] sm:$0xff]
    %v108 = vld [vmem:[%s0 + $0x41] sm:$0xff]
    %v109 = vld [vmem:[%s0 + $0x49] sm:$0xff]
    %v110 = vld [vmem:[%s0 + $0x51] sm:$0xff]
    %v111 = vld [vmem:[%s0 + $0x59] sm:$0xff]
    %v112 = vld [vmem:[%s0 + $0x61] sm:$0xff]
    %v113 = vld [vmem:[%s0 + $0x69] sm:$0xff]
    %v114 = vld [vmem:[%s0 + $0x71] sm:$0xff]
    %v115 = vld [vmem:[%s0 + $0x79] sm:$0xff]
    %v116 = vld [vmem:[%s0 + $0x81] sm:$0xff]
    %v117 = vld [vmem:[%s0 + $0x89] sm:$0xff]
    %v118 = vld [vmem:[%s0 + $0x91] sm:$0xff]
    %v119 = vld [vmem:[%s0 + $0x99] sm:$0xff]
    %v120 = vld [vmem:[%s0 + $0xa1] sm:$0xff]
    %v121 = vld [vmem:[%s0 + $0xa9] sm:$0xff]
    %v122 = vld [vmem:[%s0 + $0xb1] sm:$0xff]
    %v123 = vld [vmem:[%s0 + $0xb9] sm:$0xff]
    %v124 = vld [vmem:[%s0 + $0xc1] sm:$0xff]
    %v125 = vld [vmem:[%s0 + $0xc9] sm:$0xff]
    %v126 = vld [vmem:[%s0 + $0xd1] sm:$0xff]
    %v127 = vld [vmem:[%s0 + $0xd9] sm:$0xff]
    %v128 = vld [vmem:[%s0 + $0xe1] sm:$0xff]
    %v129 = vld [vmem:[%s0 + $0xe9] sm:$0xff]
    %v130 = vld [vmem:[%s0 + $0xf1] sm:$0xff]
    %v131 = vld [vmem:[%s0 + $0xf9] sm:$0xff]
    %v132 = vld [vmem:[%s0 + $0x101] sm:$0xff]
    %v133 = vld [vmem:[%s0 + $0x109] sm:$0xff]
    %v134 = vld [vmem:[%s0 + $0x111] sm:$0xff]
    %v135 = vld [vmem:[%s0 + $0x119] sm:$0xff]
    %v136 = vld [vmem:[%s0 + $0x121] sm:$0xff]
    %v137 = vld [vmem:[%s0 + $0x129] sm:$0xff]
    %vm138 = vcmask 261120
    %v140 = vsel %vm138, %v102, 0
    %v143 = vsel %vm138, %v103, 0
    %v146 = vsel %vm138, %v104, 0
    %v149 = vsel %vm138, %v105, 0
    %v152 = vsel %vm138, %v106, 0
    %v155 = vsel %vm138, %v107, 0
    %v158 = vsel %vm138, %v108, 0
    %v161 = vsel %vm138, %v109, 0
    %v164 = vsel %vm138, %v110, 0
    %v167 = vsel %vm138, %v111, 0
    %v170 = vsel %vm138, %v112, 0
    %v173 = vsel %vm138, %v113, 0
    %v176 = vsel %vm138, %v114, 0
    %v179 = vsel %vm138, %v115, 0
    %v182 = vsel %vm138, %v116, 0
    %v185 = vsel %vm138, %v117, 0
    %v188 = vsel %vm138, %v118, 0
    %v191 = vsel %vm138, %v119, 0
    %v194 = vsel %vm138, %v120, 0
    %v197 = vsel %vm138, %v121, 0
    %v200 = vsel %vm138, %v122, 0
    %v203 = vsel %vm138, %v123, 0
    %v206 = vsel %vm138, %v124, 0
    %v209 = vsel %vm138, %v125, 0
    %v212 = vsel %vm138, %v126, 0
    %v215 = vsel %vm138, %v127, 0
    %v218 = vsel %vm138, %v128, 0
    %v221 = vsel %vm138, %v129, 0
    %v224 = vsel %vm138, %v130, 0
    %v227 = vsel %vm138, %v131, 0
    %v230 = vsel %vm138, %v132, 0
    %v233 = vsel %vm138, %v133, 0
    %v236 = vsel %vm138, %v134, 0
    %v239 = vsel %vm138, %v135, 0
    %v242 = vsel %vm138, %v136, 0
    %v245 = vsel %vm138, %v137, 0
    %247 = vmatprep.subr.mxu0 0.0
    %248 = vmatpush1.msra.mxu0 0.0
    %249 = vmatprep.subr.mxu0 0.0
    %250 = vmatpush1.msra.mxu0 0.0
    %251 = vmatprep.subr.mxu0 0.0
    %252 = vmatpush1.msra.mxu0 0.0
    %253 = vmatprep.subr.mxu0 0.0
    %254 = vmatpush1.msra.mxu0 0.0
    %255 = vmatprep.subr.mxu0 0.0
    %256 = vmatpush1.msra.mxu0 0.0
    %257 = vmatprep.subr.mxu0 0.0
    %258 = vmatpush1.msra.mxu0 0.0
    %259 = vmatprep.subr.mxu0 0.0
    %260 = vmatpush1.msra.mxu0 0.0
    %261 = vmatprep.subr.mxu0 0.0
    %262 = vmatpush1.msra.mxu0 0.0
    %263 = vmatprep.subr.mxu0 0.0
    %264 = vmatpush1.msra.mxu0 0.0
    %265 = vmatprep.subr.mxu0 0.0
    %266 = vmatpush1.msra.mxu0 0.0
    %267 = vmatprep.subr.mxu0 0.0
    %268 = vmatpush1.msra.mxu0 0.0
    %269 = vmatprep.subr.mxu0 0.0
    %270 = vmatpush1.msra.mxu0 0.0
    %271 = vmatprep.subr.mxu0 0.0
    %272 = vmatpush1.msra.mxu0 %v27
    %273 = vmatprep.subr.mxu0 0.0
    %274 = vmatpush1.msra.mxu0 %v26
    %275 = vmatprep.subr.mxu0 0.0
    %276 = vmatpush1.msra.mxu0 %v25
    %277 = vmatprep.subr.mxu0 0.0
    %278 = vmatpush1.msra.mxu0 %v24
    %279 = vmatprep.subr.mxu0 0.0
    %280 = vmatpush2.msra.mxu0 0.0
    %281 = vmatprep.subr.mxu0 0.0
    %282 = vmatpush2.msra.mxu0 0.0
    %283 = vmatprep.subr.mxu0 0.0
    %284 = vmatpush2.msra.mxu0 0.0
    %285 = vmatprep.subr.mxu0 0.0
    %286 = vmatpush2.msra.mxu0 0.0
    %287 = vmatprep.subr.mxu0 0.0
    %288 = vmatpush2.msra.mxu0 0.0
    %289 = vmatprep.subr.mxu0 0.0
    %290 = vmatpush2.msra.mxu0 0.0
    %291 = vmatprep.subr.mxu0 0.0
    %292 = vmatpush2.msra.mxu0 0.0
    %293 = vmatprep.subr.mxu0 0.0
    %294 = vmatpush2.msra.mxu0 0.0
    %295 = vmatprep.subr.mxu0 0.0
    %296 = vmatpush2.msra.mxu0 0.0
    %297 = vmatprep.subr.mxu0 0.0
    %298 = vmatpush2.msra.mxu0 0.0
    %299 = vmatprep.subr.mxu0 0.0
    %300 = vmatpush2.msra.mxu0 0.0
    %301 = vmatprep.subr.mxu0 0.0
    %302 = vmatpush2.msra.mxu0 0.0
    %303 = vmatprep.subr.mxu0 0.0
    %304 = vmatpush2.msra.mxu0 0.0
    %305 = vmatprep.subr.mxu0 0.0
    %306 = vmatpush2.msra.mxu0 0.0
    %307 = vmatprep.subr.mxu0 0.0
    %308 = vmatpush2.msra.mxu0 0.0
    %309 = vmatprep.subr.mxu0 0.0
    %310 = vmatpush2.msra.mxu0 0.0
    %311 = vmatprep.mubr.f32.mxu0 0.0
    %312 = vmatmul.mubr.f32.gmra.mxu0 %v140
    %v313 = vpop.f32.mrf.mxu0
    %v314 = vadd.f32 0.0, %v313
    %v315 = vpop.f32.mrf.mxu0
    %316 = vmatprep.mubr.f32.mxu0 0.0
    %317 = vmatmul.mubr.f32.gmra.mxu0 %v143
    %v318 = vpop.f32.mrf.mxu0
    %v319 = vadd.f32 0.0, %v318
    %v320 = vpop.f32.mrf.mxu0
    %321 = vmatprep.mubr.f32.mxu0 0.0
    %322 = vmatmul.mubr.f32.gmra.mxu0 %v146
    %v323 = vpop.f32.mrf.mxu0
    %v324 = vadd.f32 0.0, %v323
    %v325 = vpop.f32.mrf.mxu0
    %326 = vmatprep.mubr.f32.mxu0 0.0
    %327 = vmatmul.mubr.f32.gmra.mxu0 %v149
    %v328 = vpop.f32.mrf.mxu0
    %v329 = vadd.f32 0.0, %v328
    %v330 = vpop.f32.mrf.mxu0
    %331 = vmatprep.mubr.f32.mxu0 0.0
    %332 = vmatmul.mubr.f32.gmra.mxu0 %v152
    %v333 = vpop.f32.mrf.mxu0
    %v334 = vadd.f32 0.0, %v333
    %v335 = vpop.f32.mrf.mxu0
    %336 = vmatprep.mubr.f32.mxu0 0.0
    %337 = vmatmul.mubr.f32.gmra.mxu0 %v155
    %v338 = vpop.f32.mrf.mxu0
    %v339 = vadd.f32 0.0, %v338
    %v340 = vpop.f32.mrf.mxu0
    %341 = vmatprep.mubr.f32.mxu0 0.0
    %342 = vmatmul.mubr.f32.gmra.mxu0 %v158
    %v343 = vpop.f32.mrf.mxu0
    %v344 = vadd.f32 0.0, %v343
    %v345 = vpop.f32.mrf.mxu0
    %346 = vmatprep.mubr.f32.mxu0 0.0
    %347 = vmatmul.mubr.f32.gmra.mxu0 %v161
    %v348 = vpop.f32.mrf.mxu0
    %v349 = vadd.f32 0.0, %v348
    %v350 = vpop.f32.mrf.mxu0
    %351 = vmatprep.mubr.f32.mxu0 0.0
    %352 = vmatmul.mubr.f32.gmra.mxu0 %v164
    %v353 = vpop.f32.mrf.mxu0
    %v354 = vadd.f32 0.0, %v353
    %v355 = vpop.f32.mrf.mxu0
    %356 = vmatprep.mubr.f32.mxu0 0.0
    %357 = vmatmul.mubr.f32.gmra.mxu0 %v167
    %v358 = vpop.f32.mrf.mxu0
    %v359 = vadd.f32 0.0, %v358
    %v360 = vpop.f32.mrf.mxu0
    %361 = vmatprep.mubr.f32.mxu0 0.0
    %362 = vmatmul.mubr.f32.gmra.mxu0 %v170
    %v363 = vpop.f32.mrf.mxu0
    %v364 = vadd.f32 0.0, %v363
    %v365 = vpop.f32.mrf.mxu0
    %366 = vmatprep.mubr.f32.mxu0 0.0
    %367 = vmatmul.mubr.f32.gmra.mxu0 %v173
    %v368 = vpop.f32.mrf.mxu0
    %v369 = vadd.f32 0.0, %v368
    %v370 = vpop.f32.mrf.mxu0
    %371 = vmatprep.mubr.f32.mxu0 0.0
    %372 = vmatmul.mubr.f32.gmra.mxu0 %v176
    %v373 = vpop.f32.mrf.mxu0
    %v374 = vadd.f32 0.0, %v373
    %v375 = vpop.f32.mrf.mxu0
    %376 = vmatprep.mubr.f32.mxu0 0.0
    %377 = vmatmul.mubr.f32.gmra.mxu0 %v179
    %v378 = vpop.f32.mrf.mxu0
    %v379 = vadd.f32 0.0, %v378
    %v380 = vpop.f32.mrf.mxu0
    %381 = vmatprep.mubr.f32.mxu0 0.0
    %382 = vmatmul.mubr.f32.gmra.mxu0 %v182
    %v383 = vpop.f32.mrf.mxu0
    %v384 = vadd.f32 0.0, %v383
    %v385 = vpop.f32.mrf.mxu0
    %386 = vmatprep.mubr.f32.mxu0 0.0
    %387 = vmatmul.mubr.f32.gmra.mxu0 %v185
    %v388 = vpop.f32.mrf.mxu0
    %v389 = vadd.f32 0.0, %v388
    %v390 = vpop.f32.mrf.mxu0
    %391 = vmatprep.mubr.f32.mxu0 0.0
    %392 = vmatmul.mubr.f32.gmra.mxu0 %v188
    %v393 = vpop.f32.mrf.mxu0
    %v394 = vadd.f32 0.0, %v393
    %v395 = vpop.f32.mrf.mxu0
    %396 = vmatprep.mubr.f32.mxu0 0.0
    %397 = vmatmul.mubr.f32.gmra.mxu0 %v191
    %v398 = vpop.f32.mrf.mxu0
    %v399 = vadd.f32 0.0, %v398
    %v400 = vpop.f32.mrf.mxu0
    %401 = vmatprep.mubr.f32.mxu0 0.0
    %402 = vmatmul.mubr.f32.gmra.mxu0 %v194
    %v403 = vpop.f32.mrf.mxu0
    %v404 = vadd.f32 0.0, %v403
    %v405 = vpop.f32.mrf.mxu0
    %406 = vmatprep.mubr.f32.mxu0 0.0
    %407 = vmatmul.mubr.f32.gmra.mxu0 %v197
    %v408 = vpop.f32.mrf.mxu0
    %v409 = vadd.f32 0.0, %v408
    %v410 = vpop.f32.mrf.mxu0
    %411 = vmatprep.mubr.f32.mxu0 0.0
    %412 = vmatmul.mubr.f32.gmra.mxu0 %v200
    %v413 = vpop.f32.mrf.mxu0
    %v414 = vadd.f32 0.0, %v413
    %v415 = vpop.f32.mrf.mxu0
    %416 = vmatprep.mubr.f32.mxu0 0.0
    %417 = vmatmul.mubr.f32.gmra.mxu0 %v203
    %v418 = vpop.f32.mrf.mxu0
    %v419 = vadd.f32 0.0, %v418
    %v420 = vpop.f32.mrf.mxu0
    %421 = vmatprep.mubr.f32.mxu0 0.0
    %422 = vmatmul.mubr.f32.gmra.mxu0 %v206
    %v423 = vpop.f32.mrf.mxu0
    %v424 = vadd.f32 0.0, %v423
    %v425 = vpop.f32.mrf.mxu0
    %426 = vmatprep.mubr.f32.mxu0 0.0
    %427 = vmatmul.mubr.f32.gmra.mxu0 %v209
    %v428 = vpop.f32.mrf.mxu0
    %v429 = vadd.f32 0.0, %v428
    %v430 = vpop.f32.mrf.mxu0
    %431 = vmatprep.mubr.f32.mxu0 0.0
    %432 = vmatmul.mubr.f32.gmra.mxu0 %v212
    %v433 = vpop.f32.mrf.mxu0
    %v434 = vadd.f32 0.0, %v433
    %v435 = vpop.f32.mrf.mxu0
    %436 = vmatprep.mubr.f32.mxu0 0.0
    %437 = vmatmul.mubr.f32.gmra.mxu0 %v215
    %v438 = vpop.f32.mrf.mxu0
    %v439 = vadd.f32 0.0, %v438
    %v440 = vpop.f32.mrf.mxu0
    %441 = vmatprep.mubr.f32.mxu0 0.0
    %442 = vmatmul.mubr.f32.gmra.mxu0 %v218
    %v443 = vpop.f32.mrf.mxu0
    %v444 = vadd.f32 0.0, %v443
    %v445 = vpop.f32.mrf.mxu0
    %446 = vmatprep.mubr.f32.mxu0 0.0
    %447 = vmatmul.mubr.f32.gmra.mxu0 %v221
    %v448 = vpop.f32.mrf.mxu0
    %v449 = vadd.f32 0.0, %v448
    %v450 = vpop.f32.mrf.mxu0
    %451 = vmatprep.mubr.f32.mxu0 0.0
    %452 = vmatmul.mubr.f32.gmra.mxu0 %v224
    %v453 = vpop.f32.mrf.mxu0
    %v454 = vadd.f32 0.0, %v453
    %v455 = vpop.f32.mrf.mxu0
    %456 = vmatprep.mubr.f32.mxu0 0.0
    %457 = vmatmul.mubr.f32.gmra.mxu0 %v227
    %v458 = vpop.f32.mrf.mxu0
    %v459 = vadd.f32 0.0, %v458
    %v460 = vpop.f32.mrf.mxu0
    %461 = vmatprep.mubr.f32.mxu0 0.0
    %462 = vmatmul.mubr.f32.gmra.mxu0 %v230
    %v463 = vpop.f32.mrf.mxu0
    %v464 = vadd.f32 0.0, %v463
    %v465 = vpop.f32.mrf.mxu0
    %466 = vmatprep.mubr.f32.mxu0 0.0
    %467 = vmatmul.mubr.f32.gmra.mxu0 %v233
    %v468 = vpop.f32.mrf.mxu0
    %v469 = vadd.f32 0.0, %v468
    %v470 = vpop.f32.mrf.mxu0
    %471 = vmatprep.mubr.f32.mxu0 0.0
    %472 = vmatmul.mubr.f32.gmra.mxu0 %v236
    %v473 = vpop.f32.mrf.mxu0
    %v474 = vadd.f32 0.0, %v473
    %v475 = vpop.f32.mrf.mxu0
    %476 = vmatprep.mubr.f32.mxu0 0.0
    %477 = vmatmul.mubr.f32.gmra.mxu0 %v239
    %v478 = vpop.f32.mrf.mxu0
    %v479 = vadd.f32 0.0, %v478
    %v480 = vpop.f32.mrf.mxu0
    %481 = vmatprep.mubr.f32.mxu0 0.0
    %482 = vmatmul.mubr.f32.gmra.mxu0 %v242
    %v483 = vpop.f32.mrf.mxu0
    %v484 = vadd.f32 0.0, %v483
    %v485 = vpop.f32.mrf.mxu0
    %486 = vmatprep.mubr.f32.mxu0 0.0
    %487 = vmatmul.mubr.f32.gmra.mxu0 %v245
    %v488 = vpop.f32.mrf.mxu0
    %v489 = vadd.f32 0.0, %v488
    %v490 = vpop.f32.mrf.mxu0
    %491 = vdwg.mxu0
    %v492 = vadd.f32 %v73, %v314
    %v493 = vadd.f32 %v73, %v319
    %v494 = vadd.f32 %v73, %v324
    %v495 = vadd.f32 %v73, %v329
    %v496 = vadd.f32 %v73, %v334
    %v497 = vadd.f32 %v73, %v339
    %v498 = vadd.f32 %v73, %v344
    %v499 = vadd.f32 %v73, %v349
    %v500 = vadd.f32 %v73, %v354
    %v501 = vadd.f32 %v73, %v359
    %v502 = vadd.f32 %v73, %v364
    %v503 = vadd.f32 %v73, %v369
    %v504 = vadd.f32 %v73, %v374
    %v505 = vadd.f32 %v73, %v379
    %v506 = vadd.f32 %v73, %v384
    %v507 = vadd.f32 %v73, %v389
    %v508 = vadd.f32 %v73, %v394
    %v509 = vadd.f32 %v73, %v399
    %v510 = vadd.f32 %v73, %v404
    %v511 = vadd.f32 %v73, %v409
    %v512 = vadd.f32 %v73, %v414
    %v513 = vadd.f32 %v73, %v419
    %v514 = vadd.f32 %v73, %v424
    %v515 = vadd.f32 %v73, %v429
    %v516 = vadd.f32 %v73, %v434
    %v517 = vadd.f32 %v73, %v439
    %v518 = vadd.f32 %v73, %v444
    %v519 = vadd.f32 %v73, %v449
    %v520 = vadd.f32 %v73, %v454
    %v521 = vadd.f32 %v73, %v459
    %v522 = vadd.f32 %v73, %v464
    %v523 = vadd.f32 %v73, %v469
    %v524 = vadd.f32 %v73, %v474
    %v525 = vadd.f32 %v73, %v479
    %v526 = vadd.f32 %v73, %v484
    %v527 = vadd.f32 %v73, %v489
    %v528 = vld [vmem:[%s0 + $0x12] sm:$0xff]
    %v529 = vld [vmem:[%s0 + $0x1a] sm:$0xff]
    %v530 = vld [vmem:[%s0 + $0x22] sm:$0xff]
    %v531 = vld [vmem:[%s0 + $0x2a] sm:$0xff]
    %v532 = vld [vmem:[%s0 + $0x32] sm:$0xff]
    %v533 = vld [vmem:[%s0 + $0x3a] sm:$0xff]
    %v534 = vld [vmem:[%s0 + $0x42] sm:$0xff]
    %v535 = vld [vmem:[%s0 + $0x4a] sm:$0xff]
    %v536 = vld [vmem:[%s0 + $0x52] sm:$0xff]
    %v537 = vld [vmem:[%s0 + $0x5a] sm:$0xff]
    %v538 = vld [vmem:[%s0 + $0x62] sm:$0xff]
    %v539 = vld [vmem:[%s0 + $0x6a] sm:$0xff]
    %v540 = vld [vmem:[%s0 + $0x72] sm:$0xff]
    %v541 = vld [vmem:[%s0 + $0x7a] sm:$0xff]
    %v542 = vld [vmem:[%s0 + $0x82] sm:$0xff]
    %v543 = vld [vmem:[%s0 + $0x8a] sm:$0xff]
    %v544 = vld [vmem:[%s0 + $0x92] sm:$0xff]
    %v545 = vld [vmem:[%s0 + $0x9a] sm:$0xff]
    %v546 = vld [vmem:[%s0 + $0xa2] sm:$0xff]
    %v547 = vld [vmem:[%s0 + $0xaa] sm:$0xff]
    %v548 = vld [vmem:[%s0 + $0xb2] sm:$0xff]
    %v549 = vld [vmem:[%s0 + $0xba] sm:$0xff]
    %v550 = vld [vmem:[%s0 + $0xc2] sm:$0xff]
    %v551 = vld [vmem:[%s0 + $0xca] sm:$0xff]
    %v552 = vld [vmem:[%s0 + $0xd2] sm:$0xff]
    %v553 = vld [vmem:[%s0 + $0xda] sm:$0xff]
    %v554 = vld [vmem:[%s0 + $0xe2] sm:$0xff]
    %v555 = vld [vmem:[%s0 + $0xea] sm:$0xff]
    %v556 = vld [vmem:[%s0 + $0xf2] sm:$0xff]
    %v557 = vld [vmem:[%s0 + $0xfa] sm:$0xff]
    %v558 = vld [vmem:[%s0 + $0x102] sm:$0xff]
    %v559 = vld [vmem:[%s0 + $0x10a] sm:$0xff]
    %v560 = vld [vmem:[%s0 + $0x112] sm:$0xff]
    %v561 = vld [vmem:[%s0 + $0x11a] sm:$0xff]
    %v562 = vld [vmem:[%s0 + $0x122] sm:$0xff]
    %v563 = vld [vmem:[%s0 + $0x12a] sm:$0xff]
    %v565 = vsel %vm138, %v528, 0
    %v568 = vsel %vm138, %v529, 0
    %v571 = vsel %vm138, %v530, 0
    %v574 = vsel %vm138, %v531, 0
    %v577 = vsel %vm138, %v532, 0
    %v580 = vsel %vm138, %v533, 0
    %v583 = vsel %vm138, %v534, 0
    %v586 = vsel %vm138, %v535, 0
    %v589 = vsel %vm138, %v536, 0
    %v592 = vsel %vm138, %v537, 0
    %v595 = vsel %vm138, %v538, 0
    %v598 = vsel %vm138, %v539, 0
    %v601 = vsel %vm138, %v540, 0
    %v604 = vsel %vm138, %v541, 0
    %v607 = vsel %vm138, %v542, 0
    %v610 = vsel %vm138, %v543, 0
    %v613 = vsel %vm138, %v544, 0
    %v616 = vsel %vm138, %v545, 0
    %v619 = vsel %vm138, %v546, 0
    %v622 = vsel %vm138, %v547, 0
    %v625 = vsel %vm138, %v548, 0
    %v628 = vsel %vm138, %v549, 0
    %v631 = vsel %vm138, %v550, 0
    %v634 = vsel %vm138, %v551, 0
    %v637 = vsel %vm138, %v552, 0
    %v640 = vsel %vm138, %v553, 0
    %v643 = vsel %vm138, %v554, 0
    %v646 = vsel %vm138, %v555, 0
    %v649 = vsel %vm138, %v556, 0
    %v652 = vsel %vm138, %v557, 0
    %v655 = vsel %vm138, %v558, 0
    %v658 = vsel %vm138, %v559, 0
    %v661 = vsel %vm138, %v560, 0
    %v664 = vsel %vm138, %v561, 0
    %v667 = vsel %vm138, %v562, 0
    %v670 = vsel %vm138, %v563, 0
    %672 = vmatprep.subr.mxu0 0.0
    %673 = vmatpush1.msra.mxu0 0.0
    %674 = vmatprep.subr.mxu0 0.0
    %675 = vmatpush1.msra.mxu0 0.0
    %676 = vmatprep.subr.mxu0 0.0
    %677 = vmatpush1.msra.mxu0 0.0
    %678 = vmatprep.subr.mxu0 0.0
    %679 = vmatpush1.msra.mxu0 0.0
    %680 = vmatprep.subr.mxu0 0.0
    %681 = vmatpush1.msra.mxu0 0.0
    %682 = vmatprep.subr.mxu0 0.0
    %683 = vmatpush1.msra.mxu0 0.0
    %684 = vmatprep.subr.mxu0 0.0
    %685 = vmatpush1.msra.mxu0 0.0
    %686 = vmatprep.subr.mxu0 0.0
    %687 = vmatpush1.msra.mxu0 0.0
    %688 = vmatprep.subr.mxu0 0.0
    %689 = vmatpush1.msra.mxu0 0.0
    %690 = vmatprep.subr.mxu0 0.0
    %691 = vmatpush1.msra.mxu0 0.0
    %692 = vmatprep.subr.mxu0 0.0
    %693 = vmatpush1.msra.mxu0 0.0
    %694 = vmatprep.subr.mxu0 0.0
    %695 = vmatpush1.msra.mxu0 0.0
    %696 = vmatprep.subr.mxu0 0.0
    %697 = vmatpush1.msra.mxu0 %v32
    %698 = vmatprep.subr.mxu0 0.0
    %699 = vmatpush1.msra.mxu0 %v31
    %700 = vmatprep.subr.mxu0 0.0
    %701 = vmatpush1.msra.mxu0 %v30
    %702 = vmatprep.subr.mxu0 0.0
    %703 = vmatpush1.msra.mxu0 %v29
    %704 = vmatprep.subr.mxu0 0.0
    %705 = vmatpush2.msra.mxu0 0.0
    %706 = vmatprep.subr.mxu0 0.0
    %707 = vmatpush2.msra.mxu0 0.0
    %708 = vmatprep.subr.mxu0 0.0
    %709 = vmatpush2.msra.mxu0 0.0
    %710 = vmatprep.subr.mxu0 0.0
    %711 = vmatpush2.msra.mxu0 0.0
    %712 = vmatprep.subr.mxu0 0.0
    %713 = vmatpush2.msra.mxu0 0.0
    %714 = vmatprep.subr.mxu0 0.0
    %715 = vmatpush2.msra.mxu0 0.0
    %716 = vmatprep.subr.mxu0 0.0
    %717 = vmatpush2.msra.mxu0 0.0
    %718 = vmatprep.subr.mxu0 0.0
    %719 = vmatpush2.msra.mxu0 0.0
    %720 = vmatprep.subr.mxu0 0.0
    %721 = vmatpush2.msra.mxu0 0.0
    %722 = vmatprep.subr.mxu0 0.0
    %723 = vmatpush2.msra.mxu0 0.0
    %724 = vmatprep.subr.mxu0 0.0
    %725 = vmatpush2.msra.mxu0 0.0
    %726 = vmatprep.subr.mxu0 0.0
    %727 = vmatpush2.msra.mxu0 0.0
    %728 = vmatprep.subr.mxu0 0.0
    %729 = vmatpush2.msra.mxu0 0.0
    %730 = vmatprep.subr.mxu0 0.0
    %731 = vmatpush2.msra.mxu0 0.0
    %732 = vmatprep.subr.mxu0 0.0
    %733 = vmatpush2.msra.mxu0 0.0
    %734 = vmatprep.subr.mxu0 0.0
    %735 = vmatpush2.msra.mxu0 0.0
    %736 = vmatprep.mubr.f32.mxu0 0.0
    %737 = vmatmul.mubr.f32.gmra.mxu0 %v565
    %v738 = vpop.f32.mrf.mxu0
    %v739 = vadd.f32 0.0, %v738
    %v740 = vpop.f32.mrf.mxu0
    %741 = vmatprep.mubr.f32.mxu0 0.0
    %742 = vmatmul.mubr.f32.gmra.mxu0 %v568
    %v743 = vpop.f32.mrf.mxu0
    %v744 = vadd.f32 0.0, %v743
    %v745 = vpop.f32.mrf.mxu0
    %746 = vmatprep.mubr.f32.mxu0 0.0
    %747 = vmatmul.mubr.f32.gmra.mxu0 %v571
    %v748 = vpop.f32.mrf.mxu0
    %v749 = vadd.f32 0.0, %v748
    %v750 = vpop.f32.mrf.mxu0
    %751 = vmatprep.mubr.f32.mxu0 0.0
    %752 = vmatmul.mubr.f32.gmra.mxu0 %v574
    %v753 = vpop.f32.mrf.mxu0
    %v754 = vadd.f32 0.0, %v753
    %v755 = vpop.f32.mrf.mxu0
    %756 = vmatprep.mubr.f32.mxu0 0.0
    %757 = vmatmul.mubr.f32.gmra.mxu0 %v577
    %v758 = vpop.f32.mrf.mxu0
    %v759 = vadd.f32 0.0, %v758
    %v760 = vpop.f32.mrf.mxu0
    %761 = vmatprep.mubr.f32.mxu0 0.0
    %762 = vmatmul.mubr.f32.gmra.mxu0 %v580
    %v763 = vpop.f32.mrf.mxu0
    %v764 = vadd.f32 0.0, %v763
    %v765 = vpop.f32.mrf.mxu0
    %766 = vmatprep.mubr.f32.mxu0 0.0
    %767 = vmatmul.mubr.f32.gmra.mxu0 %v583
    %v768 = vpop.f32.mrf.mxu0
    %v769 = vadd.f32 0.0, %v768
    %v770 = vpop.f32.mrf.mxu0
    %771 = vmatprep.mubr.f32.mxu0 0.0
    %772 = vmatmul.mubr.f32.gmra.mxu0 %v586
    %v773 = vpop.f32.mrf.mxu0
    %v774 = vadd.f32 0.0, %v773
    %v775 = vpop.f32.mrf.mxu0
    %776 = vmatprep.mubr.f32.mxu0 0.0
    %777 = vmatmul.mubr.f32.gmra.mxu0 %v589
    %v778 = vpop.f32.mrf.mxu0
    %v779 = vadd.f32 0.0, %v778
    %v780 = vpop.f32.mrf.mxu0
    %781 = vmatprep.mubr.f32.mxu0 0.0
    %782 = vmatmul.mubr.f32.gmra.mxu0 %v592
    %v783 = vpop.f32.mrf.mxu0
    %v784 = vadd.f32 0.0, %v783
    %v785 = vpop.f32.mrf.mxu0
    %786 = vmatprep.mubr.f32.mxu0 0.0
    %787 = vmatmul.mubr.f32.gmra.mxu0 %v595
    %v788 = vpop.f32.mrf.mxu0
    %v789 = vadd.f32 0.0, %v788
    %v790 = vpop.f32.mrf.mxu0
    %791 = vmatprep.mubr.f32.mxu0 0.0
    %792 = vmatmul.mubr.f32.gmra.mxu0 %v598
    %v793 = vpop.f32.mrf.mxu0
    %v794 = vadd.f32 0.0, %v793
    %v795 = vpop.f32.mrf.mxu0
    %796 = vmatprep.mubr.f32.mxu0 0.0
    %797 = vmatmul.mubr.f32.gmra.mxu0 %v601
    %v798 = vpop.f32.mrf.mxu0
    %v799 = vadd.f32 0.0, %v798
    %v800 = vpop.f32.mrf.mxu0
    %801 = vmatprep.mubr.f32.mxu0 0.0
    %802 = vmatmul.mubr.f32.gmra.mxu0 %v604
    %v803 = vpop.f32.mrf.mxu0
    %v804 = vadd.f32 0.0, %v803
    %v805 = vpop.f32.mrf.mxu0
    %806 = vmatprep.mubr.f32.mxu0 0.0
    %807 = vmatmul.mubr.f32.gmra.mxu0 %v607
    %v808 = vpop.f32.mrf.mxu0
    %v809 = vadd.f32 0.0, %v808
    %v810 = vpop.f32.mrf.mxu0
    %811 = vmatprep.mubr.f32.mxu0 0.0
    %812 = vmatmul.mubr.f32.gmra.mxu0 %v610
    %v813 = vpop.f32.mrf.mxu0
    %v814 = vadd.f32 0.0, %v813
    %v815 = vpop.f32.mrf.mxu0
    %816 = vmatprep.mubr.f32.mxu0 0.0
    %817 = vmatmul.mubr.f32.gmra.mxu0 %v613
    %v818 = vpop.f32.mrf.mxu0
    %v819 = vadd.f32 0.0, %v818
    %v820 = vpop.f32.mrf.mxu0
    %821 = vmatprep.mubr.f32.mxu0 0.0
    %822 = vmatmul.mubr.f32.gmra.mxu0 %v616
    %v823 = vpop.f32.mrf.mxu0
    %v824 = vadd.f32 0.0, %v823
    %v825 = vpop.f32.mrf.mxu0
    %826 = vmatprep.mubr.f32.mxu0 0.0
    %827 = vmatmul.mubr.f32.gmra.mxu0 %v619
    %v828 = vpop.f32.mrf.mxu0
    %v829 = vadd.f32 0.0, %v828
    %v830 = vpop.f32.mrf.mxu0
    %831 = vmatprep.mubr.f32.mxu0 0.0
    %832 = vmatmul.mubr.f32.gmra.mxu0 %v622
    %v833 = vpop.f32.mrf.mxu0
    %v834 = vadd.f32 0.0, %v833
    %v835 = vpop.f32.mrf.mxu0
    %836 = vmatprep.mubr.f32.mxu0 0.0
    %837 = vmatmul.mubr.f32.gmra.mxu0 %v625
    %v838 = vpop.f32.mrf.mxu0
    %v839 = vadd.f32 0.0, %v838
    %v840 = vpop.f32.mrf.mxu0
    %841 = vmatprep.mubr.f32.mxu0 0.0
    %842 = vmatmul.mubr.f32.gmra.mxu0 %v628
    %v843 = vpop.f32.mrf.mxu0
    %v844 = vadd.f32 0.0, %v843
    %v845 = vpop.f32.mrf.mxu0
    %846 = vmatprep.mubr.f32.mxu0 0.0
    %847 = vmatmul.mubr.f32.gmra.mxu0 %v631
    %v848 = vpop.f32.mrf.mxu0
    %v849 = vadd.f32 0.0, %v848
    %v850 = vpop.f32.mrf.mxu0
    %851 = vmatprep.mubr.f32.mxu0 0.0
    %852 = vmatmul.mubr.f32.gmra.mxu0 %v634
    %v853 = vpop.f32.mrf.mxu0
    %v854 = vadd.f32 0.0, %v853
    %v855 = vpop.f32.mrf.mxu0
    %856 = vmatprep.mubr.f32.mxu0 0.0
    %857 = vmatmul.mubr.f32.gmra.mxu0 %v637
    %v858 = vpop.f32.mrf.mxu0
    %v859 = vadd.f32 0.0, %v858
    %v860 = vpop.f32.mrf.mxu0
    %861 = vmatprep.mubr.f32.mxu0 0.0
    %862 = vmatmul.mubr.f32.gmra.mxu0 %v640
    %v863 = vpop.f32.mrf.mxu0
    %v864 = vadd.f32 0.0, %v863
    %v865 = vpop.f32.mrf.mxu0
    %866 = vmatprep.mubr.f32.mxu0 0.0
    %867 = vmatmul.mubr.f32.gmra.mxu0 %v643
    %v868 = vpop.f32.mrf.mxu0
    %v869 = vadd.f32 0.0, %v868
    %v870 = vpop.f32.mrf.mxu0
    %871 = vmatprep.mubr.f32.mxu0 0.0
    %872 = vmatmul.mubr.f32.gmra.mxu0 %v646
    %v873 = vpop.f32.mrf.mxu0
    %v874 = vadd.f32 0.0, %v873
    %v875 = vpop.f32.mrf.mxu0
    %876 = vmatprep.mubr.f32.mxu0 0.0
    %877 = vmatmul.mubr.f32.gmra.mxu0 %v649
    %v878 = vpop.f32.mrf.mxu0
    %v879 = vadd.f32 0.0, %v878
    %v880 = vpop.f32.mrf.mxu0
    %881 = vmatprep.mubr.f32.mxu0 0.0
    %882 = vmatmul.mubr.f32.gmra.mxu0 %v652
    %v883 = vpop.f32.mrf.mxu0
    %v884 = vadd.f32 0.0, %v883
    %v885 = vpop.f32.mrf.mxu0
    %886 = vmatprep.mubr.f32.mxu0 0.0
    %887 = vmatmul.mubr.f32.gmra.mxu0 %v655
    %v888 = vpop.f32.mrf.mxu0
    %v889 = vadd.f32 0.0, %v888
    %v890 = vpop.f32.mrf.mxu0
    %891 = vmatprep.mubr.f32.mxu0 0.0
    %892 = vmatmul.mubr.f32.gmra.mxu0 %v658
    %v893 = vpop.f32.mrf.mxu0
    %v894 = vadd.f32 0.0, %v893
    %v895 = vpop.f32.mrf.mxu0
    %896 = vmatprep.mubr.f32.mxu0 0.0
    %897 = vmatmul.mubr.f32.gmra.mxu0 %v661
    %v898 = vpop.f32.mrf.mxu0
    %v899 = vadd.f32 0.0, %v898
    %v900 = vpop.f32.mrf.mxu0
    %901 = vmatprep.mubr.f32.mxu0 0.0
    %902 = vmatmul.mubr.f32.gmra.mxu0 %v664
    %v903 = vpop.f32.mrf.mxu0
    %v904 = vadd.f32 0.0, %v903
    %v905 = vpop.f32.mrf.mxu0
    %906 = vmatprep.mubr.f32.mxu0 0.0
    %907 = vmatmul.mubr.f32.gmra.mxu0 %v667
    %v908 = vpop.f32.mrf.mxu0
    %v909 = vadd.f32 0.0, %v908
    %v910 = vpop.f32.mrf.mxu0
    %911 = vmatprep.mubr.f32.mxu0 0.0
    %912 = vmatmul.mubr.f32.gmra.mxu0 %v670
    %v913 = vpop.f32.mrf.mxu0
    %v914 = vadd.f32 0.0, %v913
    %v915 = vpop.f32.mrf.mxu0
    %916 = vdwg.mxu0
    %v917 = vadd.f32 %v492, %v739
    %v918 = vadd.f32 %v493, %v744
    %v919 = vadd.f32 %v494, %v749
    %v920 = vadd.f32 %v495, %v754
    %v921 = vadd.f32 %v496, %v759
    %v922 = vadd.f32 %v497, %v764
    %v923 = vadd.f32 %v498, %v769
    %v924 = vadd.f32 %v499, %v774
    %v925 = vadd.f32 %v500, %v779
    %v926 = vadd.f32 %v501, %v784
    %v927 = vadd.f32 %v502, %v789
    %v928 = vadd.f32 %v503, %v794
    %v929 = vadd.f32 %v504, %v799
    %v930 = vadd.f32 %v505, %v804
    %v931 = vadd.f32 %v506, %v809
    %v932 = vadd.f32 %v507, %v814
    %v933 = vadd.f32 %v508, %v819
    %v934 = vadd.f32 %v509, %v824
    %v935 = vadd.f32 %v510, %v829
    %v936 = vadd.f32 %v511, %v834
    %v937 = vadd.f32 %v512, %v839
    %v938 = vadd.f32 %v513, %v844
    %v939 = vadd.f32 %v514, %v849
    %v940 = vadd.f32 %v515, %v854
    %v941 = vadd.f32 %v516, %v859
    %v942 = vadd.f32 %v517, %v864
    %v943 = vadd.f32 %v518, %v869
    %v944 = vadd.f32 %v519, %v874
    %v945 = vadd.f32 %v520, %v879
    %v946 = vadd.f32 %v521, %v884
    %v947 = vadd.f32 %v522, %v889
    %v948 = vadd.f32 %v523, %v894
    %v949 = vadd.f32 %v524, %v899
    %v950 = vadd.f32 %v525, %v904
    %v951 = vadd.f32 %v526, %v909
    %v952 = vadd.f32 %v527, %v914
    %v953 = vld [vmem:[%s0 + $0x13] sm:$0xff]
    %v954 = vld [vmem:[%s0 + $0x1b] sm:$0xff]
    %v955 = vld [vmem:[%s0 + $0x23] sm:$0xff]
    %v956 = vld [vmem:[%s0 + $0x2b] sm:$0xff]
    %v957 = vld [vmem:[%s0 + $0x33] sm:$0xff]
    %v958 = vld [vmem:[%s0 + $0x3b] sm:$0xff]
    %v959 = vld [vmem:[%s0 + $0x43] sm:$0xff]
    %v960 = vld [vmem:[%s0 + $0x4b] sm:$0xff]
    %v961 = vld [vmem:[%s0 + $0x53] sm:$0xff]
    %v962 = vld [vmem:[%s0 + $0x5b] sm:$0xff]
    %v963 = vld [vmem:[%s0 + $0x63] sm:$0xff]
    %v964 = vld [vmem:[%s0 + $0x6b] sm:$0xff]
    %v965 = vld [vmem:[%s0 + $0x73] sm:$0xff]
    %v966 = vld [vmem:[%s0 + $0x7b] sm:$0xff]
    %v967 = vld [vmem:[%s0 + $0x83] sm:$0xff]
    %v968 = vld [vmem:[%s0 + $0x8b] sm:$0xff]
    %v969 = vld [vmem:[%s0 + $0x93] sm:$0xff]
    %v970 = vld [vmem:[%s0 + $0x9b] sm:$0xff]
    %v971 = vld [vmem:[%s0 + $0xa3] sm:$0xff]
    %v972 = vld [vmem:[%s0 + $0xab] sm:$0xff]
    %v973 = vld [vmem:[%s0 + $0xb3] sm:$0xff]
    %v974 = vld [vmem:[%s0 + $0xbb] sm:$0xff]
    %v975 = vld [vmem:[%s0 + $0xc3] sm:$0xff]
    %v976 = vld [vmem:[%s0 + $0xcb] sm:$0xff]
    %v977 = vld [vmem:[%s0 + $0xd3] sm:$0xff]
    %v978 = vld [vmem:[%s0 + $0xdb] sm:$0xff]
    %v979 = vld [vmem:[%s0 + $0xe3] sm:$0xff]
    %v980 = vld [vmem:[%s0 + $0xeb] sm:$0xff]
    %v981 = vld [vmem:[%s0 + $0xf3] sm:$0xff]
    %v982 = vld [vmem:[%s0 + $0xfb] sm:$0xff]
    %v983 = vld [vmem:[%s0 + $0x103] sm:$0xff]
    %v984 = vld [vmem:[%s0 + $0x10b] sm:$0xff]
    %v985 = vld [vmem:[%s0 + $0x113] sm:$0xff]
    %v986 = vld [vmem:[%s0 + $0x11b] sm:$0xff]
    %v987 = vld [vmem:[%s0 + $0x123] sm:$0xff]
    %v988 = vld [vmem:[%s0 + $0x12b] sm:$0xff]
    %v990 = vsel %vm138, %v953, 0
    %v993 = vsel %vm138, %v954, 0
    %v996 = vsel %vm138, %v955, 0
    %v999 = vsel %vm138, %v956, 0
    %v1002 = vsel %vm138, %v957, 0
    %v1005 = vsel %vm138, %v958, 0
    %v1008 = vsel %vm138, %v959, 0
    %v1011 = vsel %vm138, %v960, 0
    %v1014 = vsel %vm138, %v961, 0
    %v1017 = vsel %vm138, %v962, 0
    %v1020 = vsel %vm138, %v963, 0
    %v1023 = vsel %vm138, %v964, 0
    %v1026 = vsel %vm138, %v965, 0
    %v1029 = vsel %vm138, %v966, 0
    %v1032 = vsel %vm138, %v967, 0
    %v1035 = vsel %vm138, %v968, 0
    %v1038 = vsel %vm138, %v969, 0
    %v1041 = vsel %vm138, %v970, 0
    %v1044 = vsel %vm138, %v971, 0
    %v1047 = vsel %vm138, %v972, 0
    %v1050 = vsel %vm138, %v973, 0
    %v1053 = vsel %vm138, %v974, 0
    %v1056 = vsel %vm138, %v975, 0
    %v1059 = vsel %vm138, %v976, 0
    %v1062 = vsel %vm138, %v977, 0
    %v1065 = vsel %vm138, %v978, 0
    %v1068 = vsel %vm138, %v979, 0
    %v1071 = vsel %vm138, %v980, 0
    %v1074 = vsel %vm138, %v981, 0
    %v1077 = vsel %vm138, %v982, 0
    %v1080 = vsel %vm138, %v983, 0
    %v1083 = vsel %vm138, %v984, 0
    %v1086 = vsel %vm138, %v985, 0
    %v1089 = vsel %vm138, %v986, 0
    %v1092 = vsel %vm138, %v987, 0
    %v1095 = vsel %vm138, %v988, 0
    %1097 = vmatprep.subr.mxu0 0.0
    %1098 = vmatpush1.msra.mxu0 0.0
    %1099 = vmatprep.subr.mxu0 0.0
    %1100 = vmatpush1.msra.mxu0 0.0
    %1101 = vmatprep.subr.mxu0 0.0
    %1102 = vmatpush1.msra.mxu0 0.0
    %1103 = vmatprep.subr.mxu0 0.0
    %1104 = vmatpush1.msra.mxu0 0.0
    %1105 = vmatprep.subr.mxu0 0.0
    %1106 = vmatpush1.msra.mxu0 0.0
    %1107 = vmatprep.subr.mxu0 0.0
    %1108 = vmatpush1.msra.mxu0 0.0
    %1109 = vmatprep.subr.mxu0 0.0
    %1110 = vmatpush1.msra.mxu0 0.0
    %1111 = vmatprep.subr.mxu0 0.0
    %1112 = vmatpush1.msra.mxu0 0.0
    %1113 = vmatprep.subr.mxu0 0.0
    %1114 = vmatpush1.msra.mxu0 0.0
    %1115 = vmatprep.subr.mxu0 0.0
    %1116 = vmatpush1.msra.mxu0 0.0
    %1117 = vmatprep.subr.mxu0 0.0
    %1118 = vmatpush1.msra.mxu0 0.0
    %1119 = vmatprep.subr.mxu0 0.0
    %1120 = vmatpush1.msra.mxu0 0.0
    %1121 = vmatprep.subr.mxu0 0.0
    %1122 = vmatpush1.msra.mxu0 %v37
    %1123 = vmatprep.subr.mxu0 0.0
    %1124 = vmatpush1.msra.mxu0 %v36
    %1125 = vmatprep.subr.mxu0 0.0
    %1126 = vmatpush1.msra.mxu0 %v35
    %1127 = vmatprep.subr.mxu0 0.0
    %1128 = vmatpush1.msra.mxu0 %v34
    %1129 = vmatprep.subr.mxu0 0.0
    %1130 = vmatpush2.msra.mxu0 0.0
    %1131 = vmatprep.subr.mxu0 0.0
    %1132 = vmatpush2.msra.mxu0 0.0
    %1133 = vmatprep.subr.mxu0 0.0
    %1134 = vmatpush2.msra.mxu0 0.0
    %1135 = vmatprep.subr.mxu0 0.0
    %1136 = vmatpush2.msra.mxu0 0.0
    %1137 = vmatprep.subr.mxu0 0.0
    %1138 = vmatpush2.msra.mxu0 0.0
    %1139 = vmatprep.subr.mxu0 0.0
    %1140 = vmatpush2.msra.mxu0 0.0
    %1141 = vmatprep.subr.mxu0 0.0
    %1142 = vmatpush2.msra.mxu0 0.0
    %1143 = vmatprep.subr.mxu0 0.0
    %1144 = vmatpush2.msra.mxu0 0.0
    %1145 = vmatprep.subr.mxu0 0.0
    %1146 = vmatpush2.msra.mxu0 0.0
    %1147 = vmatprep.subr.mxu0 0.0
    %1148 = vmatpush2.msra.mxu0 0.0
    %1149 = vmatprep.subr.mxu0 0.0
    %1150 = vmatpush2.msra.mxu0 0.0
    %1151 = vmatprep.subr.mxu0 0.0
    %1152 = vmatpush2.msra.mxu0 0.0
    %1153 = vmatprep.subr.mxu0 0.0
    %1154 = vmatpush2.msra.mxu0 0.0
    %1155 = vmatprep.subr.mxu0 0.0
    %1156 = vmatpush2.msra.mxu0 0.0
    %1157 = vmatprep.subr.mxu0 0.0
    %1158 = vmatpush2.msra.mxu0 0.0
    %1159 = vmatprep.subr.mxu0 0.0
    %1160 = vmatpush2.msra.mxu0 0.0
    %1161 = vmatprep.mubr.f32.mxu0 0.0
    %1162 = vmatmul.mubr.f32.gmra.mxu0 %v990
    %v1163 = vpop.f32.mrf.mxu0
    %v1164 = vadd.f32 0.0, %v1163
    %v1165 = vpop.f32.mrf.mxu0
    %1166 = vmatprep.mubr.f32.mxu0 0.0
    %1167 = vmatmul.mubr.f32.gmra.mxu0 %v993
    %v1168 = vpop.f32.mrf.mxu0
    %v1169 = vadd.f32 0.0, %v1168
    %v1170 = vpop.f32.mrf.mxu0
    %1171 = vmatprep.mubr.f32.mxu0 0.0
    %1172 = vmatmul.mubr.f32.gmra.mxu0 %v996
    %v1173 = vpop.f32.mrf.mxu0
    %v1174 = vadd.f32 0.0, %v1173
    %v1175 = vpop.f32.mrf.mxu0
    %1176 = vmatprep.mubr.f32.mxu0 0.0
    %1177 = vmatmul.mubr.f32.gmra.mxu0 %v999
    %v1178 = vpop.f32.mrf.mxu0
    %v1179 = vadd.f32 0.0, %v1178
    %v1180 = vpop.f32.mrf.mxu0
    %1181 = vmatprep.mubr.f32.mxu0 0.0
    %1182 = vmatmul.mubr.f32.gmra.mxu0 %v1002
    %v1183 = vpop.f32.mrf.mxu0
    %v1184 = vadd.f32 0.0, %v1183
    %v1185 = vpop.f32.mrf.mxu0
    %1186 = vmatprep.mubr.f32.mxu0 0.0
    %1187 = vmatmul.mubr.f32.gmra.mxu0 %v1005
    %v1188 = vpop.f32.mrf.mxu0
    %v1189 = vadd.f32 0.0, %v1188
    %v1190 = vpop.f32.mrf.mxu0
    %1191 = vmatprep.mubr.f32.mxu0 0.0
    %1192 = vmatmul.mubr.f32.gmra.mxu0 %v1008
    %v1193 = vpop.f32.mrf.mxu0
    %v1194 = vadd.f32 0.0, %v1193
    %v1195 = vpop.f32.mrf.mxu0
    %1196 = vmatprep.mubr.f32.mxu0 0.0
    %1197 = vmatmul.mubr.f32.gmra.mxu0 %v1011
    %v1198 = vpop.f32.mrf.mxu0
    %v1199 = vadd.f32 0.0, %v1198
    %v1200 = vpop.f32.mrf.mxu0
    %1201 = vmatprep.mubr.f32.mxu0 0.0
    %1202 = vmatmul.mubr.f32.gmra.mxu0 %v1014
    %v1203 = vpop.f32.mrf.mxu0
    %v1204 = vadd.f32 0.0, %v1203
    %v1205 = vpop.f32.mrf.mxu0
    %1206 = vmatprep.mubr.f32.mxu0 0.0
    %1207 = vmatmul.mubr.f32.gmra.mxu0 %v1017
    %v1208 = vpop.f32.mrf.mxu0
    %v1209 = vadd.f32 0.0, %v1208
    %v1210 = vpop.f32.mrf.mxu0
    %1211 = vmatprep.mubr.f32.mxu0 0.0
    %1212 = vmatmul.mubr.f32.gmra.mxu0 %v1020
    %v1213 = vpop.f32.mrf.mxu0
    %v1214 = vadd.f32 0.0, %v1213
    %v1215 = vpop.f32.mrf.mxu0
    %1216 = vmatprep.mubr.f32.mxu0 0.0
    %1217 = vmatmul.mubr.f32.gmra.mxu0 %v1023
    %v1218 = vpop.f32.mrf.mxu0
    %v1219 = vadd.f32 0.0, %v1218
    %v1220 = vpop.f32.mrf.mxu0
    %1221 = vmatprep.mubr.f32.mxu0 0.0
    %1222 = vmatmul.mubr.f32.gmra.mxu0 %v1026
    %v1223 = vpop.f32.mrf.mxu0
    %v1224 = vadd.f32 0.0, %v1223
    %v1225 = vpop.f32.mrf.mxu0
    %1226 = vmatprep.mubr.f32.mxu0 0.0
    %1227 = vmatmul.mubr.f32.gmra.mxu0 %v1029
    %v1228 = vpop.f32.mrf.mxu0
    %v1229 = vadd.f32 0.0, %v1228
    %v1230 = vpop.f32.mrf.mxu0
    %1231 = vmatprep.mubr.f32.mxu0 0.0
    %1232 = vmatmul.mubr.f32.gmra.mxu0 %v1032
    %v1233 = vpop.f32.mrf.mxu0
    %v1234 = vadd.f32 0.0, %v1233
    %v1235 = vpop.f32.mrf.mxu0
    %1236 = vmatprep.mubr.f32.mxu0 0.0
    %1237 = vmatmul.mubr.f32.gmra.mxu0 %v1035
    %v1238 = vpop.f32.mrf.mxu0
    %v1239 = vadd.f32 0.0, %v1238
    %v1240 = vpop.f32.mrf.mxu0
    %1241 = vmatprep.mubr.f32.mxu0 0.0
    %1242 = vmatmul.mubr.f32.gmra.mxu0 %v1038
    %v1243 = vpop.f32.mrf.mxu0
    %v1244 = vadd.f32 0.0, %v1243
    %v1245 = vpop.f32.mrf.mxu0
    %1246 = vmatprep.mubr.f32.mxu0 0.0
    %1247 = vmatmul.mubr.f32.gmra.mxu0 %v1041
    %v1248 = vpop.f32.mrf.mxu0
    %v1249 = vadd.f32 0.0, %v1248
    %v1250 = vpop.f32.mrf.mxu0
    %1251 = vmatprep.mubr.f32.mxu0 0.0
    %1252 = vmatmul.mubr.f32.gmra.mxu0 %v1044
    %v1253 = vpop.f32.mrf.mxu0
    %v1254 = vadd.f32 0.0, %v1253
    %v1255 = vpop.f32.mrf.mxu0
    %1256 = vmatprep.mubr.f32.mxu0 0.0
    %1257 = vmatmul.mubr.f32.gmra.mxu0 %v1047
    %v1258 = vpop.f32.mrf.mxu0
    %v1259 = vadd.f32 0.0, %v1258
    %v1260 = vpop.f32.mrf.mxu0
    %1261 = vmatprep.mubr.f32.mxu0 0.0
    %1262 = vmatmul.mubr.f32.gmra.mxu0 %v1050
    %v1263 = vpop.f32.mrf.mxu0
    %v1264 = vadd.f32 0.0, %v1263
    %v1265 = vpop.f32.mrf.mxu0
    %1266 = vmatprep.mubr.f32.mxu0 0.0
    %1267 = vmatmul.mubr.f32.gmra.mxu0 %v1053
    %v1268 = vpop.f32.mrf.mxu0
    %v1269 = vadd.f32 0.0, %v1268
    %v1270 = vpop.f32.mrf.mxu0
    %1271 = vmatprep.mubr.f32.mxu0 0.0
    %1272 = vmatmul.mubr.f32.gmra.mxu0 %v1056
    %v1273 = vpop.f32.mrf.mxu0
    %v1274 = vadd.f32 0.0, %v1273
    %v1275 = vpop.f32.mrf.mxu0
    %1276 = vmatprep.mubr.f32.mxu0 0.0
    %1277 = vmatmul.mubr.f32.gmra.mxu0 %v1059
    %v1278 = vpop.f32.mrf.mxu0
    %v1279 = vadd.f32 0.0, %v1278
    %v1280 = vpop.f32.mrf.mxu0
    %1281 = vmatprep.mubr.f32.mxu0 0.0
    %1282 = vmatmul.mubr.f32.gmra.mxu0 %v1062
    %v1283 = vpop.f32.mrf.mxu0
    %v1284 = vadd.f32 0.0, %v1283
    %v1285 = vpop.f32.mrf.mxu0
    %1286 = vmatprep.mubr.f32.mxu0 0.0
    %1287 = vmatmul.mubr.f32.gmra.mxu0 %v1065
    %v1288 = vpop.f32.mrf.mxu0
    %v1289 = vadd.f32 0.0, %v1288
    %v1290 = vpop.f32.mrf.mxu0
    %1291 = vmatprep.mubr.f32.mxu0 0.0
    %1292 = vmatmul.mubr.f32.gmra.mxu0 %v1068
    %v1293 = vpop.f32.mrf.mxu0
    %v1294 = vadd.f32 0.0, %v1293
    %v1295 = vpop.f32.mrf.mxu0
    %1296 = vmatprep.mubr.f32.mxu0 0.0
    %1297 = vmatmul.mubr.f32.gmra.mxu0 %v1071
    %v1298 = vpop.f32.mrf.mxu0
    %v1299 = vadd.f32 0.0, %v1298
    %v1300 = vpop.f32.mrf.mxu0
    %1301 = vmatprep.mubr.f32.mxu0 0.0
    %1302 = vmatmul.mubr.f32.gmra.mxu0 %v1074
    %v1303 = vpop.f32.mrf.mxu0
    %v1304 = vadd.f32 0.0, %v1303
    %v1305 = vpop.f32.mrf.mxu0
    %1306 = vmatprep.mubr.f32.mxu0 0.0
    %1307 = vmatmul.mubr.f32.gmra.mxu0 %v1077
    %v1308 = vpop.f32.mrf.mxu0
    %v1309 = vadd.f32 0.0, %v1308
    %v1310 = vpop.f32.mrf.mxu0
    %1311 = vmatprep.mubr.f32.mxu0 0.0
    %1312 = vmatmul.mubr.f32.gmra.mxu0 %v1080
    %v1313 = vpop.f32.mrf.mxu0
    %v1314 = vadd.f32 0.0, %v1313
    %v1315 = vpop.f32.mrf.mxu0
    %1316 = vmatprep.mubr.f32.mxu0 0.0
    %1317 = vmatmul.mubr.f32.gmra.mxu0 %v1083
    %v1318 = vpop.f32.mrf.mxu0
    %v1319 = vadd.f32 0.0, %v1318
    %v1320 = vpop.f32.mrf.mxu0
    %1321 = vmatprep.mubr.f32.mxu0 0.0
    %1322 = vmatmul.mubr.f32.gmra.mxu0 %v1086
    %v1323 = vpop.f32.mrf.mxu0
    %v1324 = vadd.f32 0.0, %v1323
    %v1325 = vpop.f32.mrf.mxu0
    %1326 = vmatprep.mubr.f32.mxu0 0.0
    %1327 = vmatmul.mubr.f32.gmra.mxu0 %v1089
    %v1328 = vpop.f32.mrf.mxu0
    %v1329 = vadd.f32 0.0, %v1328
    %v1330 = vpop.f32.mrf.mxu0
    %1331 = vmatprep.mubr.f32.mxu0 0.0
    %1332 = vmatmul.mubr.f32.gmra.mxu0 %v1092
    %v1333 = vpop.f32.mrf.mxu0
    %v1334 = vadd.f32 0.0, %v1333
    %v1335 = vpop.f32.mrf.mxu0
    %1336 = vmatprep.mubr.f32.mxu0 0.0
    %1337 = vmatmul.mubr.f32.gmra.mxu0 %v1095
    %v1338 = vpop.f32.mrf.mxu0
    %v1339 = vadd.f32 0.0, %v1338
    %v1340 = vpop.f32.mrf.mxu0
    %1341 = vdwg.mxu0
    %v1342 = vadd.f32 %v917, %v1164
    %v1343 = vadd.f32 %v918, %v1169
    %v1344 = vadd.f32 %v919, %v1174
    %v1345 = vadd.f32 %v920, %v1179
    %v1346 = vadd.f32 %v921, %v1184
    %v1347 = vadd.f32 %v922, %v1189
    %v1348 = vadd.f32 %v923, %v1194
    %v1349 = vadd.f32 %v924, %v1199
    %v1350 = vadd.f32 %v925, %v1204
    %v1351 = vadd.f32 %v926, %v1209
    %v1352 = vadd.f32 %v927, %v1214
    %v1353 = vadd.f32 %v928, %v1219
    %v1354 = vadd.f32 %v929, %v1224
    %v1355 = vadd.f32 %v930, %v1229
    %v1356 = vadd.f32 %v931, %v1234
    %v1357 = vadd.f32 %v932, %v1239
    %v1358 = vadd.f32 %v933, %v1244
    %v1359 = vadd.f32 %v934, %v1249
    %v1360 = vadd.f32 %v935, %v1254
    %v1361 = vadd.f32 %v936, %v1259
    %v1362 = vadd.f32 %v937, %v1264
    %v1363 = vadd.f32 %v938, %v1269
    %v1364 = vadd.f32 %v939, %v1274
    %v1365 = vadd.f32 %v940, %v1279
    %v1366 = vadd.f32 %v941, %v1284
    %v1367 = vadd.f32 %v942, %v1289
    %v1368 = vadd.f32 %v943, %v1294
    %v1369 = vadd.f32 %v944, %v1299
    %v1370 = vadd.f32 %v945, %v1304
    %v1371 = vadd.f32 %v946, %v1309
    %v1372 = vadd.f32 %v947, %v1314
    %v1373 = vadd.f32 %v948, %v1319
    %v1374 = vadd.f32 %v949, %v1324
    %v1375 = vadd.f32 %v950, %v1329
    %v1376 = vadd.f32 %v951, %v1334
    %v1377 = vadd.f32 %v952, %v1339
    %v1378 = vld [vmem:[%s0 + $0x23] sm:$0xff]
    %v1379 = vld [vmem:[%s0 + $0x2b] sm:$0xff]
    %v1380 = vld [vmem:[%s0 + $0x33] sm:$0xff]
    %v1381 = vld [vmem:[%s0 + $0x3b] sm:$0xff]
    %v1382 = vld [vmem:[%s0 + $0x43] sm:$0xff]
    %v1383 = vld [vmem:[%s0 + $0x4b] sm:$0xff]
    %v1384 = vld [vmem:[%s0 + $0x53] sm:$0xff]
    %v1385 = vld [vmem:[%s0 + $0x5b] sm:$0xff]
    %v1386 = vld [vmem:[%s0 + $0x63] sm:$0xff]
    %v1387 = vld [vmem:[%s0 + $0x6b] sm:$0xff]
    %v1388 = vld [vmem:[%s0 + $0x73] sm:$0xff]
    %v1389 = vld [vmem:[%s0 + $0x7b] sm:$0xff]
    %v1390 = vld [vmem:[%s0 + $0x83] sm:$0xff]
    %v1391 = vld [vmem:[%s0 + $0x8b] sm:$0xff]
    %v1392 = vld [vmem:[%s0 + $0x93] sm:$0xff]
    %v1393 = vld [vmem:[%s0 + $0x9b] sm:$0xff]
    %v1394 = vld [vmem:[%s0 + $0xa3] sm:$0xff]
    %v1395 = vld [vmem:[%s0 + $0xab] sm:$0xff]
    %v1396 = vld [vmem:[%s0 + $0xb3] sm:$0xff]
    %v1397 = vld [vmem:[%s0 + $0xbb] sm:$0xff]
    %v1398 = vld [vmem:[%s0 + $0xc3] sm:$0xff]
    %v1399 = vld [vmem:[%s0 + $0xcb] sm:$0xff]
    %v1400 = vld [vmem:[%s0 + $0xd3] sm:$0xff]
    %v1401 = vld [vmem:[%s0 + $0xdb] sm:$0xff]
    %v1402 = vld [vmem:[%s0 + $0xe3] sm:$0xff]
    %v1403 = vld [vmem:[%s0 + $0xeb] sm:$0xff]
    %v1404 = vld [vmem:[%s0 + $0xf3] sm:$0xff]
    %v1405 = vld [vmem:[%s0 + $0xfb] sm:$0xff]
    %v1406 = vld [vmem:[%s0 + $0x103] sm:$0xff]
    %v1407 = vld [vmem:[%s0 + $0x10b] sm:$0xff]
    %v1408 = vld [vmem:[%s0 + $0x113] sm:$0xff]
    %v1409 = vld [vmem:[%s0 + $0x11b] sm:$0xff]
    %v1410 = vld [vmem:[%s0 + $0x123] sm:$0xff]
    %v1411 = vld [vmem:[%s0 + $0x12b] sm:$0xff]
    %v1412 = vld [vmem:[%s0 + $0x133] sm:$0xff]
    %v1413 = vld [vmem:[%s0 + $0x13b] sm:$0xff]
    %v1415 = vsel %vm138, %v1378, 0
    %v1418 = vsel %vm138, %v1379, 0
    %v1421 = vsel %vm138, %v1380, 0
    %v1424 = vsel %vm138, %v1381, 0
    %v1427 = vsel %vm138, %v1382, 0
    %v1430 = vsel %vm138, %v1383, 0
    %v1433 = vsel %vm138, %v1384, 0
    %v1436 = vsel %vm138, %v1385, 0
    %v1439 = vsel %vm138, %v1386, 0
    %v1442 = vsel %vm138, %v1387, 0
    %v1445 = vsel %vm138, %v1388, 0
    %v1448 = vsel %vm138, %v1389, 0
    %v1451 = vsel %vm138, %v1390, 0
    %v1454 = vsel %vm138, %v1391, 0
    %v1457 = vsel %vm138, %v1392, 0
    %v1460 = vsel %vm138, %v1393, 0
    %v1463 = vsel %vm138, %v1394, 0
    %v1466 = vsel %vm138, %v1395, 0
    %v1469 = vsel %vm138, %v1396, 0
    %v1472 = vsel %vm138, %v1397, 0
    %v1475 = vsel %vm138, %v1398, 0
    %v1478 = vsel %vm138, %v1399, 0
    %v1481 = vsel %vm138, %v1400, 0
    %v1484 = vsel %vm138, %v1401, 0
    %v1487 = vsel %vm138, %v1402, 0
    %v1490 = vsel %vm138, %v1403, 0
    %v1493 = vsel %vm138, %v1404, 0
    %v1496 = vsel %vm138, %v1405, 0
    %v1499 = vsel %vm138, %v1406, 0
    %v1502 = vsel %vm138, %v1407, 0
    %v1505 = vsel %vm138, %v1408, 0
    %v1508 = vsel %vm138, %v1409, 0
    %v1511 = vsel %vm138, %v1410, 0
    %v1514 = vsel %vm138, %v1411, 0
    %v1517 = vsel %vm138, %v1412, 0
    %v1520 = vsel %vm138, %v1413, 0
    %1522 = vmatprep.subr.mxu0 0.0
    %1523 = vmatpush1.msra.mxu0 0.0
    %1524 = vmatprep.subr.mxu0 0.0
    %1525 = vmatpush1.msra.mxu0 0.0
    %1526 = vmatprep.subr.mxu0 0.0
    %1527 = vmatpush1.msra.mxu0 0.0
    %1528 = vmatprep.subr.mxu0 0.0
    %1529 = vmatpush1.msra.mxu0 0.0
    %1530 = vmatprep.subr.mxu0 0.0
    %1531 = vmatpush1.msra.mxu0 0.0
    %1532 = vmatprep.subr.mxu0 0.0
    %1533 = vmatpush1.msra.mxu0 0.0
    %1534 = vmatprep.subr.mxu0 0.0
    %1535 = vmatpush1.msra.mxu0 0.0
    %1536 = vmatprep.subr.mxu0 0.0
    %1537 = vmatpush1.msra.mxu0 0.0
    %1538 = vmatprep.subr.mxu0 0.0
    %1539 = vmatpush1.msra.mxu0 0.0
    %1540 = vmatprep.subr.mxu0 0.0
    %1541 = vmatpush1.msra.mxu0 0.0
    %1542 = vmatprep.subr.mxu0 0.0
    %1543 = vmatpush1.msra.mxu0 0.0
    %1544 = vmatprep.subr.mxu0 0.0
    %1545 = vmatpush1.msra.mxu0 0.0
    %1546 = vmatprep.subr.mxu0 0.0
    %1547 = vmatpush1.msra.mxu0 %v42
    %1548 = vmatprep.subr.mxu0 0.0
    %1549 = vmatpush1.msra.mxu0 %v41
    %1550 = vmatprep.subr.mxu0 0.0
    %1551 = vmatpush1.msra.mxu0 %v40
    %1552 = vmatprep.subr.mxu0 0.0
    %1553 = vmatpush1.msra.mxu0 %v39
    %1554 = vmatprep.subr.mxu0 0.0
    %1555 = vmatpush2.msra.mxu0 0.0
    %1556 = vmatprep.subr.mxu0 0.0
    %1557 = vmatpush2.msra.mxu0 0.0
    %1558 = vmatprep.subr.mxu0 0.0
    %1559 = vmatpush2.msra.mxu0 0.0
    %1560 = vmatprep.subr.mxu0 0.0
    %1561 = vmatpush2.msra.mxu0 0.0
    %1562 = vmatprep.subr.mxu0 0.0
    %1563 = vmatpush2.msra.mxu0 0.0
    %1564 = vmatprep.subr.mxu0 0.0
    %1565 = vmatpush2.msra.mxu0 0.0
    %1566 = vmatprep.subr.mxu0 0.0
    %1567 = vmatpush2.msra.mxu0 0.0
    %1568 = vmatprep.subr.mxu0 0.0
    %1569 = vmatpush2.msra.mxu0 0.0
    %1570 = vmatprep.subr.mxu0 0.0
    %1571 = vmatpush2.msra.mxu0 0.0
    %1572 = vmatprep.subr.mxu0 0.0
    %1573 = vmatpush2.msra.mxu0 0.0
    %1574 = vmatprep.subr.mxu0 0.0
    %1575 = vmatpush2.msra.mxu0 0.0
    %1576 = vmatprep.subr.mxu0 0.0
    %1577 = vmatpush2.msra.mxu0 0.0
    %1578 = vmatprep.subr.mxu0 0.0
    %1579 = vmatpush2.msra.mxu0 0.0
    %1580 = vmatprep.subr.mxu0 0.0
    %1581 = vmatpush2.msra.mxu0 0.0
    %1582 = vmatprep.subr.mxu0 0.0
    %1583 = vmatpush2.msra.mxu0 0.0
    %1584 = vmatprep.subr.mxu0 0.0
    %1585 = vmatpush2.msra.mxu0 0.0
    %1586 = vmatprep.mubr.f32.mxu0 0.0
    %1587 = vmatmul.mubr.f32.gmra.mxu0 %v1415
    %v1588 = vpop.f32.mrf.mxu0
    %v1589 = vadd.f32 0.0, %v1588
    %v1590 = vpop.f32.mrf.mxu0
    %1591 = vmatprep.mubr.f32.mxu0 0.0
    %1592 = vmatmul.mubr.f32.gmra.mxu0 %v1418
    %v1593 = vpop.f32.mrf.mxu0
    %v1594 = vadd.f32 0.0, %v1593
    %v1595 = vpop.f32.mrf.mxu0
    %1596 = vmatprep.mubr.f32.mxu0 0.0
    %1597 = vmatmul.mubr.f32.gmra.mxu0 %v1421
    %v1598 = vpop.f32.mrf.mxu0
    %v1599 = vadd.f32 0.0, %v1598
    %v1600 = vpop.f32.mrf.mxu0
    %1601 = vmatprep.mubr.f32.mxu0 0.0
    %1602 = vmatmul.mubr.f32.gmra.mxu0 %v1424
    %v1603 = vpop.f32.mrf.mxu0
    %v1604 = vadd.f32 0.0, %v1603
    %v1605 = vpop.f32.mrf.mxu0
    %1606 = vmatprep.mubr.f32.mxu0 0.0
    %1607 = vmatmul.mubr.f32.gmra.mxu0 %v1427
    %v1608 = vpop.f32.mrf.mxu0
    %v1609 = vadd.f32 0.0, %v1608
    %v1610 = vpop.f32.mrf.mxu0
    %1611 = vmatprep.mubr.f32.mxu0 0.0
    %1612 = vmatmul.mubr.f32.gmra.mxu0 %v1430
    %v1613 = vpop.f32.mrf.mxu0
    %v1614 = vadd.f32 0.0, %v1613
    %v1615 = vpop.f32.mrf.mxu0
    %1616 = vmatprep.mubr.f32.mxu0 0.0
    %1617 = vmatmul.mubr.f32.gmra.mxu0 %v1433
    %v1618 = vpop.f32.mrf.mxu0
    %v1619 = vadd.f32 0.0, %v1618
    %v1620 = vpop.f32.mrf.mxu0
    %1621 = vmatprep.mubr.f32.mxu0 0.0
    %1622 = vmatmul.mubr.f32.gmra.mxu0 %v1436
    %v1623 = vpop.f32.mrf.mxu0
    %v1624 = vadd.f32 0.0, %v1623
    %v1625 = vpop.f32.mrf.mxu0
    %1626 = vmatprep.mubr.f32.mxu0 0.0
    %1627 = vmatmul.mubr.f32.gmra.mxu0 %v1439
    %v1628 = vpop.f32.mrf.mxu0
    %v1629 = vadd.f32 0.0, %v1628
    %v1630 = vpop.f32.mrf.mxu0
    %1631 = vmatprep.mubr.f32.mxu0 0.0
    %1632 = vmatmul.mubr.f32.gmra.mxu0 %v1442
    %v1633 = vpop.f32.mrf.mxu0
    %v1634 = vadd.f32 0.0, %v1633
    %v1635 = vpop.f32.mrf.mxu0
    %1636 = vmatprep.mubr.f32.mxu0 0.0
    %1637 = vmatmul.mubr.f32.gmra.mxu0 %v1445
    %v1638 = vpop.f32.mrf.mxu0
    %v1639 = vadd.f32 0.0, %v1638
    %v1640 = vpop.f32.mrf.mxu0
    %1641 = vmatprep.mubr.f32.mxu0 0.0
    %1642 = vmatmul.mubr.f32.gmra.mxu0 %v1448
    %v1643 = vpop.f32.mrf.mxu0
    %v1644 = vadd.f32 0.0, %v1643
    %v1645 = vpop.f32.mrf.mxu0
    %1646 = vmatprep.mubr.f32.mxu0 0.0
    %1647 = vmatmul.mubr.f32.gmra.mxu0 %v1451
    %v1648 = vpop.f32.mrf.mxu0
    %v1649 = vadd.f32 0.0, %v1648
    %v1650 = vpop.f32.mrf.mxu0
    %1651 = vmatprep.mubr.f32.mxu0 0.0
    %1652 = vmatmul.mubr.f32.gmra.mxu0 %v1454
    %v1653 = vpop.f32.mrf.mxu0
    %v1654 = vadd.f32 0.0, %v1653
    %v1655 = vpop.f32.mrf.mxu0
    %1656 = vmatprep.mubr.f32.mxu0 0.0
    %1657 = vmatmul.mubr.f32.gmra.mxu0 %v1457
    %v1658 = vpop.f32.mrf.mxu0
    %v1659 = vadd.f32 0.0, %v1658
    %v1660 = vpop.f32.mrf.mxu0
    %1661 = vmatprep.mubr.f32.mxu0 0.0
    %1662 = vmatmul.mubr.f32.gmra.mxu0 %v1460
    %v1663 = vpop.f32.mrf.mxu0
    %v1664 = vadd.f32 0.0, %v1663
    %v1665 = vpop.f32.mrf.mxu0
    %1666 = vmatprep.mubr.f32.mxu0 0.0
    %1667 = vmatmul.mubr.f32.gmra.mxu0 %v1463
    %v1668 = vpop.f32.mrf.mxu0
    %v1669 = vadd.f32 0.0, %v1668
    %v1670 = vpop.f32.mrf.mxu0
    %1671 = vmatprep.mubr.f32.mxu0 0.0
    %1672 = vmatmul.mubr.f32.gmra.mxu0 %v1466
    %v1673 = vpop.f32.mrf.mxu0
    %v1674 = vadd.f32 0.0, %v1673
    %v1675 = vpop.f32.mrf.mxu0
    %1676 = vmatprep.mubr.f32.mxu0 0.0
    %1677 = vmatmul.mubr.f32.gmra.mxu0 %v1469
    %v1678 = vpop.f32.mrf.mxu0
    %v1679 = vadd.f32 0.0, %v1678
    %v1680 = vpop.f32.mrf.mxu0
    %1681 = vmatprep.mubr.f32.mxu0 0.0
    %1682 = vmatmul.mubr.f32.gmra.mxu0 %v1472
    %v1683 = vpop.f32.mrf.mxu0
    %v1684 = vadd.f32 0.0, %v1683
    %v1685 = vpop.f32.mrf.mxu0
    %1686 = vmatprep.mubr.f32.mxu0 0.0
    %1687 = vmatmul.mubr.f32.gmra.mxu0 %v1475
    %v1688 = vpop.f32.mrf.mxu0
    %v1689 = vadd.f32 0.0, %v1688
    %v1690 = vpop.f32.mrf.mxu0
    %1691 = vmatprep.mubr.f32.mxu0 0.0
    %1692 = vmatmul.mubr.f32.gmra.mxu0 %v1478
    %v1693 = vpop.f32.mrf.mxu0
    %v1694 = vadd.f32 0.0, %v1693
    %v1695 = vpop.f32.mrf.mxu0
    %1696 = vmatprep.mubr.f32.mxu0 0.0
    %1697 = vmatmul.mubr.f32.gmra.mxu0 %v1481
    %v1698 = vpop.f32.mrf.mxu0
    %v1699 = vadd.f32 0.0, %v1698
    %v1700 = vpop.f32.mrf.mxu0
    %1701 = vmatprep.mubr.f32.mxu0 0.0
    %1702 = vmatmul.mubr.f32.gmra.mxu0 %v1484
    %v1703 = vpop.f32.mrf.mxu0
    %v1704 = vadd.f32 0.0, %v1703
    %v1705 = vpop.f32.mrf.mxu0
    %1706 = vmatprep.mubr.f32.mxu0 0.0
    %1707 = vmatmul.mubr.f32.gmra.mxu0 %v1487
    %v1708 = vpop.f32.mrf.mxu0
    %v1709 = vadd.f32 0.0, %v1708
    %v1710 = vpop.f32.mrf.mxu0
    %1711 = vmatprep.mubr.f32.mxu0 0.0
    %1712 = vmatmul.mubr.f32.gmra.mxu0 %v1490
    %v1713 = vpop.f32.mrf.mxu0
    %v1714 = vadd.f32 0.0, %v1713
    %v1715 = vpop.f32.mrf.mxu0
    %1716 = vmatprep.mubr.f32.mxu0 0.0
    %1717 = vmatmul.mubr.f32.gmra.mxu0 %v1493
    %v1718 = vpop.f32.mrf.mxu0
    %v1719 = vadd.f32 0.0, %v1718
    %v1720 = vpop.f32.mrf.mxu0
    %1721 = vmatprep.mubr.f32.mxu0 0.0
    %1722 = vmatmul.mubr.f32.gmra.mxu0 %v1496
    %v1723 = vpop.f32.mrf.mxu0
    %v1724 = vadd.f32 0.0, %v1723
    %v1725 = vpop.f32.mrf.mxu0
    %1726 = vmatprep.mubr.f32.mxu0 0.0
    %1727 = vmatmul.mubr.f32.gmra.mxu0 %v1499
    %v1728 = vpop.f32.mrf.mxu0
    %v1729 = vadd.f32 0.0, %v1728
    %v1730 = vpop.f32.mrf.mxu0
    %1731 = vmatprep.mubr.f32.mxu0 0.0
    %1732 = vmatmul.mubr.f32.gmra.mxu0 %v1502
    %v1733 = vpop.f32.mrf.mxu0
    %v1734 = vadd.f32 0.0, %v1733
    %v1735 = vpop.f32.mrf.mxu0
    %1736 = vmatprep.mubr.f32.mxu0 0.0
    %1737 = vmatmul.mubr.f32.gmra.mxu0 %v1505
    %v1738 = vpop.f32.mrf.mxu0
    %v1739 = vadd.f32 0.0, %v1738
    %v1740 = vpop.f32.mrf.mxu0
    %1741 = vmatprep.mubr.f32.mxu0 0.0
    %1742 = vmatmul.mubr.f32.gmra.mxu0 %v1508
    %v1743 = vpop.f32.mrf.mxu0
    %v1744 = vadd.f32 0.0, %v1743
    %v1745 = vpop.f32.mrf.mxu0
    %1746 = vmatprep.mubr.f32.mxu0 0.0
    %1747 = vmatmul.mubr.f32.gmra.mxu0 %v1511
    %v1748 = vpop.f32.mrf.mxu0
    %v1749 = vadd.f32 0.0, %v1748
    %v1750 = vpop.f32.mrf.mxu0
    %1751 = vmatprep.mubr.f32.mxu0 0.0
    %1752 = vmatmul.mubr.f32.gmra.mxu0 %v1514
    %v1753 = vpop.f32.mrf.mxu0
    %v1754 = vadd.f32 0.0, %v1753
    %v1755 = vpop.f32.mrf.mxu0
    %1756 = vmatprep.mubr.f32.mxu0 0.0
    %1757 = vmatmul.mubr.f32.gmra.mxu0 %v1517
    %v1758 = vpop.f32.mrf.mxu0
    %v1759 = vadd.f32 0.0, %v1758
    %v1760 = vpop.f32.mrf.mxu0
    %1761 = vmatprep.mubr.f32.mxu0 0.0
    %1762 = vmatmul.mubr.f32.gmra.mxu0 %v1520
    %v1763 = vpop.f32.mrf.mxu0
    %v1764 = vadd.f32 0.0, %v1763
    %v1765 = vpop.f32.mrf.mxu0
    %1766 = vdwg.mxu0
    %v1767 = vadd.f32 %v1342, %v1589
    %v1768 = vadd.f32 %v1343, %v1594
    %v1769 = vadd.f32 %v1344, %v1599
    %v1770 = vadd.f32 %v1345, %v1604
    %v1771 = vadd.f32 %v1346, %v1609
    %v1772 = vadd.f32 %v1347, %v1614
    %v1773 = vadd.f32 %v1348, %v1619
    %v1774 = vadd.f32 %v1349, %v1624
    %v1775 = vadd.f32 %v1350, %v1629
    %v1776 = vadd.f32 %v1351, %v1634
    %v1777 = vadd.f32 %v1352, %v1639
    %v1778 = vadd.f32 %v1353, %v1644
    %v1779 = vadd.f32 %v1354, %v1649
    %v1780 = vadd.f32 %v1355, %v1654
    %v1781 = vadd.f32 %v1356, %v1659
    %v1782 = vadd.f32 %v1357, %v1664
    %v1783 = vadd.f32 %v1358, %v1669
    %v1784 = vadd.f32 %v1359, %v1674
    %v1785 = vadd.f32 %v1360, %v1679
    %v1786 = vadd.f32 %v1361, %v1684
    %v1787 = vadd.f32 %v1362, %v1689
    %v1788 = vadd.f32 %v1363, %v1694
    %v1789 = vadd.f32 %v1364, %v1699
    %v1790 = vadd.f32 %v1365, %v1704
    %v1791 = vadd.f32 %v1366, %v1709
    %v1792 = vadd.f32 %v1367, %v1714
    %v1793 = vadd.f32 %v1368, %v1719
    %v1794 = vadd.f32 %v1369, %v1724
    %v1795 = vadd.f32 %v1370, %v1729
    %v1796 = vadd.f32 %v1371, %v1734
    %v1797 = vadd.f32 %v1372, %v1739
    %v1798 = vadd.f32 %v1373, %v1744
    %v1799 = vadd.f32 %v1374, %v1749
    %v1800 = vadd.f32 %v1375, %v1754
    %v1801 = vadd.f32 %v1376, %v1759
    %v1802 = vadd.f32 %v1377, %v1764
    %v1803 = vld [vmem:[%s0 + $0x24] sm:$0xff]
    %v1804 = vld [vmem:[%s0 + $0x2c] sm:$0xff]
    %v1805 = vld [vmem:[%s0 + $0x34] sm:$0xff]
    %v1806 = vld [vmem:[%s0 + $0x3c] sm:$0xff]
    %v1807 = vld [vmem:[%s0 + $0x44] sm:$0xff]
    %v1808 = vld [vmem:[%s0 + $0x4c] sm:$0xff]
    %v1809 = vld [vmem:[%s0 + $0x54] sm:$0xff]
    %v1810 = vld [vmem:[%s0 + $0x5c] sm:$0xff]
    %v1811 = vld [vmem:[%s0 + $0x64] sm:$0xff]
    %v1812 = vld [vmem:[%s0 + $0x6c] sm:$0xff]
    %v1813 = vld [vmem:[%s0 + $0x74] sm:$0xff]
    %v1814 = vld [vmem:[%s0 + $0x7c] sm:$0xff]
    %v1815 = vld [vmem:[%s0 + $0x84] sm:$0xff]
    %v1816 = vld [vmem:[%s0 + $0x8c] sm:$0xff]
    %v1817 = vld [vmem:[%s0 + $0x94] sm:$0xff]
    %v1818 = vld [vmem:[%s0 + $0x9c] sm:$0xff]
    %v1819 = vld [vmem:[%s0 + $0xa4] sm:$0xff]
    %v1820 = vld [vmem:[%s0 + $0xac] sm:$0xff]
    %v1821 = vld [vmem:[%s0 + $0xb4] sm:$0xff]
    %v1822 = vld [vmem:[%s0 + $0xbc] sm:$0xff]
    %v1823 = vld [vmem:[%s0 + $0xc4] sm:$0xff]
    %v1824 = vld [vmem:[%s0 + $0xcc] sm:$0xff]
    %v1825 = vld [vmem:[%s0 + $0xd4] sm:$0xff]
    %v1826 = vld [vmem:[%s0 + $0xdc] sm:$0xff]
    %v1827 = vld [vmem:[%s0 + $0xe4] sm:$0xff]
    %v1828 = vld [vmem:[%s0 + $0xec] sm:$0xff]
    %v1829 = vld [vmem:[%s0 + $0xf4] sm:$0xff]
    %v1830 = vld [vmem:[%s0 + $0xfc] sm:$0xff]
    %v1831 = vld [vmem:[%s0 + $0x104] sm:$0xff]
    %v1832 = vld [vmem:[%s0 + $0x10c] sm:$0xff]
    %v1833 = vld [vmem:[%s0 + $0x114] sm:$0xff]
    %v1834 = vld [vmem:[%s0 + $0x11c] sm:$0xff]
    %v1835 = vld [vmem:[%s0 + $0x124] sm:$0xff]
    %v1836 = vld [vmem:[%s0 + $0x12c] sm:$0xff]
    %v1837 = vld [vmem:[%s0 + $0x134] sm:$0xff]
    %v1838 = vld [vmem:[%s0 + $0x13c] sm:$0xff]
    %v1840 = vsel %vm138, %v1803, 0
    %v1843 = vsel %vm138, %v1804, 0
    %v1846 = vsel %vm138, %v1805, 0
    %v1849 = vsel %vm138, %v1806, 0
    %v1852 = vsel %vm138, %v1807, 0
    %v1855 = vsel %vm138, %v1808, 0
    %v1858 = vsel %vm138, %v1809, 0
    %v1861 = vsel %vm138, %v1810, 0
    %v1864 = vsel %vm138, %v1811, 0
    %v1867 = vsel %vm138, %v1812, 0
    %v1870 = vsel %vm138, %v1813, 0
    %v1873 = vsel %vm138, %v1814, 0
    %v1876 = vsel %vm138, %v1815, 0
    %v1879 = vsel %vm138, %v1816, 0
    %v1882 = vsel %vm138, %v1817, 0
    %v1885 = vsel %vm138, %v1818, 0
    %v1888 = vsel %vm138, %v1819, 0
    %v1891 = vsel %vm138, %v1820, 0
    %v1894 = vsel %vm138, %v1821, 0
    %v1897 = vsel %vm138, %v1822, 0
    %v1900 = vsel %vm138, %v1823, 0
    %v1903 = vsel %vm138, %v1824, 0
    %v1906 = vsel %vm138, %v1825, 0
    %v1909 = vsel %vm138, %v1826, 0
    %v1912 = vsel %vm138, %v1827, 0
    %v1915 = vsel %vm138, %v1828, 0
    %v1918 = vsel %vm138, %v1829, 0
    %v1921 = vsel %vm138, %v1830, 0
    %v1924 = vsel %vm138, %v1831, 0
    %v1927 = vsel %vm138, %v1832, 0
    %v1930 = vsel %vm138, %v1833, 0
    %v1933 = vsel %vm138, %v1834, 0
    %v1936 = vsel %vm138, %v1835, 0
    %v1939 = vsel %vm138, %v1836, 0
    %v1942 = vsel %vm138, %v1837, 0
    %v1945 = vsel %vm138, %v1838, 0
    %1947 = vmatprep.subr.mxu0 0.0
    %1948 = vmatpush1.msra.mxu0 0.0
    %1949 = vmatprep.subr.mxu0 0.0
    %1950 = vmatpush1.msra.mxu0 0.0
    %1951 = vmatprep.subr.mxu0 0.0
    %1952 = vmatpush1.msra.mxu0 0.0
    %1953 = vmatprep.subr.mxu0 0.0
    %1954 = vmatpush1.msra.mxu0 0.0
    %1955 = vmatprep.subr.mxu0 0.0
    %1956 = vmatpush1.msra.mxu0 0.0
    %1957 = vmatprep.subr.mxu0 0.0
    %1958 = vmatpush1.msra.mxu0 0.0
    %1959 = vmatprep.subr.mxu0 0.0
    %1960 = vmatpush1.msra.mxu0 0.0
    %1961 = vmatprep.subr.mxu0 0.0
    %1962 = vmatpush1.msra.mxu0 0.0
    %1963 = vmatprep.subr.mxu0 0.0
    %1964 = vmatpush1.msra.mxu0 0.0
    %1965 = vmatprep.subr.mxu0 0.0
    %1966 = vmatpush1.msra.mxu0 0.0
    %1967 = vmatprep.subr.mxu0 0.0
    %1968 = vmatpush1.msra.mxu0 0.0
    %1969 = vmatprep.subr.mxu0 0.0
    %1970 = vmatpush1.msra.mxu0 0.0
    %1971 = vmatprep.subr.mxu0 0.0
    %1972 = vmatpush1.msra.mxu0 %v47
    %1973 = vmatprep.subr.mxu0 0.0
    %1974 = vmatpush1.msra.mxu0 %v46
    %1975 = vmatprep.subr.mxu0 0.0
    %1976 = vmatpush1.msra.mxu0 %v45
    %1977 = vmatprep.subr.mxu0 0.0
    %1978 = vmatpush1.msra.mxu0 %v44
    %1979 = vmatprep.subr.mxu0 0.0
    %1980 = vmatpush2.msra.mxu0 0.0
    %1981 = vmatprep.subr.mxu0 0.0
    %1982 = vmatpush2.msra.mxu0 0.0
    %1983 = vmatprep.subr.mxu0 0.0
    %1984 = vmatpush2.msra.mxu0 0.0
    %1985 = vmatprep.subr.mxu0 0.0
    %1986 = vmatpush2.msra.mxu0 0.0
    %1987 = vmatprep.subr.mxu0 0.0
    %1988 = vmatpush2.msra.mxu0 0.0
    %1989 = vmatprep.subr.mxu0 0.0
    %1990 = vmatpush2.msra.mxu0 0.0
    %1991 = vmatprep.subr.mxu0 0.0
    %1992 = vmatpush2.msra.mxu0 0.0
    %1993 = vmatprep.subr.mxu0 0.0
    %1994 = vmatpush2.msra.mxu0 0.0
    %1995 = vmatprep.subr.mxu0 0.0
    %1996 = vmatpush2.msra.mxu0 0.0
    %1997 = vmatprep.subr.mxu0 0.0
    %1998 = vmatpush2.msra.mxu0 0.0
    %1999 = vmatprep.subr.mxu0 0.0
    %2000 = vmatpush2.msra.mxu0 0.0
    %2001 = vmatprep.subr.mxu0 0.0
    %2002 = vmatpush2.msra.mxu0 0.0
    %2003 = vmatprep.subr.mxu0 0.0
    %2004 = vmatpush2.msra.mxu0 0.0
    %2005 = vmatprep.subr.mxu0 0.0
    %2006 = vmatpush2.msra.mxu0 0.0
    %2007 = vmatprep.subr.mxu0 0.0
    %2008 = vmatpush2.msra.mxu0 0.0
    %2009 = vmatprep.subr.mxu0 0.0
    %2010 = vmatpush2.msra.mxu0 0.0
    %2011 = vmatprep.mubr.f32.mxu0 0.0
    %2012 = vmatmul.mubr.f32.gmra.mxu0 %v1840
    %v2013 = vpop.f32.mrf.mxu0
    %v2014 = vadd.f32 0.0, %v2013
    %v2015 = vpop.f32.mrf.mxu0
    %2016 = vmatprep.mubr.f32.mxu0 0.0
    %2017 = vmatmul.mubr.f32.gmra.mxu0 %v1843
    %v2018 = vpop.f32.mrf.mxu0
    %v2019 = vadd.f32 0.0, %v2018
    %v2020 = vpop.f32.mrf.mxu0
    %2021 = vmatprep.mubr.f32.mxu0 0.0
    %2022 = vmatmul.mubr.f32.gmra.mxu0 %v1846
    %v2023 = vpop.f32.mrf.mxu0
    %v2024 = vadd.f32 0.0, %v2023
    %v2025 = vpop.f32.mrf.mxu0
    %2026 = vmatprep.mubr.f32.mxu0 0.0
    %2027 = vmatmul.mubr.f32.gmra.mxu0 %v1849
    %v2028 = vpop.f32.mrf.mxu0
    %v2029 = vadd.f32 0.0, %v2028
    %v2030 = vpop.f32.mrf.mxu0
    %2031 = vmatprep.mubr.f32.mxu0 0.0
    %2032 = vmatmul.mubr.f32.gmra.mxu0 %v1852
    %v2033 = vpop.f32.mrf.mxu0
    %v2034 = vadd.f32 0.0, %v2033
    %v2035 = vpop.f32.mrf.mxu0
    %2036 = vmatprep.mubr.f32.mxu0 0.0
    %2037 = vmatmul.mubr.f32.gmra.mxu0 %v1855
    %v2038 = vpop.f32.mrf.mxu0
    %v2039 = vadd.f32 0.0, %v2038
    %v2040 = vpop.f32.mrf.mxu0
    %2041 = vmatprep.mubr.f32.mxu0 0.0
    %2042 = vmatmul.mubr.f32.gmra.mxu0 %v1858
    %v2043 = vpop.f32.mrf.mxu0
    %v2044 = vadd.f32 0.0, %v2043
    %v2045 = vpop.f32.mrf.mxu0
    %2046 = vmatprep.mubr.f32.mxu0 0.0
    %2047 = vmatmul.mubr.f32.gmra.mxu0 %v1861
    %v2048 = vpop.f32.mrf.mxu0
    %v2049 = vadd.f32 0.0, %v2048
    %v2050 = vpop.f32.mrf.mxu0
    %2051 = vmatprep.mubr.f32.mxu0 0.0
    %2052 = vmatmul.mubr.f32.gmra.mxu0 %v1864
    %v2053 = vpop.f32.mrf.mxu0
    %v2054 = vadd.f32 0.0, %v2053
    %v2055 = vpop.f32.mrf.mxu0
    %2056 = vmatprep.mubr.f32.mxu0 0.0
    %2057 = vmatmul.mubr.f32.gmra.mxu0 %v1867
    %v2058 = vpop.f32.mrf.mxu0
    %v2059 = vadd.f32 0.0, %v2058
    %v2060 = vpop.f32.mrf.mxu0
    %2061 = vmatprep.mubr.f32.mxu0 0.0
    %2062 = vmatmul.mubr.f32.gmra.mxu0 %v1870
    %v2063 = vpop.f32.mrf.mxu0
    %v2064 = vadd.f32 0.0, %v2063
    %v2065 = vpop.f32.mrf.mxu0
    %2066 = vmatprep.mubr.f32.mxu0 0.0
    %2067 = vmatmul.mubr.f32.gmra.mxu0 %v1873
    %v2068 = vpop.f32.mrf.mxu0
    %v2069 = vadd.f32 0.0, %v2068
    %v2070 = vpop.f32.mrf.mxu0
    %2071 = vmatprep.mubr.f32.mxu0 0.0
    %2072 = vmatmul.mubr.f32.gmra.mxu0 %v1876
    %v2073 = vpop.f32.mrf.mxu0
    %v2074 = vadd.f32 0.0, %v2073
    %v2075 = vpop.f32.mrf.mxu0
    %2076 = vmatprep.mubr.f32.mxu0 0.0
    %2077 = vmatmul.mubr.f32.gmra.mxu0 %v1879
    %v2078 = vpop.f32.mrf.mxu0
    %v2079 = vadd.f32 0.0, %v2078
    %v2080 = vpop.f32.mrf.mxu0
    %2081 = vmatprep.mubr.f32.mxu0 0.0
    %2082 = vmatmul.mubr.f32.gmra.mxu0 %v1882
    %v2083 = vpop.f32.mrf.mxu0
    %v2084 = vadd.f32 0.0, %v2083
    %v2085 = vpop.f32.mrf.mxu0
    %2086 = vmatprep.mubr.f32.mxu0 0.0
    %2087 = vmatmul.mubr.f32.gmra.mxu0 %v1885
    %v2088 = vpop.f32.mrf.mxu0
    %v2089 = vadd.f32 0.0, %v2088
    %v2090 = vpop.f32.mrf.mxu0
    %2091 = vmatprep.mubr.f32.mxu0 0.0
    %2092 = vmatmul.mubr.f32.gmra.mxu0 %v1888
    %v2093 = vpop.f32.mrf.mxu0
    %v2094 = vadd.f32 0.0, %v2093
    %v2095 = vpop.f32.mrf.mxu0
    %2096 = vmatprep.mubr.f32.mxu0 0.0
    %2097 = vmatmul.mubr.f32.gmra.mxu0 %v1891
    %v2098 = vpop.f32.mrf.mxu0
    %v2099 = vadd.f32 0.0, %v2098
    %v2100 = vpop.f32.mrf.mxu0
    %2101 = vmatprep.mubr.f32.mxu0 0.0
    %2102 = vmatmul.mubr.f32.gmra.mxu0 %v1894
    %v2103 = vpop.f32.mrf.mxu0
    %v2104 = vadd.f32 0.0, %v2103
    %v2105 = vpop.f32.mrf.mxu0
    %2106 = vmatprep.mubr.f32.mxu0 0.0
    %2107 = vmatmul.mubr.f32.gmra.mxu0 %v1897
    %v2108 = vpop.f32.mrf.mxu0
    %v2109 = vadd.f32 0.0, %v2108
    %v2110 = vpop.f32.mrf.mxu0
    %2111 = vmatprep.mubr.f32.mxu0 0.0
    %2112 = vmatmul.mubr.f32.gmra.mxu0 %v1900
    %v2113 = vpop.f32.mrf.mxu0
    %v2114 = vadd.f32 0.0, %v2113
    %v2115 = vpop.f32.mrf.mxu0
    %2116 = vmatprep.mubr.f32.mxu0 0.0
    %2117 = vmatmul.mubr.f32.gmra.mxu0 %v1903
    %v2118 = vpop.f32.mrf.mxu0
    %v2119 = vadd.f32 0.0, %v2118
    %v2120 = vpop.f32.mrf.mxu0
    %2121 = vmatprep.mubr.f32.mxu0 0.0
    %2122 = vmatmul.mubr.f32.gmra.mxu0 %v1906
    %v2123 = vpop.f32.mrf.mxu0
    %v2124 = vadd.f32 0.0, %v2123
    %v2125 = vpop.f32.mrf.mxu0
    %2126 = vmatprep.mubr.f32.mxu0 0.0
    %2127 = vmatmul.mubr.f32.gmra.mxu0 %v1909
    %v2128 = vpop.f32.mrf.mxu0
    %v2129 = vadd.f32 0.0, %v2128
    %v2130 = vpop.f32.mrf.mxu0
    %2131 = vmatprep.mubr.f32.mxu0 0.0
    %2132 = vmatmul.mubr.f32.gmra.mxu0 %v1912
    %v2133 = vpop.f32.mrf.mxu0
    %v2134 = vadd.f32 0.0, %v2133
    %v2135 = vpop.f32.mrf.mxu0
    %2136 = vmatprep.mubr.f32.mxu0 0.0
    %2137 = vmatmul.mubr.f32.gmra.mxu0 %v1915
    %v2138 = vpop.f32.mrf.mxu0
    %v2139 = vadd.f32 0.0, %v2138
    %v2140 = vpop.f32.mrf.mxu0
    %2141 = vmatprep.mubr.f32.mxu0 0.0
    %2142 = vmatmul.mubr.f32.gmra.mxu0 %v1918
    %v2143 = vpop.f32.mrf.mxu0
    %v2144 = vadd.f32 0.0, %v2143
    %v2145 = vpop.f32.mrf.mxu0
    %2146 = vmatprep.mubr.f32.mxu0 0.0
    %2147 = vmatmul.mubr.f32.gmra.mxu0 %v1921
    %v2148 = vpop.f32.mrf.mxu0
    %v2149 = vadd.f32 0.0, %v2148
    %v2150 = vpop.f32.mrf.mxu0
    %2151 = vmatprep.mubr.f32.mxu0 0.0
    %2152 = vmatmul.mubr.f32.gmra.mxu0 %v1924
    %v2153 = vpop.f32.mrf.mxu0
    %v2154 = vadd.f32 0.0, %v2153
    %v2155 = vpop.f32.mrf.mxu0
    %2156 = vmatprep.mubr.f32.mxu0 0.0
    %2157 = vmatmul.mubr.f32.gmra.mxu0 %v1927
    %v2158 = vpop.f32.mrf.mxu0
    %v2159 = vadd.f32 0.0, %v2158
    %v2160 = vpop.f32.mrf.mxu0
    %2161 = vmatprep.mubr.f32.mxu0 0.0
    %2162 = vmatmul.mubr.f32.gmra.mxu0 %v1930
    %v2163 = vpop.f32.mrf.mxu0
    %v2164 = vadd.f32 0.0, %v2163
    %v2165 = vpop.f32.mrf.mxu0
    %2166 = vmatprep.mubr.f32.mxu0 0.0
    %2167 = vmatmul.mubr.f32.gmra.mxu0 %v1933
    %v2168 = vpop.f32.mrf.mxu0
    %v2169 = vadd.f32 0.0, %v2168
    %v2170 = vpop.f32.mrf.mxu0
    %2171 = vmatprep.mubr.f32.mxu0 0.0
    %2172 = vmatmul.mubr.f32.gmra.mxu0 %v1936
    %v2173 = vpop.f32.mrf.mxu0
    %v2174 = vadd.f32 0.0, %v2173
    %v2175 = vpop.f32.mrf.mxu0
    %2176 = vmatprep.mubr.f32.mxu0 0.0
    %2177 = vmatmul.mubr.f32.gmra.mxu0 %v1939
    %v2178 = vpop.f32.mrf.mxu0
    %v2179 = vadd.f32 0.0, %v2178
    %v2180 = vpop.f32.mrf.mxu0
    %2181 = vmatprep.mubr.f32.mxu0 0.0
    %2182 = vmatmul.mubr.f32.gmra.mxu0 %v1942
    %v2183 = vpop.f32.mrf.mxu0
    %v2184 = vadd.f32 0.0, %v2183
    %v2185 = vpop.f32.mrf.mxu0
    %2186 = vmatprep.mubr.f32.mxu0 0.0
    %2187 = vmatmul.mubr.f32.gmra.mxu0 %v1945
    %v2188 = vpop.f32.mrf.mxu0
    %v2189 = vadd.f32 0.0, %v2188
    %v2190 = vpop.f32.mrf.mxu0
    %2191 = vdwg.mxu0
    %v2192 = vadd.f32 %v1767, %v2014
    %v2193 = vadd.f32 %v1768, %v2019
    %v2194 = vadd.f32 %v1769, %v2024
    %v2195 = vadd.f32 %v1770, %v2029
    %v2196 = vadd.f32 %v1771, %v2034
    %v2197 = vadd.f32 %v1772, %v2039
    %v2198 = vadd.f32 %v1773, %v2044
    %v2199 = vadd.f32 %v1774, %v2049
    %v2200 = vadd.f32 %v1775, %v2054
    %v2201 = vadd.f32 %v1776, %v2059
    %v2202 = vadd.f32 %v1777, %v2064
    %v2203 = vadd.f32 %v1778, %v2069
    %v2204 = vadd.f32 %v1779, %v2074
    %v2205 = vadd.f32 %v1780, %v2079
    %v2206 = vadd.f32 %v1781, %v2084
    %v2207 = vadd.f32 %v1782, %v2089
    %v2208 = vadd.f32 %v1783, %v2094
    %v2209 = vadd.f32 %v1784, %v2099
    %v2210 = vadd.f32 %v1785, %v2104
    %v2211 = vadd.f32 %v1786, %v2109
    %v2212 = vadd.f32 %v1787, %v2114
    %v2213 = vadd.f32 %v1788, %v2119
    %v2214 = vadd.f32 %v1789, %v2124
    %v2215 = vadd.f32 %v1790, %v2129
    %v2216 = vadd.f32 %v1791, %v2134
    %v2217 = vadd.f32 %v1792, %v2139
    %v2218 = vadd.f32 %v1793, %v2144
    %v2219 = vadd.f32 %v1794, %v2149
    %v2220 = vadd.f32 %v1795, %v2154
    %v2221 = vadd.f32 %v1796, %v2159
    %v2222 = vadd.f32 %v1797, %v2164
    %v2223 = vadd.f32 %v1798, %v2169
    %v2224 = vadd.f32 %v1799, %v2174
    %v2225 = vadd.f32 %v1800, %v2179
    %v2226 = vadd.f32 %v1801, %v2184
    %v2227 = vadd.f32 %v1802, %v2189
    %v2228 = vld [vmem:[%s0 + $0x25] sm:$0xff]
    %v2229 = vld [vmem:[%s0 + $0x2d] sm:$0xff]
    %v2230 = vld [vmem:[%s0 + $0x35] sm:$0xff]
    %v2231 = vld [vmem:[%s0 + $0x3d] sm:$0xff]
    %v2232 = vld [vmem:[%s0 + $0x45] sm:$0xff]
    %v2233 = vld [vmem:[%s0 + $0x4d] sm:$0xff]
    %v2234 = vld [vmem:[%s0 + $0x55] sm:$0xff]
    %v2235 = vld [vmem:[%s0 + $0x5d] sm:$0xff]
    %v2236 = vld [vmem:[%s0 + $0x65] sm:$0xff]
    %v2237 = vld [vmem:[%s0 + $0x6d] sm:$0xff]
    %v2238 = vld [vmem:[%s0 + $0x75] sm:$0xff]
    %v2239 = vld [vmem:[%s0 + $0x7d] sm:$0xff]
    %v2240 = vld [vmem:[%s0 + $0x85] sm:$0xff]
    %v2241 = vld [vmem:[%s0 + $0x8d] sm:$0xff]
    %v2242 = vld [vmem:[%s0 + $0x95] sm:$0xff]
    %v2243 = vld [vmem:[%s0 + $0x9d] sm:$0xff]
    %v2244 = vld [vmem:[%s0 + $0xa5] sm:$0xff]
    %v2245 = vld [vmem:[%s0 + $0xad] sm:$0xff]
    %v2246 = vld [vmem:[%s0 + $0xb5] sm:$0xff]
    %v2247 = vld [vmem:[%s0 + $0xbd] sm:$0xff]
    %v2248 = vld [vmem:[%s0 + $0xc5] sm:$0xff]
    %v2249 = vld [vmem:[%s0 + $0xcd] sm:$0xff]
    %v2250 = vld [vmem:[%s0 + $0xd5] sm:$0xff]
    %v2251 = vld [vmem:[%s0 + $0xdd] sm:$0xff]
    %v2252 = vld [vmem:[%s0 + $0xe5] sm:$0xff]
    %v2253 = vld [vmem:[%s0 + $0xed] sm:$0xff]
    %v2254 = vld [vmem:[%s0 + $0xf5] sm:$0xff]
    %v2255 = vld [vmem:[%s0 + $0xfd] sm:$0xff]
    %v2256 = vld [vmem:[%s0 + $0x105] sm:$0xff]
    %v2257 = vld [vmem:[%s0 + $0x10d] sm:$0xff]
    %v2258 = vld [vmem:[%s0 + $0x115] sm:$0xff]
    %v2259 = vld [vmem:[%s0 + $0x11d] sm:$0xff]
    %v2260 = vld [vmem:[%s0 + $0x125] sm:$0xff]
    %v2261 = vld [vmem:[%s0 + $0x12d] sm:$0xff]
    %v2262 = vld [vmem:[%s0 + $0x135] sm:$0xff]
    %v2263 = vld [vmem:[%s0 + $0x13d] sm:$0xff]
    %v2265 = vsel %vm138, %v2228, 0
    %v2268 = vsel %vm138, %v2229, 0
    %v2271 = vsel %vm138, %v2230, 0
    %v2274 = vsel %vm138, %v2231, 0
    %v2277 = vsel %vm138, %v2232, 0
    %v2280 = vsel %vm138, %v2233, 0
    %v2283 = vsel %vm138, %v2234, 0
    %v2286 = vsel %vm138, %v2235, 0
    %v2289 = vsel %vm138, %v2236, 0
    %v2292 = vsel %vm138, %v2237, 0
    %v2295 = vsel %vm138, %v2238, 0
    %v2298 = vsel %vm138, %v2239, 0
    %v2301 = vsel %vm138, %v2240, 0
    %v2304 = vsel %vm138, %v2241, 0
    %v2307 = vsel %vm138, %v2242, 0
    %v2310 = vsel %vm138, %v2243, 0
    %v2313 = vsel %vm138, %v2244, 0
    %v2316 = vsel %vm138, %v2245, 0
    %v2319 = vsel %vm138, %v2246, 0
    %v2322 = vsel %vm138, %v2247, 0
    %v2325 = vsel %vm138, %v2248, 0
    %v2328 = vsel %vm138, %v2249, 0
    %v2331 = vsel %vm138, %v2250, 0
    %v2334 = vsel %vm138, %v2251, 0
    %v2337 = vsel %vm138, %v2252, 0
    %v2340 = vsel %vm138, %v2253, 0
    %v2343 = vsel %vm138, %v2254, 0
    %v2346 = vsel %vm138, %v2255, 0
    %v2349 = vsel %vm138, %v2256, 0
    %v2352 = vsel %vm138, %v2257, 0
    %v2355 = vsel %vm138, %v2258, 0
    %v2358 = vsel %vm138, %v2259, 0
    %v2361 = vsel %vm138, %v2260, 0
    %v2364 = vsel %vm138, %v2261, 0
    %v2367 = vsel %vm138, %v2262, 0
    %v2370 = vsel %vm138, %v2263, 0
    %2372 = vmatprep.subr.mxu0 0.0
    %2373 = vmatpush1.msra.mxu0 0.0
    %2374 = vmatprep.subr.mxu0 0.0
    %2375 = vmatpush1.msra.mxu0 0.0
    %2376 = vmatprep.subr.mxu0 0.0
    %2377 = vmatpush1.msra.mxu0 0.0
    %2378 = vmatprep.subr.mxu0 0.0
    %2379 = vmatpush1.msra.mxu0 0.0
    %2380 = vmatprep.subr.mxu0 0.0
    %2381 = vmatpush1.msra.mxu0 0.0
    %2382 = vmatprep.subr.mxu0 0.0
    %2383 = vmatpush1.msra.mxu0 0.0
    %2384 = vmatprep.subr.mxu0 0.0
    %2385 = vmatpush1.msra.mxu0 0.0
    %2386 = vmatprep.subr.mxu0 0.0
    %2387 = vmatpush1.msra.mxu0 0.0
    %2388 = vmatprep.subr.mxu0 0.0
    %2389 = vmatpush1.msra.mxu0 0.0
    %2390 = vmatprep.subr.mxu0 0.0
    %2391 = vmatpush1.msra.mxu0 0.0
    %2392 = vmatprep.subr.mxu0 0.0
    %2393 = vmatpush1.msra.mxu0 0.0
    %2394 = vmatprep.subr.mxu0 0.0
    %2395 = vmatpush1.msra.mxu0 0.0
    %2396 = vmatprep.subr.mxu0 0.0
    %2397 = vmatpush1.msra.mxu0 %v52
    %2398 = vmatprep.subr.mxu0 0.0
    %2399 = vmatpush1.msra.mxu0 %v51
    %2400 = vmatprep.subr.mxu0 0.0
    %2401 = vmatpush1.msra.mxu0 %v50
    %2402 = vmatprep.subr.mxu0 0.0
    %2403 = vmatpush1.msra.mxu0 %v49
    %2404 = vmatprep.subr.mxu0 0.0
    %2405 = vmatpush2.msra.mxu0 0.0
    %2406 = vmatprep.subr.mxu0 0.0
    %2407 = vmatpush2.msra.mxu0 0.0
    %2408 = vmatprep.subr.mxu0 0.0
    %2409 = vmatpush2.msra.mxu0 0.0
    %2410 = vmatprep.subr.mxu0 0.0
    %2411 = vmatpush2.msra.mxu0 0.0
    %2412 = vmatprep.subr.mxu0 0.0
    %2413 = vmatpush2.msra.mxu0 0.0
    %2414 = vmatprep.subr.mxu0 0.0
    %2415 = vmatpush2.msra.mxu0 0.0
    %2416 = vmatprep.subr.mxu0 0.0
    %2417 = vmatpush2.msra.mxu0 0.0
    %2418 = vmatprep.subr.mxu0 0.0
    %2419 = vmatpush2.msra.mxu0 0.0
    %2420 = vmatprep.subr.mxu0 0.0
    %2421 = vmatpush2.msra.mxu0 0.0
    %2422 = vmatprep.subr.mxu0 0.0
    %2423 = vmatpush2.msra.mxu0 0.0
    %2424 = vmatprep.subr.mxu0 0.0
    %2425 = vmatpush2.msra.mxu0 0.0
    %2426 = vmatprep.subr.mxu0 0.0
    %2427 = vmatpush2.msra.mxu0 0.0
    %2428 = vmatprep.subr.mxu0 0.0
    %2429 = vmatpush2.msra.mxu0 0.0
    %2430 = vmatprep.subr.mxu0 0.0
    %2431 = vmatpush2.msra.mxu0 0.0
    %2432 = vmatprep.subr.mxu0 0.0
    %2433 = vmatpush2.msra.mxu0 0.0
    %2434 = vmatprep.subr.mxu0 0.0
    %2435 = vmatpush2.msra.mxu0 0.0
    %2436 = vmatprep.mubr.f32.mxu0 0.0
    %2437 = vmatmul.mubr.f32.gmra.mxu0 %v2265
    %v2438 = vpop.f32.mrf.mxu0
    %v2439 = vadd.f32 0.0, %v2438
    %v2440 = vpop.f32.mrf.mxu0
    %2441 = vmatprep.mubr.f32.mxu0 0.0
    %2442 = vmatmul.mubr.f32.gmra.mxu0 %v2268
    %v2443 = vpop.f32.mrf.mxu0
    %v2444 = vadd.f32 0.0, %v2443
    %v2445 = vpop.f32.mrf.mxu0
    %2446 = vmatprep.mubr.f32.mxu0 0.0
    %2447 = vmatmul.mubr.f32.gmra.mxu0 %v2271
    %v2448 = vpop.f32.mrf.mxu0
    %v2449 = vadd.f32 0.0, %v2448
    %v2450 = vpop.f32.mrf.mxu0
    %2451 = vmatprep.mubr.f32.mxu0 0.0
    %2452 = vmatmul.mubr.f32.gmra.mxu0 %v2274
    %v2453 = vpop.f32.mrf.mxu0
    %v2454 = vadd.f32 0.0, %v2453
    %v2455 = vpop.f32.mrf.mxu0
    %2456 = vmatprep.mubr.f32.mxu0 0.0
    %2457 = vmatmul.mubr.f32.gmra.mxu0 %v2277
    %v2458 = vpop.f32.mrf.mxu0
    %v2459 = vadd.f32 0.0, %v2458
    %v2460 = vpop.f32.mrf.mxu0
    %2461 = vmatprep.mubr.f32.mxu0 0.0
    %2462 = vmatmul.mubr.f32.gmra.mxu0 %v2280
    %v2463 = vpop.f32.mrf.mxu0
    %v2464 = vadd.f32 0.0, %v2463
    %v2465 = vpop.f32.mrf.mxu0
    %2466 = vmatprep.mubr.f32.mxu0 0.0
    %2467 = vmatmul.mubr.f32.gmra.mxu0 %v2283
    %v2468 = vpop.f32.mrf.mxu0
    %v2469 = vadd.f32 0.0, %v2468
    %v2470 = vpop.f32.mrf.mxu0
    %2471 = vmatprep.mubr.f32.mxu0 0.0
    %2472 = vmatmul.mubr.f32.gmra.mxu0 %v2286
    %v2473 = vpop.f32.mrf.mxu0
    %v2474 = vadd.f32 0.0, %v2473
    %v2475 = vpop.f32.mrf.mxu0
    %2476 = vmatprep.mubr.f32.mxu0 0.0
    %2477 = vmatmul.mubr.f32.gmra.mxu0 %v2289
    %v2478 = vpop.f32.mrf.mxu0
    %v2479 = vadd.f32 0.0, %v2478
    %v2480 = vpop.f32.mrf.mxu0
    %2481 = vmatprep.mubr.f32.mxu0 0.0
    %2482 = vmatmul.mubr.f32.gmra.mxu0 %v2292
    %v2483 = vpop.f32.mrf.mxu0
    %v2484 = vadd.f32 0.0, %v2483
    %v2485 = vpop.f32.mrf.mxu0
    %2486 = vmatprep.mubr.f32.mxu0 0.0
    %2487 = vmatmul.mubr.f32.gmra.mxu0 %v2295
    %v2488 = vpop.f32.mrf.mxu0
    %v2489 = vadd.f32 0.0, %v2488
    %v2490 = vpop.f32.mrf.mxu0
    %2491 = vmatprep.mubr.f32.mxu0 0.0
    %2492 = vmatmul.mubr.f32.gmra.mxu0 %v2298
    %v2493 = vpop.f32.mrf.mxu0
    %v2494 = vadd.f32 0.0, %v2493
    %v2495 = vpop.f32.mrf.mxu0
    %2496 = vmatprep.mubr.f32.mxu0 0.0
    %2497 = vmatmul.mubr.f32.gmra.mxu0 %v2301
    %v2498 = vpop.f32.mrf.mxu0
    %v2499 = vadd.f32 0.0, %v2498
    %v2500 = vpop.f32.mrf.mxu0
    %2501 = vmatprep.mubr.f32.mxu0 0.0
    %2502 = vmatmul.mubr.f32.gmra.mxu0 %v2304
    %v2503 = vpop.f32.mrf.mxu0
    %v2504 = vadd.f32 0.0, %v2503
    %v2505 = vpop.f32.mrf.mxu0
    %2506 = vmatprep.mubr.f32.mxu0 0.0
    %2507 = vmatmul.mubr.f32.gmra.mxu0 %v2307
    %v2508 = vpop.f32.mrf.mxu0
    %v2509 = vadd.f32 0.0, %v2508
    %v2510 = vpop.f32.mrf.mxu0
    %2511 = vmatprep.mubr.f32.mxu0 0.0
    %2512 = vmatmul.mubr.f32.gmra.mxu0 %v2310
    %v2513 = vpop.f32.mrf.mxu0
    %v2514 = vadd.f32 0.0, %v2513
    %v2515 = vpop.f32.mrf.mxu0
    %2516 = vmatprep.mubr.f32.mxu0 0.0
    %2517 = vmatmul.mubr.f32.gmra.mxu0 %v2313
    %v2518 = vpop.f32.mrf.mxu0
    %v2519 = vadd.f32 0.0, %v2518
    %v2520 = vpop.f32.mrf.mxu0
    %2521 = vmatprep.mubr.f32.mxu0 0.0
    %2522 = vmatmul.mubr.f32.gmra.mxu0 %v2316
    %v2523 = vpop.f32.mrf.mxu0
    %v2524 = vadd.f32 0.0, %v2523
    %v2525 = vpop.f32.mrf.mxu0
    %2526 = vmatprep.mubr.f32.mxu0 0.0
    %2527 = vmatmul.mubr.f32.gmra.mxu0 %v2319
    %v2528 = vpop.f32.mrf.mxu0
    %v2529 = vadd.f32 0.0, %v2528
    %v2530 = vpop.f32.mrf.mxu0
    %2531 = vmatprep.mubr.f32.mxu0 0.0
    %2532 = vmatmul.mubr.f32.gmra.mxu0 %v2322
    %v2533 = vpop.f32.mrf.mxu0
    %v2534 = vadd.f32 0.0, %v2533
    %v2535 = vpop.f32.mrf.mxu0
    %2536 = vmatprep.mubr.f32.mxu0 0.0
    %2537 = vmatmul.mubr.f32.gmra.mxu0 %v2325
    %v2538 = vpop.f32.mrf.mxu0
    %v2539 = vadd.f32 0.0, %v2538
    %v2540 = vpop.f32.mrf.mxu0
    %2541 = vmatprep.mubr.f32.mxu0 0.0
    %2542 = vmatmul.mubr.f32.gmra.mxu0 %v2328
    %v2543 = vpop.f32.mrf.mxu0
    %v2544 = vadd.f32 0.0, %v2543
    %v2545 = vpop.f32.mrf.mxu0
    %2546 = vmatprep.mubr.f32.mxu0 0.0
    %2547 = vmatmul.mubr.f32.gmra.mxu0 %v2331
    %v2548 = vpop.f32.mrf.mxu0
    %v2549 = vadd.f32 0.0, %v2548
    %v2550 = vpop.f32.mrf.mxu0
    %2551 = vmatprep.mubr.f32.mxu0 0.0
    %2552 = vmatmul.mubr.f32.gmra.mxu0 %v2334
    %v2553 = vpop.f32.mrf.mxu0
    %v2554 = vadd.f32 0.0, %v2553
    %v2555 = vpop.f32.mrf.mxu0
    %2556 = vmatprep.mubr.f32.mxu0 0.0
    %2557 = vmatmul.mubr.f32.gmra.mxu0 %v2337
    %v2558 = vpop.f32.mrf.mxu0
    %v2559 = vadd.f32 0.0, %v2558
    %v2560 = vpop.f32.mrf.mxu0
    %2561 = vmatprep.mubr.f32.mxu0 0.0
    %2562 = vmatmul.mubr.f32.gmra.mxu0 %v2340
    %v2563 = vpop.f32.mrf.mxu0
    %v2564 = vadd.f32 0.0, %v2563
    %v2565 = vpop.f32.mrf.mxu0
    %2566 = vmatprep.mubr.f32.mxu0 0.0
    %2567 = vmatmul.mubr.f32.gmra.mxu0 %v2343
    %v2568 = vpop.f32.mrf.mxu0
    %v2569 = vadd.f32 0.0, %v2568
    %v2570 = vpop.f32.mrf.mxu0
    %2571 = vmatprep.mubr.f32.mxu0 0.0
    %2572 = vmatmul.mubr.f32.gmra.mxu0 %v2346
    %v2573 = vpop.f32.mrf.mxu0
    %v2574 = vadd.f32 0.0, %v2573
    %v2575 = vpop.f32.mrf.mxu0
    %2576 = vmatprep.mubr.f32.mxu0 0.0
    %2577 = vmatmul.mubr.f32.gmra.mxu0 %v2349
    %v2578 = vpop.f32.mrf.mxu0
    %v2579 = vadd.f32 0.0, %v2578
    %v2580 = vpop.f32.mrf.mxu0
    %2581 = vmatprep.mubr.f32.mxu0 0.0
    %2582 = vmatmul.mubr.f32.gmra.mxu0 %v2352
    %v2583 = vpop.f32.mrf.mxu0
    %v2584 = vadd.f32 0.0, %v2583
    %v2585 = vpop.f32.mrf.mxu0
    %2586 = vmatprep.mubr.f32.mxu0 0.0
    %2587 = vmatmul.mubr.f32.gmra.mxu0 %v2355
    %v2588 = vpop.f32.mrf.mxu0
    %v2589 = vadd.f32 0.0, %v2588
    %v2590 = vpop.f32.mrf.mxu0
    %2591 = vmatprep.mubr.f32.mxu0 0.0
    %2592 = vmatmul.mubr.f32.gmra.mxu0 %v2358
    %v2593 = vpop.f32.mrf.mxu0
    %v2594 = vadd.f32 0.0, %v2593
    %v2595 = vpop.f32.mrf.mxu0
    %2596 = vmatprep.mubr.f32.mxu0 0.0
    %2597 = vmatmul.mubr.f32.gmra.mxu0 %v2361
    %v2598 = vpop.f32.mrf.mxu0
    %v2599 = vadd.f32 0.0, %v2598
    %v2600 = vpop.f32.mrf.mxu0
    %2601 = vmatprep.mubr.f32.mxu0 0.0
    %2602 = vmatmul.mubr.f32.gmra.mxu0 %v2364
    %v2603 = vpop.f32.mrf.mxu0
    %v2604 = vadd.f32 0.0, %v2603
    %v2605 = vpop.f32.mrf.mxu0
    %2606 = vmatprep.mubr.f32.mxu0 0.0
    %2607 = vmatmul.mubr.f32.gmra.mxu0 %v2367
    %v2608 = vpop.f32.mrf.mxu0
    %v2609 = vadd.f32 0.0, %v2608
    %v2610 = vpop.f32.mrf.mxu0
    %2611 = vmatprep.mubr.f32.mxu0 0.0
    %2612 = vmatmul.mubr.f32.gmra.mxu0 %v2370
    %v2613 = vpop.f32.mrf.mxu0
    %v2614 = vadd.f32 0.0, %v2613
    %v2615 = vpop.f32.mrf.mxu0
    %2616 = vdwg.mxu0
    %v2617 = vadd.f32 %v2192, %v2439
    %v2618 = vadd.f32 %v2193, %v2444
    %v2619 = vadd.f32 %v2194, %v2449
    %v2620 = vadd.f32 %v2195, %v2454
    %v2621 = vadd.f32 %v2196, %v2459
    %v2622 = vadd.f32 %v2197, %v2464
    %v2623 = vadd.f32 %v2198, %v2469
    %v2624 = vadd.f32 %v2199, %v2474
    %v2625 = vadd.f32 %v2200, %v2479
    %v2626 = vadd.f32 %v2201, %v2484
    %v2627 = vadd.f32 %v2202, %v2489
    %v2628 = vadd.f32 %v2203, %v2494
    %v2629 = vadd.f32 %v2204, %v2499
    %v2630 = vadd.f32 %v2205, %v2504
    %v2631 = vadd.f32 %v2206, %v2509
    %v2632 = vadd.f32 %v2207, %v2514
    %v2633 = vadd.f32 %v2208, %v2519
    %v2634 = vadd.f32 %v2209, %v2524
    %v2635 = vadd.f32 %v2210, %v2529
    %v2636 = vadd.f32 %v2211, %v2534
    %v2637 = vadd.f32 %v2212, %v2539
    %v2638 = vadd.f32 %v2213, %v2544
    %v2639 = vadd.f32 %v2214, %v2549
    %v2640 = vadd.f32 %v2215, %v2554
    %v2641 = vadd.f32 %v2216, %v2559
    %v2642 = vadd.f32 %v2217, %v2564
    %v2643 = vadd.f32 %v2218, %v2569
    %v2644 = vadd.f32 %v2219, %v2574
    %v2645 = vadd.f32 %v2220, %v2579
    %v2646 = vadd.f32 %v2221, %v2584
    %v2647 = vadd.f32 %v2222, %v2589
    %v2648 = vadd.f32 %v2223, %v2594
    %v2649 = vadd.f32 %v2224, %v2599
    %v2650 = vadd.f32 %v2225, %v2604
    %v2651 = vadd.f32 %v2226, %v2609
    %v2652 = vadd.f32 %v2227, %v2614
    %v2653 = vld [vmem:[%s0 + $0x35] sm:$0xff]
    %v2654 = vld [vmem:[%s0 + $0x3d] sm:$0xff]
    %v2655 = vld [vmem:[%s0 + $0x45] sm:$0xff]
    %v2656 = vld [vmem:[%s0 + $0x4d] sm:$0xff]
    %v2657 = vld [vmem:[%s0 + $0x55] sm:$0xff]
    %v2658 = vld [vmem:[%s0 + $0x5d] sm:$0xff]
    %v2659 = vld [vmem:[%s0 + $0x65] sm:$0xff]
    %v2660 = vld [vmem:[%s0 + $0x6d] sm:$0xff]
    %v2661 = vld [vmem:[%s0 + $0x75] sm:$0xff]
    %v2662 = vld [vmem:[%s0 + $0x7d] sm:$0xff]
    %v2663 = vld [vmem:[%s0 + $0x85] sm:$0xff]
    %v2664 = vld [vmem:[%s0 + $0x8d] sm:$0xff]
    %v2665 = vld [vmem:[%s0 + $0x95] sm:$0xff]
    %v2666 = vld [vmem:[%s0 + $0x9d] sm:$0xff]
    %v2667 = vld [vmem:[%s0 + $0xa5] sm:$0xff]
    %v2668 = vld [vmem:[%s0 + $0xad] sm:$0xff]
    %v2669 = vld [vmem:[%s0 + $0xb5] sm:$0xff]
    %v2670 = vld [vmem:[%s0 + $0xbd] sm:$0xff]
    %v2671 = vld [vmem:[%s0 + $0xc5] sm:$0xff]
    %v2672 = vld [vmem:[%s0 + $0xcd] sm:$0xff]
    %v2673 = vld [vmem:[%s0 + $0xd5] sm:$0xff]
    %v2674 = vld [vmem:[%s0 + $0xdd] sm:$0xff]
    %v2675 = vld [vmem:[%s0 + $0xe5] sm:$0xff]
    %v2676 = vld [vmem:[%s0 + $0xed] sm:$0xff]
    %v2677 = vld [vmem:[%s0 + $0xf5] sm:$0xff]
    %v2678 = vld [vmem:[%s0 + $0xfd] sm:$0xff]
    %v2679 = vld [vmem:[%s0 + $0x105] sm:$0xff]
    %v2680 = vld [vmem:[%s0 + $0x10d] sm:$0xff]
    %v2681 = vld [vmem:[%s0 + $0x115] sm:$0xff]
    %v2682 = vld [vmem:[%s0 + $0x11d] sm:$0xff]
    %v2683 = vld [vmem:[%s0 + $0x125] sm:$0xff]
    %v2684 = vld [vmem:[%s0 + $0x12d] sm:$0xff]
    %v2685 = vld [vmem:[%s0 + $0x135] sm:$0xff]
    %v2686 = vld [vmem:[%s0 + $0x13d] sm:$0xff]
    %v2687 = vld [vmem:[%s0 + $0x145] sm:$0xff]
    %v2688 = vld [vmem:[%s0 + $0x14d] sm:$0xff]
    %v2690 = vsel %vm138, %v2653, 0
    %v2693 = vsel %vm138, %v2654, 0
    %v2696 = vsel %vm138, %v2655, 0
    %v2699 = vsel %vm138, %v2656, 0
    %v2702 = vsel %vm138, %v2657, 0
    %v2705 = vsel %vm138, %v2658, 0
    %v2708 = vsel %vm138, %v2659, 0
    %v2711 = vsel %vm138, %v2660, 0
    %v2714 = vsel %vm138, %v2661, 0
    %v2717 = vsel %vm138, %v2662, 0
    %v2720 = vsel %vm138, %v2663, 0
    %v2723 = vsel %vm138, %v2664, 0
    %v2726 = vsel %vm138, %v2665, 0
    %v2729 = vsel %vm138, %v2666, 0
    %v2732 = vsel %vm138, %v2667, 0
    %v2735 = vsel %vm138, %v2668, 0
    %v2738 = vsel %vm138, %v2669, 0
    %v2741 = vsel %vm138, %v2670, 0
    %v2744 = vsel %vm138, %v2671, 0
    %v2747 = vsel %vm138, %v2672, 0
    %v2750 = vsel %vm138, %v2673, 0
    %v2753 = vsel %vm138, %v2674, 0
    %v2756 = vsel %vm138, %v2675, 0
    %v2759 = vsel %vm138, %v2676, 0
    %v2762 = vsel %vm138, %v2677, 0
    %v2765 = vsel %vm138, %v2678, 0
    %v2768 = vsel %vm138, %v2679, 0
    %v2771 = vsel %vm138, %v2680, 0
    %v2774 = vsel %vm138, %v2681, 0
    %v2777 = vsel %vm138, %v2682, 0
    %v2780 = vsel %vm138, %v2683, 0
    %v2783 = vsel %vm138, %v2684, 0
    %v2786 = vsel %vm138, %v2685, 0
    %v2789 = vsel %vm138, %v2686, 0
    %v2792 = vsel %vm138, %v2687, 0
    %v2795 = vsel %vm138, %v2688, 0
    %2797 = vmatprep.subr.mxu0 0.0
    %2798 = vmatpush1.msra.mxu0 0.0
    %2799 = vmatprep.subr.mxu0 0.0
    %2800 = vmatpush1.msra.mxu0 0.0
    %2801 = vmatprep.subr.mxu0 0.0
    %2802 = vmatpush1.msra.mxu0 0.0
    %2803 = vmatprep.subr.mxu0 0.0
    %2804 = vmatpush1.msra.mxu0 0.0
    %2805 = vmatprep.subr.mxu0 0.0
    %2806 = vmatpush1.msra.mxu0 0.0
    %2807 = vmatprep.subr.mxu0 0.0
    %2808 = vmatpush1.msra.mxu0 0.0
    %2809 = vmatprep.subr.mxu0 0.0
    %2810 = vmatpush1.msra.mxu0 0.0
    %2811 = vmatprep.subr.mxu0 0.0
    %2812 = vmatpush1.msra.mxu0 0.0
    %2813 = vmatprep.subr.mxu0 0.0
    %2814 = vmatpush1.msra.mxu0 0.0
    %2815 = vmatprep.subr.mxu0 0.0
    %2816 = vmatpush1.msra.mxu0 0.0
    %2817 = vmatprep.subr.mxu0 0.0
    %2818 = vmatpush1.msra.mxu0 0.0
    %2819 = vmatprep.subr.mxu0 0.0
    %2820 = vmatpush1.msra.mxu0 0.0
    %2821 = vmatprep.subr.mxu0 0.0
    %2822 = vmatpush1.msra.mxu0 %v57
    %2823 = vmatprep.subr.mxu0 0.0
    %2824 = vmatpush1.msra.mxu0 %v56
    %2825 = vmatprep.subr.mxu0 0.0
    %2826 = vmatpush1.msra.mxu0 %v55
    %2827 = vmatprep.subr.mxu0 0.0
    %2828 = vmatpush1.msra.mxu0 %v54
    %2829 = vmatprep.subr.mxu0 0.0
    %2830 = vmatpush2.msra.mxu0 0.0
    %2831 = vmatprep.subr.mxu0 0.0
    %2832 = vmatpush2.msra.mxu0 0.0
    %2833 = vmatprep.subr.mxu0 0.0
    %2834 = vmatpush2.msra.mxu0 0.0
    %2835 = vmatprep.subr.mxu0 0.0
    %2836 = vmatpush2.msra.mxu0 0.0
    %2837 = vmatprep.subr.mxu0 0.0
    %2838 = vmatpush2.msra.mxu0 0.0
    %2839 = vmatprep.subr.mxu0 0.0
    %2840 = vmatpush2.msra.mxu0 0.0
    %2841 = vmatprep.subr.mxu0 0.0
    %2842 = vmatpush2.msra.mxu0 0.0
    %2843 = vmatprep.subr.mxu0 0.0
    %2844 = vmatpush2.msra.mxu0 0.0
    %2845 = vmatprep.subr.mxu0 0.0
    %2846 = vmatpush2.msra.mxu0 0.0
    %2847 = vmatprep.subr.mxu0 0.0
    %2848 = vmatpush2.msra.mxu0 0.0
    %2849 = vmatprep.subr.mxu0 0.0
    %2850 = vmatpush2.msra.mxu0 0.0
    %2851 = vmatprep.subr.mxu0 0.0
    %2852 = vmatpush2.msra.mxu0 0.0
    %2853 = vmatprep.subr.mxu0 0.0
    %2854 = vmatpush2.msra.mxu0 0.0
    %2855 = vmatprep.subr.mxu0 0.0
    %2856 = vmatpush2.msra.mxu0 0.0
    %2857 = vmatprep.subr.mxu0 0.0
    %2858 = vmatpush2.msra.mxu0 0.0
    %2859 = vmatprep.subr.mxu0 0.0
    %2860 = vmatpush2.msra.mxu0 0.0
    %2861 = vmatprep.mubr.f32.mxu0 0.0
    %2862 = vmatmul.mubr.f32.gmra.mxu0 %v2690
    %v2863 = vpop.f32.mrf.mxu0
    %v2864 = vadd.f32 0.0, %v2863
    %v2865 = vpop.f32.mrf.mxu0
    %2866 = vmatprep.mubr.f32.mxu0 0.0
    %2867 = vmatmul.mubr.f32.gmra.mxu0 %v2693
    %v2868 = vpop.f32.mrf.mxu0
    %v2869 = vadd.f32 0.0, %v2868
    %v2870 = vpop.f32.mrf.mxu0
    %2871 = vmatprep.mubr.f32.mxu0 0.0
    %2872 = vmatmul.mubr.f32.gmra.mxu0 %v2696
    %v2873 = vpop.f32.mrf.mxu0
    %v2874 = vadd.f32 0.0, %v2873
    %v2875 = vpop.f32.mrf.mxu0
    %2876 = vmatprep.mubr.f32.mxu0 0.0
    %2877 = vmatmul.mubr.f32.gmra.mxu0 %v2699
    %v2878 = vpop.f32.mrf.mxu0
    %v2879 = vadd.f32 0.0, %v2878
    %v2880 = vpop.f32.mrf.mxu0
    %2881 = vmatprep.mubr.f32.mxu0 0.0
    %2882 = vmatmul.mubr.f32.gmra.mxu0 %v2702
    %v2883 = vpop.f32.mrf.mxu0
    %v2884 = vadd.f32 0.0, %v2883
    %v2885 = vpop.f32.mrf.mxu0
    %2886 = vmatprep.mubr.f32.mxu0 0.0
    %2887 = vmatmul.mubr.f32.gmra.mxu0 %v2705
    %v2888 = vpop.f32.mrf.mxu0
    %v2889 = vadd.f32 0.0, %v2888
    %v2890 = vpop.f32.mrf.mxu0
    %2891 = vmatprep.mubr.f32.mxu0 0.0
    %2892 = vmatmul.mubr.f32.gmra.mxu0 %v2708
    %v2893 = vpop.f32.mrf.mxu0
    %v2894 = vadd.f32 0.0, %v2893
    %v2895 = vpop.f32.mrf.mxu0
    %2896 = vmatprep.mubr.f32.mxu0 0.0
    %2897 = vmatmul.mubr.f32.gmra.mxu0 %v2711
    %v2898 = vpop.f32.mrf.mxu0
    %v2899 = vadd.f32 0.0, %v2898
    %v2900 = vpop.f32.mrf.mxu0
    %2901 = vmatprep.mubr.f32.mxu0 0.0
    %2902 = vmatmul.mubr.f32.gmra.mxu0 %v2714
    %v2903 = vpop.f32.mrf.mxu0
    %v2904 = vadd.f32 0.0, %v2903
    %v2905 = vpop.f32.mrf.mxu0
    %2906 = vmatprep.mubr.f32.mxu0 0.0
    %2907 = vmatmul.mubr.f32.gmra.mxu0 %v2717
    %v2908 = vpop.f32.mrf.mxu0
    %v2909 = vadd.f32 0.0, %v2908
    %v2910 = vpop.f32.mrf.mxu0
    %2911 = vmatprep.mubr.f32.mxu0 0.0
    %2912 = vmatmul.mubr.f32.gmra.mxu0 %v2720
    %v2913 = vpop.f32.mrf.mxu0
    %v2914 = vadd.f32 0.0, %v2913
    %v2915 = vpop.f32.mrf.mxu0
    %2916 = vmatprep.mubr.f32.mxu0 0.0
    %2917 = vmatmul.mubr.f32.gmra.mxu0 %v2723
    %v2918 = vpop.f32.mrf.mxu0
    %v2919 = vadd.f32 0.0, %v2918
    %v2920 = vpop.f32.mrf.mxu0
    %2921 = vmatprep.mubr.f32.mxu0 0.0
    %2922 = vmatmul.mubr.f32.gmra.mxu0 %v2726
    %v2923 = vpop.f32.mrf.mxu0
    %v2924 = vadd.f32 0.0, %v2923
    %v2925 = vpop.f32.mrf.mxu0
    %2926 = vmatprep.mubr.f32.mxu0 0.0
    %2927 = vmatmul.mubr.f32.gmra.mxu0 %v2729
    %v2928 = vpop.f32.mrf.mxu0
    %v2929 = vadd.f32 0.0, %v2928
    %v2930 = vpop.f32.mrf.mxu0
    %2931 = vmatprep.mubr.f32.mxu0 0.0
    %2932 = vmatmul.mubr.f32.gmra.mxu0 %v2732
    %v2933 = vpop.f32.mrf.mxu0
    %v2934 = vadd.f32 0.0, %v2933
    %v2935 = vpop.f32.mrf.mxu0
    %2936 = vmatprep.mubr.f32.mxu0 0.0
    %2937 = vmatmul.mubr.f32.gmra.mxu0 %v2735
    %v2938 = vpop.f32.mrf.mxu0
    %v2939 = vadd.f32 0.0, %v2938
    %v2940 = vpop.f32.mrf.mxu0
    %2941 = vmatprep.mubr.f32.mxu0 0.0
    %2942 = vmatmul.mubr.f32.gmra.mxu0 %v2738
    %v2943 = vpop.f32.mrf.mxu0
    %v2944 = vadd.f32 0.0, %v2943
    %v2945 = vpop.f32.mrf.mxu0
    %2946 = vmatprep.mubr.f32.mxu0 0.0
    %2947 = vmatmul.mubr.f32.gmra.mxu0 %v2741
    %v2948 = vpop.f32.mrf.mxu0
    %v2949 = vadd.f32 0.0, %v2948
    %v2950 = vpop.f32.mrf.mxu0
    %2951 = vmatprep.mubr.f32.mxu0 0.0
    %2952 = vmatmul.mubr.f32.gmra.mxu0 %v2744
    %v2953 = vpop.f32.mrf.mxu0
    %v2954 = vadd.f32 0.0, %v2953
    %v2955 = vpop.f32.mrf.mxu0
    %2956 = vmatprep.mubr.f32.mxu0 0.0
    %2957 = vmatmul.mubr.f32.gmra.mxu0 %v2747
    %v2958 = vpop.f32.mrf.mxu0
    %v2959 = vadd.f32 0.0, %v2958
    %v2960 = vpop.f32.mrf.mxu0
    %2961 = vmatprep.mubr.f32.mxu0 0.0
    %2962 = vmatmul.mubr.f32.gmra.mxu0 %v2750
    %v2963 = vpop.f32.mrf.mxu0
    %v2964 = vadd.f32 0.0, %v2963
    %v2965 = vpop.f32.mrf.mxu0
    %2966 = vmatprep.mubr.f32.mxu0 0.0
    %2967 = vmatmul.mubr.f32.gmra.mxu0 %v2753
    %v2968 = vpop.f32.mrf.mxu0
    %v2969 = vadd.f32 0.0, %v2968
    %v2970 = vpop.f32.mrf.mxu0
    %2971 = vmatprep.mubr.f32.mxu0 0.0
    %2972 = vmatmul.mubr.f32.gmra.mxu0 %v2756
    %v2973 = vpop.f32.mrf.mxu0
    %v2974 = vadd.f32 0.0, %v2973
    %v2975 = vpop.f32.mrf.mxu0
    %2976 = vmatprep.mubr.f32.mxu0 0.0
    %2977 = vmatmul.mubr.f32.gmra.mxu0 %v2759
    %v2978 = vpop.f32.mrf.mxu0
    %v2979 = vadd.f32 0.0, %v2978
    %v2980 = vpop.f32.mrf.mxu0
    %2981 = vmatprep.mubr.f32.mxu0 0.0
    %2982 = vmatmul.mubr.f32.gmra.mxu0 %v2762
    %v2983 = vpop.f32.mrf.mxu0
    %v2984 = vadd.f32 0.0, %v2983
    %v2985 = vpop.f32.mrf.mxu0
    %2986 = vmatprep.mubr.f32.mxu0 0.0
    %2987 = vmatmul.mubr.f32.gmra.mxu0 %v2765
    %v2988 = vpop.f32.mrf.mxu0
    %v2989 = vadd.f32 0.0, %v2988
    %v2990 = vpop.f32.mrf.mxu0
    %2991 = vmatprep.mubr.f32.mxu0 0.0
    %2992 = vmatmul.mubr.f32.gmra.mxu0 %v2768
    %v2993 = vpop.f32.mrf.mxu0
    %v2994 = vadd.f32 0.0, %v2993
    %v2995 = vpop.f32.mrf.mxu0
    %2996 = vmatprep.mubr.f32.mxu0 0.0
    %2997 = vmatmul.mubr.f32.gmra.mxu0 %v2771
    %v2998 = vpop.f32.mrf.mxu0
    %v2999 = vadd.f32 0.0, %v2998
    %v3000 = vpop.f32.mrf.mxu0
    %3001 = vmatprep.mubr.f32.mxu0 0.0
    %3002 = vmatmul.mubr.f32.gmra.mxu0 %v2774
    %v3003 = vpop.f32.mrf.mxu0
    %v3004 = vadd.f32 0.0, %v3003
    %v3005 = vpop.f32.mrf.mxu0
    %3006 = vmatprep.mubr.f32.mxu0 0.0
    %3007 = vmatmul.mubr.f32.gmra.mxu0 %v2777
    %v3008 = vpop.f32.mrf.mxu0
    %v3009 = vadd.f32 0.0, %v3008
    %v3010 = vpop.f32.mrf.mxu0
    %3011 = vmatprep.mubr.f32.mxu0 0.0
    %3012 = vmatmul.mubr.f32.gmra.mxu0 %v2780
    %v3013 = vpop.f32.mrf.mxu0
    %v3014 = vadd.f32 0.0, %v3013
    %v3015 = vpop.f32.mrf.mxu0
    %3016 = vmatprep.mubr.f32.mxu0 0.0
    %3017 = vmatmul.mubr.f32.gmra.mxu0 %v2783
    %v3018 = vpop.f32.mrf.mxu0
    %v3019 = vadd.f32 0.0, %v3018
    %v3020 = vpop.f32.mrf.mxu0
    %3021 = vmatprep.mubr.f32.mxu0 0.0
    %3022 = vmatmul.mubr.f32.gmra.mxu0 %v2786
    %v3023 = vpop.f32.mrf.mxu0
    %v3024 = vadd.f32 0.0, %v3023
    %v3025 = vpop.f32.mrf.mxu0
    %3026 = vmatprep.mubr.f32.mxu0 0.0
    %3027 = vmatmul.mubr.f32.gmra.mxu0 %v2789
    %v3028 = vpop.f32.mrf.mxu0
    %v3029 = vadd.f32 0.0, %v3028
    %v3030 = vpop.f32.mrf.mxu0
    %3031 = vmatprep.mubr.f32.mxu0 0.0
    %3032 = vmatmul.mubr.f32.gmra.mxu0 %v2792
    %v3033 = vpop.f32.mrf.mxu0
    %v3034 = vadd.f32 0.0, %v3033
    %v3035 = vpop.f32.mrf.mxu0
    %3036 = vmatprep.mubr.f32.mxu0 0.0
    %3037 = vmatmul.mubr.f32.gmra.mxu0 %v2795
    %v3038 = vpop.f32.mrf.mxu0
    %v3039 = vadd.f32 0.0, %v3038
    %v3040 = vpop.f32.mrf.mxu0
    %3041 = vdwg.mxu0
    %v3042 = vadd.f32 %v2617, %v2864
    %v3043 = vadd.f32 %v2618, %v2869
    %v3044 = vadd.f32 %v2619, %v2874
    %v3045 = vadd.f32 %v2620, %v2879
    %v3046 = vadd.f32 %v2621, %v2884
    %v3047 = vadd.f32 %v2622, %v2889
    %v3048 = vadd.f32 %v2623, %v2894
    %v3049 = vadd.f32 %v2624, %v2899
    %v3050 = vadd.f32 %v2625, %v2904
    %v3051 = vadd.f32 %v2626, %v2909
    %v3052 = vadd.f32 %v2627, %v2914
    %v3053 = vadd.f32 %v2628, %v2919
    %v3054 = vadd.f32 %v2629, %v2924
    %v3055 = vadd.f32 %v2630, %v2929
    %v3056 = vadd.f32 %v2631, %v2934
    %v3057 = vadd.f32 %v2632, %v2939
    %v3058 = vadd.f32 %v2633, %v2944
    %v3059 = vadd.f32 %v2634, %v2949
    %v3060 = vadd.f32 %v2635, %v2954
    %v3061 = vadd.f32 %v2636, %v2959
    %v3062 = vadd.f32 %v2637, %v2964
    %v3063 = vadd.f32 %v2638, %v2969
    %v3064 = vadd.f32 %v2639, %v2974
    %v3065 = vadd.f32 %v2640, %v2979
    %v3066 = vadd.f32 %v2641, %v2984
    %v3067 = vadd.f32 %v2642, %v2989
    %v3068 = vadd.f32 %v2643, %v2994
    %v3069 = vadd.f32 %v2644, %v2999
    %v3070 = vadd.f32 %v2645, %v3004
    %v3071 = vadd.f32 %v2646, %v3009
    %v3072 = vadd.f32 %v2647, %v3014
    %v3073 = vadd.f32 %v2648, %v3019
    %v3074 = vadd.f32 %v2649, %v3024
    %v3075 = vadd.f32 %v2650, %v3029
    %v3076 = vadd.f32 %v2651, %v3034
    %v3077 = vadd.f32 %v2652, %v3039
    %v3078 = vld [vmem:[%s0 + $0x36] sm:$0xff]
    %v3079 = vld [vmem:[%s0 + $0x3e] sm:$0xff]
    %v3080 = vld [vmem:[%s0 + $0x46] sm:$0xff]
    %v3081 = vld [vmem:[%s0 + $0x4e] sm:$0xff]
    %v3082 = vld [vmem:[%s0 + $0x56] sm:$0xff]
    %v3083 = vld [vmem:[%s0 + $0x5e] sm:$0xff]
    %v3084 = vld [vmem:[%s0 + $0x66] sm:$0xff]
    %v3085 = vld [vmem:[%s0 + $0x6e] sm:$0xff]
    %v3086 = vld [vmem:[%s0 + $0x76] sm:$0xff]
    %v3087 = vld [vmem:[%s0 + $0x7e] sm:$0xff]
    %v3088 = vld [vmem:[%s0 + $0x86] sm:$0xff]
    %v3089 = vld [vmem:[%s0 + $0x8e] sm:$0xff]
    %v3090 = vld [vmem:[%s0 + $0x96] sm:$0xff]
    %v3091 = vld [vmem:[%s0 + $0x9e] sm:$0xff]
    %v3092 = vld [vmem:[%s0 + $0xa6] sm:$0xff]
    %v3093 = vld [vmem:[%s0 + $0xae] sm:$0xff]
    %v3094 = vld [vmem:[%s0 + $0xb6] sm:$0xff]
    %v3095 = vld [vmem:[%s0 + $0xbe] sm:$0xff]
    %v3096 = vld [vmem:[%s0 + $0xc6] sm:$0xff]
    %v3097 = vld [vmem:[%s0 + $0xce] sm:$0xff]
    %v3098 = vld [vmem:[%s0 + $0xd6] sm:$0xff]
    %v3099 = vld [vmem:[%s0 + $0xde] sm:$0xff]
    %v3100 = vld [vmem:[%s0 + $0xe6] sm:$0xff]
    %v3101 = vld [vmem:[%s0 + $0xee] sm:$0xff]
    %v3102 = vld [vmem:[%s0 + $0xf6] sm:$0xff]
    %v3103 = vld [vmem:[%s0 + $0xfe] sm:$0xff]
    %v3104 = vld [vmem:[%s0 + $0x106] sm:$0xff]
    %v3105 = vld [vmem:[%s0 + $0x10e] sm:$0xff]
    %v3106 = vld [vmem:[%s0 + $0x116] sm:$0xff]
    %v3107 = vld [vmem:[%s0 + $0x11e] sm:$0xff]
    %v3108 = vld [vmem:[%s0 + $0x126] sm:$0xff]
    %v3109 = vld [vmem:[%s0 + $0x12e] sm:$0xff]
    %v3110 = vld [vmem:[%s0 + $0x136] sm:$0xff]
    %v3111 = vld [vmem:[%s0 + $0x13e] sm:$0xff]
    %v3112 = vld [vmem:[%s0 + $0x146] sm:$0xff]
    %v3113 = vld [vmem:[%s0 + $0x14e] sm:$0xff]
    %v3115 = vsel %vm138, %v3078, 0
    %v3118 = vsel %vm138, %v3079, 0
    %v3121 = vsel %vm138, %v3080, 0
    %v3124 = vsel %vm138, %v3081, 0
    %v3127 = vsel %vm138, %v3082, 0
    %v3130 = vsel %vm138, %v3083, 0
    %v3133 = vsel %vm138, %v3084, 0
    %v3136 = vsel %vm138, %v3085, 0
    %v3139 = vsel %vm138, %v3086, 0
    %v3142 = vsel %vm138, %v3087, 0
    %v3145 = vsel %vm138, %v3088, 0
    %v3148 = vsel %vm138, %v3089, 0
    %v3151 = vsel %vm138, %v3090, 0
    %v3154 = vsel %vm138, %v3091, 0
    %v3157 = vsel %vm138, %v3092, 0
    %v3160 = vsel %vm138, %v3093, 0
    %v3163 = vsel %vm138, %v3094, 0
    %v3166 = vsel %vm138, %v3095, 0
    %v3169 = vsel %vm138, %v3096, 0
    %v3172 = vsel %vm138, %v3097, 0
    %v3175 = vsel %vm138, %v3098, 0
    %v3178 = vsel %vm138, %v3099, 0
    %v3181 = vsel %vm138, %v3100, 0
    %v3184 = vsel %vm138, %v3101, 0
    %v3187 = vsel %vm138, %v3102, 0
    %v3190 = vsel %vm138, %v3103, 0
    %v3193 = vsel %vm138, %v3104, 0
    %v3196 = vsel %vm138, %v3105, 0
    %v3199 = vsel %vm138, %v3106, 0
    %v3202 = vsel %vm138, %v3107, 0
    %v3205 = vsel %vm138, %v3108, 0
    %v3208 = vsel %vm138, %v3109, 0
    %v3211 = vsel %vm138, %v3110, 0
    %v3214 = vsel %vm138, %v3111, 0
    %v3217 = vsel %vm138, %v3112, 0
    %v3220 = vsel %vm138, %v3113, 0
    %3222 = vmatprep.subr.mxu0 0.0
    %3223 = vmatpush1.msra.mxu0 0.0
    %3224 = vmatprep.subr.mxu0 0.0
    %3225 = vmatpush1.msra.mxu0 0.0
    %3226 = vmatprep.subr.mxu0 0.0
    %3227 = vmatpush1.msra.mxu0 0.0
    %3228 = vmatprep.subr.mxu0 0.0
    %3229 = vmatpush1.msra.mxu0 0.0
    %3230 = vmatprep.subr.mxu0 0.0
    %3231 = vmatpush1.msra.mxu0 0.0
    %3232 = vmatprep.subr.mxu0 0.0
    %3233 = vmatpush1.msra.mxu0 0.0
    %3234 = vmatprep.subr.mxu0 0.0
    %3235 = vmatpush1.msra.mxu0 0.0
    %3236 = vmatprep.subr.mxu0 0.0
    %3237 = vmatpush1.msra.mxu0 0.0
    %3238 = vmatprep.subr.mxu0 0.0
    %3239 = vmatpush1.msra.mxu0 0.0
    %3240 = vmatprep.subr.mxu0 0.0
    %3241 = vmatpush1.msra.mxu0 0.0
    %3242 = vmatprep.subr.mxu0 0.0
    %3243 = vmatpush1.msra.mxu0 0.0
    %3244 = vmatprep.subr.mxu0 0.0
    %3245 = vmatpush1.msra.mxu0 0.0
    %3246 = vmatprep.subr.mxu0 0.0
    %3247 = vmatpush1.msra.mxu0 %v62
    %3248 = vmatprep.subr.mxu0 0.0
    %3249 = vmatpush1.msra.mxu0 %v61
    %3250 = vmatprep.subr.mxu0 0.0
    %3251 = vmatpush1.msra.mxu0 %v60
    %3252 = vmatprep.subr.mxu0 0.0
    %3253 = vmatpush1.msra.mxu0 %v59
    %3254 = vmatprep.subr.mxu0 0.0
    %3255 = vmatpush2.msra.mxu0 0.0
    %3256 = vmatprep.subr.mxu0 0.0
    %3257 = vmatpush2.msra.mxu0 0.0
    %3258 = vmatprep.subr.mxu0 0.0
    %3259 = vmatpush2.msra.mxu0 0.0
    %3260 = vmatprep.subr.mxu0 0.0
    %3261 = vmatpush2.msra.mxu0 0.0
    %3262 = vmatprep.subr.mxu0 0.0
    %3263 = vmatpush2.msra.mxu0 0.0
    %3264 = vmatprep.subr.mxu0 0.0
    %3265 = vmatpush2.msra.mxu0 0.0
    %3266 = vmatprep.subr.mxu0 0.0
    %3267 = vmatpush2.msra.mxu0 0.0
    %3268 = vmatprep.subr.mxu0 0.0
    %3269 = vmatpush2.msra.mxu0 0.0
    %3270 = vmatprep.subr.mxu0 0.0
    %3271 = vmatpush2.msra.mxu0 0.0
    %3272 = vmatprep.subr.mxu0 0.0
    %3273 = vmatpush2.msra.mxu0 0.0
    %3274 = vmatprep.subr.mxu0 0.0
    %3275 = vmatpush2.msra.mxu0 0.0
    %3276 = vmatprep.subr.mxu0 0.0
    %3277 = vmatpush2.msra.mxu0 0.0
    %3278 = vmatprep.subr.mxu0 0.0
    %3279 = vmatpush2.msra.mxu0 0.0
    %3280 = vmatprep.subr.mxu0 0.0
    %3281 = vmatpush2.msra.mxu0 0.0
    %3282 = vmatprep.subr.mxu0 0.0
    %3283 = vmatpush2.msra.mxu0 0.0
    %3284 = vmatprep.subr.mxu0 0.0
    %3285 = vmatpush2.msra.mxu0 0.0
    %3286 = vmatprep.mubr.f32.mxu0 0.0
    %3287 = vmatmul.mubr.f32.gmra.mxu0 %v3115
    %v3288 = vpop.f32.mrf.mxu0
    %v3289 = vadd.f32 0.0, %v3288
    %v3290 = vpop.f32.mrf.mxu0
    %3291 = vmatprep.mubr.f32.mxu0 0.0
    %3292 = vmatmul.mubr.f32.gmra.mxu0 %v3118
    %v3293 = vpop.f32.mrf.mxu0
    %v3294 = vadd.f32 0.0, %v3293
    %v3295 = vpop.f32.mrf.mxu0
    %3296 = vmatprep.mubr.f32.mxu0 0.0
    %3297 = vmatmul.mubr.f32.gmra.mxu0 %v3121
    %v3298 = vpop.f32.mrf.mxu0
    %v3299 = vadd.f32 0.0, %v3298
    %v3300 = vpop.f32.mrf.mxu0
    %3301 = vmatprep.mubr.f32.mxu0 0.0
    %3302 = vmatmul.mubr.f32.gmra.mxu0 %v3124
    %v3303 = vpop.f32.mrf.mxu0
    %v3304 = vadd.f32 0.0, %v3303
    %v3305 = vpop.f32.mrf.mxu0
    %3306 = vmatprep.mubr.f32.mxu0 0.0
    %3307 = vmatmul.mubr.f32.gmra.mxu0 %v3127
    %v3308 = vpop.f32.mrf.mxu0
    %v3309 = vadd.f32 0.0, %v3308
    %v3310 = vpop.f32.mrf.mxu0
    %3311 = vmatprep.mubr.f32.mxu0 0.0
    %3312 = vmatmul.mubr.f32.gmra.mxu0 %v3130
    %v3313 = vpop.f32.mrf.mxu0
    %v3314 = vadd.f32 0.0, %v3313
    %v3315 = vpop.f32.mrf.mxu0
    %3316 = vmatprep.mubr.f32.mxu0 0.0
    %3317 = vmatmul.mubr.f32.gmra.mxu0 %v3133
    %v3318 = vpop.f32.mrf.mxu0
    %v3319 = vadd.f32 0.0, %v3318
    %v3320 = vpop.f32.mrf.mxu0
    %3321 = vmatprep.mubr.f32.mxu0 0.0
    %3322 = vmatmul.mubr.f32.gmra.mxu0 %v3136
    %v3323 = vpop.f32.mrf.mxu0
    %v3324 = vadd.f32 0.0, %v3323
    %v3325 = vpop.f32.mrf.mxu0
    %3326 = vmatprep.mubr.f32.mxu0 0.0
    %3327 = vmatmul.mubr.f32.gmra.mxu0 %v3139
    %v3328 = vpop.f32.mrf.mxu0
    %v3329 = vadd.f32 0.0, %v3328
    %v3330 = vpop.f32.mrf.mxu0
    %3331 = vmatprep.mubr.f32.mxu0 0.0
    %3332 = vmatmul.mubr.f32.gmra.mxu0 %v3142
    %v3333 = vpop.f32.mrf.mxu0
    %v3334 = vadd.f32 0.0, %v3333
    %v3335 = vpop.f32.mrf.mxu0
    %3336 = vmatprep.mubr.f32.mxu0 0.0
    %3337 = vmatmul.mubr.f32.gmra.mxu0 %v3145
    %v3338 = vpop.f32.mrf.mxu0
    %v3339 = vadd.f32 0.0, %v3338
    %v3340 = vpop.f32.mrf.mxu0
    %3341 = vmatprep.mubr.f32.mxu0 0.0
    %3342 = vmatmul.mubr.f32.gmra.mxu0 %v3148
    %v3343 = vpop.f32.mrf.mxu0
    %v3344 = vadd.f32 0.0, %v3343
    %v3345 = vpop.f32.mrf.mxu0
    %3346 = vmatprep.mubr.f32.mxu0 0.0
    %3347 = vmatmul.mubr.f32.gmra.mxu0 %v3151
    %v3348 = vpop.f32.mrf.mxu0
    %v3349 = vadd.f32 0.0, %v3348
    %v3350 = vpop.f32.mrf.mxu0
    %3351 = vmatprep.mubr.f32.mxu0 0.0
    %3352 = vmatmul.mubr.f32.gmra.mxu0 %v3154
    %v3353 = vpop.f32.mrf.mxu0
    %v3354 = vadd.f32 0.0, %v3353
    %v3355 = vpop.f32.mrf.mxu0
    %3356 = vmatprep.mubr.f32.mxu0 0.0
    %3357 = vmatmul.mubr.f32.gmra.mxu0 %v3157
    %v3358 = vpop.f32.mrf.mxu0
    %v3359 = vadd.f32 0.0, %v3358
    %v3360 = vpop.f32.mrf.mxu0
    %3361 = vmatprep.mubr.f32.mxu0 0.0
    %3362 = vmatmul.mubr.f32.gmra.mxu0 %v3160
    %v3363 = vpop.f32.mrf.mxu0
    %v3364 = vadd.f32 0.0, %v3363
    %v3365 = vpop.f32.mrf.mxu0
    %3366 = vmatprep.mubr.f32.mxu0 0.0
    %3367 = vmatmul.mubr.f32.gmra.mxu0 %v3163
    %v3368 = vpop.f32.mrf.mxu0
    %v3369 = vadd.f32 0.0, %v3368
    %v3370 = vpop.f32.mrf.mxu0
    %3371 = vmatprep.mubr.f32.mxu0 0.0
    %3372 = vmatmul.mubr.f32.gmra.mxu0 %v3166
    %v3373 = vpop.f32.mrf.mxu0
    %v3374 = vadd.f32 0.0, %v3373
    %v3375 = vpop.f32.mrf.mxu0
    %3376 = vmatprep.mubr.f32.mxu0 0.0
    %3377 = vmatmul.mubr.f32.gmra.mxu0 %v3169
    %v3378 = vpop.f32.mrf.mxu0
    %v3379 = vadd.f32 0.0, %v3378
    %v3380 = vpop.f32.mrf.mxu0
    %3381 = vmatprep.mubr.f32.mxu0 0.0
    %3382 = vmatmul.mubr.f32.gmra.mxu0 %v3172
    %v3383 = vpop.f32.mrf.mxu0
    %v3384 = vadd.f32 0.0, %v3383
    %v3385 = vpop.f32.mrf.mxu0
    %3386 = vmatprep.mubr.f32.mxu0 0.0
    %3387 = vmatmul.mubr.f32.gmra.mxu0 %v3175
    %v3388 = vpop.f32.mrf.mxu0
    %v3389 = vadd.f32 0.0, %v3388
    %v3390 = vpop.f32.mrf.mxu0
    %3391 = vmatprep.mubr.f32.mxu0 0.0
    %3392 = vmatmul.mubr.f32.gmra.mxu0 %v3178
    %v3393 = vpop.f32.mrf.mxu0
    %v3394 = vadd.f32 0.0, %v3393
    %v3395 = vpop.f32.mrf.mxu0
    %3396 = vmatprep.mubr.f32.mxu0 0.0
    %3397 = vmatmul.mubr.f32.gmra.mxu0 %v3181
    %v3398 = vpop.f32.mrf.mxu0
    %v3399 = vadd.f32 0.0, %v3398
    %v3400 = vpop.f32.mrf.mxu0
    %3401 = vmatprep.mubr.f32.mxu0 0.0
    %3402 = vmatmul.mubr.f32.gmra.mxu0 %v3184
    %v3403 = vpop.f32.mrf.mxu0
    %v3404 = vadd.f32 0.0, %v3403
    %v3405 = vpop.f32.mrf.mxu0
    %3406 = vmatprep.mubr.f32.mxu0 0.0
    %3407 = vmatmul.mubr.f32.gmra.mxu0 %v3187
    %v3408 = vpop.f32.mrf.mxu0
    %v3409 = vadd.f32 0.0, %v3408
    %v3410 = vpop.f32.mrf.mxu0
    %3411 = vmatprep.mubr.f32.mxu0 0.0
    %3412 = vmatmul.mubr.f32.gmra.mxu0 %v3190
    %v3413 = vpop.f32.mrf.mxu0
    %v3414 = vadd.f32 0.0, %v3413
    %v3415 = vpop.f32.mrf.mxu0
    %3416 = vmatprep.mubr.f32.mxu0 0.0
    %3417 = vmatmul.mubr.f32.gmra.mxu0 %v3193
    %v3418 = vpop.f32.mrf.mxu0
    %v3419 = vadd.f32 0.0, %v3418
    %v3420 = vpop.f32.mrf.mxu0
    %3421 = vmatprep.mubr.f32.mxu0 0.0
    %3422 = vmatmul.mubr.f32.gmra.mxu0 %v3196
    %v3423 = vpop.f32.mrf.mxu0
    %v3424 = vadd.f32 0.0, %v3423
    %v3425 = vpop.f32.mrf.mxu0
    %3426 = vmatprep.mubr.f32.mxu0 0.0
    %3427 = vmatmul.mubr.f32.gmra.mxu0 %v3199
    %v3428 = vpop.f32.mrf.mxu0
    %v3429 = vadd.f32 0.0, %v3428
    %v3430 = vpop.f32.mrf.mxu0
    %3431 = vmatprep.mubr.f32.mxu0 0.0
    %3432 = vmatmul.mubr.f32.gmra.mxu0 %v3202
    %v3433 = vpop.f32.mrf.mxu0
    %v3434 = vadd.f32 0.0, %v3433
    %v3435 = vpop.f32.mrf.mxu0
    %3436 = vmatprep.mubr.f32.mxu0 0.0
    %3437 = vmatmul.mubr.f32.gmra.mxu0 %v3205
    %v3438 = vpop.f32.mrf.mxu0
    %v3439 = vadd.f32 0.0, %v3438
    %v3440 = vpop.f32.mrf.mxu0
    %3441 = vmatprep.mubr.f32.mxu0 0.0
    %3442 = vmatmul.mubr.f32.gmra.mxu0 %v3208
    %v3443 = vpop.f32.mrf.mxu0
    %v3444 = vadd.f32 0.0, %v3443
    %v3445 = vpop.f32.mrf.mxu0
    %3446 = vmatprep.mubr.f32.mxu0 0.0
    %3447 = vmatmul.mubr.f32.gmra.mxu0 %v3211
    %v3448 = vpop.f32.mrf.mxu0
    %v3449 = vadd.f32 0.0, %v3448
    %v3450 = vpop.f32.mrf.mxu0
    %3451 = vmatprep.mubr.f32.mxu0 0.0
    %3452 = vmatmul.mubr.f32.gmra.mxu0 %v3214
    %v3453 = vpop.f32.mrf.mxu0
    %v3454 = vadd.f32 0.0, %v3453
    %v3455 = vpop.f32.mrf.mxu0
    %3456 = vmatprep.mubr.f32.mxu0 0.0
    %3457 = vmatmul.mubr.f32.gmra.mxu0 %v3217
    %v3458 = vpop.f32.mrf.mxu0
    %v3459 = vadd.f32 0.0, %v3458
    %v3460 = vpop.f32.mrf.mxu0
    %3461 = vmatprep.mubr.f32.mxu0 0.0
    %3462 = vmatmul.mubr.f32.gmra.mxu0 %v3220
    %v3463 = vpop.f32.mrf.mxu0
    %v3464 = vadd.f32 0.0, %v3463
    %v3465 = vpop.f32.mrf.mxu0
    %3466 = vdwg.mxu0
    %v3467 = vadd.f32 %v3042, %v3289
    %v3468 = vadd.f32 %v3043, %v3294
    %v3469 = vadd.f32 %v3044, %v3299
    %v3470 = vadd.f32 %v3045, %v3304
    %v3471 = vadd.f32 %v3046, %v3309
    %v3472 = vadd.f32 %v3047, %v3314
    %v3473 = vadd.f32 %v3048, %v3319
    %v3474 = vadd.f32 %v3049, %v3324
    %v3475 = vadd.f32 %v3050, %v3329
    %v3476 = vadd.f32 %v3051, %v3334
    %v3477 = vadd.f32 %v3052, %v3339
    %v3478 = vadd.f32 %v3053, %v3344
    %v3479 = vadd.f32 %v3054, %v3349
    %v3480 = vadd.f32 %v3055, %v3354
    %v3481 = vadd.f32 %v3056, %v3359
    %v3482 = vadd.f32 %v3057, %v3364
    %v3483 = vadd.f32 %v3058, %v3369
    %v3484 = vadd.f32 %v3059, %v3374
    %v3485 = vadd.f32 %v3060, %v3379
    %v3486 = vadd.f32 %v3061, %v3384
    %v3487 = vadd.f32 %v3062, %v3389
    %v3488 = vadd.f32 %v3063, %v3394
    %v3489 = vadd.f32 %v3064, %v3399
    %v3490 = vadd.f32 %v3065, %v3404
    %v3491 = vadd.f32 %v3066, %v3409
    %v3492 = vadd.f32 %v3067, %v3414
    %v3493 = vadd.f32 %v3068, %v3419
    %v3494 = vadd.f32 %v3069, %v3424
    %v3495 = vadd.f32 %v3070, %v3429
    %v3496 = vadd.f32 %v3071, %v3434
    %v3497 = vadd.f32 %v3072, %v3439
    %v3498 = vadd.f32 %v3073, %v3444
    %v3499 = vadd.f32 %v3074, %v3449
    %v3500 = vadd.f32 %v3075, %v3454
    %v3501 = vadd.f32 %v3076, %v3459
    %v3502 = vadd.f32 %v3077, %v3464
    %v3503 = vld [vmem:[%s0 + $0x37] sm:$0xff]
    %v3504 = vld [vmem:[%s0 + $0x3f] sm:$0xff]
    %v3505 = vld [vmem:[%s0 + $0x47] sm:$0xff]
    %v3506 = vld [vmem:[%s0 + $0x4f] sm:$0xff]
    %v3507 = vld [vmem:[%s0 + $0x57] sm:$0xff]
    %v3508 = vld [vmem:[%s0 + $0x5f] sm:$0xff]
    %v3509 = vld [vmem:[%s0 + $0x67] sm:$0xff]
    %v3510 = vld [vmem:[%s0 + $0x6f] sm:$0xff]
    %v3511 = vld [vmem:[%s0 + $0x77] sm:$0xff]
    %v3512 = vld [vmem:[%s0 + $0x7f] sm:$0xff]
    %v3513 = vld [vmem:[%s0 + $0x87] sm:$0xff]
    %v3514 = vld [vmem:[%s0 + $0x8f] sm:$0xff]
    %v3515 = vld [vmem:[%s0 + $0x97] sm:$0xff]
    %v3516 = vld [vmem:[%s0 + $0x9f] sm:$0xff]
    %v3517 = vld [vmem:[%s0 + $0xa7] sm:$0xff]
    %v3518 = vld [vmem:[%s0 + $0xaf] sm:$0xff]
    %v3519 = vld [vmem:[%s0 + $0xb7] sm:$0xff]
    %v3520 = vld [vmem:[%s0 + $0xbf] sm:$0xff]
    %v3521 = vld [vmem:[%s0 + $0xc7] sm:$0xff]
    %v3522 = vld [vmem:[%s0 + $0xcf] sm:$0xff]
    %v3523 = vld [vmem:[%s0 + $0xd7] sm:$0xff]
    %v3524 = vld [vmem:[%s0 + $0xdf] sm:$0xff]
    %v3525 = vld [vmem:[%s0 + $0xe7] sm:$0xff]
    %v3526 = vld [vmem:[%s0 + $0xef] sm:$0xff]
    %v3527 = vld [vmem:[%s0 + $0xf7] sm:$0xff]
    %v3528 = vld [vmem:[%s0 + $0xff] sm:$0xff]
    %v3529 = vld [vmem:[%s0 + $0x107] sm:$0xff]
    %v3530 = vld [vmem:[%s0 + $0x10f] sm:$0xff]
    %v3531 = vld [vmem:[%s0 + $0x117] sm:$0xff]
    %v3532 = vld [vmem:[%s0 + $0x11f] sm:$0xff]
    %v3533 = vld [vmem:[%s0 + $0x127] sm:$0xff]
    %v3534 = vld [vmem:[%s0 + $0x12f] sm:$0xff]
    %v3535 = vld [vmem:[%s0 + $0x137] sm:$0xff]
    %v3536 = vld [vmem:[%s0 + $0x13f] sm:$0xff]
    %v3537 = vld [vmem:[%s0 + $0x147] sm:$0xff]
    %v3538 = vld [vmem:[%s0 + $0x14f] sm:$0xff]
    %v3540 = vsel %vm138, %v3503, 0
    %v3543 = vsel %vm138, %v3504, 0
    %v3546 = vsel %vm138, %v3505, 0
    %v3549 = vsel %vm138, %v3506, 0
    %v3552 = vsel %vm138, %v3507, 0
    %v3555 = vsel %vm138, %v3508, 0
    %v3558 = vsel %vm138, %v3509, 0
    %v3561 = vsel %vm138, %v3510, 0
    %v3564 = vsel %vm138, %v3511, 0
    %v3567 = vsel %vm138, %v3512, 0
    %v3570 = vsel %vm138, %v3513, 0
    %v3573 = vsel %vm138, %v3514, 0
    %v3576 = vsel %vm138, %v3515, 0
    %v3579 = vsel %vm138, %v3516, 0
    %v3582 = vsel %vm138, %v3517, 0
    %v3585 = vsel %vm138, %v3518, 0
    %v3588 = vsel %vm138, %v3519, 0
    %v3591 = vsel %vm138, %v3520, 0
    %v3594 = vsel %vm138, %v3521, 0
    %v3597 = vsel %vm138, %v3522, 0
    %v3600 = vsel %vm138, %v3523, 0
    %v3603 = vsel %vm138, %v3524, 0
    %v3606 = vsel %vm138, %v3525, 0
    %v3609 = vsel %vm138, %v3526, 0
    %v3612 = vsel %vm138, %v3527, 0
    %v3615 = vsel %vm138, %v3528, 0
    %v3618 = vsel %vm138, %v3529, 0
    %v3621 = vsel %vm138, %v3530, 0
    %v3624 = vsel %vm138, %v3531, 0
    %v3627 = vsel %vm138, %v3532, 0
    %v3630 = vsel %vm138, %v3533, 0
    %v3633 = vsel %vm138, %v3534, 0
    %v3636 = vsel %vm138, %v3535, 0
    %v3639 = vsel %vm138, %v3536, 0
    %v3642 = vsel %vm138, %v3537, 0
    %v3645 = vsel %vm138, %v3538, 0
    %3647 = vmatprep.subr.mxu0 0.0
    %3648 = vmatpush1.msra.mxu0 0.0
    %3649 = vmatprep.subr.mxu0 0.0
    %3650 = vmatpush1.msra.mxu0 0.0
    %3651 = vmatprep.subr.mxu0 0.0
    %3652 = vmatpush1.msra.mxu0 0.0
    %3653 = vmatprep.subr.mxu0 0.0
    %3654 = vmatpush1.msra.mxu0 0.0
    %3655 = vmatprep.subr.mxu0 0.0
    %3656 = vmatpush1.msra.mxu0 0.0
    %3657 = vmatprep.subr.mxu0 0.0
    %3658 = vmatpush1.msra.mxu0 0.0
    %3659 = vmatprep.subr.mxu0 0.0
    %3660 = vmatpush1.msra.mxu0 0.0
    %3661 = vmatprep.subr.mxu0 0.0
    %3662 = vmatpush1.msra.mxu0 0.0
    %3663 = vmatprep.subr.mxu0 0.0
    %3664 = vmatpush1.msra.mxu0 0.0
    %3665 = vmatprep.subr.mxu0 0.0
    %3666 = vmatpush1.msra.mxu0 0.0
    %3667 = vmatprep.subr.mxu0 0.0
    %3668 = vmatpush1.msra.mxu0 0.0
    %3669 = vmatprep.subr.mxu0 0.0
    %3670 = vmatpush1.msra.mxu0 0.0
    %3671 = vmatprep.subr.mxu0 0.0
    %3672 = vmatpush1.msra.mxu0 %v67
    %3673 = vmatprep.subr.mxu0 0.0
    %3674 = vmatpush1.msra.mxu0 %v66
    %3675 = vmatprep.subr.mxu0 0.0
    %3676 = vmatpush1.msra.mxu0 %v65
    %3677 = vmatprep.subr.mxu0 0.0
    %3678 = vmatpush1.msra.mxu0 %v64
    %3679 = vmatprep.subr.mxu0 0.0
    %3680 = vmatpush2.msra.mxu0 0.0
    %3681 = vmatprep.subr.mxu0 0.0
    %3682 = vmatpush2.msra.mxu0 0.0
    %3683 = vmatprep.subr.mxu0 0.0
    %3684 = vmatpush2.msra.mxu0 0.0
    %3685 = vmatprep.subr.mxu0 0.0
    %3686 = vmatpush2.msra.mxu0 0.0
    %3687 = vmatprep.subr.mxu0 0.0
    %3688 = vmatpush2.msra.mxu0 0.0
    %3689 = vmatprep.subr.mxu0 0.0
    %3690 = vmatpush2.msra.mxu0 0.0
    %3691 = vmatprep.subr.mxu0 0.0
    %3692 = vmatpush2.msra.mxu0 0.0
    %3693 = vmatprep.subr.mxu0 0.0
    %3694 = vmatpush2.msra.mxu0 0.0
    %3695 = vmatprep.subr.mxu0 0.0
    %3696 = vmatpush2.msra.mxu0 0.0
    %3697 = vmatprep.subr.mxu0 0.0
    %3698 = vmatpush2.msra.mxu0 0.0
    %3699 = vmatprep.subr.mxu0 0.0
    %3700 = vmatpush2.msra.mxu0 0.0
    %3701 = vmatprep.subr.mxu0 0.0
    %3702 = vmatpush2.msra.mxu0 0.0
    %3703 = vmatprep.subr.mxu0 0.0
    %3704 = vmatpush2.msra.mxu0 0.0
    %3705 = vmatprep.subr.mxu0 0.0
    %3706 = vmatpush2.msra.mxu0 0.0
    %3707 = vmatprep.subr.mxu0 0.0
    %3708 = vmatpush2.msra.mxu0 0.0
    %3709 = vmatprep.subr.mxu0 0.0
    %3710 = vmatpush2.msra.mxu0 0.0
    %3711 = vmatprep.mubr.f32.mxu0 0.0
    %3712 = vmatmul.mubr.f32.gmra.mxu0 %v3540
    %v3713 = vpop.f32.mrf.mxu0
    %v3714 = vadd.f32 0.0, %v3713
    %v3715 = vpop.f32.mrf.mxu0
    %3716 = vmatprep.mubr.f32.mxu0 0.0
    %3717 = vmatmul.mubr.f32.gmra.mxu0 %v3543
    %v3718 = vpop.f32.mrf.mxu0
    %v3719 = vadd.f32 0.0, %v3718
    %v3720 = vpop.f32.mrf.mxu0
    %3721 = vmatprep.mubr.f32.mxu0 0.0
    %3722 = vmatmul.mubr.f32.gmra.mxu0 %v3546
    %v3723 = vpop.f32.mrf.mxu0
    %v3724 = vadd.f32 0.0, %v3723
    %v3725 = vpop.f32.mrf.mxu0
    %3726 = vmatprep.mubr.f32.mxu0 0.0
    %3727 = vmatmul.mubr.f32.gmra.mxu0 %v3549
    %v3728 = vpop.f32.mrf.mxu0
    %v3729 = vadd.f32 0.0, %v3728
    %v3730 = vpop.f32.mrf.mxu0
    %3731 = vmatprep.mubr.f32.mxu0 0.0
    %3732 = vmatmul.mubr.f32.gmra.mxu0 %v3552
    %v3733 = vpop.f32.mrf.mxu0
    %v3734 = vadd.f32 0.0, %v3733
    %v3735 = vpop.f32.mrf.mxu0
    %3736 = vmatprep.mubr.f32.mxu0 0.0
    %3737 = vmatmul.mubr.f32.gmra.mxu0 %v3555
    %v3738 = vpop.f32.mrf.mxu0
    %v3739 = vadd.f32 0.0, %v3738
    %v3740 = vpop.f32.mrf.mxu0
    %3741 = vmatprep.mubr.f32.mxu0 0.0
    %3742 = vmatmul.mubr.f32.gmra.mxu0 %v3558
    %v3743 = vpop.f32.mrf.mxu0
    %v3744 = vadd.f32 0.0, %v3743
    %v3745 = vpop.f32.mrf.mxu0
    %3746 = vmatprep.mubr.f32.mxu0 0.0
    %3747 = vmatmul.mubr.f32.gmra.mxu0 %v3561
    %v3748 = vpop.f32.mrf.mxu0
    %v3749 = vadd.f32 0.0, %v3748
    %v3750 = vpop.f32.mrf.mxu0
    %3751 = vmatprep.mubr.f32.mxu0 0.0
    %3752 = vmatmul.mubr.f32.gmra.mxu0 %v3564
    %v3753 = vpop.f32.mrf.mxu0
    %v3754 = vadd.f32 0.0, %v3753
    %v3755 = vpop.f32.mrf.mxu0
    %3756 = vmatprep.mubr.f32.mxu0 0.0
    %3757 = vmatmul.mubr.f32.gmra.mxu0 %v3567
    %v3758 = vpop.f32.mrf.mxu0
    %v3759 = vadd.f32 0.0, %v3758
    %v3760 = vpop.f32.mrf.mxu0
    %3761 = vmatprep.mubr.f32.mxu0 0.0
    %3762 = vmatmul.mubr.f32.gmra.mxu0 %v3570
    %v3763 = vpop.f32.mrf.mxu0
    %v3764 = vadd.f32 0.0, %v3763
    %v3765 = vpop.f32.mrf.mxu0
    %3766 = vmatprep.mubr.f32.mxu0 0.0
    %3767 = vmatmul.mubr.f32.gmra.mxu0 %v3573
    %v3768 = vpop.f32.mrf.mxu0
    %v3769 = vadd.f32 0.0, %v3768
    %v3770 = vpop.f32.mrf.mxu0
    %3771 = vmatprep.mubr.f32.mxu0 0.0
    %3772 = vmatmul.mubr.f32.gmra.mxu0 %v3576
    %v3773 = vpop.f32.mrf.mxu0
    %v3774 = vadd.f32 0.0, %v3773
    %v3775 = vpop.f32.mrf.mxu0
    %3776 = vmatprep.mubr.f32.mxu0 0.0
    %3777 = vmatmul.mubr.f32.gmra.mxu0 %v3579
    %v3778 = vpop.f32.mrf.mxu0
    %v3779 = vadd.f32 0.0, %v3778
    %v3780 = vpop.f32.mrf.mxu0
    %3781 = vmatprep.mubr.f32.mxu0 0.0
    %3782 = vmatmul.mubr.f32.gmra.mxu0 %v3582
    %v3783 = vpop.f32.mrf.mxu0
    %v3784 = vadd.f32 0.0, %v3783
    %v3785 = vpop.f32.mrf.mxu0
    %3786 = vmatprep.mubr.f32.mxu0 0.0
    %3787 = vmatmul.mubr.f32.gmra.mxu0 %v3585
    %v3788 = vpop.f32.mrf.mxu0
    %v3789 = vadd.f32 0.0, %v3788
    %v3790 = vpop.f32.mrf.mxu0
    %3791 = vmatprep.mubr.f32.mxu0 0.0
    %3792 = vmatmul.mubr.f32.gmra.mxu0 %v3588
    %v3793 = vpop.f32.mrf.mxu0
    %v3794 = vadd.f32 0.0, %v3793
    %v3795 = vpop.f32.mrf.mxu0
    %3796 = vmatprep.mubr.f32.mxu0 0.0
    %3797 = vmatmul.mubr.f32.gmra.mxu0 %v3591
    %v3798 = vpop.f32.mrf.mxu0
    %v3799 = vadd.f32 0.0, %v3798
    %v3800 = vpop.f32.mrf.mxu0
    %3801 = vmatprep.mubr.f32.mxu0 0.0
    %3802 = vmatmul.mubr.f32.gmra.mxu0 %v3594
    %v3803 = vpop.f32.mrf.mxu0
    %v3804 = vadd.f32 0.0, %v3803
    %v3805 = vpop.f32.mrf.mxu0
    %3806 = vmatprep.mubr.f32.mxu0 0.0
    %3807 = vmatmul.mubr.f32.gmra.mxu0 %v3597
    %v3808 = vpop.f32.mrf.mxu0
    %v3809 = vadd.f32 0.0, %v3808
    %v3810 = vpop.f32.mrf.mxu0
    %3811 = vmatprep.mubr.f32.mxu0 0.0
    %3812 = vmatmul.mubr.f32.gmra.mxu0 %v3600
    %v3813 = vpop.f32.mrf.mxu0
    %v3814 = vadd.f32 0.0, %v3813
    %v3815 = vpop.f32.mrf.mxu0
    %3816 = vmatprep.mubr.f32.mxu0 0.0
    %3817 = vmatmul.mubr.f32.gmra.mxu0 %v3603
    %v3818 = vpop.f32.mrf.mxu0
    %v3819 = vadd.f32 0.0, %v3818
    %v3820 = vpop.f32.mrf.mxu0
    %3821 = vmatprep.mubr.f32.mxu0 0.0
    %3822 = vmatmul.mubr.f32.gmra.mxu0 %v3606
    %v3823 = vpop.f32.mrf.mxu0
    %v3824 = vadd.f32 0.0, %v3823
    %v3825 = vpop.f32.mrf.mxu0
    %3826 = vmatprep.mubr.f32.mxu0 0.0
    %3827 = vmatmul.mubr.f32.gmra.mxu0 %v3609
    %v3828 = vpop.f32.mrf.mxu0
    %v3829 = vadd.f32 0.0, %v3828
    %v3830 = vpop.f32.mrf.mxu0
    %3831 = vmatprep.mubr.f32.mxu0 0.0
    %3832 = vmatmul.mubr.f32.gmra.mxu0 %v3612
    %v3833 = vpop.f32.mrf.mxu0
    %v3834 = vadd.f32 0.0, %v3833
    %v3835 = vpop.f32.mrf.mxu0
    %3836 = vmatprep.mubr.f32.mxu0 0.0
    %3837 = vmatmul.mubr.f32.gmra.mxu0 %v3615
    %v3838 = vpop.f32.mrf.mxu0
    %v3839 = vadd.f32 0.0, %v3838
    %v3840 = vpop.f32.mrf.mxu0
    %3841 = vmatprep.mubr.f32.mxu0 0.0
    %3842 = vmatmul.mubr.f32.gmra.mxu0 %v3618
    %v3843 = vpop.f32.mrf.mxu0
    %v3844 = vadd.f32 0.0, %v3843
    %v3845 = vpop.f32.mrf.mxu0
    %3846 = vmatprep.mubr.f32.mxu0 0.0
    %3847 = vmatmul.mubr.f32.gmra.mxu0 %v3621
    %v3848 = vpop.f32.mrf.mxu0
    %v3849 = vadd.f32 0.0, %v3848
    %v3850 = vpop.f32.mrf.mxu0
    %3851 = vmatprep.mubr.f32.mxu0 0.0
    %3852 = vmatmul.mubr.f32.gmra.mxu0 %v3624
    %v3853 = vpop.f32.mrf.mxu0
    %v3854 = vadd.f32 0.0, %v3853
    %v3855 = vpop.f32.mrf.mxu0
    %3856 = vmatprep.mubr.f32.mxu0 0.0
    %3857 = vmatmul.mubr.f32.gmra.mxu0 %v3627
    %v3858 = vpop.f32.mrf.mxu0
    %v3859 = vadd.f32 0.0, %v3858
    %v3860 = vpop.f32.mrf.mxu0
    %3861 = vmatprep.mubr.f32.mxu0 0.0
    %3862 = vmatmul.mubr.f32.gmra.mxu0 %v3630
    %v3863 = vpop.f32.mrf.mxu0
    %v3864 = vadd.f32 0.0, %v3863
    %v3865 = vpop.f32.mrf.mxu0
    %3866 = vmatprep.mubr.f32.mxu0 0.0
    %3867 = vmatmul.mubr.f32.gmra.mxu0 %v3633
    %v3868 = vpop.f32.mrf.mxu0
    %v3869 = vadd.f32 0.0, %v3868
    %v3870 = vpop.f32.mrf.mxu0
    %3871 = vmatprep.mubr.f32.mxu0 0.0
    %3872 = vmatmul.mubr.f32.gmra.mxu0 %v3636
    %v3873 = vpop.f32.mrf.mxu0
    %v3874 = vadd.f32 0.0, %v3873
    %v3875 = vpop.f32.mrf.mxu0
    %3876 = vmatprep.mubr.f32.mxu0 0.0
    %3877 = vmatmul.mubr.f32.gmra.mxu0 %v3639
    %v3878 = vpop.f32.mrf.mxu0
    %v3879 = vadd.f32 0.0, %v3878
    %v3880 = vpop.f32.mrf.mxu0
    %3881 = vmatprep.mubr.f32.mxu0 0.0
    %3882 = vmatmul.mubr.f32.gmra.mxu0 %v3642
    %v3883 = vpop.f32.mrf.mxu0
    %v3884 = vadd.f32 0.0, %v3883
    %v3885 = vpop.f32.mrf.mxu0
    %3886 = vmatprep.mubr.f32.mxu0 0.0
    %3887 = vmatmul.mubr.f32.gmra.mxu0 %v3645
    %v3888 = vpop.f32.mrf.mxu0
    %v3889 = vadd.f32 0.0, %v3888
    %v3890 = vpop.f32.mrf.mxu0
    %3891 = vdwg.mxu0
    %v3892 = vadd.f32 %v3467, %v3714
    %v3893 = vadd.f32 %v3468, %v3719
    %v3894 = vadd.f32 %v3469, %v3724
    %v3895 = vadd.f32 %v3470, %v3729
    %v3896 = vadd.f32 %v3471, %v3734
    %v3897 = vadd.f32 %v3472, %v3739
    %v3898 = vadd.f32 %v3473, %v3744
    %v3899 = vadd.f32 %v3474, %v3749
    %v3900 = vadd.f32 %v3475, %v3754
    %v3901 = vadd.f32 %v3476, %v3759
    %v3902 = vadd.f32 %v3477, %v3764
    %v3903 = vadd.f32 %v3478, %v3769
    %v3904 = vadd.f32 %v3479, %v3774
    %v3905 = vadd.f32 %v3480, %v3779
    %v3906 = vadd.f32 %v3481, %v3784
    %v3907 = vadd.f32 %v3482, %v3789
    %v3908 = vadd.f32 %v3483, %v3794
    %v3909 = vadd.f32 %v3484, %v3799
    %v3910 = vadd.f32 %v3485, %v3804
    %v3911 = vadd.f32 %v3486, %v3809
    %v3912 = vadd.f32 %v3487, %v3814
    %v3913 = vadd.f32 %v3488, %v3819
    %v3914 = vadd.f32 %v3489, %v3824
    %v3915 = vadd.f32 %v3490, %v3829
    %v3916 = vadd.f32 %v3491, %v3834
    %v3917 = vadd.f32 %v3492, %v3839
    %v3918 = vadd.f32 %v3493, %v3844
    %v3919 = vadd.f32 %v3494, %v3849
    %v3920 = vadd.f32 %v3495, %v3854
    %v3921 = vadd.f32 %v3496, %v3859
    %v3922 = vadd.f32 %v3497, %v3864
    %v3923 = vadd.f32 %v3498, %v3869
    %v3924 = vadd.f32 %v3499, %v3874
    %v3925 = vadd.f32 %v3500, %v3879
    %v3926 = vadd.f32 %v3501, %v3884
    %v3927 = vadd.f32 %v3502, %v3889
    %v3928 = vmax.f32 %v3892, 0.0
    %v3929 = vmax.f32 %v3893, 0.0
    %v3930 = vmax.f32 %v3894, 0.0
    %v3931 = vmax.f32 %v3895, 0.0
    %v3932 = vmax.f32 %v3896, 0.0
    %v3933 = vmax.f32 %v3897, 0.0
    %v3934 = vmax.f32 %v3898, 0.0
    %v3935 = vmax.f32 %v3899, 0.0
    %v3936 = vmax.f32 %v3900, 0.0
    %v3937 = vmax.f32 %v3901, 0.0
    %v3938 = vmax.f32 %v3902, 0.0
    %v3939 = vmax.f32 %v3903, 0.0
    %v3940 = vmax.f32 %v3904, 0.0
    %v3941 = vmax.f32 %v3905, 0.0
    %v3942 = vmax.f32 %v3906, 0.0
    %v3943 = vmax.f32 %v3907, 0.0
    %v3944 = vmax.f32 %v3908, 0.0
    %v3945 = vmax.f32 %v3909, 0.0
    %v3946 = vmax.f32 %v3910, 0.0
    %v3947 = vmax.f32 %v3911, 0.0
    %v3948 = vmax.f32 %v3912, 0.0
    %v3949 = vmax.f32 %v3913, 0.0
    %v3950 = vmax.f32 %v3914, 0.0
    %v3951 = vmax.f32 %v3915, 0.0
    %v3952 = vmax.f32 %v3916, 0.0
    %v3953 = vmax.f32 %v3917, 0.0
    %v3954 = vmax.f32 %v3918, 0.0
    %v3955 = vmax.f32 %v3919, 0.0
    %v3956 = vmax.f32 %v3920, 0.0
    %v3957 = vmax.f32 %v3921, 0.0
    %v3958 = vmax.f32 %v3922, 0.0
    %v3959 = vmax.f32 %v3923, 0.0
    %v3960 = vmax.f32 %v3924, 0.0
    %v3961 = vmax.f32 %v3925, 0.0
    %v3962 = vmax.f32 %v3926, 0.0
    %v3963 = vmax.f32 %v3927, 0.0
    %v3965 = vsel %vm138, %v75, 0
    %v3968 = vsel %vm138, %v3928, 0
    %v3971 = vsel %vm138, %v3929, 0
    %v3974 = vsel %vm138, %v3930, 0
    %v3977 = vsel %vm138, %v3931, 0
    %v3980 = vsel %vm138, %v3932, 0
    %v3983 = vsel %vm138, %v3933, 0
    %v3986 = vsel %vm138, %v3934, 0
    %v3989 = vsel %vm138, %v3935, 0
    %v3992 = vsel %vm138, %v3936, 0
    %v3995 = vsel %vm138, %v3937, 0
    %v3998 = vsel %vm138, %v3938, 0
    %v4001 = vsel %vm138, %v3939, 0
    %v4004 = vsel %vm138, %v3940, 0
    %v4007 = vsel %vm138, %v3941, 0
    %v4010 = vsel %vm138, %v3942, 0
    %v4013 = vsel %vm138, %v3943, 0
    %v4016 = vsel %vm138, %v3944, 0
    %v4019 = vsel %vm138, %v3945, 0
    %v4022 = vsel %vm138, %v3946, 0
    %v4025 = vsel %vm138, %v3947, 0
    %v4028 = vsel %vm138, %v3948, 0
    %v4031 = vsel %vm138, %v3949, 0
    %v4034 = vsel %vm138, %v3950, 0
    %v4037 = vsel %vm138, %v3951, 0
    %v4040 = vsel %vm138, %v3952, 0
    %v4043 = vsel %vm138, %v3953, 0
    %v4046 = vsel %vm138, %v3954, 0
    %v4049 = vsel %vm138, %v3955, 0
    %v4052 = vsel %vm138, %v3956, 0
    %v4055 = vsel %vm138, %v3957, 0
    %v4058 = vsel %vm138, %v3958, 0
    %v4061 = vsel %vm138, %v3959, 0
    %v4064 = vsel %vm138, %v3960, 0
    %v4067 = vsel %vm138, %v3961, 0
    %v4070 = vsel %vm138, %v3962, 0
    %v4073 = vsel %vm138, %v3963, 0
    %4075 = vmatprep.subr.mxu0 0.0
    %4076 = vmatpush1.xpose.msra.mxu0 %v4013
    %4077 = vmatprep.subr.mxu0 0.0
    %4078 = vmatpush1.xpose.msra.mxu0 %v4010
    %4079 = vmatprep.subr.mxu0 0.0
    %4080 = vmatpush1.xpose.msra.mxu0 %v4007
    %4081 = vmatprep.subr.mxu0 0.0
    %4082 = vmatpush1.xpose.msra.mxu0 %v4004
    %4083 = vmatprep.subr.mxu0 0.0
    %4084 = vmatpush1.xpose.msra.mxu0 %v4001
    %4085 = vmatprep.subr.mxu0 0.0
    %4086 = vmatpush1.xpose.msra.mxu0 %v3998
    %4087 = vmatprep.subr.mxu0 0.0
    %4088 = vmatpush1.xpose.msra.mxu0 %v3995
    %4089 = vmatprep.subr.mxu0 0.0
    %4090 = vmatpush1.xpose.msra.mxu0 %v3992
    %4091 = vmatprep.subr.mxu0 0.0
    %4092 = vmatpush1.xpose.msra.mxu0 %v3989
    %4093 = vmatprep.subr.mxu0 0.0
    %4094 = vmatpush1.xpose.msra.mxu0 %v3986
    %4095 = vmatprep.subr.mxu0 0.0
    %4096 = vmatpush1.xpose.msra.mxu0 %v3983
    %4097 = vmatprep.subr.mxu0 0.0
    %4098 = vmatpush1.xpose.msra.mxu0 %v3980
    %4099 = vmatprep.subr.mxu0 0.0
    %4100 = vmatpush1.xpose.msra.mxu0 %v3977
    %4101 = vmatprep.subr.mxu0 0.0
    %4102 = vmatpush1.xpose.msra.mxu0 %v3974
    %4103 = vmatprep.subr.mxu0 0.0
    %4104 = vmatpush1.xpose.msra.mxu0 %v3971
    %4105 = vmatprep.subr.mxu0 0.0
    %4106 = vmatpush1.xpose.msra.mxu0 %v3968
    %4107 = vmatprep.subr.mxu0 0.0
    %4108 = vmatpush2.xpose.msra.mxu0 %v4061
    %4109 = vmatprep.subr.mxu0 0.0
    %4110 = vmatpush2.xpose.msra.mxu0 %v4058
    %4111 = vmatprep.subr.mxu0 0.0
    %4112 = vmatpush2.xpose.msra.mxu0 %v4055
    %4113 = vmatprep.subr.mxu0 0.0
    %4114 = vmatpush2.xpose.msra.mxu0 %v4052
    %4115 = vmatprep.subr.mxu0 0.0
    %4116 = vmatpush2.xpose.msra.mxu0 %v4049
    %4117 = vmatprep.subr.mxu0 0.0
    %4118 = vmatpush2.xpose.msra.mxu0 %v4046
    %4119 = vmatprep.subr.mxu0 0.0
    %4120 = vmatpush2.xpose.msra.mxu0 %v4043
    %4121 = vmatprep.subr.mxu0 0.0
    %4122 = vmatpush2.xpose.msra.mxu0 %v4040
    %4123 = vmatprep.subr.mxu0 0.0
    %4124 = vmatpush2.xpose.msra.mxu0 %v4037
    %4125 = vmatprep.subr.mxu0 0.0
    %4126 = vmatpush2.xpose.msra.mxu0 %v4034
    %4127 = vmatprep.subr.mxu0 0.0
    %4128 = vmatpush2.xpose.msra.mxu0 %v4031
    %4129 = vmatprep.subr.mxu0 0.0
    %4130 = vmatpush2.xpose.msra.mxu0 %v4028
    %4131 = vmatprep.subr.mxu0 0.0
    %4132 = vmatpush2.xpose.msra.mxu0 %v4025
    %4133 = vmatprep.subr.mxu0 0.0
    %4134 = vmatpush2.xpose.msra.mxu0 %v4022
    %4135 = vmatprep.subr.mxu0 0.0
    %4136 = vmatpush2.xpose.msra.mxu0 %v4019
    %4137 = vmatprep.subr.mxu0 0.0
    %4138 = vmatpush2.xpose.msra.mxu0 %v4016
    %4139 = vmatprep.mubr.f32.mxu0 0.0
    %4140 = vmatmul.mubr.f32.gmra.mxu0 %v3965
    %v4141 = vpop.f32.mrf.mxu0
    %v4142 = vadd.f32 %v99, %v4141
    %v4143 = vpop.f32.mrf.mxu0
    %v4144 = vadd.f32 %v100, %v4143
    %4145 = vdwg.mxu0
    %4146 = vmatprep.subr.mxu0 0.0
    %4147 = vmatpush1.xpose.msra.mxu0 0.0
    %4148 = vmatprep.subr.mxu0 0.0
    %4149 = vmatpush1.xpose.msra.mxu0 0.0
    %4150 = vmatprep.subr.mxu0 0.0
    %4151 = vmatpush1.xpose.msra.mxu0 0.0
    %4152 = vmatprep.subr.mxu0 0.0
    %4153 = vmatpush1.xpose.msra.mxu0 0.0
    %4154 = vmatprep.subr.mxu0 0.0
    %4155 = vmatpush1.xpose.msra.mxu0 0.0
    %4156 = vmatprep.subr.mxu0 0.0
    %4157 = vmatpush1.xpose.msra.mxu0 0.0
    %4158 = vmatprep.subr.mxu0 0.0
    %4159 = vmatpush1.xpose.msra.mxu0 0.0
    %4160 = vmatprep.subr.mxu0 0.0
    %4161 = vmatpush1.xpose.msra.mxu0 0.0
    %4162 = vmatprep.subr.mxu0 0.0
    %4163 = vmatpush1.xpose.msra.mxu0 0.0
    %4164 = vmatprep.subr.mxu0 0.0
    %4165 = vmatpush1.xpose.msra.mxu0 0.0
    %4166 = vmatprep.subr.mxu0 0.0
    %4167 = vmatpush1.xpose.msra.mxu0 0.0
    %4168 = vmatprep.subr.mxu0 0.0
    %4169 = vmatpush1.xpose.msra.mxu0 0.0
    %4170 = vmatprep.subr.mxu0 0.0
    %4171 = vmatpush1.xpose.msra.mxu0 %v4073
    %4172 = vmatprep.subr.mxu0 0.0
    %4173 = vmatpush1.xpose.msra.mxu0 %v4070
    %4174 = vmatprep.subr.mxu0 0.0
    %4175 = vmatpush1.xpose.msra.mxu0 %v4067
    %4176 = vmatprep.subr.mxu0 0.0
    %4177 = vmatpush1.xpose.msra.mxu0 %v4064
    %4178 = vmatprep.subr.mxu0 0.0
    %4179 = vmatpush2.xpose.msra.mxu0 0.0
    %4180 = vmatprep.subr.mxu0 0.0
    %4181 = vmatpush2.xpose.msra.mxu0 0.0
    %4182 = vmatprep.subr.mxu0 0.0
    %4183 = vmatpush2.xpose.msra.mxu0 0.0
    %4184 = vmatprep.subr.mxu0 0.0
    %4185 = vmatpush2.xpose.msra.mxu0 0.0
    %4186 = vmatprep.subr.mxu0 0.0
    %4187 = vmatpush2.xpose.msra.mxu0 0.0
    %4188 = vmatprep.subr.mxu0 0.0
    %4189 = vmatpush2.xpose.msra.mxu0 0.0
    %4190 = vmatprep.subr.mxu0 0.0
    %4191 = vmatpush2.xpose.msra.mxu0 0.0
    %4192 = vmatprep.subr.mxu0 0.0
    %4193 = vmatpush2.xpose.msra.mxu0 0.0
    %4194 = vmatprep.subr.mxu0 0.0
    %4195 = vmatpush2.xpose.msra.mxu0 0.0
    %4196 = vmatprep.subr.mxu0 0.0
    %4197 = vmatpush2.xpose.msra.mxu0 0.0
    %4198 = vmatprep.subr.mxu0 0.0
    %4199 = vmatpush2.xpose.msra.mxu0 0.0
    %4200 = vmatprep.subr.mxu0 0.0
    %4201 = vmatpush2.xpose.msra.mxu0 0.0
    %4202 = vmatprep.subr.mxu0 0.0
    %4203 = vmatpush2.xpose.msra.mxu0 0.0
    %4204 = vmatprep.subr.mxu0 0.0
    %4205 = vmatpush2.xpose.msra.mxu0 0.0
    %4206 = vmatprep.subr.mxu0 0.0
    %4207 = vmatpush2.xpose.msra.mxu0 0.0
    %4208 = vmatprep.subr.mxu0 0.0
    %4209 = vmatpush2.xpose.msra.mxu0 0.0
    %4210 = vmatprep.mubr.f32.mxu0 0.0
    %4211 = vmatmul.mubr.f32.gmra.mxu0 %v3965
    %v4212 = vpop.f32.mrf.mxu0
    %v4213 = vadd.f32 %v101, %v4212
    %v4214 = vpop.f32.mrf.mxu0
    %4215 = vdwg.mxu0
    %v4216 = vsel %vm138, %v4213, -inf
    %v4217 = vmax.f32 %v4142, %v4144
    %v4218 = vmax.f32 %v4217, %v4216
    %4219 = vmax.xlane.f32.xlu0 %v4218
    %v4220 = vpop.xlane.xlu0 %4219
    %v4221 = vsub.f32 %v4142, %v4220
    %v4222 = vsub.f32 %v4144, %v4220
    %v4223 = vsub.f32 %v4213, %v4220
    %v4224 = vmul.f32 %v4221, 1.442695
    %v4225 = vpow.pop %v4224
    %v4226 = vmul.f32 %v4222, 1.442695
    %v4227 = vpow.pop %v4226
    %v4228 = vmul.f32 %v4223, 1.442695
    %v4229 = vpow.pop %v4228
    %v4230 = vadd.f32 %v4225, %v4227
    %v4231 = vsel %vm138, %v4229, 0.0
    %v4232 = vadd.f32 %v4230, %v4231
    %4233 = vadd.xlane.f32.xlu0 %v4232
    %v4234 = vpop.xlane.xlu0 %4233
    %v4235 = vld [vmem:[%s0 + $0x24] sm:$0xff]
    %v4236 = vld [vmem:[%s0 + $0x2c] sm:$0xff]
    %v4237 = vld [vmem:[%s0 + $0x34] sm:$0xff]
    %v4238 = vld [vmem:[%s0 + $0x3c] sm:$0xff]
    %v4239 = vld [vmem:[%s0 + $0x44] sm:$0xff]
    %v4240 = vld [vmem:[%s0 + $0x4c] sm:$0xff]
    %v4241 = vld [vmem:[%s0 + $0x54] sm:$0xff]
    %v4242 = vld [vmem:[%s0 + $0x5c] sm:$0xff]
    %v4243 = vld [vmem:[%s0 + $0x64] sm:$0xff]
    %v4244 = vld [vmem:[%s0 + $0x6c] sm:$0xff]
    %v4245 = vld [vmem:[%s0 + $0x74] sm:$0xff]
    %v4246 = vld [vmem:[%s0 + $0x7c] sm:$0xff]
    %v4247 = vld [vmem:[%s0 + $0x84] sm:$0xff]
    %v4248 = vld [vmem:[%s0 + $0x8c] sm:$0xff]
    %v4249 = vld [vmem:[%s0 + $0x94] sm:$0xff]
    %v4250 = vld [vmem:[%s0 + $0x9c] sm:$0xff]
    %v4251 = vld [vmem:[%s0 + $0xa4] sm:$0xff]
    %v4252 = vld [vmem:[%s0 + $0xac] sm:$0xff]
    %v4253 = vld [vmem:[%s0 + $0xb4] sm:$0xff]
    %v4254 = vld [vmem:[%s0 + $0xbc] sm:$0xff]
    %v4255 = vld [vmem:[%s0 + $0xc4] sm:$0xff]
    %v4256 = vld [vmem:[%s0 + $0xcc] sm:$0xff]
    %v4257 = vld [vmem:[%s0 + $0xd4] sm:$0xff]
    %v4258 = vld [vmem:[%s0 + $0xdc] sm:$0xff]
    %v4259 = vld [vmem:[%s0 + $0xe4] sm:$0xff]
    %v4260 = vld [vmem:[%s0 + $0xec] sm:$0xff]
    %v4261 = vld [vmem:[%s0 + $0xf4] sm:$0xff]
    %v4262 = vld [vmem:[%s0 + $0xfc] sm:$0xff]
    %v4263 = vld [vmem:[%s0 + $0x104] sm:$0xff]
    %v4264 = vld [vmem:[%s0 + $0x10c] sm:$0xff]
    %v4265 = vld [vmem:[%s0 + $0x114] sm:$0xff]
    %v4266 = vld [vmem:[%s0 + $0x11c] sm:$0xff]
    %v4267 = vld [vmem:[%s0 + $0x124] sm:$0xff]
    %v4268 = vld [vmem:[%s0 + $0x12c] sm:$0xff]
    %v4269 = vld [vmem:[%s0 + $0x134] sm:$0xff]
    %v4270 = vld [vmem:[%s0 + $0x13c] sm:$0xff]
    %v4272 = vsel %vm138, %v4229, 0
    %4274 = vmatprep.subr.mxu0 0.0
    %4275 = vmatpush1.msra.mxu0 %v4250
    %4276 = vmatprep.subr.mxu0 0.0
    %4277 = vmatpush1.msra.mxu0 %v4249
    %4278 = vmatprep.subr.mxu0 0.0
    %4279 = vmatpush1.msra.mxu0 %v4248
    %4280 = vmatprep.subr.mxu0 0.0
    %4281 = vmatpush1.msra.mxu0 %v4247
    %4282 = vmatprep.subr.mxu0 0.0
    %4283 = vmatpush1.msra.mxu0 %v4246
    %4284 = vmatprep.subr.mxu0 0.0
    %4285 = vmatpush1.msra.mxu0 %v4245
    %4286 = vmatprep.subr.mxu0 0.0
    %4287 = vmatpush1.msra.mxu0 %v4244
    %4288 = vmatprep.subr.mxu0 0.0
    %4289 = vmatpush1.msra.mxu0 %v4243
    %4290 = vmatprep.subr.mxu0 0.0
    %4291 = vmatpush1.msra.mxu0 %v4242
    %4292 = vmatprep.subr.mxu0 0.0
    %4293 = vmatpush1.msra.mxu0 %v4241
    %4294 = vmatprep.subr.mxu0 0.0
    %4295 = vmatpush1.msra.mxu0 %v4240
    %4296 = vmatprep.subr.mxu0 0.0
    %4297 = vmatpush1.msra.mxu0 %v4239
    %4298 = vmatprep.subr.mxu0 0.0
    %4299 = vmatpush1.msra.mxu0 %v4238
    %4300 = vmatprep.subr.mxu0 0.0
    %4301 = vmatpush1.msra.mxu0 %v4237
    %4302 = vmatprep.subr.mxu0 0.0
    %4303 = vmatpush1.msra.mxu0 %v4236
    %4304 = vmatprep.subr.mxu0 0.0
    %4305 = vmatpush1.msra.mxu0 %v4235
    %4306 = vmatprep.subr.mxu0 0.0
    %4307 = vmatpush2.msra.mxu0 %v4266
    %4308 = vmatprep.subr.mxu0 0.0
    %4309 = vmatpush2.msra.mxu0 %v4265
    %4310 = vmatprep.subr.mxu0 0.0
    %4311 = vmatpush2.msra.mxu0 %v4264
    %4312 = vmatprep.subr.mxu0 0.0
    %4313 = vmatpush2.msra.mxu0 %v4263
    %4314 = vmatprep.subr.mxu0 0.0
    %4315 = vmatpush2.msra.mxu0 %v4262
    %4316 = vmatprep.subr.mxu0 0.0
    %4317 = vmatpush2.msra.mxu0 %v4261
    %4318 = vmatprep.subr.mxu0 0.0
    %4319 = vmatpush2.msra.mxu0 %v4260
    %4320 = vmatprep.subr.mxu0 0.0
    %4321 = vmatpush2.msra.mxu0 %v4259
    %4322 = vmatprep.subr.mxu0 0.0
    %4323 = vmatpush2.msra.mxu0 %v4258
    %4324 = vmatprep.subr.mxu0 0.0
    %4325 = vmatpush2.msra.mxu0 %v4257
    %4326 = vmatprep.subr.mxu0 0.0
    %4327 = vmatpush2.msra.mxu0 %v4256
    %4328 = vmatprep.subr.mxu0 0.0
    %4329 = vmatpush2.msra.mxu0 %v4255
    %4330 = vmatprep.subr.mxu0 0.0
    %4331 = vmatpush2.msra.mxu0 %v4254
    %4332 = vmatprep.subr.mxu0 0.0
    %4333 = vmatpush2.msra.mxu0 %v4253
    %4334 = vmatprep.subr.mxu0 0.0
    %4335 = vmatpush2.msra.mxu0 %v4252
    %4336 = vmatprep.subr.mxu0 0.0
    %4337 = vmatpush2.msra.mxu0 %v4251
    %4338 = vmatprep.mubr.f32.mxu0 %v4227
    %4339 = vmatmul.mubr.f32.gmra.mxu0 %v4225
    %v4340 = vpop.f32.mrf.mxu0
    %v4341 = vadd.f32 0.0, %v4340
    %v4342 = vpop.f32.mrf.mxu0
    %4343 = vdwg.mxu0
    %4344 = vmatprep.subr.mxu0 0.0
    %4345 = vmatpush1.msra.mxu0 0.0
    %4346 = vmatprep.subr.mxu0 0.0
    %4347 = vmatpush1.msra.mxu0 0.0
    %4348 = vmatprep.subr.mxu0 0.0
    %4349 = vmatpush1.msra.mxu0 0.0
    %4350 = vmatprep.subr.mxu0 0.0
    %4351 = vmatpush1.msra.mxu0 0.0
    %4352 = vmatprep.subr.mxu0 0.0
    %4353 = vmatpush1.msra.mxu0 0.0
    %4354 = vmatprep.subr.mxu0 0.0
    %4355 = vmatpush1.msra.mxu0 0.0
    %4356 = vmatprep.subr.mxu0 0.0
    %4357 = vmatpush1.msra.mxu0 0.0
    %4358 = vmatprep.subr.mxu0 0.0
    %4359 = vmatpush1.msra.mxu0 0.0
    %4360 = vmatprep.subr.mxu0 0.0
    %4361 = vmatpush1.msra.mxu0 0.0
    %4362 = vmatprep.subr.mxu0 0.0
    %4363 = vmatpush1.msra.mxu0 0.0
    %4364 = vmatprep.subr.mxu0 0.0
    %4365 = vmatpush1.msra.mxu0 0.0
    %4366 = vmatprep.subr.mxu0 0.0
    %4367 = vmatpush1.msra.mxu0 0.0
    %4368 = vmatprep.subr.mxu0 0.0
    %4369 = vmatpush1.msra.mxu0 %v4270
    %4370 = vmatprep.subr.mxu0 0.0
    %4371 = vmatpush1.msra.mxu0 %v4269
    %4372 = vmatprep.subr.mxu0 0.0
    %4373 = vmatpush1.msra.mxu0 %v4268
    %4374 = vmatprep.subr.mxu0 0.0
    %4375 = vmatpush1.msra.mxu0 %v4267
    %4376 = vmatprep.subr.mxu0 0.0
    %4377 = vmatpush2.msra.mxu0 0.0
    %4378 = vmatprep.subr.mxu0 0.0
    %4379 = vmatpush2.msra.mxu0 0.0
    %4380 = vmatprep.subr.mxu0 0.0
    %4381 = vmatpush2.msra.mxu0 0.0
    %4382 = vmatprep.subr.mxu0 0.0
    %4383 = vmatpush2.msra.mxu0 0.0
    %4384 = vmatprep.subr.mxu0 0.0
    %4385 = vmatpush2.msra.mxu0 0.0
    %4386 = vmatprep.subr.mxu0 0.0
    %4387 = vmatpush2.msra.mxu0 0.0
    %4388 = vmatprep.subr.mxu0 0.0
    %4389 = vmatpush2.msra.mxu0 0.0
    %4390 = vmatprep.subr.mxu0 0.0
    %4391 = vmatpush2.msra.mxu0 0.0
    %4392 = vmatprep.subr.mxu0 0.0
    %4393 = vmatpush2.msra.mxu0 0.0
    %4394 = vmatprep.subr.mxu0 0.0
    %4395 = vmatpush2.msra.mxu0 0.0
    %4396 = vmatprep.subr.mxu0 0.0
    %4397 = vmatpush2.msra.mxu0 0.0
    %4398 = vmatprep.subr.mxu0 0.0
    %4399 = vmatpush2.msra.mxu0 0.0
    %4400 = vmatprep.subr.mxu0 0.0
    %4401 = vmatpush2.msra.mxu0 0.0
    %4402 = vmatprep.subr.mxu0 0.0
    %4403 = vmatpush2.msra.mxu0 0.0
    %4404 = vmatprep.subr.mxu0 0.0
    %4405 = vmatpush2.msra.mxu0 0.0
    %4406 = vmatprep.subr.mxu0 0.0
    %4407 = vmatpush2.msra.mxu0 0.0
    %4408 = vmatprep.mubr.f32.mxu0 0.0
    %4409 = vmatmul.mubr.f32.gmra.mxu0 %v4272
    %v4410 = vpop.f32.mrf.mxu0
    %v4411 = vadd.f32 %v4341, %v4410
    %v4412 = vpop.f32.mrf.mxu0
    %4413 = vdwg.mxu0
    %v4414 = vrcp.pop %v4234
    %v4415 = vmul.f32 %v4411, %v4414
    %4416 = vst.msk [vmem:[#allocation2] sm:$0xff] %vm138, %v4415
    %s4417 = scalar_lea.vmem %s0, 360
    %v4418 = vld [vmem:[%s4417 + $0x11] sm:$0xff]
    %v4419 = vld [vmem:[%s4417 + $0x19] sm:$0xff]
    %v4420 = vld [vmem:[%s4417 + $0x21] sm:$0xff]
    %v4421 = vld [vmem:[%s4417 + $0x29] sm:$0xff]
    %v4422 = vld [vmem:[%s4417 + $0x31] sm:$0xff]
    %v4423 = vld [vmem:[%s4417 + $0x39] sm:$0xff]
    %v4424 = vld [vmem:[%s4417 + $0x41] sm:$0xff]
    %v4425 = vld [vmem:[%s4417 + $0x49] sm:$0xff]
    %v4426 = vld [vmem:[%s4417 + $0x51] sm:$0xff]
    %v4427 = vld [vmem:[%s4417 + $0x59] sm:$0xff]
    %v4428 = vld [vmem:[%s4417 + $0x61] sm:$0xff]
    %v4429 = vld [vmem:[%s4417 + $0x69] sm:$0xff]
    %v4430 = vld [vmem:[%s4417 + $0x71] sm:$0xff]
    %v4431 = vld [vmem:[%s4417 + $0x79] sm:$0xff]
    %v4432 = vld [vmem:[%s4417 + $0x81] sm:$0xff]
    %v4433 = vld [vmem:[%s4417 + $0x89] sm:$0xff]
    %v4434 = vld [vmem:[%s4417 + $0x91] sm:$0xff]
    %v4435 = vld [vmem:[%s4417 + $0x99] sm:$0xff]
    %v4436 = vld [vmem:[%s4417 + $0xa1] sm:$0xff]
    %v4437 = vld [vmem:[%s4417 + $0xa9] sm:$0xff]
    %v4438 = vld [vmem:[%s4417 + $0xb1] sm:$0xff]
    %v4439 = vld [vmem:[%s4417 + $0xb9] sm:$0xff]
    %v4440 = vld [vmem:[%s4417 + $0xc1] sm:$0xff]
    %v4441 = vld [vmem:[%s4417 + $0xc9] sm:$0xff]
    %v4442 = vld [vmem:[%s4417 + $0xd1] sm:$0xff]
    %v4443 = vld [vmem:[%s4417 + $0xd9] sm:$0xff]
    %v4444 = vld [vmem:[%s4417 + $0xe1] sm:$0xff]
    %v4445 = vld [vmem:[%s4417 + $0xe9] sm:$0xff]
    %v4446 = vld [vmem:[%s4417 + $0xf1] sm:$0xff]
    %v4447 = vld [vmem:[%s4417 + $0xf9] sm:$0xff]
    %v4448 = vld [vmem:[%s4417 + $0x101] sm:$0xff]
    %v4449 = vld [vmem:[%s4417 + $0x109] sm:$0xff]
    %v4450 = vld [vmem:[%s4417 + $0x111] sm:$0xff]
    %v4451 = vld [vmem:[%s4417 + $0x119] sm:$0xff]
    %v4452 = vld [vmem:[%s4417 + $0x121] sm:$0xff]
    %v4453 = vld [vmem:[%s4417 + $0x129] sm:$0xff]
    %v4455 = vsel %vm138, %v4418, 0
    %v4458 = vsel %vm138, %v4419, 0
    %v4461 = vsel %vm138, %v4420, 0
    %v4464 = vsel %vm138, %v4421, 0
    %v4467 = vsel %vm138, %v4422, 0
    %v4470 = vsel %vm138, %v4423, 0
    %v4473 = vsel %vm138, %v4424, 0
    %v4476 = vsel %vm138, %v4425, 0
    %v4479 = vsel %vm138, %v4426, 0
    %v4482 = vsel %vm138, %v4427, 0
    %v4485 = vsel %vm138, %v4428, 0
    %v4488 = vsel %vm138, %v4429, 0
    %v4491 = vsel %vm138, %v4430, 0
    %v4494 = vsel %vm138, %v4431, 0
    %v4497 = vsel %vm138, %v4432, 0
    %v4500 = vsel %vm138, %v4433, 0
    %v4503 = vsel %vm138, %v4434, 0
    %v4506 = vsel %vm138, %v4435, 0
    %v4509 = vsel %vm138, %v4436, 0
    %v4512 = vsel %vm138, %v4437, 0
    %v4515 = vsel %vm138, %v4438, 0
    %v4518 = vsel %vm138, %v4439, 0
    %v4521 = vsel %vm138, %v4440, 0
    %v4524 = vsel %vm138, %v4441, 0
    %v4527 = vsel %vm138, %v4442, 0
    %v4530 = vsel %vm138, %v4443, 0
    %v4533 = vsel %vm138, %v4444, 0
    %v4536 = vsel %vm138, %v4445, 0
    %v4539 = vsel %vm138, %v4446, 0
    %v4542 = vsel %vm138, %v4447, 0
    %v4545 = vsel %vm138, %v4448, 0
    %v4548 = vsel %vm138, %v4449, 0
    %v4551 = vsel %vm138, %v4450, 0
    %v4554 = vsel %vm138, %v4451, 0
    %v4557 = vsel %vm138, %v4452, 0
    %v4560 = vsel %vm138, %v4453, 0
    %4562 = vmatprep.subr.mxu0 0.0
    %4563 = vmatpush1.msra.mxu0 0.0
    %4564 = vmatprep.subr.mxu0 0.0
    %4565 = vmatpush1.msra.mxu0 0.0
    %4566 = vmatprep.subr.mxu0 0.0
    %4567 = vmatpush1.msra.mxu0 0.0
    %4568 = vmatprep.subr.mxu0 0.0
    %4569 = vmatpush1.msra.mxu0 0.0
    %4570 = vmatprep.subr.mxu0 0.0
    %4571 = vmatpush1.msra.mxu0 0.0
    %4572 = vmatprep.subr.mxu0 0.0
    %4573 = vmatpush1.msra.mxu0 0.0
    %4574 = vmatprep.subr.mxu0 0.0
    %4575 = vmatpush1.msra.mxu0 0.0
    %4576 = vmatprep.subr.mxu0 0.0
    %4577 = vmatpush1.msra.mxu0 0.0
    %4578 = vmatprep.subr.mxu0 0.0
    %4579 = vmatpush1.msra.mxu0 0.0
    %4580 = vmatprep.subr.mxu0 0.0
    %4581 = vmatpush1.msra.mxu0 0.0
    %4582 = vmatprep.subr.mxu0 0.0
    %4583 = vmatpush1.msra.mxu0 0.0
    %4584 = vmatprep.subr.mxu0 0.0
    %4585 = vmatpush1.msra.mxu0 0.0
    %4586 = vmatprep.subr.mxu0 0.0
    %4587 = vmatpush1.msra.mxu0 %v27
    %4588 = vmatprep.subr.mxu0 0.0
    %4589 = vmatpush1.msra.mxu0 %v26
    %4590 = vmatprep.subr.mxu0 0.0
    %4591 = vmatpush1.msra.mxu0 %v25
    %4592 = vmatprep.subr.mxu0 0.0
    %4593 = vmatpush1.msra.mxu0 %v24
    %4594 = vmatprep.subr.mxu0 0.0
    %4595 = vmatpush2.msra.mxu0 0.0
    %4596 = vmatprep.subr.mxu0 0.0
    %4597 = vmatpush2.msra.mxu0 0.0
    %4598 = vmatprep.subr.mxu0 0.0
    %4599 = vmatpush2.msra.mxu0 0.0
    %4600 = vmatprep.subr.mxu0 0.0
    %4601 = vmatpush2.msra.mxu0 0.0
    %4602 = vmatprep.subr.mxu0 0.0
    %4603 = vmatpush2.msra.mxu0 0.0
    %4604 = vmatprep.subr.mxu0 0.0
    %4605 = vmatpush2.msra.mxu0 0.0
    %4606 = vmatprep.subr.mxu0 0.0
    %4607 = vmatpush2.msra.mxu0 0.0
    %4608 = vmatprep.subr.mxu0 0.0
    %4609 = vmatpush2.msra.mxu0 0.0
    %4610 = vmatprep.subr.mxu0 0.0
    %4611 = vmatpush2.msra.mxu0 0.0
    %4612 = vmatprep.subr.mxu0 0.0
    %4613 = vmatpush2.msra.mxu0 0.0
    %4614 = vmatprep.subr.mxu0 0.0
    %4615 = vmatpush2.msra.mxu0 0.0
    %4616 = vmatprep.subr.mxu0 0.0
    %4617 = vmatpush2.msra.mxu0 0.0
    %4618 = vmatprep.subr.mxu0 0.0
    %4619 = vmatpush2.msra.mxu0 0.0
    %4620 = vmatprep.subr.mxu0 0.0
    %4621 = vmatpush2.msra.mxu0 0.0
    %4622 = vmatprep.subr.mxu0 0.0
    %4623 = vmatpush2.msra.mxu0 0.0
    %4624 = vmatprep.subr.mxu0 0.0
    %4625 = vmatpush2.msra.mxu0 0.0
    %4626 = vmatprep.mubr.f32.mxu0 0.0
    %4627 = vmatmul.mubr.f32.gmra.mxu0 %v4455
    %v4628 = vpop.f32.mrf.mxu0
    %v4629 = vadd.f32 0.0, %v4628
    %v4630 = vpop.f32.mrf.mxu0
    %4631 = vmatprep.mubr.f32.mxu0 0.0
    %4632 = vmatmul.mubr.f32.gmra.mxu0 %v4458
    %v4633 = vpop.f32.mrf.mxu0
    %v4634 = vadd.f32 0.0, %v4633
    %v4635 = vpop.f32.mrf.mxu0
    %4636 = vmatprep.mubr.f32.mxu0 0.0
    %4637 = vmatmul.mubr.f32.gmra.mxu0 %v4461
    %v4638 = vpop.f32.mrf.mxu0
    %v4639 = vadd.f32 0.0, %v4638
    %v4640 = vpop.f32.mrf.mxu0
    %4641 = vmatprep.mubr.f32.mxu0 0.0
    %4642 = vmatmul.mubr.f32.gmra.mxu0 %v4464
    %v4643 = vpop.f32.mrf.mxu0
    %v4644 = vadd.f32 0.0, %v4643
    %v4645 = vpop.f32.mrf.mxu0
    %4646 = vmatprep.mubr.f32.mxu0 0.0
    %4647 = vmatmul.mubr.f32.gmra.mxu0 %v4467
    %v4648 = vpop.f32.mrf.mxu0
    %v4649 = vadd.f32 0.0, %v4648
    %v4650 = vpop.f32.mrf.mxu0
    %4651 = vmatprep.mubr.f32.mxu0 0.0
    %4652 = vmatmul.mubr.f32.gmra.mxu0 %v4470
    %v4653 = vpop.f32.mrf.mxu0
    %v4654 = vadd.f32 0.0, %v4653
    %v4655 = vpop.f32.mrf.mxu0
    %4656 = vmatprep.mubr.f32.mxu0 0.0
    %4657 = vmatmul.mubr.f32.gmra.mxu0 %v4473
    %v4658 = vpop.f32.mrf.mxu0
    %v4659 = vadd.f32 0.0, %v4658
    %v4660 = vpop.f32.mrf.mxu0
    %4661 = vmatprep.mubr.f32.mxu0 0.0
    %4662 = vmatmul.mubr.f32.gmra.mxu0 %v4476
    %v4663 = vpop.f32.mrf.mxu0
    %v4664 = vadd.f32 0.0, %v4663
    %v4665 = vpop.f32.mrf.mxu0
    %4666 = vmatprep.mubr.f32.mxu0 0.0
    %4667 = vmatmul.mubr.f32.gmra.mxu0 %v4479
    %v4668 = vpop.f32.mrf.mxu0
    %v4669 = vadd.f32 0.0, %v4668
    %v4670 = vpop.f32.mrf.mxu0
    %4671 = vmatprep.mubr.f32.mxu0 0.0
    %4672 = vmatmul.mubr.f32.gmra.mxu0 %v4482
    %v4673 = vpop.f32.mrf.mxu0
    %v4674 = vadd.f32 0.0, %v4673
    %v4675 = vpop.f32.mrf.mxu0
    %4676 = vmatprep.mubr.f32.mxu0 0.0
    %4677 = vmatmul.mubr.f32.gmra.mxu0 %v4485
    %v4678 = vpop.f32.mrf.mxu0
    %v4679 = vadd.f32 0.0, %v4678
    %v4680 = vpop.f32.mrf.mxu0
    %4681 = vmatprep.mubr.f32.mxu0 0.0
    %4682 = vmatmul.mubr.f32.gmra.mxu0 %v4488
    %v4683 = vpop.f32.mrf.mxu0
    %v4684 = vadd.f32 0.0, %v4683
    %v4685 = vpop.f32.mrf.mxu0
    %4686 = vmatprep.mubr.f32.mxu0 0.0
    %4687 = vmatmul.mubr.f32.gmra.mxu0 %v4491
    %v4688 = vpop.f32.mrf.mxu0
    %v4689 = vadd.f32 0.0, %v4688
    %v4690 = vpop.f32.mrf.mxu0
    %4691 = vmatprep.mubr.f32.mxu0 0.0
    %4692 = vmatmul.mubr.f32.gmra.mxu0 %v4494
    %v4693 = vpop.f32.mrf.mxu0
    %v4694 = vadd.f32 0.0, %v4693
    %v4695 = vpop.f32.mrf.mxu0
    %4696 = vmatprep.mubr.f32.mxu0 0.0
    %4697 = vmatmul.mubr.f32.gmra.mxu0 %v4497
    %v4698 = vpop.f32.mrf.mxu0
    %v4699 = vadd.f32 0.0, %v4698
    %v4700 = vpop.f32.mrf.mxu0
    %4701 = vmatprep.mubr.f32.mxu0 0.0
    %4702 = vmatmul.mubr.f32.gmra.mxu0 %v4500
    %v4703 = vpop.f32.mrf.mxu0
    %v4704 = vadd.f32 0.0, %v4703
    %v4705 = vpop.f32.mrf.mxu0
    %4706 = vmatprep.mubr.f32.mxu0 0.0
    %4707 = vmatmul.mubr.f32.gmra.mxu0 %v4503
    %v4708 = vpop.f32.mrf.mxu0
    %v4709 = vadd.f32 0.0, %v4708
    %v4710 = vpop.f32.mrf.mxu0
    %4711 = vmatprep.mubr.f32.mxu0 0.0
    %4712 = vmatmul.mubr.f32.gmra.mxu0 %v4506
    %v4713 = vpop.f32.mrf.mxu0
    %v4714 = vadd.f32 0.0, %v4713
    %v4715 = vpop.f32.mrf.mxu0
    %4716 = vmatprep.mubr.f32.mxu0 0.0
    %4717 = vmatmul.mubr.f32.gmra.mxu0 %v4509
    %v4718 = vpop.f32.mrf.mxu0
    %v4719 = vadd.f32 0.0, %v4718
    %v4720 = vpop.f32.mrf.mxu0
    %4721 = vmatprep.mubr.f32.mxu0 0.0
    %4722 = vmatmul.mubr.f32.gmra.mxu0 %v4512
    %v4723 = vpop.f32.mrf.mxu0
    %v4724 = vadd.f32 0.0, %v4723
    %v4725 = vpop.f32.mrf.mxu0
    %4726 = vmatprep.mubr.f32.mxu0 0.0
    %4727 = vmatmul.mubr.f32.gmra.mxu0 %v4515
    %v4728 = vpop.f32.mrf.mxu0
    %v4729 = vadd.f32 0.0, %v4728
    %v4730 = vpop.f32.mrf.mxu0
    %4731 = vmatprep.mubr.f32.mxu0 0.0
    %4732 = vmatmul.mubr.f32.gmra.mxu0 %v4518
    %v4733 = vpop.f32.mrf.mxu0
    %v4734 = vadd.f32 0.0, %v4733
    %v4735 = vpop.f32.mrf.mxu0
    %4736 = vmatprep.mubr.f32.mxu0 0.0
    %4737 = vmatmul.mubr.f32.gmra.mxu0 %v4521
    %v4738 = vpop.f32.mrf.mxu0
    %v4739 = vadd.f32 0.0, %v4738
    %v4740 = vpop.f32.mrf.mxu0
    %4741 = vmatprep.mubr.f32.mxu0 0.0
    %4742 = vmatmul.mubr.f32.gmra.mxu0 %v4524
    %v4743 = vpop.f32.mrf.mxu0
    %v4744 = vadd.f32 0.0, %v4743
    %v4745 = vpop.f32.mrf.mxu0
    %4746 = vmatprep.mubr.f32.mxu0 0.0
    %4747 = vmatmul.mubr.f32.gmra.mxu0 %v4527
    %v4748 = vpop.f32.mrf.mxu0
    %v4749 = vadd.f32 0.0, %v4748
    %v4750 = vpop.f32.mrf.mxu0
    %4751 = vmatprep.mubr.f32.mxu0 0.0
    %4752 = vmatmul.mubr.f32.gmra.mxu0 %v4530
    %v4753 = vpop.f32.mrf.mxu0
    %v4754 = vadd.f32 0.0, %v4753
    %v4755 = vpop.f32.mrf.mxu0
    %4756 = vmatprep.mubr.f32.mxu0 0.0
    %4757 = vmatmul.mubr.f32.gmra.mxu0 %v4533
    %v4758 = vpop.f32.mrf.mxu0
    %v4759 = vadd.f32 0.0, %v4758
    %v4760 = vpop.f32.mrf.mxu0
    %4761 = vmatprep.mubr.f32.mxu0 0.0
    %4762 = vmatmul.mubr.f32.gmra.mxu0 %v4536
    %v4763 = vpop.f32.mrf.mxu0
    %v4764 = vadd.f32 0.0, %v4763
    %v4765 = vpop.f32.mrf.mxu0
    %4766 = vmatprep.mubr.f32.mxu0 0.0
    %4767 = vmatmul.mubr.f32.gmra.mxu0 %v4539
    %v4768 = vpop.f32.mrf.mxu0
    %v4769 = vadd.f32 0.0, %v4768
    %v4770 = vpop.f32.mrf.mxu0
    %4771 = vmatprep.mubr.f32.mxu0 0.0
    %4772 = vmatmul.mubr.f32.gmra.mxu0 %v4542
    %v4773 = vpop.f32.mrf.mxu0
    %v4774 = vadd.f32 0.0, %v4773
    %v4775 = vpop.f32.mrf.mxu0
    %4776 = vmatprep.mubr.f32.mxu0 0.0
    %4777 = vmatmul.mubr.f32.gmra.mxu0 %v4545
    %v4778 = vpop.f32.mrf.mxu0
    %v4779 = vadd.f32 0.0, %v4778
    %v4780 = vpop.f32.mrf.mxu0
    %4781 = vmatprep.mubr.f32.mxu0 0.0
    %4782 = vmatmul.mubr.f32.gmra.mxu0 %v4548
    %v4783 = vpop.f32.mrf.mxu0
    %v4784 = vadd.f32 0.0, %v4783
    %v4785 = vpop.f32.mrf.mxu0
    %4786 = vmatprep.mubr.f32.mxu0 0.0
    %4787 = vmatmul.mubr.f32.gmra.mxu0 %v4551
    %v4788 = vpop.f32.mrf.mxu0
    %v4789 = vadd.f32 0.0, %v4788
    %v4790 = vpop.f32.mrf.mxu0
    %4791 = vmatprep.mubr.f32.mxu0 0.0
    %4792 = vmatmul.mubr.f32.gmra.mxu0 %v4554
    %v4793 = vpop.f32.mrf.mxu0
    %v4794 = vadd.f32 0.0, %v4793
    %v4795 = vpop.f32.mrf.mxu0
    %4796 = vmatprep.mubr.f32.mxu0 0.0
    %4797 = vmatmul.mubr.f32.gmra.mxu0 %v4557
    %v4798 = vpop.f32.mrf.mxu0
    %v4799 = vadd.f32 0.0, %v4798
    %v4800 = vpop.f32.mrf.mxu0
    %4801 = vmatprep.mubr.f32.mxu0 0.0
    %4802 = vmatmul.mubr.f32.gmra.mxu0 %v4560
    %v4803 = vpop.f32.mrf.mxu0
    %v4804 = vadd.f32 0.0, %v4803
    %v4805 = vpop.f32.mrf.mxu0
    %4806 = vdwg.mxu0
    %v4807 = vadd.f32 %v73, %v4629
    %v4808 = vadd.f32 %v73, %v4634
    %v4809 = vadd.f32 %v73, %v4639
    %v4810 = vadd.f32 %v73, %v4644
    %v4811 = vadd.f32 %v73, %v4649
    %v4812 = vadd.f32 %v73, %v4654
    %v4813 = vadd.f32 %v73, %v4659
    %v4814 = vadd.f32 %v73, %v4664
    %v4815 = vadd.f32 %v73, %v4669
    %v4816 = vadd.f32 %v73, %v4674
    %v4817 = vadd.f32 %v73, %v4679
    %v4818 = vadd.f32 %v73, %v4684
    %v4819 = vadd.f32 %v73, %v4689
    %v4820 = vadd.f32 %v73, %v4694
    %v4821 = vadd.f32 %v73, %v4699
    %v4822 = vadd.f32 %v73, %v4704
    %v4823 = vadd.f32 %v73, %v4709
    %v4824 = vadd.f32 %v73, %v4714
    %v4825 = vadd.f32 %v73, %v4719
    %v4826 = vadd.f32 %v73, %v4724
    %v4827 = vadd.f32 %v73, %v4729
    %v4828 = vadd.f32 %v73, %v4734
    %v4829 = vadd.f32 %v73, %v4739
    %v4830 = vadd.f32 %v73, %v4744
    %v4831 = vadd.f32 %v73, %v4749
    %v4832 = vadd.f32 %v73, %v4754
    %v4833 = vadd.f32 %v73, %v4759
    %v4834 = vadd.f32 %v73, %v4764
    %v4835 = vadd.f32 %v73, %v4769
    %v4836 = vadd.f32 %v73, %v4774
    %v4837 = vadd.f32 %v73, %v4779
    %v4838 = vadd.f32 %v73, %v4784
    %v4839 = vadd.f32 %v73, %v4789
    %v4840 = vadd.f32 %v73, %v4794
    %v4841 = vadd.f32 %v73, %v4799
    %v4842 = vadd.f32 %v73, %v4804
    %v4843 = vld [vmem:[%s4417 + $0x12] sm:$0xff]
    %v4844 = vld [vmem:[%s4417 + $0x1a] sm:$0xff]
    %v4845 = vld [vmem:[%s4417 + $0x22] sm:$0xff]
    %v4846 = vld [vmem:[%s4417 + $0x2a] sm:$0xff]
    %v4847 = vld [vmem:[%s4417 + $0x32] sm:$0xff]
    %v4848 = vld [vmem:[%s4417 + $0x3a] sm:$0xff]
    %v4849 = vld [vmem:[%s4417 + $0x42] sm:$0xff]
    %v4850 = vld [vmem:[%s4417 + $0x4a] sm:$0xff]
    %v4851 = vld [vmem:[%s4417 + $0x52] sm:$0xff]
    %v4852 = vld [vmem:[%s4417 + $0x5a] sm:$0xff]
    %v4853 = vld [vmem:[%s4417 + $0x62] sm:$0xff]
    %v4854 = vld [vmem:[%s4417 + $0x6a] sm:$0xff]
    %v4855 = vld [vmem:[%s4417 + $0x72] sm:$0xff]
    %v4856 = vld [vmem:[%s4417 + $0x7a] sm:$0xff]
    %v4857 = vld [vmem:[%s4417 + $0x82] sm:$0xff]
    %v4858 = vld [vmem:[%s4417 + $0x8a] sm:$0xff]
    %v4859 = vld [vmem:[%s4417 + $0x92] sm:$0xff]
    %v4860 = vld [vmem:[%s4417 + $0x9a] sm:$0xff]
    %v4861 = vld [vmem:[%s4417 + $0xa2] sm:$0xff]
    %v4862 = vld [vmem:[%s4417 + $0xaa] sm:$0xff]
    %v4863 = vld [vmem:[%s4417 + $0xb2] sm:$0xff]
    %v4864 = vld [vmem:[%s4417 + $0xba] sm:$0xff]
    %v4865 = vld [vmem:[%s4417 + $0xc2] sm:$0xff]
    %v4866 = vld [vmem:[%s4417 + $0xca] sm:$0xff]
    %v4867 = vld [vmem:[%s4417 + $0xd2] sm:$0xff]
    %v4868 = vld [vmem:[%s4417 + $0xda] sm:$0xff]
    %v4869 = vld [vmem:[%s4417 + $0xe2] sm:$0xff]
    %v4870 = vld [vmem:[%s4417 + $0xea] sm:$0xff]
    %v4871 = vld [vmem:[%s4417 + $0xf2] sm:$0xff]
    %v4872 = vld [vmem:[%s4417 + $0xfa] sm:$0xff]
    %v4873 = vld [vmem:[%s4417 + $0x102] sm:$0xff]
    %v4874 = vld [vmem:[%s4417 + $0x10a] sm:$0xff]
    %v4875 = vld [vmem:[%s4417 + $0x112] sm:$0xff]
    %v4876 = vld [vmem:[%s4417 + $0x11a] sm:$0xff]
    %v4877 = vld [vmem:[%s4417 + $0x122] sm:$0xff]
    %v4878 = vld [vmem:[%s4417 + $0x12a] sm:$0xff]
    %v4880 = vsel %vm138, %v4843, 0
    %v4883 = vsel %vm138, %v4844, 0
    %v4886 = vsel %vm138, %v4845, 0
    %v4889 = vsel %vm138, %v4846, 0
    %v4892 = vsel %vm138, %v4847, 0
    %v4895 = vsel %vm138, %v4848, 0
    %v4898 = vsel %vm138, %v4849, 0
    %v4901 = vsel %vm138, %v4850, 0
    %v4904 = vsel %vm138, %v4851, 0
    %v4907 = vsel %vm138, %v4852, 0
    %v4910 = vsel %vm138, %v4853, 0
    %v4913 = vsel %vm138, %v4854, 0
    %v4916 = vsel %vm138, %v4855, 0
    %v4919 = vsel %vm138, %v4856, 0
    %v4922 = vsel %vm138, %v4857, 0
    %v4925 = vsel %vm138, %v4858, 0
    %v4928 = vsel %vm138, %v4859, 0
    %v4931 = vsel %vm138, %v4860, 0
    %v4934 = vsel %vm138, %v4861, 0
    %v4937 = vsel %vm138, %v4862, 0
    %v4940 = vsel %vm138, %v4863, 0
    %v4943 = vsel %vm138, %v4864, 0
    %v4946 = vsel %vm138, %v4865, 0
    %v4949 = vsel %vm138, %v4866, 0
    %v4952 = vsel %vm138, %v4867, 0
    %v4955 = vsel %vm138, %v4868, 0
    %v4958 = vsel %vm138, %v4869, 0
    %v4961 = vsel %vm138, %v4870, 0
    %v4964 = vsel %vm138, %v4871, 0
    %v4967 = vsel %vm138, %v4872, 0
    %v4970 = vsel %vm138, %v4873, 0
    %v4973 = vsel %vm138, %v4874, 0
    %v4976 = vsel %vm138, %v4875, 0
    %v4979 = vsel %vm138, %v4876, 0
    %v4982 = vsel %vm138, %v4877, 0
    %v4985 = vsel %vm138, %v4878, 0
    %4987 = vmatprep.subr.mxu0 0.0
    %4988 = vmatpush1.msra.mxu0 0.0
    %4989 = vmatprep.subr.mxu0 0.0
    %4990 = vmatpush1.msra.mxu0 0.0
    %4991 = vmatprep.subr.mxu0 0.0
    %4992 = vmatpush1.msra.mxu0 0.0
    %4993 = vmatprep.subr.mxu0 0.0
    %4994 = vmatpush1.msra.mxu0 0.0
    %4995 = vmatprep.subr.mxu0 0.0
    %4996 = vmatpush1.msra.mxu0 0.0
    %4997 = vmatprep.subr.mxu0 0.0
    %4998 = vmatpush1.msra.mxu0 0.0
    %4999 = vmatprep.subr.mxu0 0.0
    %5000 = vmatpush1.msra.mxu0 0.0
    %5001 = vmatprep.subr.mxu0 0.0
    %5002 = vmatpush1.msra.mxu0 0.0
    %5003 = vmatprep.subr.mxu0 0.0
    %5004 = vmatpush1.msra.mxu0 0.0
    %5005 = vmatprep.subr.mxu0 0.0
    %5006 = vmatpush1.msra.mxu0 0.0
    %5007 = vmatprep.subr.mxu0 0.0
    %5008 = vmatpush1.msra.mxu0 0.0
    %5009 = vmatprep.subr.mxu0 0.0
    %5010 = vmatpush1.msra.mxu0 0.0
    %5011 = vmatprep.subr.mxu0 0.0
    %5012 = vmatpush1.msra.mxu0 %v32
    %5013 = vmatprep.subr.mxu0 0.0
    %5014 = vmatpush1.msra.mxu0 %v31
    %5015 = vmatprep.subr.mxu0 0.0
    %5016 = vmatpush1.msra.mxu0 %v30
    %5017 = vmatprep.subr.mxu0 0.0
    %5018 = vmatpush1.msra.mxu0 %v29
    %5019 = vmatprep.subr.mxu0 0.0
    %5020 = vmatpush2.msra.mxu0 0.0
    %5021 = vmatprep.subr.mxu0 0.0
    %5022 = vmatpush2.msra.mxu0 0.0
    %5023 = vmatprep.subr.mxu0 0.0
    %5024 = vmatpush2.msra.mxu0 0.0
    %5025 = vmatprep.subr.mxu0 0.0
    %5026 = vmatpush2.msra.mxu0 0.0
    %5027 = vmatprep.subr.mxu0 0.0
    %5028 = vmatpush2.msra.mxu0 0.0
    %5029 = vmatprep.subr.mxu0 0.0
    %5030 = vmatpush2.msra.mxu0 0.0
    %5031 = vmatprep.subr.mxu0 0.0
    %5032 = vmatpush2.msra.mxu0 0.0
    %5033 = vmatprep.subr.mxu0 0.0
    %5034 = vmatpush2.msra.mxu0 0.0
    %5035 = vmatprep.subr.mxu0 0.0
    %5036 = vmatpush2.msra.mxu0 0.0
    %5037 = vmatprep.subr.mxu0 0.0
    %5038 = vmatpush2.msra.mxu0 0.0
    %5039 = vmatprep.subr.mxu0 0.0
    %5040 = vmatpush2.msra.mxu0 0.0
    %5041 = vmatprep.subr.mxu0 0.0
    %5042 = vmatpush2.msra.mxu0 0.0
    %5043 = vmatprep.subr.mxu0 0.0
    %5044 = vmatpush2.msra.mxu0 0.0
    %5045 = vmatprep.subr.mxu0 0.0
    %5046 = vmatpush2.msra.mxu0 0.0
    %5047 = vmatprep.subr.mxu0 0.0
    %5048 = vmatpush2.msra.mxu0 0.0
    %5049 = vmatprep.subr.mxu0 0.0
    %5050 = vmatpush2.msra.mxu0 0.0
    %5051 = vmatprep.mubr.f32.mxu0 0.0
    %5052 = vmatmul.mubr.f32.gmra.mxu0 %v4880
    %v5053 = vpop.f32.mrf.mxu0
    %v5054 = vadd.f32 0.0, %v5053
    %v5055 = vpop.f32.mrf.mxu0
    %5056 = vmatprep.mubr.f32.mxu0 0.0
    %5057 = vmatmul.mubr.f32.gmra.mxu0 %v4883
    %v5058 = vpop.f32.mrf.mxu0
    %v5059 = vadd.f32 0.0, %v5058
    %v5060 = vpop.f32.mrf.mxu0
    %5061 = vmatprep.mubr.f32.mxu0 0.0
    %5062 = vmatmul.mubr.f32.gmra.mxu0 %v4886
    %v5063 = vpop.f32.mrf.mxu0
    %v5064 = vadd.f32 0.0, %v5063
    %v5065 = vpop.f32.mrf.mxu0
    %5066 = vmatprep.mubr.f32.mxu0 0.0
    %5067 = vmatmul.mubr.f32.gmra.mxu0 %v4889
    %v5068 = vpop.f32.mrf.mxu0
    %v5069 = vadd.f32 0.0, %v5068
    %v5070 = vpop.f32.mrf.mxu0
    %5071 = vmatprep.mubr.f32.mxu0 0.0
    %5072 = vmatmul.mubr.f32.gmra.mxu0 %v4892
    %v5073 = vpop.f32.mrf.mxu0
    %v5074 = vadd.f32 0.0, %v5073
    %v5075 = vpop.f32.mrf.mxu0
    %5076 = vmatprep.mubr.f32.mxu0 0.0
    %5077 = vmatmul.mubr.f32.gmra.mxu0 %v4895
    %v5078 = vpop.f32.mrf.mxu0
    %v5079 = vadd.f32 0.0, %v5078
    %v5080 = vpop.f32.mrf.mxu0
    %5081 = vmatprep.mubr.f32.mxu0 0.0
    %5082 = vmatmul.mubr.f32.gmra.mxu0 %v4898
    %v5083 = vpop.f32.mrf.mxu0
    %v5084 = vadd.f32 0.0, %v5083
    %v5085 = vpop.f32.mrf.mxu0
    %5086 = vmatprep.mubr.f32.mxu0 0.0
    %5087 = vmatmul.mubr.f32.gmra.mxu0 %v4901
    %v5088 = vpop.f32.mrf.mxu0
    %v5089 = vadd.f32 0.0, %v5088
    %v5090 = vpop.f32.mrf.mxu0
    %5091 = vmatprep.mubr.f32.mxu0 0.0
    %5092 = vmatmul.mubr.f32.gmra.mxu0 %v4904
    %v5093 = vpop.f32.mrf.mxu0
    %v5094 = vadd.f32 0.0, %v5093
    %v5095 = vpop.f32.mrf.mxu0
    %5096 = vmatprep.mubr.f32.mxu0 0.0
    %5097 = vmatmul.mubr.f32.gmra.mxu0 %v4907
    %v5098 = vpop.f32.mrf.mxu0
    %v5099 = vadd.f32 0.0, %v5098
    %v5100 = vpop.f32.mrf.mxu0
    %5101 = vmatprep.mubr.f32.mxu0 0.0
    %5102 = vmatmul.mubr.f32.gmra.mxu0 %v4910
    %v5103 = vpop.f32.mrf.mxu0
    %v5104 = vadd.f32 0.0, %v5103
    %v5105 = vpop.f32.mrf.mxu0
    %5106 = vmatprep.mubr.f32.mxu0 0.0
    %5107 = vmatmul.mubr.f32.gmra.mxu0 %v4913
    %v5108 = vpop.f32.mrf.mxu0
    %v5109 = vadd.f32 0.0, %v5108
    %v5110 = vpop.f32.mrf.mxu0
    %5111 = vmatprep.mubr.f32.mxu0 0.0
    %5112 = vmatmul.mubr.f32.gmra.mxu0 %v4916
    %v5113 = vpop.f32.mrf.mxu0
    %v5114 = vadd.f32 0.0, %v5113
    %v5115 = vpop.f32.mrf.mxu0
    %5116 = vmatprep.mubr.f32.mxu0 0.0
    %5117 = vmatmul.mubr.f32.gmra.mxu0 %v4919
    %v5118 = vpop.f32.mrf.mxu0
    %v5119 = vadd.f32 0.0, %v5118
    %v5120 = vpop.f32.mrf.mxu0
    %5121 = vmatprep.mubr.f32.mxu0 0.0
    %5122 = vmatmul.mubr.f32.gmra.mxu0 %v4922
    %v5123 = vpop.f32.mrf.mxu0
    %v5124 = vadd.f32 0.0, %v5123
    %v5125 = vpop.f32.mrf.mxu0
    %5126 = vmatprep.mubr.f32.mxu0 0.0
    %5127 = vmatmul.mubr.f32.gmra.mxu0 %v4925
    %v5128 = vpop.f32.mrf.mxu0
    %v5129 = vadd.f32 0.0, %v5128
    %v5130 = vpop.f32.mrf.mxu0
    %5131 = vmatprep.mubr.f32.mxu0 0.0
    %5132 = vmatmul.mubr.f32.gmra.mxu0 %v4928
    %v5133 = vpop.f32.mrf.mxu0
    %v5134 = vadd.f32 0.0, %v5133
    %v5135 = vpop.f32.mrf.mxu0
    %5136 = vmatprep.mubr.f32.mxu0 0.0
    %5137 = vmatmul.mubr.f32.gmra.mxu0 %v4931
    %v5138 = vpop.f32.mrf.mxu0
    %v5139 = vadd.f32 0.0, %v5138
    %v5140 = vpop.f32.mrf.mxu0
    %5141 = vmatprep.mubr.f32.mxu0 0.0
    %5142 = vmatmul.mubr.f32.gmra.mxu0 %v4934
    %v5143 = vpop.f32.mrf.mxu0
    %v5144 = vadd.f32 0.0, %v5143
    %v5145 = vpop.f32.mrf.mxu0
    %5146 = vmatprep.mubr.f32.mxu0 0.0
    %5147 = vmatmul.mubr.f32.gmra.mxu0 %v4937
    %v5148 = vpop.f32.mrf.mxu0
    %v5149 = vadd.f32 0.0, %v5148
    %v5150 = vpop.f32.mrf.mxu0
    %5151 = vmatprep.mubr.f32.mxu0 0.0
    %5152 = vmatmul.mubr.f32.gmra.mxu0 %v4940
    %v5153 = vpop.f32.mrf.mxu0
    %v5154 = vadd.f32 0.0, %v5153
    %v5155 = vpop.f32.mrf.mxu0
    %5156 = vmatprep.mubr.f32.mxu0 0.0
    %5157 = vmatmul.mubr.f32.gmra.mxu0 %v4943
    %v5158 = vpop.f32.mrf.mxu0
    %v5159 = vadd.f32 0.0, %v5158
    %v5160 = vpop.f32.mrf.mxu0
    %5161 = vmatprep.mubr.f32.mxu0 0.0
    %5162 = vmatmul.mubr.f32.gmra.mxu0 %v4946
    %v5163 = vpop.f32.mrf.mxu0
    %v5164 = vadd.f32 0.0, %v5163
    %v5165 = vpop.f32.mrf.mxu0
    %5166 = vmatprep.mubr.f32.mxu0 0.0
    %5167 = vmatmul.mubr.f32.gmra.mxu0 %v4949
    %v5168 = vpop.f32.mrf.mxu0
    %v5169 = vadd.f32 0.0, %v5168
    %v5170 = vpop.f32.mrf.mxu0
    %5171 = vmatprep.mubr.f32.mxu0 0.0
    %5172 = vmatmul.mubr.f32.gmra.mxu0 %v4952
    %v5173 = vpop.f32.mrf.mxu0
    %v5174 = vadd.f32 0.0, %v5173
    %v5175 = vpop.f32.mrf.mxu0
    %5176 = vmatprep.mubr.f32.mxu0 0.0
    %5177 = vmatmul.mubr.f32.gmra.mxu0 %v4955
    %v5178 = vpop.f32.mrf.mxu0
    %v5179 = vadd.f32 0.0, %v5178
    %v5180 = vpop.f32.mrf.mxu0
    %5181 = vmatprep.mubr.f32.mxu0 0.0
    %5182 = vmatmul.mubr.f32.gmra.mxu0 %v4958
    %v5183 = vpop.f32.mrf.mxu0
    %v5184 = vadd.f32 0.0, %v5183
    %v5185 = vpop.f32.mrf.mxu0
    %5186 = vmatprep.mubr.f32.mxu0 0.0
    %5187 = vmatmul.mubr.f32.gmra.mxu0 %v4961
    %v5188 = vpop.f32.mrf.mxu0
    %v5189 = vadd.f32 0.0, %v5188
    %v5190 = vpop.f32.mrf.mxu0
    %5191 = vmatprep.mubr.f32.mxu0 0.0
    %5192 = vmatmul.mubr.f32.gmra.mxu0 %v4964
    %v5193 = vpop.f32.mrf.mxu0
    %v5194 = vadd.f32 0.0, %v5193
    %v5195 = vpop.f32.mrf.mxu0
    %5196 = vmatprep.mubr.f32.mxu0 0.0
    %5197 = vmatmul.mubr.f32.gmra.mxu0 %v4967
    %v5198 = vpop.f32.mrf.mxu0
    %v5199 = vadd.f32 0.0, %v5198
    %v5200 = vpop.f32.mrf.mxu0
    %5201 = vmatprep.mubr.f32.mxu0 0.0
    %5202 = vmatmul.mubr.f32.gmra.mxu0 %v4970
    %v5203 = vpop.f32.mrf.mxu0
    %v5204 = vadd.f32 0.0, %v5203
    %v5205 = vpop.f32.mrf.mxu0
    %5206 = vmatprep.mubr.f32.mxu0 0.0
    %5207 = vmatmul.mubr.f32.gmra.mxu0 %v4973
    %v5208 = vpop.f32.mrf.mxu0
    %v5209 = vadd.f32 0.0, %v5208
    %v5210 = vpop.f32.mrf.mxu0
    %5211 = vmatprep.mubr.f32.mxu0 0.0
    %5212 = vmatmul.mubr.f32.gmra.mxu0 %v4976
    %v5213 = vpop.f32.mrf.mxu0
    %v5214 = vadd.f32 0.0, %v5213
    %v5215 = vpop.f32.mrf.mxu0
    %5216 = vmatprep.mubr.f32.mxu0 0.0
    %5217 = vmatmul.mubr.f32.gmra.mxu0 %v4979
    %v5218 = vpop.f32.mrf.mxu0
    %v5219 = vadd.f32 0.0, %v5218
    %v5220 = vpop.f32.mrf.mxu0
    %5221 = vmatprep.mubr.f32.mxu0 0.0
    %5222 = vmatmul.mubr.f32.gmra.mxu0 %v4982
    %v5223 = vpop.f32.mrf.mxu0
    %v5224 = vadd.f32 0.0, %v5223
    %v5225 = vpop.f32.mrf.mxu0
    %5226 = vmatprep.mubr.f32.mxu0 0.0
    %5227 = vmatmul.mubr.f32.gmra.mxu0 %v4985
    %v5228 = vpop.f32.mrf.mxu0
    %v5229 = vadd.f32 0.0, %v5228
    %v5230 = vpop.f32.mrf.mxu0
    %5231 = vdwg.mxu0
    %v5232 = vadd.f32 %v4807, %v5054
    %v5233 = vadd.f32 %v4808, %v5059
    %v5234 = vadd.f32 %v4809, %v5064
    %v5235 = vadd.f32 %v4810, %v5069
    %v5236 = vadd.f32 %v4811, %v5074
    %v5237 = vadd.f32 %v4812, %v5079
    %v5238 = vadd.f32 %v4813, %v5084
    %v5239 = vadd.f32 %v4814, %v5089
    %v5240 = vadd.f32 %v4815, %v5094
    %v5241 = vadd.f32 %v4816, %v5099
    %v5242 = vadd.f32 %v4817, %v5104
    %v5243 = vadd.f32 %v4818, %v5109
    %v5244 = vadd.f32 %v4819, %v5114
    %v5245 = vadd.f32 %v4820, %v5119
    %v5246 = vadd.f32 %v4821, %v5124
    %v5247 = vadd.f32 %v4822, %v5129
    %v5248 = vadd.f32 %v4823, %v5134
    %v5249 = vadd.f32 %v4824, %v5139
    %v5250 = vadd.f32 %v4825, %v5144
    %v5251 = vadd.f32 %v4826, %v5149
    %v5252 = vadd.f32 %v4827, %v5154
    %v5253 = vadd.f32 %v4828, %v5159
    %v5254 = vadd.f32 %v4829, %v5164
    %v5255 = vadd.f32 %v4830, %v5169
    %v5256 = vadd.f32 %v4831, %v5174
    %v5257 = vadd.f32 %v4832, %v5179
    %v5258 = vadd.f32 %v4833, %v5184
    %v5259 = vadd.f32 %v4834, %v5189
    %v5260 = vadd.f32 %v4835, %v5194
    %v5261 = vadd.f32 %v4836, %v5199
    %v5262 = vadd.f32 %v4837, %v5204
    %v5263 = vadd.f32 %v4838, %v5209
    %v5264 = vadd.f32 %v4839, %v5214
    %v5265 = vadd.f32 %v4840, %v5219
    %v5266 = vadd.f32 %v4841, %v5224
    %v5267 = vadd.f32 %v4842, %v5229
    %v5268 = vld [vmem:[%s4417 + $0x13] sm:$0xff]
    %v5269 = vld [vmem:[%s4417 + $0x1b] sm:$0xff]
    %v5270 = vld [vmem:[%s4417 + $0x23] sm:$0xff]
    %v5271 = vld [vmem:[%s4417 + $0x2b] sm:$0xff]
    %v5272 = vld [vmem:[%s4417 + $0x33] sm:$0xff]
    %v5273 = vld [vmem:[%s4417 + $0x3b] sm:$0xff]
    %v5274 = vld [vmem:[%s4417 + $0x43] sm:$0xff]
    %v5275 = vld [vmem:[%s4417 + $0x4b] sm:$0xff]
    %v5276 = vld [vmem:[%s4417 + $0x53] sm:$0xff]
    %v5277 = vld [vmem:[%s4417 + $0x5b] sm:$0xff]
    %v5278 = vld [vmem:[%s4417 + $0x63] sm:$0xff]
    %v5279 = vld [vmem:[%s4417 + $0x6b] sm:$0xff]
    %v5280 = vld [vmem:[%s4417 + $0x73] sm:$0xff]
    %v5281 = vld [vmem:[%s4417 + $0x7b] sm:$0xff]
    %v5282 = vld [vmem:[%s4417 + $0x83] sm:$0xff]
    %v5283 = vld [vmem:[%s4417 + $0x8b] sm:$0xff]
    %v5284 = vld [vmem:[%s4417 + $0x93] sm:$0xff]
    %v5285 = vld [vmem:[%s4417 + $0x9b] sm:$0xff]
    %v5286 = vld [vmem:[%s4417 + $0xa3] sm:$0xff]
    %v5287 = vld [vmem:[%s4417 + $0xab] sm:$0xff]
    %v5288 = vld [vmem:[%s4417 + $0xb3] sm:$0xff]
    %v5289 = vld [vmem:[%s4417 + $0xbb] sm:$0xff]
    %v5290 = vld [vmem:[%s4417 + $0xc3] sm:$0xff]
    %v5291 = vld [vmem:[%s4417 + $0xcb] sm:$0xff]
    %v5292 = vld [vmem:[%s4417 + $0xd3] sm:$0xff]
    %v5293 = vld [vmem:[%s4417 + $0xdb] sm:$0xff]
    %v5294 = vld [vmem:[%s4417 + $0xe3] sm:$0xff]
    %v5295 = vld [vmem:[%s4417 + $0xeb] sm:$0xff]
    %v5296 = vld [vmem:[%s4417 + $0xf3] sm:$0xff]
    %v5297 = vld [vmem:[%s4417 + $0xfb] sm:$0xff]
    %v5298 = vld [vmem:[%s4417 + $0x103] sm:$0xff]
    %v5299 = vld [vmem:[%s4417 + $0x10b] sm:$0xff]
    %v5300 = vld [vmem:[%s4417 + $0x113] sm:$0xff]
    %v5301 = vld [vmem:[%s4417 + $0x11b] sm:$0xff]
    %v5302 = vld [vmem:[%s4417 + $0x123] sm:$0xff]
    %v5303 = vld [vmem:[%s4417 + $0x12b] sm:$0xff]
    %v5305 = vsel %vm138, %v5268, 0
    %v5308 = vsel %vm138, %v5269, 0
    %v5311 = vsel %vm138, %v5270, 0
    %v5314 = vsel %vm138, %v5271, 0
    %v5317 = vsel %vm138, %v5272, 0
    %v5320 = vsel %vm138, %v5273, 0
    %v5323 = vsel %vm138, %v5274, 0
    %v5326 = vsel %vm138, %v5275, 0
    %v5329 = vsel %vm138, %v5276, 0
    %v5332 = vsel %vm138, %v5277, 0
    %v5335 = vsel %vm138, %v5278, 0
    %v5338 = vsel %vm138, %v5279, 0
    %v5341 = vsel %vm138, %v5280, 0
    %v5344 = vsel %vm138, %v5281, 0
    %v5347 = vsel %vm138, %v5282, 0
    %v5350 = vsel %vm138, %v5283, 0
    %v5353 = vsel %vm138, %v5284, 0
    %v5356 = vsel %vm138, %v5285, 0
    %v5359 = vsel %vm138, %v5286, 0
    %v5362 = vsel %vm138, %v5287, 0
    %v5365 = vsel %vm138, %v5288, 0
    %v5368 = vsel %vm138, %v5289, 0
    %v5371 = vsel %vm138, %v5290, 0
    %v5374 = vsel %vm138, %v5291, 0
    %v5377 = vsel %vm138, %v5292, 0
    %v5380 = vsel %vm138, %v5293, 0
    %v5383 = vsel %vm138, %v5294, 0
    %v5386 = vsel %vm138, %v5295, 0
    %v5389 = vsel %vm138, %v5296, 0
    %v5392 = vsel %vm138, %v5297, 0
    %v5395 = vsel %vm138, %v5298, 0
    %v5398 = vsel %vm138, %v5299, 0
    %v5401 = vsel %vm138, %v5300, 0
    %v5404 = vsel %vm138, %v5301, 0
    %v5407 = vsel %vm138, %v5302, 0
    %v5410 = vsel %vm138, %v5303, 0
    %5412 = vmatprep.subr.mxu0 0.0
    %5413 = vmatpush1.msra.mxu0 0.0
    %5414 = vmatprep.subr.mxu0 0.0
    %5415 = vmatpush1.msra.mxu0 0.0
    %5416 = vmatprep.subr.mxu0 0.0
    %5417 = vmatpush1.msra.mxu0 0.0
    %5418 = vmatprep.subr.mxu0 0.0
    %5419 = vmatpush1.msra.mxu0 0.0
    %5420 = vmatprep.subr.mxu0 0.0
    %5421 = vmatpush1.msra.mxu0 0.0
    %5422 = vmatprep.subr.mxu0 0.0
    %5423 = vmatpush1.msra.mxu0 0.0
    %5424 = vmatprep.subr.mxu0 0.0
    %5425 = vmatpush1.msra.mxu0 0.0
    %5426 = vmatprep.subr.mxu0 0.0
    %5427 = vmatpush1.msra.mxu0 0.0
    %5428 = vmatprep.subr.mxu0 0.0
    %5429 = vmatpush1.msra.mxu0 0.0
    %5430 = vmatprep.subr.mxu0 0.0
    %5431 = vmatpush1.msra.mxu0 0.0
    %5432 = vmatprep.subr.mxu0 0.0
    %5433 = vmatpush1.msra.mxu0 0.0
    %5434 = vmatprep.subr.mxu0 0.0
    %5435 = vmatpush1.msra.mxu0 0.0
    %5436 = vmatprep.subr.mxu0 0.0
    %5437 = vmatpush1.msra.mxu0 %v37
    %5438 = vmatprep.subr.mxu0 0.0
    %5439 = vmatpush1.msra.mxu0 %v36
    %5440 = vmatprep.subr.mxu0 0.0
    %5441 = vmatpush1.msra.mxu0 %v35
    %5442 = vmatprep.subr.mxu0 0.0
    %5443 = vmatpush1.msra.mxu0 %v34
    %5444 = vmatprep.subr.mxu0 0.0
    %5445 = vmatpush2.msra.mxu0 0.0
    %5446 = vmatprep.subr.mxu0 0.0
    %5447 = vmatpush2.msra.mxu0 0.0
    %5448 = vmatprep.subr.mxu0 0.0
    %5449 = vmatpush2.msra.mxu0 0.0
    %5450 = vmatprep.subr.mxu0 0.0
    %5451 = vmatpush2.msra.mxu0 0.0
    %5452 = vmatprep.subr.mxu0 0.0
    %5453 = vmatpush2.msra.mxu0 0.0
    %5454 = vmatprep.subr.mxu0 0.0
    %5455 = vmatpush2.msra.mxu0 0.0
    %5456 = vmatprep.subr.mxu0 0.0
    %5457 = vmatpush2.msra.mxu0 0.0
    %5458 = vmatprep.subr.mxu0 0.0
    %5459 = vmatpush2.msra.mxu0 0.0
    %5460 = vmatprep.subr.mxu0 0.0
    %5461 = vmatpush2.msra.mxu0 0.0
    %5462 = vmatprep.subr.mxu0 0.0
    %5463 = vmatpush2.msra.mxu0 0.0
    %5464 = vmatprep.subr.mxu0 0.0
    %5465 = vmatpush2.msra.mxu0 0.0
    %5466 = vmatprep.subr.mxu0 0.0
    %5467 = vmatpush2.msra.mxu0 0.0
    %5468 = vmatprep.subr.mxu0 0.0
    %5469 = vmatpush2.msra.mxu0 0.0
    %5470 = vmatprep.subr.mxu0 0.0
    %5471 = vmatpush2.msra.mxu0 0.0
    %5472 = vmatprep.subr.mxu0 0.0
    %5473 = vmatpush2.msra.mxu0 0.0
    %5474 = vmatprep.subr.mxu0 0.0
    %5475 = vmatpush2.msra.mxu0 0.0
    %5476 = vmatprep.mubr.f32.mxu0 0.0
    %5477 = vmatmul.mubr.f32.gmra.mxu0 %v5305
    %v5478 = vpop.f32.mrf.mxu0
    %v5479 = vadd.f32 0.0, %v5478
    %v5480 = vpop.f32.mrf.mxu0
    %5481 = vmatprep.mubr.f32.mxu0 0.0
    %5482 = vmatmul.mubr.f32.gmra.mxu0 %v5308
    %v5483 = vpop.f32.mrf.mxu0
    %v5484 = vadd.f32 0.0, %v5483
    %v5485 = vpop.f32.mrf.mxu0
    %5486 = vmatprep.mubr.f32.mxu0 0.0
    %5487 = vmatmul.mubr.f32.gmra.mxu0 %v5311
    %v5488 = vpop.f32.mrf.mxu0
    %v5489 = vadd.f32 0.0, %v5488
    %v5490 = vpop.f32.mrf.mxu0
    %5491 = vmatprep.mubr.f32.mxu0 0.0
    %5492 = vmatmul.mubr.f32.gmra.mxu0 %v5314
    %v5493 = vpop.f32.mrf.mxu0
    %v5494 = vadd.f32 0.0, %v5493
    %v5495 = vpop.f32.mrf.mxu0
    %5496 = vmatprep.mubr.f32.mxu0 0.0
    %5497 = vmatmul.mubr.f32.gmra.mxu0 %v5317
    %v5498 = vpop.f32.mrf.mxu0
    %v5499 = vadd.f32 0.0, %v5498
    %v5500 = vpop.f32.mrf.mxu0
    %5501 = vmatprep.mubr.f32.mxu0 0.0
    %5502 = vmatmul.mubr.f32.gmra.mxu0 %v5320
    %v5503 = vpop.f32.mrf.mxu0
    %v5504 = vadd.f32 0.0, %v5503
    %v5505 = vpop.f32.mrf.mxu0
    %5506 = vmatprep.mubr.f32.mxu0 0.0
    %5507 = vmatmul.mubr.f32.gmra.mxu0 %v5323
    %v5508 = vpop.f32.mrf.mxu0
    %v5509 = vadd.f32 0.0, %v5508
    %v5510 = vpop.f32.mrf.mxu0
    %5511 = vmatprep.mubr.f32.mxu0 0.0
    %5512 = vmatmul.mubr.f32.gmra.mxu0 %v5326
    %v5513 = vpop.f32.mrf.mxu0
    %v5514 = vadd.f32 0.0, %v5513
    %v5515 = vpop.f32.mrf.mxu0
    %5516 = vmatprep.mubr.f32.mxu0 0.0
    %5517 = vmatmul.mubr.f32.gmra.mxu0 %v5329
    %v5518 = vpop.f32.mrf.mxu0
    %v5519 = vadd.f32 0.0, %v5518
    %v5520 = vpop.f32.mrf.mxu0
    %5521 = vmatprep.mubr.f32.mxu0 0.0
    %5522 = vmatmul.mubr.f32.gmra.mxu0 %v5332
    %v5523 = vpop.f32.mrf.mxu0
    %v5524 = vadd.f32 0.0, %v5523
    %v5525 = vpop.f32.mrf.mxu0
    %5526 = vmatprep.mubr.f32.mxu0 0.0
    %5527 = vmatmul.mubr.f32.gmra.mxu0 %v5335
    %v5528 = vpop.f32.mrf.mxu0
    %v5529 = vadd.f32 0.0, %v5528
    %v5530 = vpop.f32.mrf.mxu0
    %5531 = vmatprep.mubr.f32.mxu0 0.0
    %5532 = vmatmul.mubr.f32.gmra.mxu0 %v5338
    %v5533 = vpop.f32.mrf.mxu0
    %v5534 = vadd.f32 0.0, %v5533
    %v5535 = vpop.f32.mrf.mxu0
    %5536 = vmatprep.mubr.f32.mxu0 0.0
    %5537 = vmatmul.mubr.f32.gmra.mxu0 %v5341
    %v5538 = vpop.f32.mrf.mxu0
    %v5539 = vadd.f32 0.0, %v5538
    %v5540 = vpop.f32.mrf.mxu0
    %5541 = vmatprep.mubr.f32.mxu0 0.0
    %5542 = vmatmul.mubr.f32.gmra.mxu0 %v5344
    %v5543 = vpop.f32.mrf.mxu0
    %v5544 = vadd.f32 0.0, %v5543
    %v5545 = vpop.f32.mrf.mxu0
    %5546 = vmatprep.mubr.f32.mxu0 0.0
    %5547 = vmatmul.mubr.f32.gmra.mxu0 %v5347
    %v5548 = vpop.f32.mrf.mxu0
    %v5549 = vadd.f32 0.0, %v5548
    %v5550 = vpop.f32.mrf.mxu0
    %5551 = vmatprep.mubr.f32.mxu0 0.0
    %5552 = vmatmul.mubr.f32.gmra.mxu0 %v5350
    %v5553 = vpop.f32.mrf.mxu0
    %v5554 = vadd.f32 0.0, %v5553
    %v5555 = vpop.f32.mrf.mxu0
    %5556 = vmatprep.mubr.f32.mxu0 0.0
    %5557 = vmatmul.mubr.f32.gmra.mxu0 %v5353
    %v5558 = vpop.f32.mrf.mxu0
    %v5559 = vadd.f32 0.0, %v5558
    %v5560 = vpop.f32.mrf.mxu0
    %5561 = vmatprep.mubr.f32.mxu0 0.0
    %5562 = vmatmul.mubr.f32.gmra.mxu0 %v5356
    %v5563 = vpop.f32.mrf.mxu0
    %v5564 = vadd.f32 0.0, %v5563
    %v5565 = vpop.f32.mrf.mxu0
    %5566 = vmatprep.mubr.f32.mxu0 0.0
    %5567 = vmatmul.mubr.f32.gmra.mxu0 %v5359
    %v5568 = vpop.f32.mrf.mxu0
    %v5569 = vadd.f32 0.0, %v5568
    %v5570 = vpop.f32.mrf.mxu0
    %5571 = vmatprep.mubr.f32.mxu0 0.0
    %5572 = vmatmul.mubr.f32.gmra.mxu0 %v5362
    %v5573 = vpop.f32.mrf.mxu0
    %v5574 = vadd.f32 0.0, %v5573
    %v5575 = vpop.f32.mrf.mxu0
    %5576 = vmatprep.mubr.f32.mxu0 0.0
    %5577 = vmatmul.mubr.f32.gmra.mxu0 %v5365
    %v5578 = vpop.f32.mrf.mxu0
    %v5579 = vadd.f32 0.0, %v5578
    %v5580 = vpop.f32.mrf.mxu0
    %5581 = vmatprep.mubr.f32.mxu0 0.0
    %5582 = vmatmul.mubr.f32.gmra.mxu0 %v5368
    %v5583 = vpop.f32.mrf.mxu0
    %v5584 = vadd.f32 0.0, %v5583
    %v5585 = vpop.f32.mrf.mxu0
    %5586 = vmatprep.mubr.f32.mxu0 0.0
    %5587 = vmatmul.mubr.f32.gmra.mxu0 %v5371
    %v5588 = vpop.f32.mrf.mxu0
    %v5589 = vadd.f32 0.0, %v5588
    %v5590 = vpop.f32.mrf.mxu0
    %5591 = vmatprep.mubr.f32.mxu0 0.0
    %5592 = vmatmul.mubr.f32.gmra.mxu0 %v5374
    %v5593 = vpop.f32.mrf.mxu0
    %v5594 = vadd.f32 0.0, %v5593
    %v5595 = vpop.f32.mrf.mxu0
    %5596 = vmatprep.mubr.f32.mxu0 0.0
    %5597 = vmatmul.mubr.f32.gmra.mxu0 %v5377
    %v5598 = vpop.f32.mrf.mxu0
    %v5599 = vadd.f32 0.0, %v5598
    %v5600 = vpop.f32.mrf.mxu0
    %5601 = vmatprep.mubr.f32.mxu0 0.0
    %5602 = vmatmul.mubr.f32.gmra.mxu0 %v5380
    %v5603 = vpop.f32.mrf.mxu0
    %v5604 = vadd.f32 0.0, %v5603
    %v5605 = vpop.f32.mrf.mxu0
    %5606 = vmatprep.mubr.f32.mxu0 0.0
    %5607 = vmatmul.mubr.f32.gmra.mxu0 %v5383
    %v5608 = vpop.f32.mrf.mxu0
    %v5609 = vadd.f32 0.0, %v5608
    %v5610 = vpop.f32.mrf.mxu0
    %5611 = vmatprep.mubr.f32.mxu0 0.0
    %5612 = vmatmul.mubr.f32.gmra.mxu0 %v5386
    %v5613 = vpop.f32.mrf.mxu0
    %v5614 = vadd.f32 0.0, %v5613
    %v5615 = vpop.f32.mrf.mxu0
    %5616 = vmatprep.mubr.f32.mxu0 0.0
    %5617 = vmatmul.mubr.f32.gmra.mxu0 %v5389
    %v5618 = vpop.f32.mrf.mxu0
    %v5619 = vadd.f32 0.0, %v5618
    %v5620 = vpop.f32.mrf.mxu0
    %5621 = vmatprep.mubr.f32.mxu0 0.0
    %5622 = vmatmul.mubr.f32.gmra.mxu0 %v5392
    %v5623 = vpop.f32.mrf.mxu0
    %v5624 = vadd.f32 0.0, %v5623
    %v5625 = vpop.f32.mrf.mxu0
    %5626 = vmatprep.mubr.f32.mxu0 0.0
    %5627 = vmatmul.mubr.f32.gmra.mxu0 %v5395
    %v5628 = vpop.f32.mrf.mxu0
    %v5629 = vadd.f32 0.0, %v5628
    %v5630 = vpop.f32.mrf.mxu0
    %5631 = vmatprep.mubr.f32.mxu0 0.0
    %5632 = vmatmul.mubr.f32.gmra.mxu0 %v5398
    %v5633 = vpop.f32.mrf.mxu0
    %v5634 = vadd.f32 0.0, %v5633
    %v5635 = vpop.f32.mrf.mxu0
    %5636 = vmatprep.mubr.f32.mxu0 0.0
    %5637 = vmatmul.mubr.f32.gmra.mxu0 %v5401
    %v5638 = vpop.f32.mrf.mxu0
    %v5639 = vadd.f32 0.0, %v5638
    %v5640 = vpop.f32.mrf.mxu0
    %5641 = vmatprep.mubr.f32.mxu0 0.0
    %5642 = vmatmul.mubr.f32.gmra.mxu0 %v5404
    %v5643 = vpop.f32.mrf.mxu0
    %v5644 = vadd.f32 0.0, %v5643
    %v5645 = vpop.f32.mrf.mxu0
    %5646 = vmatprep.mubr.f32.mxu0 0.0
    %5647 = vmatmul.mubr.f32.gmra.mxu0 %v5407
    %v5648 = vpop.f32.mrf.mxu0
    %v5649 = vadd.f32 0.0, %v5648
    %v5650 = vpop.f32.mrf.mxu0
    %5651 = vmatprep.mubr.f32.mxu0 0.0
    %5652 = vmatmul.mubr.f32.gmra.mxu0 %v5410
    %v5653 = vpop.f32.mrf.mxu0
    %v5654 = vadd.f32 0.0, %v5653
    %v5655 = vpop.f32.mrf.mxu0
    %5656 = vdwg.mxu0
    %v5657 = vadd.f32 %v5232, %v5479
    %v5658 = vadd.f32 %v5233, %v5484
    %v5659 = vadd.f32 %v5234, %v5489
    %v5660 = vadd.f32 %v5235, %v5494
    %v5661 = vadd.f32 %v5236, %v5499
    %v5662 = vadd.f32 %v5237, %v5504
    %v5663 = vadd.f32 %v5238, %v5509
    %v5664 = vadd.f32 %v5239, %v5514
    %v5665 = vadd.f32 %v5240, %v5519
    %v5666 = vadd.f32 %v5241, %v5524
    %v5667 = vadd.f32 %v5242, %v5529
    %v5668 = vadd.f32 %v5243, %v5534
    %v5669 = vadd.f32 %v5244, %v5539
    %v5670 = vadd.f32 %v5245, %v5544
    %v5671 = vadd.f32 %v5246, %v5549
    %v5672 = vadd.f32 %v5247, %v5554
    %v5673 = vadd.f32 %v5248, %v5559
    %v5674 = vadd.f32 %v5249, %v5564
    %v5675 = vadd.f32 %v5250, %v5569
    %v5676 = vadd.f32 %v5251, %v5574
    %v5677 = vadd.f32 %v5252, %v5579
    %v5678 = vadd.f32 %v5253, %v5584
    %v5679 = vadd.f32 %v5254, %v5589
    %v5680 = vadd.f32 %v5255, %v5594
    %v5681 = vadd.f32 %v5256, %v5599
    %v5682 = vadd.f32 %v5257, %v5604
    %v5683 = vadd.f32 %v5258, %v5609
    %v5684 = vadd.f32 %v5259, %v5614
    %v5685 = vadd.f32 %v5260, %v5619
    %v5686 = vadd.f32 %v5261, %v5624
    %v5687 = vadd.f32 %v5262, %v5629
    %v5688 = vadd.f32 %v5263, %v5634
    %v5689 = vadd.f32 %v5264, %v5639
    %v5690 = vadd.f32 %v5265, %v5644
    %v5691 = vadd.f32 %v5266, %v5649
    %v5692 = vadd.f32 %v5267, %v5654
    %v5693 = vld [vmem:[%s4417 + $0x23] sm:$0xff]
    %v5694 = vld [vmem:[%s4417 + $0x2b] sm:$0xff]
    %v5695 = vld [vmem:[%s4417 + $0x33] sm:$0xff]
    %v5696 = vld [vmem:[%s4417 + $0x3b] sm:$0xff]
    %v5697 = vld [vmem:[%s4417 + $0x43] sm:$0xff]
    %v5698 = vld [vmem:[%s4417 + $0x4b] sm:$0xff]
    %v5699 = vld [vmem:[%s4417 + $0x53] sm:$0xff]
    %v5700 = vld [vmem:[%s4417 + $0x5b] sm:$0xff]
    %v5701 = vld [vmem:[%s4417 + $0x63] sm:$0xff]
    %v5702 = vld [vmem:[%s4417 + $0x6b] sm:$0xff]
    %v5703 = vld [vmem:[%s4417 + $0x73] sm:$0xff]
    %v5704 = vld [vmem:[%s4417 + $0x7b] sm:$0xff]
    %v5705 = vld [vmem:[%s4417 + $0x83] sm:$0xff]
    %v5706 = vld [vmem:[%s4417 + $0x8b] sm:$0xff]
    %v5707 = vld [vmem:[%s4417 + $0x93] sm:$0xff]
    %v5708 = vld [vmem:[%s4417 + $0x9b] sm:$0xff]
    %v5709 = vld [vmem:[%s4417 + $0xa3] sm:$0xff]
    %v5710 = vld [vmem:[%s4417 + $0xab] sm:$0xff]
    %v5711 = vld [vmem:[%s4417 + $0xb3] sm:$0xff]
    %v5712 = vld [vmem:[%s4417 + $0xbb] sm:$0xff]
    %v5713 = vld [vmem:[%s4417 + $0xc3] sm:$0xff]
    %v5714 = vld [vmem:[%s4417 + $0xcb] sm:$0xff]
    %v5715 = vld [vmem:[%s4417 + $0xd3] sm:$0xff]
    %v5716 = vld [vmem:[%s4417 + $0xdb] sm:$0xff]
    %v5717 = vld [vmem:[%s4417 + $0xe3] sm:$0xff]
    %v5718 = vld [vmem:[%s4417 + $0xeb] sm:$0xff]
    %v5719 = vld [vmem:[%s4417 + $0xf3] sm:$0xff]
    %v5720 = vld [vmem:[%s4417 + $0xfb] sm:$0xff]
    %v5721 = vld [vmem:[%s4417 + $0x103] sm:$0xff]
    %v5722 = vld [vmem:[%s4417 + $0x10b] sm:$0xff]
    %v5723 = vld [vmem:[%s4417 + $0x113] sm:$0xff]
    %v5724 = vld [vmem:[%s4417 + $0x11b] sm:$0xff]
    %v5725 = vld [vmem:[%s4417 + $0x123] sm:$0xff]
    %v5726 = vld [vmem:[%s4417 + $0x12b] sm:$0xff]
    %v5727 = vld [vmem:[%s4417 + $0x133] sm:$0xff]
    %v5728 = vld [vmem:[%s4417 + $0x13b] sm:$0xff]
    %v5730 = vsel %vm138, %v5693, 0
    %v5733 = vsel %vm138, %v5694, 0
    %v5736 = vsel %vm138, %v5695, 0
    %v5739 = vsel %vm138, %v5696, 0
    %v5742 = vsel %vm138, %v5697, 0
    %v5745 = vsel %vm138, %v5698, 0
    %v5748 = vsel %vm138, %v5699, 0
    %v5751 = vsel %vm138, %v5700, 0
    %v5754 = vsel %vm138, %v5701, 0
    %v5757 = vsel %vm138, %v5702, 0
    %v5760 = vsel %vm138, %v5703, 0
    %v5763 = vsel %vm138, %v5704, 0
    %v5766 = vsel %vm138, %v5705, 0
    %v5769 = vsel %vm138, %v5706, 0
    %v5772 = vsel %vm138, %v5707, 0
    %v5775 = vsel %vm138, %v5708, 0
    %v5778 = vsel %vm138, %v5709, 0
    %v5781 = vsel %vm138, %v5710, 0
    %v5784 = vsel %vm138, %v5711, 0
    %v5787 = vsel %vm138, %v5712, 0
    %v5790 = vsel %vm138, %v5713, 0
    %v5793 = vsel %vm138, %v5714, 0
    %v5796 = vsel %vm138, %v5715, 0
    %v5799 = vsel %vm138, %v5716, 0
    %v5802 = vsel %vm138, %v5717, 0
    %v5805 = vsel %vm138, %v5718, 0
    %v5808 = vsel %vm138, %v5719, 0
    %v5811 = vsel %vm138, %v5720, 0
    %v5814 = vsel %vm138, %v5721, 0
    %v5817 = vsel %vm138, %v5722, 0
    %v5820 = vsel %vm138, %v5723, 0
    %v5823 = vsel %vm138, %v5724, 0
    %v5826 = vsel %vm138, %v5725, 0
    %v5829 = vsel %vm138, %v5726, 0
    %v5832 = vsel %vm138, %v5727, 0
    %v5835 = vsel %vm138, %v5728, 0
    %5837 = vmatprep.subr.mxu0 0.0
    %5838 = vmatpush1.msra.mxu0 0.0
    %5839 = vmatprep.subr.mxu0 0.0
    %5840 = vmatpush1.msra.mxu0 0.0
    %5841 = vmatprep.subr.mxu0 0.0
    %5842 = vmatpush1.msra.mxu0 0.0
    %5843 = vmatprep.subr.mxu0 0.0
    %5844 = vmatpush1.msra.mxu0 0.0
    %5845 = vmatprep.subr.mxu0 0.0
    %5846 = vmatpush1.msra.mxu0 0.0
    %5847 = vmatprep.subr.mxu0 0.0
    %5848 = vmatpush1.msra.mxu0 0.0
    %5849 = vmatprep.subr.mxu0 0.0
    %5850 = vmatpush1.msra.mxu0 0.0
    %5851 = vmatprep.subr.mxu0 0.0
    %5852 = vmatpush1.msra.mxu0 0.0
    %5853 = vmatprep.subr.mxu0 0.0
    %5854 = vmatpush1.msra.mxu0 0.0
    %5855 = vmatprep.subr.mxu0 0.0
    %5856 = vmatpush1.msra.mxu0 0.0
    %5857 = vmatprep.subr.mxu0 0.0
    %5858 = vmatpush1.msra.mxu0 0.0
    %5859 = vmatprep.subr.mxu0 0.0
    %5860 = vmatpush1.msra.mxu0 0.0
    %5861 = vmatprep.subr.mxu0 0.0
    %5862 = vmatpush1.msra.mxu0 %v42
    %5863 = vmatprep.subr.mxu0 0.0
    %5864 = vmatpush1.msra.mxu0 %v41
    %5865 = vmatprep.subr.mxu0 0.0
    %5866 = vmatpush1.msra.mxu0 %v40
    %5867 = vmatprep.subr.mxu0 0.0
    %5868 = vmatpush1.msra.mxu0 %v39
    %5869 = vmatprep.subr.mxu0 0.0
    %5870 = vmatpush2.msra.mxu0 0.0
    %5871 = vmatprep.subr.mxu0 0.0
    %5872 = vmatpush2.msra.mxu0 0.0
    %5873 = vmatprep.subr.mxu0 0.0
    %5874 = vmatpush2.msra.mxu0 0.0
    %5875 = vmatprep.subr.mxu0 0.0
    %5876 = vmatpush2.msra.mxu0 0.0
    %5877 = vmatprep.subr.mxu0 0.0
    %5878 = vmatpush2.msra.mxu0 0.0
    %5879 = vmatprep.subr.mxu0 0.0
    %5880 = vmatpush2.msra.mxu0 0.0
    %5881 = vmatprep.subr.mxu0 0.0
    %5882 = vmatpush2.msra.mxu0 0.0
    %5883 = vmatprep.subr.mxu0 0.0
    %5884 = vmatpush2.msra.mxu0 0.0
    %5885 = vmatprep.subr.mxu0 0.0
    %5886 = vmatpush2.msra.mxu0 0.0
    %5887 = vmatprep.subr.mxu0 0.0
    %5888 = vmatpush2.msra.mxu0 0.0
    %5889 = vmatprep.subr.mxu0 0.0
    %5890 = vmatpush2.msra.mxu0 0.0
    %5891 = vmatprep.subr.mxu0 0.0
    %5892 = vmatpush2.msra.mxu0 0.0
    %5893 = vmatprep.subr.mxu0 0.0
    %5894 = vmatpush2.msra.mxu0 0.0
    %5895 = vmatprep.subr.mxu0 0.0
    %5896 = vmatpush2.msra.mxu0 0.0
    %5897 = vmatprep.subr.mxu0 0.0
    %5898 = vmatpush2.msra.mxu0 0.0
    %5899 = vmatprep.subr.mxu0 0.0
    %5900 = vmatpush2.msra.mxu0 0.0
    %5901 = vmatprep.mubr.f32.mxu0 0.0
    %5902 = vmatmul.mubr.f32.gmra.mxu0 %v5730
    %v5903 = vpop.f32.mrf.mxu0
    %v5904 = vadd.f32 0.0, %v5903
    %v5905 = vpop.f32.mrf.mxu0
    %5906 = vmatprep.mubr.f32.mxu0 0.0
    %5907 = vmatmul.mubr.f32.gmra.mxu0 %v5733
    %v5908 = vpop.f32.mrf.mxu0
    %v5909 = vadd.f32 0.0, %v5908
    %v5910 = vpop.f32.mrf.mxu0
    %5911 = vmatprep.mubr.f32.mxu0 0.0
    %5912 = vmatmul.mubr.f32.gmra.mxu0 %v5736
    %v5913 = vpop.f32.mrf.mxu0
    %v5914 = vadd.f32 0.0, %v5913
    %v5915 = vpop.f32.mrf.mxu0
    %5916 = vmatprep.mubr.f32.mxu0 0.0
    %5917 = vmatmul.mubr.f32.gmra.mxu0 %v5739
    %v5918 = vpop.f32.mrf.mxu0
    %v5919 = vadd.f32 0.0, %v5918
    %v5920 = vpop.f32.mrf.mxu0
    %5921 = vmatprep.mubr.f32.mxu0 0.0
    %5922 = vmatmul.mubr.f32.gmra.mxu0 %v5742
    %v5923 = vpop.f32.mrf.mxu0
    %v5924 = vadd.f32 0.0, %v5923
    %v5925 = vpop.f32.mrf.mxu0
    %5926 = vmatprep.mubr.f32.mxu0 0.0
    %5927 = vmatmul.mubr.f32.gmra.mxu0 %v5745
    %v5928 = vpop.f32.mrf.mxu0
    %v5929 = vadd.f32 0.0, %v5928
    %v5930 = vpop.f32.mrf.mxu0
    %5931 = vmatprep.mubr.f32.mxu0 0.0
    %5932 = vmatmul.mubr.f32.gmra.mxu0 %v5748
    %v5933 = vpop.f32.mrf.mxu0
    %v5934 = vadd.f32 0.0, %v5933
    %v5935 = vpop.f32.mrf.mxu0
    %5936 = vmatprep.mubr.f32.mxu0 0.0
    %5937 = vmatmul.mubr.f32.gmra.mxu0 %v5751
    %v5938 = vpop.f32.mrf.mxu0
    %v5939 = vadd.f32 0.0, %v5938
    %v5940 = vpop.f32.mrf.mxu0
    %5941 = vmatprep.mubr.f32.mxu0 0.0
    %5942 = vmatmul.mubr.f32.gmra.mxu0 %v5754
    %v5943 = vpop.f32.mrf.mxu0
    %v5944 = vadd.f32 0.0, %v5943
    %v5945 = vpop.f32.mrf.mxu0
    %5946 = vmatprep.mubr.f32.mxu0 0.0
    %5947 = vmatmul.mubr.f32.gmra.mxu0 %v5757
    %v5948 = vpop.f32.mrf.mxu0
    %v5949 = vadd.f32 0.0, %v5948
    %v5950 = vpop.f32.mrf.mxu0
    %5951 = vmatprep.mubr.f32.mxu0 0.0
    %5952 = vmatmul.mubr.f32.gmra.mxu0 %v5760
    %v5953 = vpop.f32.mrf.mxu0
    %v5954 = vadd.f32 0.0, %v5953
    %v5955 = vpop.f32.mrf.mxu0
    %5956 = vmatprep.mubr.f32.mxu0 0.0
    %5957 = vmatmul.mubr.f32.gmra.mxu0 %v5763
    %v5958 = vpop.f32.mrf.mxu0
    %v5959 = vadd.f32 0.0, %v5958
    %v5960 = vpop.f32.mrf.mxu0
    %5961 = vmatprep.mubr.f32.mxu0 0.0
    %5962 = vmatmul.mubr.f32.gmra.mxu0 %v5766
    %v5963 = vpop.f32.mrf.mxu0
    %v5964 = vadd.f32 0.0, %v5963
    %v5965 = vpop.f32.mrf.mxu0
    %5966 = vmatprep.mubr.f32.mxu0 0.0
    %5967 = vmatmul.mubr.f32.gmra.mxu0 %v5769
    %v5968 = vpop.f32.mrf.mxu0
    %v5969 = vadd.f32 0.0, %v5968
    %v5970 = vpop.f32.mrf.mxu0
    %5971 = vmatprep.mubr.f32.mxu0 0.0
    %5972 = vmatmul.mubr.f32.gmra.mxu0 %v5772
    %v5973 = vpop.f32.mrf.mxu0
    %v5974 = vadd.f32 0.0, %v5973
    %v5975 = vpop.f32.mrf.mxu0
    %5976 = vmatprep.mubr.f32.mxu0 0.0
    %5977 = vmatmul.mubr.f32.gmra.mxu0 %v5775
    %v5978 = vpop.f32.mrf.mxu0
    %v5979 = vadd.f32 0.0, %v5978
    %v5980 = vpop.f32.mrf.mxu0
    %5981 = vmatprep.mubr.f32.mxu0 0.0
    %5982 = vmatmul.mubr.f32.gmra.mxu0 %v5778
    %v5983 = vpop.f32.mrf.mxu0
    %v5984 = vadd.f32 0.0, %v5983
    %v5985 = vpop.f32.mrf.mxu0
    %5986 = vmatprep.mubr.f32.mxu0 0.0
    %5987 = vmatmul.mubr.f32.gmra.mxu0 %v5781
    %v5988 = vpop.f32.mrf.mxu0
    %v5989 = vadd.f32 0.0, %v5988
    %v5990 = vpop.f32.mrf.mxu0
    %5991 = vmatprep.mubr.f32.mxu0 0.0
    %5992 = vmatmul.mubr.f32.gmra.mxu0 %v5784
    %v5993 = vpop.f32.mrf.mxu0
    %v5994 = vadd.f32 0.0, %v5993
    %v5995 = vpop.f32.mrf.mxu0
    %5996 = vmatprep.mubr.f32.mxu0 0.0
    %5997 = vmatmul.mubr.f32.gmra.mxu0 %v5787
    %v5998 = vpop.f32.mrf.mxu0
    %v5999 = vadd.f32 0.0, %v5998
    %v6000 = vpop.f32.mrf.mxu0
    %6001 = vmatprep.mubr.f32.mxu0 0.0
    %6002 = vmatmul.mubr.f32.gmra.mxu0 %v5790
    %v6003 = vpop.f32.mrf.mxu0
    %v6004 = vadd.f32 0.0, %v6003
    %v6005 = vpop.f32.mrf.mxu0
    %6006 = vmatprep.mubr.f32.mxu0 0.0
    %6007 = vmatmul.mubr.f32.gmra.mxu0 %v5793
    %v6008 = vpop.f32.mrf.mxu0
    %v6009 = vadd.f32 0.0, %v6008
    %v6010 = vpop.f32.mrf.mxu0
    %6011 = vmatprep.mubr.f32.mxu0 0.0
    %6012 = vmatmul.mubr.f32.gmra.mxu0 %v5796
    %v6013 = vpop.f32.mrf.mxu0
    %v6014 = vadd.f32 0.0, %v6013
    %v6015 = vpop.f32.mrf.mxu0
    %6016 = vmatprep.mubr.f32.mxu0 0.0
    %6017 = vmatmul.mubr.f32.gmra.mxu0 %v5799
    %v6018 = vpop.f32.mrf.mxu0
    %v6019 = vadd.f32 0.0, %v6018
    %v6020 = vpop.f32.mrf.mxu0
    %6021 = vmatprep.mubr.f32.mxu0 0.0
    %6022 = vmatmul.mubr.f32.gmra.mxu0 %v5802
    %v6023 = vpop.f32.mrf.mxu0
    %v6024 = vadd.f32 0.0, %v6023
    %v6025 = vpop.f32.mrf.mxu0
    %6026 = vmatprep.mubr.f32.mxu0 0.0
    %6027 = vmatmul.mubr.f32.gmra.mxu0 %v5805
    %v6028 = vpop.f32.mrf.mxu0
    %v6029 = vadd.f32 0.0, %v6028
    %v6030 = vpop.f32.mrf.mxu0
    %6031 = vmatprep.mubr.f32.mxu0 0.0
    %6032 = vmatmul.mubr.f32.gmra.mxu0 %v5808
    %v6033 = vpop.f32.mrf.mxu0
    %v6034 = vadd.f32 0.0, %v6033
    %v6035 = vpop.f32.mrf.mxu0
    %6036 = vmatprep.mubr.f32.mxu0 0.0
    %6037 = vmatmul.mubr.f32.gmra.mxu0 %v5811
    %v6038 = vpop.f32.mrf.mxu0
    %v6039 = vadd.f32 0.0, %v6038
    %v6040 = vpop.f32.mrf.mxu0
    %6041 = vmatprep.mubr.f32.mxu0 0.0
    %6042 = vmatmul.mubr.f32.gmra.mxu0 %v5814
    %v6043 = vpop.f32.mrf.mxu0
    %v6044 = vadd.f32 0.0, %v6043
    %v6045 = vpop.f32.mrf.mxu0
    %6046 = vmatprep.mubr.f32.mxu0 0.0
    %6047 = vmatmul.mubr.f32.gmra.mxu0 %v5817
    %v6048 = vpop.f32.mrf.mxu0
    %v6049 = vadd.f32 0.0, %v6048
    %v6050 = vpop.f32.mrf.mxu0
    %6051 = vmatprep.mubr.f32.mxu0 0.0
    %6052 = vmatmul.mubr.f32.gmra.mxu0 %v5820
    %v6053 = vpop.f32.mrf.mxu0
    %v6054 = vadd.f32 0.0, %v6053
    %v6055 = vpop.f32.mrf.mxu0
    %6056 = vmatprep.mubr.f32.mxu0 0.0
    %6057 = vmatmul.mubr.f32.gmra.mxu0 %v5823
    %v6058 = vpop.f32.mrf.mxu0
    %v6059 = vadd.f32 0.0, %v6058
    %v6060 = vpop.f32.mrf.mxu0
    %6061 = vmatprep.mubr.f32.mxu0 0.0
    %6062 = vmatmul.mubr.f32.gmra.mxu0 %v5826
    %v6063 = vpop.f32.mrf.mxu0
    %v6064 = vadd.f32 0.0, %v6063
    %v6065 = vpop.f32.mrf.mxu0
    %6066 = vmatprep.mubr.f32.mxu0 0.0
    %6067 = vmatmul.mubr.f32.gmra.mxu0 %v5829
    %v6068 = vpop.f32.mrf.mxu0
    %v6069 = vadd.f32 0.0, %v6068
    %v6070 = vpop.f32.mrf.mxu0
    %6071 = vmatprep.mubr.f32.mxu0 0.0
    %6072 = vmatmul.mubr.f32.gmra.mxu0 %v5832
    %v6073 = vpop.f32.mrf.mxu0
    %v6074 = vadd.f32 0.0, %v6073
    %v6075 = vpop.f32.mrf.mxu0
    %6076 = vmatprep.mubr.f32.mxu0 0.0
    %6077 = vmatmul.mubr.f32.gmra.mxu0 %v5835
    %v6078 = vpop.f32.mrf.mxu0
    %v6079 = vadd.f32 0.0, %v6078
    %v6080 = vpop.f32.mrf.mxu0
    %6081 = vdwg.mxu0
    %v6082 = vadd.f32 %v5657, %v5904
    %v6083 = vadd.f32 %v5658, %v5909
    %v6084 = vadd.f32 %v5659, %v5914
    %v6085 = vadd.f32 %v5660, %v5919
    %v6086 = vadd.f32 %v5661, %v5924
    %v6087 = vadd.f32 %v5662, %v5929
    %v6088 = vadd.f32 %v5663, %v5934
    %v6089 = vadd.f32 %v5664, %v5939
    %v6090 = vadd.f32 %v5665, %v5944
    %v6091 = vadd.f32 %v5666, %v5949
    %v6092 = vadd.f32 %v5667, %v5954
    %v6093 = vadd.f32 %v5668, %v5959
    %v6094 = vadd.f32 %v5669, %v5964
    %v6095 = vadd.f32 %v5670, %v5969
    %v6096 = vadd.f32 %v5671, %v5974
    %v6097 = vadd.f32 %v5672, %v5979
    %v6098 = vadd.f32 %v5673, %v5984
    %v6099 = vadd.f32 %v5674, %v5989
    %v6100 = vadd.f32 %v5675, %v5994
    %v6101 = vadd.f32 %v5676, %v5999
    %v6102 = vadd.f32 %v5677, %v6004
    %v6103 = vadd.f32 %v5678, %v6009
    %v6104 = vadd.f32 %v5679, %v6014
    %v6105 = vadd.f32 %v5680, %v6019
    %v6106 = vadd.f32 %v5681, %v6024
    %v6107 = vadd.f32 %v5682, %v6029
    %v6108 = vadd.f32 %v5683, %v6034
    %v6109 = vadd.f32 %v5684, %v6039
    %v6110 = vadd.f32 %v5685, %v6044
    %v6111 = vadd.f32 %v5686, %v6049
    %v6112 = vadd.f32 %v5687, %v6054
    %v6113 = vadd.f32 %v5688, %v6059
    %v6114 = vadd.f32 %v5689, %v6064
    %v6115 = vadd.f32 %v5690, %v6069
    %v6116 = vadd.f32 %v5691, %v6074
    %v6117 = vadd.f32 %v5692, %v6079
    %v6118 = vld [vmem:[%s4417 + $0x24] sm:$0xff]
    %v6119 = vld [vmem:[%s4417 + $0x2c] sm:$0xff]
    %v6120 = vld [vmem:[%s4417 + $0x34] sm:$0xff]
    %v6121 = vld [vmem:[%s4417 + $0x3c] sm:$0xff]
    %v6122 = vld [vmem:[%s4417 + $0x44] sm:$0xff]
    %v6123 = vld [vmem:[%s4417 + $0x4c] sm:$0xff]
    %v6124 = vld [vmem:[%s4417 + $0x54] sm:$0xff]
    %v6125 = vld [vmem:[%s4417 + $0x5c] sm:$0xff]
    %v6126 = vld [vmem:[%s4417 + $0x64] sm:$0xff]
    %v6127 = vld [vmem:[%s4417 + $0x6c] sm:$0xff]
    %v6128 = vld [vmem:[%s4417 + $0x74] sm:$0xff]
    %v6129 = vld [vmem:[%s4417 + $0x7c] sm:$0xff]
    %v6130 = vld [vmem:[%s4417 + $0x84] sm:$0xff]
    %v6131 = vld [vmem:[%s4417 + $0x8c] sm:$0xff]
    %v6132 = vld [vmem:[%s4417 + $0x94] sm:$0xff]
    %v6133 = vld [vmem:[%s4417 + $0x9c] sm:$0xff]
    %v6134 = vld [vmem:[%s4417 + $0xa4] sm:$0xff]
    %v6135 = vld [vmem:[%s4417 + $0xac] sm:$0xff]
    %v6136 = vld [vmem:[%s4417 + $0xb4] sm:$0xff]
    %v6137 = vld [vmem:[%s4417 + $0xbc] sm:$0xff]
    %v6138 = vld [vmem:[%s4417 + $0xc4] sm:$0xff]
    %v6139 = vld [vmem:[%s4417 + $0xcc] sm:$0xff]
    %v6140 = vld [vmem:[%s4417 + $0xd4] sm:$0xff]
    %v6141 = vld [vmem:[%s4417 + $0xdc] sm:$0xff]
    %v6142 = vld [vmem:[%s4417 + $0xe4] sm:$0xff]
    %v6143 = vld [vmem:[%s4417 + $0xec] sm:$0xff]
    %v6144 = vld [vmem:[%s4417 + $0xf4] sm:$0xff]
    %v6145 = vld [vmem:[%s4417 + $0xfc] sm:$0xff]
    %v6146 = vld [vmem:[%s4417 + $0x104] sm:$0xff]
    %v6147 = vld [vmem:[%s4417 + $0x10c] sm:$0xff]
    %v6148 = vld [vmem:[%s4417 + $0x114] sm:$0xff]
    %v6149 = vld [vmem:[%s4417 + $0x11c] sm:$0xff]
    %v6150 = vld [vmem:[%s4417 + $0x124] sm:$0xff]
    %v6151 = vld [vmem:[%s4417 + $0x12c] sm:$0xff]
    %v6152 = vld [vmem:[%s4417 + $0x134] sm:$0xff]
    %v6153 = vld [vmem:[%s4417 + $0x13c] sm:$0xff]
    %v6155 = vsel %vm138, %v6118, 0
    %v6158 = vsel %vm138, %v6119, 0
    %v6161 = vsel %vm138, %v6120, 0
    %v6164 = vsel %vm138, %v6121, 0
    %v6167 = vsel %vm138, %v6122, 0
    %v6170 = vsel %vm138, %v6123, 0
    %v6173 = vsel %vm138, %v6124, 0
    %v6176 = vsel %vm138, %v6125, 0
    %v6179 = vsel %vm138, %v6126, 0
    %v6182 = vsel %vm138, %v6127, 0
    %v6185 = vsel %vm138, %v6128, 0
    %v6188 = vsel %vm138, %v6129, 0
    %v6191 = vsel %vm138, %v6130, 0
    %v6194 = vsel %vm138, %v6131, 0
    %v6197 = vsel %vm138, %v6132, 0
    %v6200 = vsel %vm138, %v6133, 0
    %v6203 = vsel %vm138, %v6134, 0
    %v6206 = vsel %vm138, %v6135, 0
    %v6209 = vsel %vm138, %v6136, 0
    %v6212 = vsel %vm138, %v6137, 0
    %v6215 = vsel %vm138, %v6138, 0
    %v6218 = vsel %vm138, %v6139, 0
    %v6221 = vsel %vm138, %v6140, 0
    %v6224 = vsel %vm138, %v6141, 0
    %v6227 = vsel %vm138, %v6142, 0
    %v6230 = vsel %vm138, %v6143, 0
    %v6233 = vsel %vm138, %v6144, 0
    %v6236 = vsel %vm138, %v6145, 0
    %v6239 = vsel %vm138, %v6146, 0
    %v6242 = vsel %vm138, %v6147, 0
    %v6245 = vsel %vm138, %v6148, 0
    %v6248 = vsel %vm138, %v6149, 0
    %v6251 = vsel %vm138, %v6150, 0
    %v6254 = vsel %vm138, %v6151, 0
    %v6257 = vsel %vm138, %v6152, 0
    %v6260 = vsel %vm138, %v6153, 0
    %6262 = vmatprep.subr.mxu0 0.0
    %6263 = vmatpush1.msra.mxu0 0.0
    %6264 = vmatprep.subr.mxu0 0.0
    %6265 = vmatpush1.msra.mxu0 0.0
    %6266 = vmatprep.subr.mxu0 0.0
    %6267 = vmatpush1.msra.mxu0 0.0
    %6268 = vmatprep.subr.mxu0 0.0
    %6269 = vmatpush1.msra.mxu0 0.0
    %6270 = vmatprep.subr.mxu0 0.0
    %6271 = vmatpush1.msra.mxu0 0.0
    %6272 = vmatprep.subr.mxu0 0.0
    %6273 = vmatpush1.msra.mxu0 0.0
    %6274 = vmatprep.subr.mxu0 0.0
    %6275 = vmatpush1.msra.mxu0 0.0
    %6276 = vmatprep.subr.mxu0 0.0
    %6277 = vmatpush1.msra.mxu0 0.0
    %6278 = vmatprep.subr.mxu0 0.0
    %6279 = vmatpush1.msra.mxu0 0.0
    %6280 = vmatprep.subr.mxu0 0.0
    %6281 = vmatpush1.msra.mxu0 0.0
    %6282 = vmatprep.subr.mxu0 0.0
    %6283 = vmatpush1.msra.mxu0 0.0
    %6284 = vmatprep.subr.mxu0 0.0
    %6285 = vmatpush1.msra.mxu0 0.0
    %6286 = vmatprep.subr.mxu0 0.0
    %6287 = vmatpush1.msra.mxu0 %v47
    %6288 = vmatprep.subr.mxu0 0.0
    %6289 = vmatpush1.msra.mxu0 %v46
    %6290 = vmatprep.subr.mxu0 0.0
    %6291 = vmatpush1.msra.mxu0 %v45
    %6292 = vmatprep.subr.mxu0 0.0
    %6293 = vmatpush1.msra.mxu0 %v44
    %6294 = vmatprep.subr.mxu0 0.0
    %6295 = vmatpush2.msra.mxu0 0.0
    %6296 = vmatprep.subr.mxu0 0.0
    %6297 = vmatpush2.msra.mxu0 0.0
    %6298 = vmatprep.subr.mxu0 0.0
    %6299 = vmatpush2.msra.mxu0 0.0
    %6300 = vmatprep.subr.mxu0 0.0
    %6301 = vmatpush2.msra.mxu0 0.0
    %6302 = vmatprep.subr.mxu0 0.0
    %6303 = vmatpush2.msra.mxu0 0.0
    %6304 = vmatprep.subr.mxu0 0.0
    %6305 = vmatpush2.msra.mxu0 0.0
    %6306 = vmatprep.subr.mxu0 0.0
    %6307 = vmatpush2.msra.mxu0 0.0
    %6308 = vmatprep.subr.mxu0 0.0
    %6309 = vmatpush2.msra.mxu0 0.0
    %6310 = vmatprep.subr.mxu0 0.0
    %6311 = vmatpush2.msra.mxu0 0.0
    %6312 = vmatprep.subr.mxu0 0.0
    %6313 = vmatpush2.msra.mxu0 0.0
    %6314 = vmatprep.subr.mxu0 0.0
    %6315 = vmatpush2.msra.mxu0 0.0
    %6316 = vmatprep.subr.mxu0 0.0
    %6317 = vmatpush2.msra.mxu0 0.0
    %6318 = vmatprep.subr.mxu0 0.0
    %6319 = vmatpush2.msra.mxu0 0.0
    %6320 = vmatprep.subr.mxu0 0.0
    %6321 = vmatpush2.msra.mxu0 0.0
    %6322 = vmatprep.subr.mxu0 0.0
    %6323 = vmatpush2.msra.mxu0 0.0
    %6324 = vmatprep.subr.mxu0 0.0
    %6325 = vmatpush2.msra.mxu0 0.0
    %6326 = vmatprep.mubr.f32.mxu0 0.0
    %6327 = vmatmul.mubr.f32.gmra.mxu0 %v6155
    %v6328 = vpop.f32.mrf.mxu0
    %v6329 = vadd.f32 0.0, %v6328
    %v6330 = vpop.f32.mrf.mxu0
    %6331 = vmatprep.mubr.f32.mxu0 0.0
    %6332 = vmatmul.mubr.f32.gmra.mxu0 %v6158
    %v6333 = vpop.f32.mrf.mxu0
    %v6334 = vadd.f32 0.0, %v6333
    %v6335 = vpop.f32.mrf.mxu0
    %6336 = vmatprep.mubr.f32.mxu0 0.0
    %6337 = vmatmul.mubr.f32.gmra.mxu0 %v6161
    %v6338 = vpop.f32.mrf.mxu0
    %v6339 = vadd.f32 0.0, %v6338
    %v6340 = vpop.f32.mrf.mxu0
    %6341 = vmatprep.mubr.f32.mxu0 0.0
    %6342 = vmatmul.mubr.f32.gmra.mxu0 %v6164
    %v6343 = vpop.f32.mrf.mxu0
    %v6344 = vadd.f32 0.0, %v6343
    %v6345 = vpop.f32.mrf.mxu0
    %6346 = vmatprep.mubr.f32.mxu0 0.0
    %6347 = vmatmul.mubr.f32.gmra.mxu0 %v6167
    %v6348 = vpop.f32.mrf.mxu0
    %v6349 = vadd.f32 0.0, %v6348
    %v6350 = vpop.f32.mrf.mxu0
    %6351 = vmatprep.mubr.f32.mxu0 0.0
    %6352 = vmatmul.mubr.f32.gmra.mxu0 %v6170
    %v6353 = vpop.f32.mrf.mxu0
    %v6354 = vadd.f32 0.0, %v6353
    %v6355 = vpop.f32.mrf.mxu0
    %6356 = vmatprep.mubr.f32.mxu0 0.0
    %6357 = vmatmul.mubr.f32.gmra.mxu0 %v6173
    %v6358 = vpop.f32.mrf.mxu0
    %v6359 = vadd.f32 0.0, %v6358
    %v6360 = vpop.f32.mrf.mxu0
    %6361 = vmatprep.mubr.f32.mxu0 0.0
    %6362 = vmatmul.mubr.f32.gmra.mxu0 %v6176
    %v6363 = vpop.f32.mrf.mxu0
    %v6364 = vadd.f32 0.0, %v6363
    %v6365 = vpop.f32.mrf.mxu0
    %6366 = vmatprep.mubr.f32.mxu0 0.0
    %6367 = vmatmul.mubr.f32.gmra.mxu0 %v6179
    %v6368 = vpop.f32.mrf.mxu0
    %v6369 = vadd.f32 0.0, %v6368
    %v6370 = vpop.f32.mrf.mxu0
    %6371 = vmatprep.mubr.f32.mxu0 0.0
    %6372 = vmatmul.mubr.f32.gmra.mxu0 %v6182
    %v6373 = vpop.f32.mrf.mxu0
    %v6374 = vadd.f32 0.0, %v6373
    %v6375 = vpop.f32.mrf.mxu0
    %6376 = vmatprep.mubr.f32.mxu0 0.0
    %6377 = vmatmul.mubr.f32.gmra.mxu0 %v6185
    %v6378 = vpop.f32.mrf.mxu0
    %v6379 = vadd.f32 0.0, %v6378
    %v6380 = vpop.f32.mrf.mxu0
    %6381 = vmatprep.mubr.f32.mxu0 0.0
    %6382 = vmatmul.mubr.f32.gmra.mxu0 %v6188
    %v6383 = vpop.f32.mrf.mxu0
    %v6384 = vadd.f32 0.0, %v6383
    %v6385 = vpop.f32.mrf.mxu0
    %6386 = vmatprep.mubr.f32.mxu0 0.0
    %6387 = vmatmul.mubr.f32.gmra.mxu0 %v6191
    %v6388 = vpop.f32.mrf.mxu0
    %v6389 = vadd.f32 0.0, %v6388
    %v6390 = vpop.f32.mrf.mxu0
    %6391 = vmatprep.mubr.f32.mxu0 0.0
    %6392 = vmatmul.mubr.f32.gmra.mxu0 %v6194
    %v6393 = vpop.f32.mrf.mxu0
    %v6394 = vadd.f32 0.0, %v6393
    %v6395 = vpop.f32.mrf.mxu0
    %6396 = vmatprep.mubr.f32.mxu0 0.0
    %6397 = vmatmul.mubr.f32.gmra.mxu0 %v6197
    %v6398 = vpop.f32.mrf.mxu0
    %v6399 = vadd.f32 0.0, %v6398
    %v6400 = vpop.f32.mrf.mxu0
    %6401 = vmatprep.mubr.f32.mxu0 0.0
    %6402 = vmatmul.mubr.f32.gmra.mxu0 %v6200
    %v6403 = vpop.f32.mrf.mxu0
    %v6404 = vadd.f32 0.0, %v6403
    %v6405 = vpop.f32.mrf.mxu0
    %6406 = vmatprep.mubr.f32.mxu0 0.0
    %6407 = vmatmul.mubr.f32.gmra.mxu0 %v6203
    %v6408 = vpop.f32.mrf.mxu0
    %v6409 = vadd.f32 0.0, %v6408
    %v6410 = vpop.f32.mrf.mxu0
    %6411 = vmatprep.mubr.f32.mxu0 0.0
    %6412 = vmatmul.mubr.f32.gmra.mxu0 %v6206
    %v6413 = vpop.f32.mrf.mxu0
    %v6414 = vadd.f32 0.0, %v6413
    %v6415 = vpop.f32.mrf.mxu0
    %6416 = vmatprep.mubr.f32.mxu0 0.0
    %6417 = vmatmul.mubr.f32.gmra.mxu0 %v6209
    %v6418 = vpop.f32.mrf.mxu0
    %v6419 = vadd.f32 0.0, %v6418
    %v6420 = vpop.f32.mrf.mxu0
    %6421 = vmatprep.mubr.f32.mxu0 0.0
    %6422 = vmatmul.mubr.f32.gmra.mxu0 %v6212
    %v6423 = vpop.f32.mrf.mxu0
    %v6424 = vadd.f32 0.0, %v6423
    %v6425 = vpop.f32.mrf.mxu0
    %6426 = vmatprep.mubr.f32.mxu0 0.0
    %6427 = vmatmul.mubr.f32.gmra.mxu0 %v6215
    %v6428 = vpop.f32.mrf.mxu0
    %v6429 = vadd.f32 0.0, %v6428
    %v6430 = vpop.f32.mrf.mxu0
    %6431 = vmatprep.mubr.f32.mxu0 0.0
    %6432 = vmatmul.mubr.f32.gmra.mxu0 %v6218
    %v6433 = vpop.f32.mrf.mxu0
    %v6434 = vadd.f32 0.0, %v6433
    %v6435 = vpop.f32.mrf.mxu0
    %6436 = vmatprep.mubr.f32.mxu0 0.0
    %6437 = vmatmul.mubr.f32.gmra.mxu0 %v6221
    %v6438 = vpop.f32.mrf.mxu0
    %v6439 = vadd.f32 0.0, %v6438
    %v6440 = vpop.f32.mrf.mxu0
    %6441 = vmatprep.mubr.f32.mxu0 0.0
    %6442 = vmatmul.mubr.f32.gmra.mxu0 %v6224
    %v6443 = vpop.f32.mrf.mxu0
    %v6444 = vadd.f32 0.0, %v6443
    %v6445 = vpop.f32.mrf.mxu0
    %6446 = vmatprep.mubr.f32.mxu0 0.0
    %6447 = vmatmul.mubr.f32.gmra.mxu0 %v6227
    %v6448 = vpop.f32.mrf.mxu0
    %v6449 = vadd.f32 0.0, %v6448
    %v6450 = vpop.f32.mrf.mxu0
    %6451 = vmatprep.mubr.f32.mxu0 0.0
    %6452 = vmatmul.mubr.f32.gmra.mxu0 %v6230
    %v6453 = vpop.f32.mrf.mxu0
    %v6454 = vadd.f32 0.0, %v6453
    %v6455 = vpop.f32.mrf.mxu0
    %6456 = vmatprep.mubr.f32.mxu0 0.0
    %6457 = vmatmul.mubr.f32.gmra.mxu0 %v6233
    %v6458 = vpop.f32.mrf.mxu0
    %v6459 = vadd.f32 0.0, %v6458
    %v6460 = vpop.f32.mrf.mxu0
    %6461 = vmatprep.mubr.f32.mxu0 0.0
    %6462 = vmatmul.mubr.f32.gmra.mxu0 %v6236
    %v6463 = vpop.f32.mrf.mxu0
    %v6464 = vadd.f32 0.0, %v6463
    %v6465 = vpop.f32.mrf.mxu0
    %6466 = vmatprep.mubr.f32.mxu0 0.0
    %6467 = vmatmul.mubr.f32.gmra.mxu0 %v6239
    %v6468 = vpop.f32.mrf.mxu0
    %v6469 = vadd.f32 0.0, %v6468
    %v6470 = vpop.f32.mrf.mxu0
    %6471 = vmatprep.mubr.f32.mxu0 0.0
    %6472 = vmatmul.mubr.f32.gmra.mxu0 %v6242
    %v6473 = vpop.f32.mrf.mxu0
    %v6474 = vadd.f32 0.0, %v6473
    %v6475 = vpop.f32.mrf.mxu0
    %6476 = vmatprep.mubr.f32.mxu0 0.0
    %6477 = vmatmul.mubr.f32.gmra.mxu0 %v6245
    %v6478 = vpop.f32.mrf.mxu0
    %v6479 = vadd.f32 0.0, %v6478
    %v6480 = vpop.f32.mrf.mxu0
    %6481 = vmatprep.mubr.f32.mxu0 0.0
    %6482 = vmatmul.mubr.f32.gmra.mxu0 %v6248
    %v6483 = vpop.f32.mrf.mxu0
    %v6484 = vadd.f32 0.0, %v6483
    %v6485 = vpop.f32.mrf.mxu0
    %6486 = vmatprep.mubr.f32.mxu0 0.0
    %6487 = vmatmul.mubr.f32.gmra.mxu0 %v6251
    %v6488 = vpop.f32.mrf.mxu0
    %v6489 = vadd.f32 0.0, %v6488
    %v6490 = vpop.f32.mrf.mxu0
    %6491 = vmatprep.mubr.f32.mxu0 0.0
    %6492 = vmatmul.mubr.f32.gmra.mxu0 %v6254
    %v6493 = vpop.f32.mrf.mxu0
    %v6494 = vadd.f32 0.0, %v6493
    %v6495 = vpop.f32.mrf.mxu0
    %6496 = vmatprep.mubr.f32.mxu0 0.0
    %6497 = vmatmul.mubr.f32.gmra.mxu0 %v6257
    %v6498 = vpop.f32.mrf.mxu0
    %v6499 = vadd.f32 0.0, %v6498
    %v6500 = vpop.f32.mrf.mxu0
    %6501 = vmatprep.mubr.f32.mxu0 0.0
    %6502 = vmatmul.mubr.f32.gmra.mxu0 %v6260
    %v6503 = vpop.f32.mrf.mxu0
    %v6504 = vadd.f32 0.0, %v6503
    %v6505 = vpop.f32.mrf.mxu0
    %6506 = vdwg.mxu0
    %v6507 = vadd.f32 %v6082, %v6329
    %v6508 = vadd.f32 %v6083, %v6334
    %v6509 = vadd.f32 %v6084, %v6339
    %v6510 = vadd.f32 %v6085, %v6344
    %v6511 = vadd.f32 %v6086, %v6349
    %v6512 = vadd.f32 %v6087, %v6354
    %v6513 = vadd.f32 %v6088, %v6359
    %v6514 = vadd.f32 %v6089, %v6364
    %v6515 = vadd.f32 %v6090, %v6369
    %v6516 = vadd.f32 %v6091, %v6374
    %v6517 = vadd.f32 %v6092, %v6379
    %v6518 = vadd.f32 %v6093, %v6384
    %v6519 = vadd.f32 %v6094, %v6389
    %v6520 = vadd.f32 %v6095, %v6394
    %v6521 = vadd.f32 %v6096, %v6399
    %v6522 = vadd.f32 %v6097, %v6404
    %v6523 = vadd.f32 %v6098, %v6409
    %v6524 = vadd.f32 %v6099, %v6414
    %v6525 = vadd.f32 %v6100, %v6419
    %v6526 = vadd.f32 %v6101, %v6424
    %v6527 = vadd.f32 %v6102, %v6429
    %v6528 = vadd.f32 %v6103, %v6434
    %v6529 = vadd.f32 %v6104, %v6439
    %v6530 = vadd.f32 %v6105, %v6444
    %v6531 = vadd.f32 %v6106, %v6449
    %v6532 = vadd.f32 %v6107, %v6454
    %v6533 = vadd.f32 %v6108, %v6459
    %v6534 = vadd.f32 %v6109, %v6464
    %v6535 = vadd.f32 %v6110, %v6469
    %v6536 = vadd.f32 %v6111, %v6474
    %v6537 = vadd.f32 %v6112, %v6479
    %v6538 = vadd.f32 %v6113, %v6484
    %v6539 = vadd.f32 %v6114, %v6489
    %v6540 = vadd.f32 %v6115, %v6494
    %v6541 = vadd.f32 %v6116, %v6499
    %v6542 = vadd.f32 %v6117, %v6504
    %v6543 = vld [vmem:[%s4417 + $0x25] sm:$0xff]
    %v6544 = vld [vmem:[%s4417 + $0x2d] sm:$0xff]
    %v6545 = vld [vmem:[%s4417 + $0x35] sm:$0xff]
    %v6546 = vld [vmem:[%s4417 + $0x3d] sm:$0xff]
    %v6547 = vld [vmem:[%s4417 + $0x45] sm:$0xff]
    %v6548 = vld [vmem:[%s4417 + $0x4d] sm:$0xff]
    %v6549 = vld [vmem:[%s4417 + $0x55] sm:$0xff]
    %v6550 = vld [vmem:[%s4417 + $0x5d] sm:$0xff]
    %v6551 = vld [vmem:[%s4417 + $0x65] sm:$0xff]
    %v6552 = vld [vmem:[%s4417 + $0x6d] sm:$0xff]
    %v6553 = vld [vmem:[%s4417 + $0x75] sm:$0xff]
    %v6554 = vld [vmem:[%s4417 + $0x7d] sm:$0xff]
    %v6555 = vld [vmem:[%s4417 + $0x85] sm:$0xff]
    %v6556 = vld [vmem:[%s4417 + $0x8d] sm:$0xff]
    %v6557 = vld [vmem:[%s4417 + $0x95] sm:$0xff]
    %v6558 = vld [vmem:[%s4417 + $0x9d] sm:$0xff]
    %v6559 = vld [vmem:[%s4417 + $0xa5] sm:$0xff]
    %v6560 = vld [vmem:[%s4417 + $0xad] sm:$0xff]
    %v6561 = vld [vmem:[%s4417 + $0xb5] sm:$0xff]
    %v6562 = vld [vmem:[%s4417 + $0xbd] sm:$0xff]
    %v6563 = vld [vmem:[%s4417 + $0xc5] sm:$0xff]
    %v6564 = vld [vmem:[%s4417 + $0xcd] sm:$0xff]
    %v6565 = vld [vmem:[%s4417 + $0xd5] sm:$0xff]
    %v6566 = vld [vmem:[%s4417 + $0xdd] sm:$0xff]
    %v6567 = vld [vmem:[%s4417 + $0xe5] sm:$0xff]
    %v6568 = vld [vmem:[%s4417 + $0xed] sm:$0xff]
    %v6569 = vld [vmem:[%s4417 + $0xf5] sm:$0xff]
    %v6570 = vld [vmem:[%s4417 + $0xfd] sm:$0xff]
    %v6571 = vld [vmem:[%s4417 + $0x105] sm:$0xff]
    %v6572 = vld [vmem:[%s4417 + $0x10d] sm:$0xff]
    %v6573 = vld [vmem:[%s4417 + $0x115] sm:$0xff]
    %v6574 = vld [vmem:[%s4417 + $0x11d] sm:$0xff]
    %v6575 = vld [vmem:[%s4417 + $0x125] sm:$0xff]
    %v6576 = vld [vmem:[%s4417 + $0x12d] sm:$0xff]
    %v6577 = vld [vmem:[%s4417 + $0x135] sm:$0xff]
    %v6578 = vld [vmem:[%s4417 + $0x13d] sm:$0xff]
    %v6580 = vsel %vm138, %v6543, 0
    %v6583 = vsel %vm138, %v6544, 0
    %v6586 = vsel %vm138, %v6545, 0
    %v6589 = vsel %vm138, %v6546, 0
    %v6592 = vsel %vm138, %v6547, 0
    %v6595 = vsel %vm138, %v6548, 0
    %v6598 = vsel %vm138, %v6549, 0
    %v6601 = vsel %vm138, %v6550, 0
    %v6604 = vsel %vm138, %v6551, 0
    %v6607 = vsel %vm138, %v6552, 0
    %v6610 = vsel %vm138, %v6553, 0
    %v6613 = vsel %vm138, %v6554, 0
    %v6616 = vsel %vm138, %v6555, 0
    %v6619 = vsel %vm138, %v6556, 0
    %v6622 = vsel %vm138, %v6557, 0
    %v6625 = vsel %vm138, %v6558, 0
    %v6628 = vsel %vm138, %v6559, 0
    %v6631 = vsel %vm138, %v6560, 0
    %v6634 = vsel %vm138, %v6561, 0
    %v6637 = vsel %vm138, %v6562, 0
    %v6640 = vsel %vm138, %v6563, 0
    %v6643 = vsel %vm138, %v6564, 0
    %v6646 = vsel %vm138, %v6565, 0
    %v6649 = vsel %vm138, %v6566, 0
    %v6652 = vsel %vm138, %v6567, 0
    %v6655 = vsel %vm138, %v6568, 0
    %v6658 = vsel %vm138, %v6569, 0
    %v6661 = vsel %vm138, %v6570, 0
    %v6664 = vsel %vm138, %v6571, 0
    %v6667 = vsel %vm138, %v6572, 0
    %v6670 = vsel %vm138, %v6573, 0
    %v6673 = vsel %vm138, %v6574, 0
    %v6676 = vsel %vm138, %v6575, 0
    %v6679 = vsel %vm138, %v6576, 0
    %v6682 = vsel %vm138, %v6577, 0
    %v6685 = vsel %vm138, %v6578, 0
    %6687 = vmatprep.subr.mxu0 0.0
    %6688 = vmatpush1.msra.mxu0 0.0
    %6689 = vmatprep.subr.mxu0 0.0
    %6690 = vmatpush1.msra.mxu0 0.0
    %6691 = vmatprep.subr.mxu0 0.0
    %6692 = vmatpush1.msra.mxu0 0.0
    %6693 = vmatprep.subr.mxu0 0.0
    %6694 = vmatpush1.msra.mxu0 0.0
    %6695 = vmatprep.subr.mxu0 0.0
    %6696 = vmatpush1.msra.mxu0 0.0
    %6697 = vmatprep.subr.mxu0 0.0
    %6698 = vmatpush1.msra.mxu0 0.0
    %6699 = vmatprep.subr.mxu0 0.0
    %6700 = vmatpush1.msra.mxu0 0.0
    %6701 = vmatprep.subr.mxu0 0.0
    %6702 = vmatpush1.msra.mxu0 0.0
    %6703 = vmatprep.subr.mxu0 0.0
    %6704 = vmatpush1.msra.mxu0 0.0
    %6705 = vmatprep.subr.mxu0 0.0
    %6706 = vmatpush1.msra.mxu0 0.0
    %6707 = vmatprep.subr.mxu0 0.0
    %6708 = vmatpush1.msra.mxu0 0.0
    %6709 = vmatprep.subr.mxu0 0.0
    %6710 = vmatpush1.msra.mxu0 0.0
    %6711 = vmatprep.subr.mxu0 0.0
    %6712 = vmatpush1.msra.mxu0 %v52
    %6713 = vmatprep.subr.mxu0 0.0
    %6714 = vmatpush1.msra.mxu0 %v51
    %6715 = vmatprep.subr.mxu0 0.0
    %6716 = vmatpush1.msra.mxu0 %v50
    %6717 = vmatprep.subr.mxu0 0.0
    %6718 = vmatpush1.msra.mxu0 %v49
    %6719 = vmatprep.subr.mxu0 0.0
    %6720 = vmatpush2.msra.mxu0 0.0
    %6721 = vmatprep.subr.mxu0 0.0
    %6722 = vmatpush2.msra.mxu0 0.0
    %6723 = vmatprep.subr.mxu0 0.0
    %6724 = vmatpush2.msra.mxu0 0.0
    %6725 = vmatprep.subr.mxu0 0.0
    %6726 = vmatpush2.msra.mxu0 0.0
    %6727 = vmatprep.subr.mxu0 0.0
    %6728 = vmatpush2.msra.mxu0 0.0
    %6729 = vmatprep.subr.mxu0 0.0
    %6730 = vmatpush2.msra.mxu0 0.0
    %6731 = vmatprep.subr.mxu0 0.0
    %6732 = vmatpush2.msra.mxu0 0.0
    %6733 = vmatprep.subr.mxu0 0.0
    %6734 = vmatpush2.msra.mxu0 0.0
    %6735 = vmatprep.subr.mxu0 0.0
    %6736 = vmatpush2.msra.mxu0 0.0
    %6737 = vmatprep.subr.mxu0 0.0
    %6738 = vmatpush2.msra.mxu0 0.0
    %6739 = vmatprep.subr.mxu0 0.0
    %6740 = vmatpush2.msra.mxu0 0.0
    %6741 = vmatprep.subr.mxu0 0.0
    %6742 = vmatpush2.msra.mxu0 0.0
    %6743 = vmatprep.subr.mxu0 0.0
    %6744 = vmatpush2.msra.mxu0 0.0
    %6745 = vmatprep.subr.mxu0 0.0
    %6746 = vmatpush2.msra.mxu0 0.0
    %6747 = vmatprep.subr.mxu0 0.0
    %6748 = vmatpush2.msra.mxu0 0.0
    %6749 = vmatprep.subr.mxu0 0.0
    %6750 = vmatpush2.msra.mxu0 0.0
    %6751 = vmatprep.mubr.f32.mxu0 0.0
    %6752 = vmatmul.mubr.f32.gmra.mxu0 %v6580
    %v6753 = vpop.f32.mrf.mxu0
    %v6754 = vadd.f32 0.0, %v6753
    %v6755 = vpop.f32.mrf.mxu0
    %6756 = vmatprep.mubr.f32.mxu0 0.0
    %6757 = vmatmul.mubr.f32.gmra.mxu0 %v6583
    %v6758 = vpop.f32.mrf.mxu0
    %v6759 = vadd.f32 0.0, %v6758
    %v6760 = vpop.f32.mrf.mxu0
    %6761 = vmatprep.mubr.f32.mxu0 0.0
    %6762 = vmatmul.mubr.f32.gmra.mxu0 %v6586
    %v6763 = vpop.f32.mrf.mxu0
    %v6764 = vadd.f32 0.0, %v6763
    %v6765 = vpop.f32.mrf.mxu0
    %6766 = vmatprep.mubr.f32.mxu0 0.0
    %6767 = vmatmul.mubr.f32.gmra.mxu0 %v6589
    %v6768 = vpop.f32.mrf.mxu0
    %v6769 = vadd.f32 0.0, %v6768
    %v6770 = vpop.f32.mrf.mxu0
    %6771 = vmatprep.mubr.f32.mxu0 0.0
    %6772 = vmatmul.mubr.f32.gmra.mxu0 %v6592
    %v6773 = vpop.f32.mrf.mxu0
    %v6774 = vadd.f32 0.0, %v6773
    %v6775 = vpop.f32.mrf.mxu0
    %6776 = vmatprep.mubr.f32.mxu0 0.0
    %6777 = vmatmul.mubr.f32.gmra.mxu0 %v6595
    %v6778 = vpop.f32.mrf.mxu0
    %v6779 = vadd.f32 0.0, %v6778
    %v6780 = vpop.f32.mrf.mxu0
    %6781 = vmatprep.mubr.f32.mxu0 0.0
    %6782 = vmatmul.mubr.f32.gmra.mxu0 %v6598
    %v6783 = vpop.f32.mrf.mxu0
    %v6784 = vadd.f32 0.0, %v6783
    %v6785 = vpop.f32.mrf.mxu0
    %6786 = vmatprep.mubr.f32.mxu0 0.0
    %6787 = vmatmul.mubr.f32.gmra.mxu0 %v6601
    %v6788 = vpop.f32.mrf.mxu0
    %v6789 = vadd.f32 0.0, %v6788
    %v6790 = vpop.f32.mrf.mxu0
    %6791 = vmatprep.mubr.f32.mxu0 0.0
    %6792 = vmatmul.mubr.f32.gmra.mxu0 %v6604
    %v6793 = vpop.f32.mrf.mxu0
    %v6794 = vadd.f32 0.0, %v6793
    %v6795 = vpop.f32.mrf.mxu0
    %6796 = vmatprep.mubr.f32.mxu0 0.0
    %6797 = vmatmul.mubr.f32.gmra.mxu0 %v6607
    %v6798 = vpop.f32.mrf.mxu0
    %v6799 = vadd.f32 0.0, %v6798
    %v6800 = vpop.f32.mrf.mxu0
    %6801 = vmatprep.mubr.f32.mxu0 0.0
    %6802 = vmatmul.mubr.f32.gmra.mxu0 %v6610
    %v6803 = vpop.f32.mrf.mxu0
    %v6804 = vadd.f32 0.0, %v6803
    %v6805 = vpop.f32.mrf.mxu0
    %6806 = vmatprep.mubr.f32.mxu0 0.0
    %6807 = vmatmul.mubr.f32.gmra.mxu0 %v6613
    %v6808 = vpop.f32.mrf.mxu0
    %v6809 = vadd.f32 0.0, %v6808
    %v6810 = vpop.f32.mrf.mxu0
    %6811 = vmatprep.mubr.f32.mxu0 0.0
    %6812 = vmatmul.mubr.f32.gmra.mxu0 %v6616
    %v6813 = vpop.f32.mrf.mxu0
    %v6814 = vadd.f32 0.0, %v6813
    %v6815 = vpop.f32.mrf.mxu0
    %6816 = vmatprep.mubr.f32.mxu0 0.0
    %6817 = vmatmul.mubr.f32.gmra.mxu0 %v6619
    %v6818 = vpop.f32.mrf.mxu0
    %v6819 = vadd.f32 0.0, %v6818
    %v6820 = vpop.f32.mrf.mxu0
    %6821 = vmatprep.mubr.f32.mxu0 0.0
    %6822 = vmatmul.mubr.f32.gmra.mxu0 %v6622
    %v6823 = vpop.f32.mrf.mxu0
    %v6824 = vadd.f32 0.0, %v6823
    %v6825 = vpop.f32.mrf.mxu0
    %6826 = vmatprep.mubr.f32.mxu0 0.0
    %6827 = vmatmul.mubr.f32.gmra.mxu0 %v6625
    %v6828 = vpop.f32.mrf.mxu0
    %v6829 = vadd.f32 0.0, %v6828
    %v6830 = vpop.f32.mrf.mxu0
    %6831 = vmatprep.mubr.f32.mxu0 0.0
    %6832 = vmatmul.mubr.f32.gmra.mxu0 %v6628
    %v6833 = vpop.f32.mrf.mxu0
    %v6834 = vadd.f32 0.0, %v6833
    %v6835 = vpop.f32.mrf.mxu0
    %6836 = vmatprep.mubr.f32.mxu0 0.0
    %6837 = vmatmul.mubr.f32.gmra.mxu0 %v6631
    %v6838 = vpop.f32.mrf.mxu0
    %v6839 = vadd.f32 0.0, %v6838
    %v6840 = vpop.f32.mrf.mxu0
    %6841 = vmatprep.mubr.f32.mxu0 0.0
    %6842 = vmatmul.mubr.f32.gmra.mxu0 %v6634
    %v6843 = vpop.f32.mrf.mxu0
    %v6844 = vadd.f32 0.0, %v6843
    %v6845 = vpop.f32.mrf.mxu0
    %6846 = vmatprep.mubr.f32.mxu0 0.0
    %6847 = vmatmul.mubr.f32.gmra.mxu0 %v6637
    %v6848 = vpop.f32.mrf.mxu0
    %v6849 = vadd.f32 0.0, %v6848
    %v6850 = vpop.f32.mrf.mxu0
    %6851 = vmatprep.mubr.f32.mxu0 0.0
    %6852 = vmatmul.mubr.f32.gmra.mxu0 %v6640
    %v6853 = vpop.f32.mrf.mxu0
    %v6854 = vadd.f32 0.0, %v6853
    %v6855 = vpop.f32.mrf.mxu0
    %6856 = vmatprep.mubr.f32.mxu0 0.0
    %6857 = vmatmul.mubr.f32.gmra.mxu0 %v6643
    %v6858 = vpop.f32.mrf.mxu0
    %v6859 = vadd.f32 0.0, %v6858
    %v6860 = vpop.f32.mrf.mxu0
    %6861 = vmatprep.mubr.f32.mxu0 0.0
    %6862 = vmatmul.mubr.f32.gmra.mxu0 %v6646
    %v6863 = vpop.f32.mrf.mxu0
    %v6864 = vadd.f32 0.0, %v6863
    %v6865 = vpop.f32.mrf.mxu0
    %6866 = vmatprep.mubr.f32.mxu0 0.0
    %6867 = vmatmul.mubr.f32.gmra.mxu0 %v6649
    %v6868 = vpop.f32.mrf.mxu0
    %v6869 = vadd.f32 0.0, %v6868
    %v6870 = vpop.f32.mrf.mxu0
    %6871 = vmatprep.mubr.f32.mxu0 0.0
    %6872 = vmatmul.mubr.f32.gmra.mxu0 %v6652
    %v6873 = vpop.f32.mrf.mxu0
    %v6874 = vadd.f32 0.0, %v6873
    %v6875 = vpop.f32.mrf.mxu0
    %6876 = vmatprep.mubr.f32.mxu0 0.0
    %6877 = vmatmul.mubr.f32.gmra.mxu0 %v6655
    %v6878 = vpop.f32.mrf.mxu0
    %v6879 = vadd.f32 0.0, %v6878
    %v6880 = vpop.f32.mrf.mxu0
    %6881 = vmatprep.mubr.f32.mxu0 0.0
    %6882 = vmatmul.mubr.f32.gmra.mxu0 %v6658
    %v6883 = vpop.f32.mrf.mxu0
    %v6884 = vadd.f32 0.0, %v6883
    %v6885 = vpop.f32.mrf.mxu0
    %6886 = vmatprep.mubr.f32.mxu0 0.0
    %6887 = vmatmul.mubr.f32.gmra.mxu0 %v6661
    %v6888 = vpop.f32.mrf.mxu0
    %v6889 = vadd.f32 0.0, %v6888
    %v6890 = vpop.f32.mrf.mxu0
    %6891 = vmatprep.mubr.f32.mxu0 0.0
    %6892 = vmatmul.mubr.f32.gmra.mxu0 %v6664
    %v6893 = vpop.f32.mrf.mxu0
    %v6894 = vadd.f32 0.0, %v6893
    %v6895 = vpop.f32.mrf.mxu0
    %6896 = vmatprep.mubr.f32.mxu0 0.0
    %6897 = vmatmul.mubr.f32.gmra.mxu0 %v6667
    %v6898 = vpop.f32.mrf.mxu0
    %v6899 = vadd.f32 0.0, %v6898
    %v6900 = vpop.f32.mrf.mxu0
    %6901 = vmatprep.mubr.f32.mxu0 0.0
    %6902 = vmatmul.mubr.f32.gmra.mxu0 %v6670
    %v6903 = vpop.f32.mrf.mxu0
    %v6904 = vadd.f32 0.0, %v6903
    %v6905 = vpop.f32.mrf.mxu0
    %6906 = vmatprep.mubr.f32.mxu0 0.0
    %6907 = vmatmul.mubr.f32.gmra.mxu0 %v6673
    %v6908 = vpop.f32.mrf.mxu0
    %v6909 = vadd.f32 0.0, %v6908
    %v6910 = vpop.f32.mrf.mxu0
    %6911 = vmatprep.mubr.f32.mxu0 0.0
    %6912 = vmatmul.mubr.f32.gmra.mxu0 %v6676
    %v6913 = vpop.f32.mrf.mxu0
    %v6914 = vadd.f32 0.0, %v6913
    %v6915 = vpop.f32.mrf.mxu0
    %6916 = vmatprep.mubr.f32.mxu0 0.0
    %6917 = vmatmul.mubr.f32.gmra.mxu0 %v6679
    %v6918 = vpop.f32.mrf.mxu0
    %v6919 = vadd.f32 0.0, %v6918
    %v6920 = vpop.f32.mrf.mxu0
    %6921 = vmatprep.mubr.f32.mxu0 0.0
    %6922 = vmatmul.mubr.f32.gmra.mxu0 %v6682
    %v6923 = vpop.f32.mrf.mxu0
    %v6924 = vadd.f32 0.0, %v6923
    %v6925 = vpop.f32.mrf.mxu0
    %6926 = vmatprep.mubr.f32.mxu0 0.0
    %6927 = vmatmul.mubr.f32.gmra.mxu0 %v6685
    %v6928 = vpop.f32.mrf.mxu0
    %v6929 = vadd.f32 0.0, %v6928
    %v6930 = vpop.f32.mrf.mxu0
    %6931 = vdwg.mxu0
    %v6932 = vadd.f32 %v6507, %v6754
    %v6933 = vadd.f32 %v6508, %v6759
    %v6934 = vadd.f32 %v6509, %v6764
    %v6935 = vadd.f32 %v6510, %v6769
    %v6936 = vadd.f32 %v6511, %v6774
    %v6937 = vadd.f32 %v6512, %v6779
    %v6938 = vadd.f32 %v6513, %v6784
    %v6939 = vadd.f32 %v6514, %v6789
    %v6940 = vadd.f32 %v6515, %v6794
    %v6941 = vadd.f32 %v6516, %v6799
    %v6942 = vadd.f32 %v6517, %v6804
    %v6943 = vadd.f32 %v6518, %v6809
    %v6944 = vadd.f32 %v6519, %v6814
    %v6945 = vadd.f32 %v6520, %v6819
    %v6946 = vadd.f32 %v6521, %v6824
    %v6947 = vadd.f32 %v6522, %v6829
    %v6948 = vadd.f32 %v6523, %v6834
    %v6949 = vadd.f32 %v6524, %v6839
    %v6950 = vadd.f32 %v6525, %v6844
    %v6951 = vadd.f32 %v6526, %v6849
    %v6952 = vadd.f32 %v6527, %v6854
    %v6953 = vadd.f32 %v6528, %v6859
    %v6954 = vadd.f32 %v6529, %v6864
    %v6955 = vadd.f32 %v6530, %v6869
    %v6956 = vadd.f32 %v6531, %v6874
    %v6957 = vadd.f32 %v6532, %v6879
    %v6958 = vadd.f32 %v6533, %v6884
    %v6959 = vadd.f32 %v6534, %v6889
    %v6960 = vadd.f32 %v6535, %v6894
    %v6961 = vadd.f32 %v6536, %v6899
    %v6962 = vadd.f32 %v6537, %v6904
    %v6963 = vadd.f32 %v6538, %v6909
    %v6964 = vadd.f32 %v6539, %v6914
    %v6965 = vadd.f32 %v6540, %v6919
    %v6966 = vadd.f32 %v6541, %v6924
    %v6967 = vadd.f32 %v6542, %v6929
    %v6968 = vld [vmem:[%s4417 + $0x35] sm:$0xff]
    %v6969 = vld [vmem:[%s4417 + $0x3d] sm:$0xff]
    %v6970 = vld [vmem:[%s4417 + $0x45] sm:$0xff]
    %v6971 = vld [vmem:[%s4417 + $0x4d] sm:$0xff]
    %v6972 = vld [vmem:[%s4417 + $0x55] sm:$0xff]
    %v6973 = vld [vmem:[%s4417 + $0x5d] sm:$0xff]
    %v6974 = vld [vmem:[%s4417 + $0x65] sm:$0xff]
    %v6975 = vld [vmem:[%s4417 + $0x6d] sm:$0xff]
    %v6976 = vld [vmem:[%s4417 + $0x75] sm:$0xff]
    %v6977 = vld [vmem:[%s4417 + $0x7d] sm:$0xff]
    %v6978 = vld [vmem:[%s4417 + $0x85] sm:$0xff]
    %v6979 = vld [vmem:[%s4417 + $0x8d] sm:$0xff]
    %v6980 = vld [vmem:[%s4417 + $0x95] sm:$0xff]
    %v6981 = vld [vmem:[%s4417 + $0x9d] sm:$0xff]
    %v6982 = vld [vmem:[%s4417 + $0xa5] sm:$0xff]
    %v6983 = vld [vmem:[%s4417 + $0xad] sm:$0xff]
    %v6984 = vld [vmem:[%s4417 + $0xb5] sm:$0xff]
    %v6985 = vld [vmem:[%s4417 + $0xbd] sm:$0xff]
    %v6986 = vld [vmem:[%s4417 + $0xc5] sm:$0xff]
    %v6987 = vld [vmem:[%s4417 + $0xcd] sm:$0xff]
    %v6988 = vld [vmem:[%s4417 + $0xd5] sm:$0xff]
    %v6989 = vld [vmem:[%s4417 + $0xdd] sm:$0xff]
    %v6990 = vld [vmem:[%s4417 + $0xe5] sm:$0xff]
    %v6991 = vld [vmem:[%s4417 + $0xed] sm:$0xff]
    %v6992 = vld [vmem:[%s4417 + $0xf5] sm:$0xff]
    %v6993 = vld [vmem:[%s4417 + $0xfd] sm:$0xff]
    %v6994 = vld [vmem:[%s4417 + $0x105] sm:$0xff]
    %v6995 = vld [vmem:[%s4417 + $0x10d] sm:$0xff]
    %v6996 = vld [vmem:[%s4417 + $0x115] sm:$0xff]
    %v6997 = vld [vmem:[%s4417 + $0x11d] sm:$0xff]
    %v6998 = vld [vmem:[%s4417 + $0x125] sm:$0xff]
    %v6999 = vld [vmem:[%s4417 + $0x12d] sm:$0xff]
    %v7000 = vld [vmem:[%s4417 + $0x135] sm:$0xff]
    %v7001 = vld [vmem:[%s4417 + $0x13d] sm:$0xff]
    %v7002 = vld [vmem:[%s4417 + $0x145] sm:$0xff]
    %v7003 = vld [vmem:[%s4417 + $0x14d] sm:$0xff]
    %v7005 = vsel %vm138, %v6968, 0
    %v7008 = vsel %vm138, %v6969, 0
    %v7011 = vsel %vm138, %v6970, 0
    %v7014 = vsel %vm138, %v6971, 0
    %v7017 = vsel %vm138, %v6972, 0
    %v7020 = vsel %vm138, %v6973, 0
    %v7023 = vsel %vm138, %v6974, 0
    %v7026 = vsel %vm138, %v6975, 0
    %v7029 = vsel %vm138, %v6976, 0
    %v7032 = vsel %vm138, %v6977, 0
    %v7035 = vsel %vm138, %v6978, 0
    %v7038 = vsel %vm138, %v6979, 0
    %v7041 = vsel %vm138, %v6980, 0
    %v7044 = vsel %vm138, %v6981, 0
    %v7047 = vsel %vm138, %v6982, 0
    %v7050 = vsel %vm138, %v6983, 0
    %v7053 = vsel %vm138, %v6984, 0
    %v7056 = vsel %vm138, %v6985, 0
    %v7059 = vsel %vm138, %v6986, 0
    %v7062 = vsel %vm138, %v6987, 0
    %v7065 = vsel %vm138, %v6988, 0
    %v7068 = vsel %vm138, %v6989, 0
    %v7071 = vsel %vm138, %v6990, 0
    %v7074 = vsel %vm138, %v6991, 0
    %v7077 = vsel %vm138, %v6992, 0
    %v7080 = vsel %vm138, %v6993, 0
    %v7083 = vsel %vm138, %v6994, 0
    %v7086 = vsel %vm138, %v6995, 0
    %v7089 = vsel %vm138, %v6996, 0
    %v7092 = vsel %vm138, %v6997, 0
    %v7095 = vsel %vm138, %v6998, 0
    %v7098 = vsel %vm138, %v6999, 0
    %v7101 = vsel %vm138, %v7000, 0
    %v7104 = vsel %vm138, %v7001, 0
    %v7107 = vsel %vm138, %v7002, 0
    %v7110 = vsel %vm138, %v7003, 0
    %7112 = vmatprep.subr.mxu0 0.0
    %7113 = vmatpush1.msra.mxu0 0.0
    %7114 = vmatprep.subr.mxu0 0.0
    %7115 = vmatpush1.msra.mxu0 0.0
    %7116 = vmatprep.subr.mxu0 0.0
    %7117 = vmatpush1.msra.mxu0 0.0
    %7118 = vmatprep.subr.mxu0 0.0
    %7119 = vmatpush1.msra.mxu0 0.0
    %7120 = vmatprep.subr.mxu0 0.0
    %7121 = vmatpush1.msra.mxu0 0.0
    %7122 = vmatprep.subr.mxu0 0.0
    %7123 = vmatpush1.msra.mxu0 0.0
    %7124 = vmatprep.subr.mxu0 0.0
    %7125 = vmatpush1.msra.mxu0 0.0
    %7126 = vmatprep.subr.mxu0 0.0
    %7127 = vmatpush1.msra.mxu0 0.0
    %7128 = vmatprep.subr.mxu0 0.0
    %7129 = vmatpush1.msra.mxu0 0.0
    %7130 = vmatprep.subr.mxu0 0.0
    %7131 = vmatpush1.msra.mxu0 0.0
    %7132 = vmatprep.subr.mxu0 0.0
    %7133 = vmatpush1.msra.mxu0 0.0
    %7134 = vmatprep.subr.mxu0 0.0
    %7135 = vmatpush1.msra.mxu0 0.0
    %7136 = vmatprep.subr.mxu0 0.0
    %7137 = vmatpush1.msra.mxu0 %v57
    %7138 = vmatprep.subr.mxu0 0.0
    %7139 = vmatpush1.msra.mxu0 %v56
    %7140 = vmatprep.subr.mxu0 0.0
    %7141 = vmatpush1.msra.mxu0 %v55
    %7142 = vmatprep.subr.mxu0 0.0
    %7143 = vmatpush1.msra.mxu0 %v54
    %7144 = vmatprep.subr.mxu0 0.0
    %7145 = vmatpush2.msra.mxu0 0.0
    %7146 = vmatprep.subr.mxu0 0.0
    %7147 = vmatpush2.msra.mxu0 0.0
    %7148 = vmatprep.subr.mxu0 0.0
    %7149 = vmatpush2.msra.mxu0 0.0
    %7150 = vmatprep.subr.mxu0 0.0
    %7151 = vmatpush2.msra.mxu0 0.0
    %7152 = vmatprep.subr.mxu0 0.0
    %7153 = vmatpush2.msra.mxu0 0.0
    %7154 = vmatprep.subr.mxu0 0.0
    %7155 = vmatpush2.msra.mxu0 0.0
    %7156 = vmatprep.subr.mxu0 0.0
    %7157 = vmatpush2.msra.mxu0 0.0
    %7158 = vmatprep.subr.mxu0 0.0
    %7159 = vmatpush2.msra.mxu0 0.0
    %7160 = vmatprep.subr.mxu0 0.0
    %7161 = vmatpush2.msra.mxu0 0.0
    %7162 = vmatprep.subr.mxu0 0.0
    %7163 = vmatpush2.msra.mxu0 0.0
    %7164 = vmatprep.subr.mxu0 0.0
    %7165 = vmatpush2.msra.mxu0 0.0
    %7166 = vmatprep.subr.mxu0 0.0
    %7167 = vmatpush2.msra.mxu0 0.0
    %7168 = vmatprep.subr.mxu0 0.0
    %7169 = vmatpush2.msra.mxu0 0.0
    %7170 = vmatprep.subr.mxu0 0.0
    %7171 = vmatpush2.msra.mxu0 0.0
    %7172 = vmatprep.subr.mxu0 0.0
    %7173 = vmatpush2.msra.mxu0 0.0
    %7174 = vmatprep.subr.mxu0 0.0
    %7175 = vmatpush2.msra.mxu0 0.0
    %7176 = vmatprep.mubr.f32.mxu0 0.0
    %7177 = vmatmul.mubr.f32.gmra.mxu0 %v7005
    %v7178 = vpop.f32.mrf.mxu0
    %v7179 = vadd.f32 0.0, %v7178
    %v7180 = vpop.f32.mrf.mxu0
    %7181 = vmatprep.mubr.f32.mxu0 0.0
    %7182 = vmatmul.mubr.f32.gmra.mxu0 %v7008
    %v7183 = vpop.f32.mrf.mxu0
    %v7184 = vadd.f32 0.0, %v7183
    %v7185 = vpop.f32.mrf.mxu0
    %7186 = vmatprep.mubr.f32.mxu0 0.0
    %7187 = vmatmul.mubr.f32.gmra.mxu0 %v7011
    %v7188 = vpop.f32.mrf.mxu0
    %v7189 = vadd.f32 0.0, %v7188
    %v7190 = vpop.f32.mrf.mxu0
    %7191 = vmatprep.mubr.f32.mxu0 0.0
    %7192 = vmatmul.mubr.f32.gmra.mxu0 %v7014
    %v7193 = vpop.f32.mrf.mxu0
    %v7194 = vadd.f32 0.0, %v7193
    %v7195 = vpop.f32.mrf.mxu0
    %7196 = vmatprep.mubr.f32.mxu0 0.0
    %7197 = vmatmul.mubr.f32.gmra.mxu0 %v7017
    %v7198 = vpop.f32.mrf.mxu0
    %v7199 = vadd.f32 0.0, %v7198
    %v7200 = vpop.f32.mrf.mxu0
    %7201 = vmatprep.mubr.f32.mxu0 0.0
    %7202 = vmatmul.mubr.f32.gmra.mxu0 %v7020
    %v7203 = vpop.f32.mrf.mxu0
    %v7204 = vadd.f32 0.0, %v7203
    %v7205 = vpop.f32.mrf.mxu0
    %7206 = vmatprep.mubr.f32.mxu0 0.0
    %7207 = vmatmul.mubr.f32.gmra.mxu0 %v7023
    %v7208 = vpop.f32.mrf.mxu0
    %v7209 = vadd.f32 0.0, %v7208
    %v7210 = vpop.f32.mrf.mxu0
    %7211 = vmatprep.mubr.f32.mxu0 0.0
    %7212 = vmatmul.mubr.f32.gmra.mxu0 %v7026
    %v7213 = vpop.f32.mrf.mxu0
    %v7214 = vadd.f32 0.0, %v7213
    %v7215 = vpop.f32.mrf.mxu0
    %7216 = vmatprep.mubr.f32.mxu0 0.0
    %7217 = vmatmul.mubr.f32.gmra.mxu0 %v7029
    %v7218 = vpop.f32.mrf.mxu0
    %v7219 = vadd.f32 0.0, %v7218
    %v7220 = vpop.f32.mrf.mxu0
    %7221 = vmatprep.mubr.f32.mxu0 0.0
    %7222 = vmatmul.mubr.f32.gmra.mxu0 %v7032
    %v7223 = vpop.f32.mrf.mxu0
    %v7224 = vadd.f32 0.0, %v7223
    %v7225 = vpop.f32.mrf.mxu0
    %7226 = vmatprep.mubr.f32.mxu0 0.0
    %7227 = vmatmul.mubr.f32.gmra.mxu0 %v7035
    %v7228 = vpop.f32.mrf.mxu0
    %v7229 = vadd.f32 0.0, %v7228
    %v7230 = vpop.f32.mrf.mxu0
    %7231 = vmatprep.mubr.f32.mxu0 0.0
    %7232 = vmatmul.mubr.f32.gmra.mxu0 %v7038
    %v7233 = vpop.f32.mrf.mxu0
    %v7234 = vadd.f32 0.0, %v7233
    %v7235 = vpop.f32.mrf.mxu0
    %7236 = vmatprep.mubr.f32.mxu0 0.0
    %7237 = vmatmul.mubr.f32.gmra.mxu0 %v7041
    %v7238 = vpop.f32.mrf.mxu0
    %v7239 = vadd.f32 0.0, %v7238
    %v7240 = vpop.f32.mrf.mxu0
    %7241 = vmatprep.mubr.f32.mxu0 0.0
    %7242 = vmatmul.mubr.f32.gmra.mxu0 %v7044
    %v7243 = vpop.f32.mrf.mxu0
    %v7244 = vadd.f32 0.0, %v7243
    %v7245 = vpop.f32.mrf.mxu0
    %7246 = vmatprep.mubr.f32.mxu0 0.0
    %7247 = vmatmul.mubr.f32.gmra.mxu0 %v7047
    %v7248 = vpop.f32.mrf.mxu0
    %v7249 = vadd.f32 0.0, %v7248
    %v7250 = vpop.f32.mrf.mxu0
    %7251 = vmatprep.mubr.f32.mxu0 0.0
    %7252 = vmatmul.mubr.f32.gmra.mxu0 %v7050
    %v7253 = vpop.f32.mrf.mxu0
    %v7254 = vadd.f32 0.0, %v7253
    %v7255 = vpop.f32.mrf.mxu0
    %7256 = vmatprep.mubr.f32.mxu0 0.0
    %7257 = vmatmul.mubr.f32.gmra.mxu0 %v7053
    %v7258 = vpop.f32.mrf.mxu0
    %v7259 = vadd.f32 0.0, %v7258
    %v7260 = vpop.f32.mrf.mxu0
    %7261 = vmatprep.mubr.f32.mxu0 0.0
    %7262 = vmatmul.mubr.f32.gmra.mxu0 %v7056
    %v7263 = vpop.f32.mrf.mxu0
    %v7264 = vadd.f32 0.0, %v7263
    %v7265 = vpop.f32.mrf.mxu0
    %7266 = vmatprep.mubr.f32.mxu0 0.0
    %7267 = vmatmul.mubr.f32.gmra.mxu0 %v7059
    %v7268 = vpop.f32.mrf.mxu0
    %v7269 = vadd.f32 0.0, %v7268
    %v7270 = vpop.f32.mrf.mxu0
    %7271 = vmatprep.mubr.f32.mxu0 0.0
    %7272 = vmatmul.mubr.f32.gmra.mxu0 %v7062
    %v7273 = vpop.f32.mrf.mxu0
    %v7274 = vadd.f32 0.0, %v7273
    %v7275 = vpop.f32.mrf.mxu0
    %7276 = vmatprep.mubr.f32.mxu0 0.0
    %7277 = vmatmul.mubr.f32.gmra.mxu0 %v7065
    %v7278 = vpop.f32.mrf.mxu0
    %v7279 = vadd.f32 0.0, %v7278
    %v7280 = vpop.f32.mrf.mxu0
    %7281 = vmatprep.mubr.f32.mxu0 0.0
    %7282 = vmatmul.mubr.f32.gmra.mxu0 %v7068
    %v7283 = vpop.f32.mrf.mxu0
    %v7284 = vadd.f32 0.0, %v7283
    %v7285 = vpop.f32.mrf.mxu0
    %7286 = vmatprep.mubr.f32.mxu0 0.0
    %7287 = vmatmul.mubr.f32.gmra.mxu0 %v7071
    %v7288 = vpop.f32.mrf.mxu0
    %v7289 = vadd.f32 0.0, %v7288
    %v7290 = vpop.f32.mrf.mxu0
    %7291 = vmatprep.mubr.f32.mxu0 0.0
    %7292 = vmatmul.mubr.f32.gmra.mxu0 %v7074
    %v7293 = vpop.f32.mrf.mxu0
    %v7294 = vadd.f32 0.0, %v7293
    %v7295 = vpop.f32.mrf.mxu0
    %7296 = vmatprep.mubr.f32.mxu0 0.0
    %7297 = vmatmul.mubr.f32.gmra.mxu0 %v7077
    %v7298 = vpop.f32.mrf.mxu0
    %v7299 = vadd.f32 0.0, %v7298
    %v7300 = vpop.f32.mrf.mxu0
    %7301 = vmatprep.mubr.f32.mxu0 0.0
    %7302 = vmatmul.mubr.f32.gmra.mxu0 %v7080
    %v7303 = vpop.f32.mrf.mxu0
    %v7304 = vadd.f32 0.0, %v7303
    %v7305 = vpop.f32.mrf.mxu0
    %7306 = vmatprep.mubr.f32.mxu0 0.0
    %7307 = vmatmul.mubr.f32.gmra.mxu0 %v7083
    %v7308 = vpop.f32.mrf.mxu0
    %v7309 = vadd.f32 0.0, %v7308
    %v7310 = vpop.f32.mrf.mxu0
    %7311 = vmatprep.mubr.f32.mxu0 0.0
    %7312 = vmatmul.mubr.f32.gmra.mxu0 %v7086
    %v7313 = vpop.f32.mrf.mxu0
    %v7314 = vadd.f32 0.0, %v7313
    %v7315 = vpop.f32.mrf.mxu0
    %7316 = vmatprep.mubr.f32.mxu0 0.0
    %7317 = vmatmul.mubr.f32.gmra.mxu0 %v7089
    %v7318 = vpop.f32.mrf.mxu0
    %v7319 = vadd.f32 0.0, %v7318
    %v7320 = vpop.f32.mrf.mxu0
    %7321 = vmatprep.mubr.f32.mxu0 0.0
    %7322 = vmatmul.mubr.f32.gmra.mxu0 %v7092
    %v7323 = vpop.f32.mrf.mxu0
    %v7324 = vadd.f32 0.0, %v7323
    %v7325 = vpop.f32.mrf.mxu0
    %7326 = vmatprep.mubr.f32.mxu0 0.0
    %7327 = vmatmul.mubr.f32.gmra.mxu0 %v7095
    %v7328 = vpop.f32.mrf.mxu0
    %v7329 = vadd.f32 0.0, %v7328
    %v7330 = vpop.f32.mrf.mxu0
    %7331 = vmatprep.mubr.f32.mxu0 0.0
    %7332 = vmatmul.mubr.f32.gmra.mxu0 %v7098
    %v7333 = vpop.f32.mrf.mxu0
    %v7334 = vadd.f32 0.0, %v7333
    %v7335 = vpop.f32.mrf.mxu0
    %7336 = vmatprep.mubr.f32.mxu0 0.0
    %7337 = vmatmul.mubr.f32.gmra.mxu0 %v7101
    %v7338 = vpop.f32.mrf.mxu0
    %v7339 = vadd.f32 0.0, %v7338
    %v7340 = vpop.f32.mrf.mxu0
    %7341 = vmatprep.mubr.f32.mxu0 0.0
    %7342 = vmatmul.mubr.f32.gmra.mxu0 %v7104
    %v7343 = vpop.f32.mrf.mxu0
    %v7344 = vadd.f32 0.0, %v7343
    %v7345 = vpop.f32.mrf.mxu0
    %7346 = vmatprep.mubr.f32.mxu0 0.0
    %7347 = vmatmul.mubr.f32.gmra.mxu0 %v7107
    %v7348 = vpop.f32.mrf.mxu0
    %v7349 = vadd.f32 0.0, %v7348
    %v7350 = vpop.f32.mrf.mxu0
    %7351 = vmatprep.mubr.f32.mxu0 0.0
    %7352 = vmatmul.mubr.f32.gmra.mxu0 %v7110
    %v7353 = vpop.f32.mrf.mxu0
    %v7354 = vadd.f32 0.0, %v7353
    %v7355 = vpop.f32.mrf.mxu0
    %7356 = vdwg.mxu0
    %v7357 = vadd.f32 %v6932, %v7179
    %v7358 = vadd.f32 %v6933, %v7184
    %v7359 = vadd.f32 %v6934, %v7189
    %v7360 = vadd.f32 %v6935, %v7194
    %v7361 = vadd.f32 %v6936, %v7199
    %v7362 = vadd.f32 %v6937, %v7204
    %v7363 = vadd.f32 %v6938, %v7209
    %v7364 = vadd.f32 %v6939, %v7214
    %v7365 = vadd.f32 %v6940, %v7219
    %v7366 = vadd.f32 %v6941, %v7224
    %v7367 = vadd.f32 %v6942, %v7229
    %v7368 = vadd.f32 %v6943, %v7234
    %v7369 = vadd.f32 %v6944, %v7239
    %v7370 = vadd.f32 %v6945, %v7244
    %v7371 = vadd.f32 %v6946, %v7249
    %v7372 = vadd.f32 %v6947, %v7254
    %v7373 = vadd.f32 %v6948, %v7259
    %v7374 = vadd.f32 %v6949, %v7264
    %v7375 = vadd.f32 %v6950, %v7269
    %v7376 = vadd.f32 %v6951, %v7274
    %v7377 = vadd.f32 %v6952, %v7279
    %v7378 = vadd.f32 %v6953, %v7284
    %v7379 = vadd.f32 %v6954, %v7289
    %v7380 = vadd.f32 %v6955, %v7294
    %v7381 = vadd.f32 %v6956, %v7299
    %v7382 = vadd.f32 %v6957, %v7304
    %v7383 = vadd.f32 %v6958, %v7309
    %v7384 = vadd.f32 %v6959, %v7314
    %v7385 = vadd.f32 %v6960, %v7319
    %v7386 = vadd.f32 %v6961, %v7324
    %v7387 = vadd.f32 %v6962, %v7329
    %v7388 = vadd.f32 %v6963, %v7334
    %v7389 = vadd.f32 %v6964, %v7339
    %v7390 = vadd.f32 %v6965, %v7344
    %v7391 = vadd.f32 %v6966, %v7349
    %v7392 = vadd.f32 %v6967, %v7354
    %v7393 = vld [vmem:[%s4417 + $0x36] sm:$0xff]
    %v7394 = vld [vmem:[%s4417 + $0x3e] sm:$0xff]
    %v7395 = vld [vmem:[%s4417 + $0x46] sm:$0xff]
    %v7396 = vld [vmem:[%s4417 + $0x4e] sm:$0xff]
    %v7397 = vld [vmem:[%s4417 + $0x56] sm:$0xff]
    %v7398 = vld [vmem:[%s4417 + $0x5e] sm:$0xff]
    %v7399 = vld [vmem:[%s4417 + $0x66] sm:$0xff]
    %v7400 = vld [vmem:[%s4417 + $0x6e] sm:$0xff]
    %v7401 = vld [vmem:[%s4417 + $0x76] sm:$0xff]
    %v7402 = vld [vmem:[%s4417 + $0x7e] sm:$0xff]
    %v7403 = vld [vmem:[%s4417 + $0x86] sm:$0xff]
    %v7404 = vld [vmem:[%s4417 + $0x8e] sm:$0xff]
    %v7405 = vld [vmem:[%s4417 + $0x96] sm:$0xff]
    %v7406 = vld [vmem:[%s4417 + $0x9e] sm:$0xff]
    %v7407 = vld [vmem:[%s4417 + $0xa6] sm:$0xff]
    %v7408 = vld [vmem:[%s4417 + $0xae] sm:$0xff]
    %v7409 = vld [vmem:[%s4417 + $0xb6] sm:$0xff]
    %v7410 = vld [vmem:[%s4417 + $0xbe] sm:$0xff]
    %v7411 = vld [vmem:[%s4417 + $0xc6] sm:$0xff]
    %v7412 = vld [vmem:[%s4417 + $0xce] sm:$0xff]
    %v7413 = vld [vmem:[%s4417 + $0xd6] sm:$0xff]
    %v7414 = vld [vmem:[%s4417 + $0xde] sm:$0xff]
    %v7415 = vld [vmem:[%s4417 + $0xe6] sm:$0xff]
    %v7416 = vld [vmem:[%s4417 + $0xee] sm:$0xff]
    %v7417 = vld [vmem:[%s4417 + $0xf6] sm:$0xff]
    %v7418 = vld [vmem:[%s4417 + $0xfe] sm:$0xff]
    %v7419 = vld [vmem:[%s4417 + $0x106] sm:$0xff]
    %v7420 = vld [vmem:[%s4417 + $0x10e] sm:$0xff]
    %v7421 = vld [vmem:[%s4417 + $0x116] sm:$0xff]
    %v7422 = vld [vmem:[%s4417 + $0x11e] sm:$0xff]
    %v7423 = vld [vmem:[%s4417 + $0x126] sm:$0xff]
    %v7424 = vld [vmem:[%s4417 + $0x12e] sm:$0xff]
    %v7425 = vld [vmem:[%s4417 + $0x136] sm:$0xff]
    %v7426 = vld [vmem:[%s4417 + $0x13e] sm:$0xff]
    %v7427 = vld [vmem:[%s4417 + $0x146] sm:$0xff]
    %v7428 = vld [vmem:[%s4417 + $0x14e] sm:$0xff]
    %v7430 = vsel %vm138, %v7393, 0
    %v7433 = vsel %vm138, %v7394, 0
    %v7436 = vsel %vm138, %v7395, 0
    %v7439 = vsel %vm138, %v7396, 0
    %v7442 = vsel %vm138, %v7397, 0
    %v7445 = vsel %vm138, %v7398, 0
    %v7448 = vsel %vm138, %v7399, 0
    %v7451 = vsel %vm138, %v7400, 0
    %v7454 = vsel %vm138, %v7401, 0
    %v7457 = vsel %vm138, %v7402, 0
    %v7460 = vsel %vm138, %v7403, 0
    %v7463 = vsel %vm138, %v7404, 0
    %v7466 = vsel %vm138, %v7405, 0
    %v7469 = vsel %vm138, %v7406, 0
    %v7472 = vsel %vm138, %v7407, 0
    %v7475 = vsel %vm138, %v7408, 0
    %v7478 = vsel %vm138, %v7409, 0
    %v7481 = vsel %vm138, %v7410, 0
    %v7484 = vsel %vm138, %v7411, 0
    %v7487 = vsel %vm138, %v7412, 0
    %v7490 = vsel %vm138, %v7413, 0
    %v7493 = vsel %vm138, %v7414, 0
    %v7496 = vsel %vm138, %v7415, 0
    %v7499 = vsel %vm138, %v7416, 0
    %v7502 = vsel %vm138, %v7417, 0
    %v7505 = vsel %vm138, %v7418, 0
    %v7508 = vsel %vm138, %v7419, 0
    %v7511 = vsel %vm138, %v7420, 0
    %v7514 = vsel %vm138, %v7421, 0
    %v7517 = vsel %vm138, %v7422, 0
    %v7520 = vsel %vm138, %v7423, 0
    %v7523 = vsel %vm138, %v7424, 0
    %v7526 = vsel %vm138, %v7425, 0
    %v7529 = vsel %vm138, %v7426, 0
    %v7532 = vsel %vm138, %v7427, 0
    %v7535 = vsel %vm138, %v7428, 0
    %7537 = vmatprep.subr.mxu0 0.0
    %7538 = vmatpush1.msra.mxu0 0.0
    %7539 = vmatprep.subr.mxu0 0.0
    %7540 = vmatpush1.msra.mxu0 0.0
    %7541 = vmatprep.subr.mxu0 0.0
    %7542 = vmatpush1.msra.mxu0 0.0
    %7543 = vmatprep.subr.mxu0 0.0
    %7544 = vmatpush1.msra.mxu0 0.0
    %7545 = vmatprep.subr.mxu0 0.0
    %7546 = vmatpush1.msra.mxu0 0.0
    %7547 = vmatprep.subr.mxu0 0.0
    %7548 = vmatpush1.msra.mxu0 0.0
    %7549 = vmatprep.subr.mxu0 0.0
    %7550 = vmatpush1.msra.mxu0 0.0
    %7551 = vmatprep.subr.mxu0 0.0
    %7552 = vmatpush1.msra.mxu0 0.0
    %7553 = vmatprep.subr.mxu0 0.0
    %7554 = vmatpush1.msra.mxu0 0.0
    %7555 = vmatprep.subr.mxu0 0.0
    %7556 = vmatpush1.msra.mxu0 0.0
    %7557 = vmatprep.subr.mxu0 0.0
    %7558 = vmatpush1.msra.mxu0 0.0
    %7559 = vmatprep.subr.mxu0 0.0
    %7560 = vmatpush1.msra.mxu0 0.0
    %7561 = vmatprep.subr.mxu0 0.0
    %7562 = vmatpush1.msra.mxu0 %v62
    %7563 = vmatprep.subr.mxu0 0.0
    %7564 = vmatpush1.msra.mxu0 %v61
    %7565 = vmatprep.subr.mxu0 0.0
    %7566 = vmatpush1.msra.mxu0 %v60
    %7567 = vmatprep.subr.mxu0 0.0
    %7568 = vmatpush1.msra.mxu0 %v59
    %7569 = vmatprep.subr.mxu0 0.0
    %7570 = vmatpush2.msra.mxu0 0.0
    %7571 = vmatprep.subr.mxu0 0.0
    %7572 = vmatpush2.msra.mxu0 0.0
    %7573 = vmatprep.subr.mxu0 0.0
    %7574 = vmatpush2.msra.mxu0 0.0
    %7575 = vmatprep.subr.mxu0 0.0
    %7576 = vmatpush2.msra.mxu0 0.0
    %7577 = vmatprep.subr.mxu0 0.0
    %7578 = vmatpush2.msra.mxu0 0.0
    %7579 = vmatprep.subr.mxu0 0.0
    %7580 = vmatpush2.msra.mxu0 0.0
    %7581 = vmatprep.subr.mxu0 0.0
    %7582 = vmatpush2.msra.mxu0 0.0
    %7583 = vmatprep.subr.mxu0 0.0
    %7584 = vmatpush2.msra.mxu0 0.0
    %7585 = vmatprep.subr.mxu0 0.0
    %7586 = vmatpush2.msra.mxu0 0.0
    %7587 = vmatprep.subr.mxu0 0.0
    %7588 = vmatpush2.msra.mxu0 0.0
    %7589 = vmatprep.subr.mxu0 0.0
    %7590 = vmatpush2.msra.mxu0 0.0
    %7591 = vmatprep.subr.mxu0 0.0
    %7592 = vmatpush2.msra.mxu0 0.0
    %7593 = vmatprep.subr.mxu0 0.0
    %7594 = vmatpush2.msra.mxu0 0.0
    %7595 = vmatprep.subr.mxu0 0.0
    %7596 = vmatpush2.msra.mxu0 0.0
    %7597 = vmatprep.subr.mxu0 0.0
    %7598 = vmatpush2.msra.mxu0 0.0
    %7599 = vmatprep.subr.mxu0 0.0
    %7600 = vmatpush2.msra.mxu0 0.0
    %7601 = vmatprep.mubr.f32.mxu0 0.0
    %7602 = vmatmul.mubr.f32.gmra.mxu0 %v7430
    %v7603 = vpop.f32.mrf.mxu0
    %v7604 = vadd.f32 0.0, %v7603
    %v7605 = vpop.f32.mrf.mxu0
    %7606 = vmatprep.mubr.f32.mxu0 0.0
    %7607 = vmatmul.mubr.f32.gmra.mxu0 %v7433
    %v7608 = vpop.f32.mrf.mxu0
    %v7609 = vadd.f32 0.0, %v7608
    %v7610 = vpop.f32.mrf.mxu0
    %7611 = vmatprep.mubr.f32.mxu0 0.0
    %7612 = vmatmul.mubr.f32.gmra.mxu0 %v7436
    %v7613 = vpop.f32.mrf.mxu0
    %v7614 = vadd.f32 0.0, %v7613
    %v7615 = vpop.f32.mrf.mxu0
    %7616 = vmatprep.mubr.f32.mxu0 0.0
    %7617 = vmatmul.mubr.f32.gmra.mxu0 %v7439
    %v7618 = vpop.f32.mrf.mxu0
    %v7619 = vadd.f32 0.0, %v7618
    %v7620 = vpop.f32.mrf.mxu0
    %7621 = vmatprep.mubr.f32.mxu0 0.0
    %7622 = vmatmul.mubr.f32.gmra.mxu0 %v7442
    %v7623 = vpop.f32.mrf.mxu0
    %v7624 = vadd.f32 0.0, %v7623
    %v7625 = vpop.f32.mrf.mxu0
    %7626 = vmatprep.mubr.f32.mxu0 0.0
    %7627 = vmatmul.mubr.f32.gmra.mxu0 %v7445
    %v7628 = vpop.f32.mrf.mxu0
    %v7629 = vadd.f32 0.0, %v7628
    %v7630 = vpop.f32.mrf.mxu0
    %7631 = vmatprep.mubr.f32.mxu0 0.0
    %7632 = vmatmul.mubr.f32.gmra.mxu0 %v7448
    %v7633 = vpop.f32.mrf.mxu0
    %v7634 = vadd.f32 0.0, %v7633
    %v7635 = vpop.f32.mrf.mxu0
    %7636 = vmatprep.mubr.f32.mxu0 0.0
    %7637 = vmatmul.mubr.f32.gmra.mxu0 %v7451
    %v7638 = vpop.f32.mrf.mxu0
    %v7639 = vadd.f32 0.0, %v7638
    %v7640 = vpop.f32.mrf.mxu0
    %7641 = vmatprep.mubr.f32.mxu0 0.0
    %7642 = vmatmul.mubr.f32.gmra.mxu0 %v7454
    %v7643 = vpop.f32.mrf.mxu0
    %v7644 = vadd.f32 0.0, %v7643
    %v7645 = vpop.f32.mrf.mxu0
    %7646 = vmatprep.mubr.f32.mxu0 0.0
    %7647 = vmatmul.mubr.f32.gmra.mxu0 %v7457
    %v7648 = vpop.f32.mrf.mxu0
    %v7649 = vadd.f32 0.0, %v7648
    %v7650 = vpop.f32.mrf.mxu0
    %7651 = vmatprep.mubr.f32.mxu0 0.0
    %7652 = vmatmul.mubr.f32.gmra.mxu0 %v7460
    %v7653 = vpop.f32.mrf.mxu0
    %v7654 = vadd.f32 0.0, %v7653
    %v7655 = vpop.f32.mrf.mxu0
    %7656 = vmatprep.mubr.f32.mxu0 0.0
    %7657 = vmatmul.mubr.f32.gmra.mxu0 %v7463
    %v7658 = vpop.f32.mrf.mxu0
    %v7659 = vadd.f32 0.0, %v7658
    %v7660 = vpop.f32.mrf.mxu0
    %7661 = vmatprep.mubr.f32.mxu0 0.0
    %7662 = vmatmul.mubr.f32.gmra.mxu0 %v7466
    %v7663 = vpop.f32.mrf.mxu0
    %v7664 = vadd.f32 0.0, %v7663
    %v7665 = vpop.f32.mrf.mxu0
    %7666 = vmatprep.mubr.f32.mxu0 0.0
    %7667 = vmatmul.mubr.f32.gmra.mxu0 %v7469
    %v7668 = vpop.f32.mrf.mxu0
    %v7669 = vadd.f32 0.0, %v7668
    %v7670 = vpop.f32.mrf.mxu0
    %7671 = vmatprep.mubr.f32.mxu0 0.0
    %7672 = vmatmul.mubr.f32.gmra.mxu0 %v7472
    %v7673 = vpop.f32.mrf.mxu0
    %v7674 = vadd.f32 0.0, %v7673
    %v7675 = vpop.f32.mrf.mxu0
    %7676 = vmatprep.mubr.f32.mxu0 0.0
    %7677 = vmatmul.mubr.f32.gmra.mxu0 %v7475
    %v7678 = vpop.f32.mrf.mxu0
    %v7679 = vadd.f32 0.0, %v7678
    %v7680 = vpop.f32.mrf.mxu0
    %7681 = vmatprep.mubr.f32.mxu0 0.0
    %7682 = vmatmul.mubr.f32.gmra.mxu0 %v7478
    %v7683 = vpop.f32.mrf.mxu0
    %v7684 = vadd.f32 0.0, %v7683
    %v7685 = vpop.f32.mrf.mxu0
    %7686 = vmatprep.mubr.f32.mxu0 0.0
    %7687 = vmatmul.mubr.f32.gmra.mxu0 %v7481
    %v7688 = vpop.f32.mrf.mxu0
    %v7689 = vadd.f32 0.0, %v7688
    %v7690 = vpop.f32.mrf.mxu0
    %7691 = vmatprep.mubr.f32.mxu0 0.0
    %7692 = vmatmul.mubr.f32.gmra.mxu0 %v7484
    %v7693 = vpop.f32.mrf.mxu0
    %v7694 = vadd.f32 0.0, %v7693
    %v7695 = vpop.f32.mrf.mxu0
    %7696 = vmatprep.mubr.f32.mxu0 0.0
    %7697 = vmatmul.mubr.f32.gmra.mxu0 %v7487
    %v7698 = vpop.f32.mrf.mxu0
    %v7699 = vadd.f32 0.0, %v7698
    %v7700 = vpop.f32.mrf.mxu0
    %7701 = vmatprep.mubr.f32.mxu0 0.0
    %7702 = vmatmul.mubr.f32.gmra.mxu0 %v7490
    %v7703 = vpop.f32.mrf.mxu0
    %v7704 = vadd.f32 0.0, %v7703
    %v7705 = vpop.f32.mrf.mxu0
    %7706 = vmatprep.mubr.f32.mxu0 0.0
    %7707 = vmatmul.mubr.f32.gmra.mxu0 %v7493
    %v7708 = vpop.f32.mrf.mxu0
    %v7709 = vadd.f32 0.0, %v7708
    %v7710 = vpop.f32.mrf.mxu0
    %7711 = vmatprep.mubr.f32.mxu0 0.0
    %7712 = vmatmul.mubr.f32.gmra.mxu0 %v7496
    %v7713 = vpop.f32.mrf.mxu0
    %v7714 = vadd.f32 0.0, %v7713
    %v7715 = vpop.f32.mrf.mxu0
    %7716 = vmatprep.mubr.f32.mxu0 0.0
    %7717 = vmatmul.mubr.f32.gmra.mxu0 %v7499
    %v7718 = vpop.f32.mrf.mxu0
    %v7719 = vadd.f32 0.0, %v7718
    %v7720 = vpop.f32.mrf.mxu0
    %7721 = vmatprep.mubr.f32.mxu0 0.0
    %7722 = vmatmul.mubr.f32.gmra.mxu0 %v7502
    %v7723 = vpop.f32.mrf.mxu0
    %v7724 = vadd.f32 0.0, %v7723
    %v7725 = vpop.f32.mrf.mxu0
    %7726 = vmatprep.mubr.f32.mxu0 0.0
    %7727 = vmatmul.mubr.f32.gmra.mxu0 %v7505
    %v7728 = vpop.f32.mrf.mxu0
    %v7729 = vadd.f32 0.0, %v7728
    %v7730 = vpop.f32.mrf.mxu0
    %7731 = vmatprep.mubr.f32.mxu0 0.0
    %7732 = vmatmul.mubr.f32.gmra.mxu0 %v7508
    %v7733 = vpop.f32.mrf.mxu0
    %v7734 = vadd.f32 0.0, %v7733
    %v7735 = vpop.f32.mrf.mxu0
    %7736 = vmatprep.mubr.f32.mxu0 0.0
    %7737 = vmatmul.mubr.f32.gmra.mxu0 %v7511
    %v7738 = vpop.f32.mrf.mxu0
    %v7739 = vadd.f32 0.0, %v7738
    %v7740 = vpop.f32.mrf.mxu0
    %7741 = vmatprep.mubr.f32.mxu0 0.0
    %7742 = vmatmul.mubr.f32.gmra.mxu0 %v7514
    %v7743 = vpop.f32.mrf.mxu0
    %v7744 = vadd.f32 0.0, %v7743
    %v7745 = vpop.f32.mrf.mxu0
    %7746 = vmatprep.mubr.f32.mxu0 0.0
    %7747 = vmatmul.mubr.f32.gmra.mxu0 %v7517
    %v7748 = vpop.f32.mrf.mxu0
    %v7749 = vadd.f32 0.0, %v7748
    %v7750 = vpop.f32.mrf.mxu0
    %7751 = vmatprep.mubr.f32.mxu0 0.0
    %7752 = vmatmul.mubr.f32.gmra.mxu0 %v7520
    %v7753 = vpop.f32.mrf.mxu0
    %v7754 = vadd.f32 0.0, %v7753
    %v7755 = vpop.f32.mrf.mxu0
    %7756 = vmatprep.mubr.f32.mxu0 0.0
    %7757 = vmatmul.mubr.f32.gmra.mxu0 %v7523
    %v7758 = vpop.f32.mrf.mxu0
    %v7759 = vadd.f32 0.0, %v7758
    %v7760 = vpop.f32.mrf.mxu0
    %7761 = vmatprep.mubr.f32.mxu0 0.0
    %7762 = vmatmul.mubr.f32.gmra.mxu0 %v7526
    %v7763 = vpop.f32.mrf.mxu0
    %v7764 = vadd.f32 0.0, %v7763
    %v7765 = vpop.f32.mrf.mxu0
    %7766 = vmatprep.mubr.f32.mxu0 0.0
    %7767 = vmatmul.mubr.f32.gmra.mxu0 %v7529
    %v7768 = vpop.f32.mrf.mxu0
    %v7769 = vadd.f32 0.0, %v7768
    %v7770 = vpop.f32.mrf.mxu0
    %7771 = vmatprep.mubr.f32.mxu0 0.0
    %7772 = vmatmul.mubr.f32.gmra.mxu0 %v7532
    %v7773 = vpop.f32.mrf.mxu0
    %v7774 = vadd.f32 0.0, %v7773
    %v7775 = vpop.f32.mrf.mxu0
    %7776 = vmatprep.mubr.f32.mxu0 0.0
    %7777 = vmatmul.mubr.f32.gmra.mxu0 %v7535
    %v7778 = vpop.f32.mrf.mxu0
    %v7779 = vadd.f32 0.0, %v7778
    %v7780 = vpop.f32.mrf.mxu0
    %7781 = vdwg.mxu0
    %v7782 = vadd.f32 %v7357, %v7604
    %v7783 = vadd.f32 %v7358, %v7609
    %v7784 = vadd.f32 %v7359, %v7614
    %v7785 = vadd.f32 %v7360, %v7619
    %v7786 = vadd.f32 %v7361, %v7624
    %v7787 = vadd.f32 %v7362, %v7629
    %v7788 = vadd.f32 %v7363, %v7634
    %v7789 = vadd.f32 %v7364, %v7639
    %v7790 = vadd.f32 %v7365, %v7644
    %v7791 = vadd.f32 %v7366, %v7649
    %v7792 = vadd.f32 %v7367, %v7654
    %v7793 = vadd.f32 %v7368, %v7659
    %v7794 = vadd.f32 %v7369, %v7664
    %v7795 = vadd.f32 %v7370, %v7669
    %v7796 = vadd.f32 %v7371, %v7674
    %v7797 = vadd.f32 %v7372, %v7679
    %v7798 = vadd.f32 %v7373, %v7684
    %v7799 = vadd.f32 %v7374, %v7689
    %v7800 = vadd.f32 %v7375, %v7694
    %v7801 = vadd.f32 %v7376, %v7699
    %v7802 = vadd.f32 %v7377, %v7704
    %v7803 = vadd.f32 %v7378, %v7709
    %v7804 = vadd.f32 %v7379, %v7714
    %v7805 = vadd.f32 %v7380, %v7719
    %v7806 = vadd.f32 %v7381, %v7724
    %v7807 = vadd.f32 %v7382, %v7729
    %v7808 = vadd.f32 %v7383, %v7734
    %v7809 = vadd.f32 %v7384, %v7739
    %v7810 = vadd.f32 %v7385, %v7744
    %v7811 = vadd.f32 %v7386, %v7749
    %v7812 = vadd.f32 %v7387, %v7754
    %v7813 = vadd.f32 %v7388, %v7759
    %v7814 = vadd.f32 %v7389, %v7764
    %v7815 = vadd.f32 %v7390, %v7769
    %v7816 = vadd.f32 %v7391, %v7774
    %v7817 = vadd.f32 %v7392, %v7779
    %v7818 = vld [vmem:[%s4417 + $0x37] sm:$0xff]
    %v7819 = vld [vmem:[%s4417 + $0x3f] sm:$0xff]
    %v7820 = vld [vmem:[%s4417 + $0x47] sm:$0xff]
    %v7821 = vld [vmem:[%s4417 + $0x4f] sm:$0xff]
    %v7822 = vld [vmem:[%s4417 + $0x57] sm:$0xff]
    %v7823 = vld [vmem:[%s4417 + $0x5f] sm:$0xff]
    %v7824 = vld [vmem:[%s4417 + $0x67] sm:$0xff]
    %v7825 = vld [vmem:[%s4417 + $0x6f] sm:$0xff]
    %v7826 = vld [vmem:[%s4417 + $0x77] sm:$0xff]
    %v7827 = vld [vmem:[%s4417 + $0x7f] sm:$0xff]
    %v7828 = vld [vmem:[%s4417 + $0x87] sm:$0xff]
    %v7829 = vld [vmem:[%s4417 + $0x8f] sm:$0xff]
    %v7830 = vld [vmem:[%s4417 + $0x97] sm:$0xff]
    %v7831 = vld [vmem:[%s4417 + $0x9f] sm:$0xff]
    %v7832 = vld [vmem:[%s4417 + $0xa7] sm:$0xff]
    %v7833 = vld [vmem:[%s4417 + $0xaf] sm:$0xff]
    %v7834 = vld [vmem:[%s4417 + $0xb7] sm:$0xff]
    %v7835 = vld [vmem:[%s4417 + $0xbf] sm:$0xff]
    %v7836 = vld [vmem:[%s4417 + $0xc7] sm:$0xff]
    %v7837 = vld [vmem:[%s4417 + $0xcf] sm:$0xff]
    %v7838 = vld [vmem:[%s4417 + $0xd7] sm:$0xff]
    %v7839 = vld [vmem:[%s4417 + $0xdf] sm:$0xff]
    %v7840 = vld [vmem:[%s4417 + $0xe7] sm:$0xff]
    %v7841 = vld [vmem:[%s4417 + $0xef] sm:$0xff]
    %v7842 = vld [vmem:[%s4417 + $0xf7] sm:$0xff]
    %v7843 = vld [vmem:[%s4417 + $0xff] sm:$0xff]
    %v7844 = vld [vmem:[%s4417 + $0x107] sm:$0xff]
    %v7845 = vld [vmem:[%s4417 + $0x10f] sm:$0xff]
    %v7846 = vld [vmem:[%s4417 + $0x117] sm:$0xff]
    %v7847 = vld [vmem:[%s4417 + $0x11f] sm:$0xff]
    %v7848 = vld [vmem:[%s4417 + $0x127] sm:$0xff]
    %v7849 = vld [vmem:[%s4417 + $0x12f] sm:$0xff]
    %v7850 = vld [vmem:[%s4417 + $0x137] sm:$0xff]
    %v7851 = vld [vmem:[%s4417 + $0x13f] sm:$0xff]
    %v7852 = vld [vmem:[%s4417 + $0x147] sm:$0xff]
    %v7853 = vld [vmem:[%s4417 + $0x14f] sm:$0xff]
    %v7855 = vsel %vm138, %v7818, 0
    %v7858 = vsel %vm138, %v7819, 0
    %v7861 = vsel %vm138, %v7820, 0
    %v7864 = vsel %vm138, %v7821, 0
    %v7867 = vsel %vm138, %v7822, 0
    %v7870 = vsel %vm138, %v7823, 0
    %v7873 = vsel %vm138, %v7824, 0
    %v7876 = vsel %vm138, %v7825, 0
    %v7879 = vsel %vm138, %v7826, 0
    %v7882 = vsel %vm138, %v7827, 0
    %v7885 = vsel %vm138, %v7828, 0
    %v7888 = vsel %vm138, %v7829, 0
    %v7891 = vsel %vm138, %v7830, 0
    %v7894 = vsel %vm138, %v7831, 0
    %v7897 = vsel %vm138, %v7832, 0
    %v7900 = vsel %vm138, %v7833, 0
    %v7903 = vsel %vm138, %v7834, 0
    %v7906 = vsel %vm138, %v7835, 0
    %v7909 = vsel %vm138, %v7836, 0
    %v7912 = vsel %vm138, %v7837, 0
    %v7915 = vsel %vm138, %v7838, 0
    %v7918 = vsel %vm138, %v7839, 0
    %v7921 = vsel %vm138, %v7840, 0
    %v7924 = vsel %vm138, %v7841, 0
    %v7927 = vsel %vm138, %v7842, 0
    %v7930 = vsel %vm138, %v7843, 0
    %v7933 = vsel %vm138, %v7844, 0
    %v7936 = vsel %vm138, %v7845, 0
    %v7939 = vsel %vm138, %v7846, 0
    %v7942 = vsel %vm138, %v7847, 0
    %v7945 = vsel %vm138, %v7848, 0
    %v7948 = vsel %vm138, %v7849, 0
    %v7951 = vsel %vm138, %v7850, 0
    %v7954 = vsel %vm138, %v7851, 0
    %v7957 = vsel %vm138, %v7852, 0
    %v7960 = vsel %vm138, %v7853, 0
    %7962 = vmatprep.subr.mxu0 0.0
    %7963 = vmatpush1.msra.mxu0 0.0
    %7964 = vmatprep.subr.mxu0 0.0
    %7965 = vmatpush1.msra.mxu0 0.0
    %7966 = vmatprep.subr.mxu0 0.0
    %7967 = vmatpush1.msra.mxu0 0.0
    %7968 = vmatprep.subr.mxu0 0.0
    %7969 = vmatpush1.msra.mxu0 0.0
    %7970 = vmatprep.subr.mxu0 0.0
    %7971 = vmatpush1.msra.mxu0 0.0
    %7972 = vmatprep.subr.mxu0 0.0
    %7973 = vmatpush1.msra.mxu0 0.0
    %7974 = vmatprep.subr.mxu0 0.0
    %7975 = vmatpush1.msra.mxu0 0.0
    %7976 = vmatprep.subr.mxu0 0.0
    %7977 = vmatpush1.msra.mxu0 0.0
    %7978 = vmatprep.subr.mxu0 0.0
    %7979 = vmatpush1.msra.mxu0 0.0
    %7980 = vmatprep.subr.mxu0 0.0
    %7981 = vmatpush1.msra.mxu0 0.0
    %7982 = vmatprep.subr.mxu0 0.0
    %7983 = vmatpush1.msra.mxu0 0.0
    %7984 = vmatprep.subr.mxu0 0.0
    %7985 = vmatpush1.msra.mxu0 0.0
    %7986 = vmatprep.subr.mxu0 0.0
    %7987 = vmatpush1.msra.mxu0 %v67
    %7988 = vmatprep.subr.mxu0 0.0
    %7989 = vmatpush1.msra.mxu0 %v66
    %7990 = vmatprep.subr.mxu0 0.0
    %7991 = vmatpush1.msra.mxu0 %v65
    %7992 = vmatprep.subr.mxu0 0.0
    %7993 = vmatpush1.msra.mxu0 %v64
    %7994 = vmatprep.subr.mxu0 0.0
    %7995 = vmatpush2.msra.mxu0 0.0
    %7996 = vmatprep.subr.mxu0 0.0
    %7997 = vmatpush2.msra.mxu0 0.0
    %7998 = vmatprep.subr.mxu0 0.0
    %7999 = vmatpush2.msra.mxu0 0.0
    %8000 = vmatprep.subr.mxu0 0.0
    %8001 = vmatpush2.msra.mxu0 0.0
    %8002 = vmatprep.subr.mxu0 0.0
    %8003 = vmatpush2.msra.mxu0 0.0
    %8004 = vmatprep.subr.mxu0 0.0
    %8005 = vmatpush2.msra.mxu0 0.0
    %8006 = vmatprep.subr.mxu0 0.0
    %8007 = vmatpush2.msra.mxu0 0.0
    %8008 = vmatprep.subr.mxu0 0.0
    %8009 = vmatpush2.msra.mxu0 0.0
    %8010 = vmatprep.subr.mxu0 0.0
    %8011 = vmatpush2.msra.mxu0 0.0
    %8012 = vmatprep.subr.mxu0 0.0
    %8013 = vmatpush2.msra.mxu0 0.0
    %8014 = vmatprep.subr.mxu0 0.0
    %8015 = vmatpush2.msra.mxu0 0.0
    %8016 = vmatprep.subr.mxu0 0.0
    %8017 = vmatpush2.msra.mxu0 0.0
    %8018 = vmatprep.subr.mxu0 0.0
    %8019 = vmatpush2.msra.mxu0 0.0
    %8020 = vmatprep.subr.mxu0 0.0
    %8021 = vmatpush2.msra.mxu0 0.0
    %8022 = vmatprep.subr.mxu0 0.0
    %8023 = vmatpush2.msra.mxu0 0.0
    %8024 = vmatprep.subr.mxu0 0.0
    %8025 = vmatpush2.msra.mxu0 0.0
    %8026 = vmatprep.mubr.f32.mxu0 0.0
    %8027 = vmatmul.mubr.f32.gmra.mxu0 %v7855
    %v8028 = vpop.f32.mrf.mxu0
    %v8029 = vadd.f32 0.0, %v8028
    %v8030 = vpop.f32.mrf.mxu0
    %8031 = vmatprep.mubr.f32.mxu0 0.0
    %8032 = vmatmul.mubr.f32.gmra.mxu0 %v7858
    %v8033 = vpop.f32.mrf.mxu0
    %v8034 = vadd.f32 0.0, %v8033
    %v8035 = vpop.f32.mrf.mxu0
    %8036 = vmatprep.mubr.f32.mxu0 0.0
    %8037 = vmatmul.mubr.f32.gmra.mxu0 %v7861
    %v8038 = vpop.f32.mrf.mxu0
    %v8039 = vadd.f32 0.0, %v8038
    %v8040 = vpop.f32.mrf.mxu0
    %8041 = vmatprep.mubr.f32.mxu0 0.0
    %8042 = vmatmul.mubr.f32.gmra.mxu0 %v7864
    %v8043 = vpop.f32.mrf.mxu0
    %v8044 = vadd.f32 0.0, %v8043
    %v8045 = vpop.f32.mrf.mxu0
    %8046 = vmatprep.mubr.f32.mxu0 0.0
    %8047 = vmatmul.mubr.f32.gmra.mxu0 %v7867
    %v8048 = vpop.f32.mrf.mxu0
    %v8049 = vadd.f32 0.0, %v8048
    %v8050 = vpop.f32.mrf.mxu0
    %8051 = vmatprep.mubr.f32.mxu0 0.0
    %8052 = vmatmul.mubr.f32.gmra.mxu0 %v7870
    %v8053 = vpop.f32.mrf.mxu0
    %v8054 = vadd.f32 0.0, %v8053
    %v8055 = vpop.f32.mrf.mxu0
    %8056 = vmatprep.mubr.f32.mxu0 0.0
    %8057 = vmatmul.mubr.f32.gmra.mxu0 %v7873
    %v8058 = vpop.f32.mrf.mxu0
    %v8059 = vadd.f32 0.0, %v8058
    %v8060 = vpop.f32.mrf.mxu0
    %8061 = vmatprep.mubr.f32.mxu0 0.0
    %8062 = vmatmul.mubr.f32.gmra.mxu0 %v7876
    %v8063 = vpop.f32.mrf.mxu0
    %v8064 = vadd.f32 0.0, %v8063
    %v8065 = vpop.f32.mrf.mxu0
    %8066 = vmatprep.mubr.f32.mxu0 0.0
    %8067 = vmatmul.mubr.f32.gmra.mxu0 %v7879
    %v8068 = vpop.f32.mrf.mxu0
    %v8069 = vadd.f32 0.0, %v8068
    %v8070 = vpop.f32.mrf.mxu0
    %8071 = vmatprep.mubr.f32.mxu0 0.0
    %8072 = vmatmul.mubr.f32.gmra.mxu0 %v7882
    %v8073 = vpop.f32.mrf.mxu0
    %v8074 = vadd.f32 0.0, %v8073
    %v8075 = vpop.f32.mrf.mxu0
    %8076 = vmatprep.mubr.f32.mxu0 0.0
    %8077 = vmatmul.mubr.f32.gmra.mxu0 %v7885
    %v8078 = vpop.f32.mrf.mxu0
    %v8079 = vadd.f32 0.0, %v8078
    %v8080 = vpop.f32.mrf.mxu0
    %8081 = vmatprep.mubr.f32.mxu0 0.0
    %8082 = vmatmul.mubr.f32.gmra.mxu0 %v7888
    %v8083 = vpop.f32.mrf.mxu0
    %v8084 = vadd.f32 0.0, %v8083
    %v8085 = vpop.f32.mrf.mxu0
    %8086 = vmatprep.mubr.f32.mxu0 0.0
    %8087 = vmatmul.mubr.f32.gmra.mxu0 %v7891
    %v8088 = vpop.f32.mrf.mxu0
    %v8089 = vadd.f32 0.0, %v8088
    %v8090 = vpop.f32.mrf.mxu0
    %8091 = vmatprep.mubr.f32.mxu0 0.0
    %8092 = vmatmul.mubr.f32.gmra.mxu0 %v7894
    %v8093 = vpop.f32.mrf.mxu0
    %v8094 = vadd.f32 0.0, %v8093
    %v8095 = vpop.f32.mrf.mxu0
    %8096 = vmatprep.mubr.f32.mxu0 0.0
    %8097 = vmatmul.mubr.f32.gmra.mxu0 %v7897
    %v8098 = vpop.f32.mrf.mxu0
    %v8099 = vadd.f32 0.0, %v8098
    %v8100 = vpop.f32.mrf.mxu0
    %8101 = vmatprep.mubr.f32.mxu0 0.0
    %8102 = vmatmul.mubr.f32.gmra.mxu0 %v7900
    %v8103 = vpop.f32.mrf.mxu0
    %v8104 = vadd.f32 0.0, %v8103
    %v8105 = vpop.f32.mrf.mxu0
    %8106 = vmatprep.mubr.f32.mxu0 0.0
    %8107 = vmatmul.mubr.f32.gmra.mxu0 %v7903
    %v8108 = vpop.f32.mrf.mxu0
    %v8109 = vadd.f32 0.0, %v8108
    %v8110 = vpop.f32.mrf.mxu0
    %8111 = vmatprep.mubr.f32.mxu0 0.0
    %8112 = vmatmul.mubr.f32.gmra.mxu0 %v7906
    %v8113 = vpop.f32.mrf.mxu0
    %v8114 = vadd.f32 0.0, %v8113
    %v8115 = vpop.f32.mrf.mxu0
    %8116 = vmatprep.mubr.f32.mxu0 0.0
    %8117 = vmatmul.mubr.f32.gmra.mxu0 %v7909
    %v8118 = vpop.f32.mrf.mxu0
    %v8119 = vadd.f32 0.0, %v8118
    %v8120 = vpop.f32.mrf.mxu0
    %8121 = vmatprep.mubr.f32.mxu0 0.0
    %8122 = vmatmul.mubr.f32.gmra.mxu0 %v7912
    %v8123 = vpop.f32.mrf.mxu0
    %v8124 = vadd.f32 0.0, %v8123
    %v8125 = vpop.f32.mrf.mxu0
    %8126 = vmatprep.mubr.f32.mxu0 0.0
    %8127 = vmatmul.mubr.f32.gmra.mxu0 %v7915
    %v8128 = vpop.f32.mrf.mxu0
    %v8129 = vadd.f32 0.0, %v8128
    %v8130 = vpop.f32.mrf.mxu0
    %8131 = vmatprep.mubr.f32.mxu0 0.0
    %8132 = vmatmul.mubr.f32.gmra.mxu0 %v7918
    %v8133 = vpop.f32.mrf.mxu0
    %v8134 = vadd.f32 0.0, %v8133
    %v8135 = vpop.f32.mrf.mxu0
    %8136 = vmatprep.mubr.f32.mxu0 0.0
    %8137 = vmatmul.mubr.f32.gmra.mxu0 %v7921
    %v8138 = vpop.f32.mrf.mxu0
    %v8139 = vadd.f32 0.0, %v8138
    %v8140 = vpop.f32.mrf.mxu0
    %8141 = vmatprep.mubr.f32.mxu0 0.0
    %8142 = vmatmul.mubr.f32.gmra.mxu0 %v7924
    %v8143 = vpop.f32.mrf.mxu0
    %v8144 = vadd.f32 0.0, %v8143
    %v8145 = vpop.f32.mrf.mxu0
    %8146 = vmatprep.mubr.f32.mxu0 0.0
    %8147 = vmatmul.mubr.f32.gmra.mxu0 %v7927
    %v8148 = vpop.f32.mrf.mxu0
    %v8149 = vadd.f32 0.0, %v8148
    %v8150 = vpop.f32.mrf.mxu0
    %8151 = vmatprep.mubr.f32.mxu0 0.0
    %8152 = vmatmul.mubr.f32.gmra.mxu0 %v7930
    %v8153 = vpop.f32.mrf.mxu0
    %v8154 = vadd.f32 0.0, %v8153
    %v8155 = vpop.f32.mrf.mxu0
    %8156 = vmatprep.mubr.f32.mxu0 0.0
    %8157 = vmatmul.mubr.f32.gmra.mxu0 %v7933
    %v8158 = vpop.f32.mrf.mxu0
    %v8159 = vadd.f32 0.0, %v8158
    %v8160 = vpop.f32.mrf.mxu0
    %8161 = vmatprep.mubr.f32.mxu0 0.0
    %8162 = vmatmul.mubr.f32.gmra.mxu0 %v7936
    %v8163 = vpop.f32.mrf.mxu0
    %v8164 = vadd.f32 0.0, %v8163
    %v8165 = vpop.f32.mrf.mxu0
    %8166 = vmatprep.mubr.f32.mxu0 0.0
    %8167 = vmatmul.mubr.f32.gmra.mxu0 %v7939
    %v8168 = vpop.f32.mrf.mxu0
    %v8169 = vadd.f32 0.0, %v8168
    %v8170 = vpop.f32.mrf.mxu0
    %8171 = vmatprep.mubr.f32.mxu0 0.0
    %8172 = vmatmul.mubr.f32.gmra.mxu0 %v7942
    %v8173 = vpop.f32.mrf.mxu0
    %v8174 = vadd.f32 0.0, %v8173
    %v8175 = vpop.f32.mrf.mxu0
    %8176 = vmatprep.mubr.f32.mxu0 0.0
    %8177 = vmatmul.mubr.f32.gmra.mxu0 %v7945
    %v8178 = vpop.f32.mrf.mxu0
    %v8179 = vadd.f32 0.0, %v8178
    %v8180 = vpop.f32.mrf.mxu0
    %8181 = vmatprep.mubr.f32.mxu0 0.0
    %8182 = vmatmul.mubr.f32.gmra.mxu0 %v7948
    %v8183 = vpop.f32.mrf.mxu0
    %v8184 = vadd.f32 0.0, %v8183
    %v8185 = vpop.f32.mrf.mxu0
    %8186 = vmatprep.mubr.f32.mxu0 0.0
    %8187 = vmatmul.mubr.f32.gmra.mxu0 %v7951
    %v8188 = vpop.f32.mrf.mxu0
    %v8189 = vadd.f32 0.0, %v8188
    %v8190 = vpop.f32.mrf.mxu0
    %8191 = vmatprep.mubr.f32.mxu0 0.0
    %8192 = vmatmul.mubr.f32.gmra.mxu0 %v7954
    %v8193 = vpop.f32.mrf.mxu0
    %v8194 = vadd.f32 0.0, %v8193
    %v8195 = vpop.f32.mrf.mxu0
    %8196 = vmatprep.mubr.f32.mxu0 0.0
    %8197 = vmatmul.mubr.f32.gmra.mxu0 %v7957
    %v8198 = vpop.f32.mrf.mxu0
    %v8199 = vadd.f32 0.0, %v8198
    %v8200 = vpop.f32.mrf.mxu0
    %8201 = vmatprep.mubr.f32.mxu0 0.0
    %8202 = vmatmul.mubr.f32.gmra.mxu0 %v7960
    %v8203 = vpop.f32.mrf.mxu0
    %v8204 = vadd.f32 0.0, %v8203
    %v8205 = vpop.f32.mrf.mxu0
    %8206 = vdwg.mxu0
    %v8207 = vadd.f32 %v7782, %v8029
    %v8208 = vadd.f32 %v7783, %v8034
    %v8209 = vadd.f32 %v7784, %v8039
    %v8210 = vadd.f32 %v7785, %v8044
    %v8211 = vadd.f32 %v7786, %v8049
    %v8212 = vadd.f32 %v7787, %v8054
    %v8213 = vadd.f32 %v7788, %v8059
    %v8214 = vadd.f32 %v7789, %v8064
    %v8215 = vadd.f32 %v7790, %v8069
    %v8216 = vadd.f32 %v7791, %v8074
    %v8217 = vadd.f32 %v7792, %v8079
    %v8218 = vadd.f32 %v7793, %v8084
    %v8219 = vadd.f32 %v7794, %v8089
    %v8220 = vadd.f32 %v7795, %v8094
    %v8221 = vadd.f32 %v7796, %v8099
    %v8222 = vadd.f32 %v7797, %v8104
    %v8223 = vadd.f32 %v7798, %v8109
    %v8224 = vadd.f32 %v7799, %v8114
    %v8225 = vadd.f32 %v7800, %v8119
    %v8226 = vadd.f32 %v7801, %v8124
    %v8227 = vadd.f32 %v7802, %v8129
    %v8228 = vadd.f32 %v7803, %v8134
    %v8229 = vadd.f32 %v7804, %v8139
    %v8230 = vadd.f32 %v7805, %v8144
    %v8231 = vadd.f32 %v7806, %v8149
    %v8232 = vadd.f32 %v7807, %v8154
    %v8233 = vadd.f32 %v7808, %v8159
    %v8234 = vadd.f32 %v7809, %v8164
    %v8235 = vadd.f32 %v7810, %v8169
    %v8236 = vadd.f32 %v7811, %v8174
    %v8237 = vadd.f32 %v7812, %v8179
    %v8238 = vadd.f32 %v7813, %v8184
    %v8239 = vadd.f32 %v7814, %v8189
    %v8240 = vadd.f32 %v7815, %v8194
    %v8241 = vadd.f32 %v7816, %v8199
    %v8242 = vadd.f32 %v7817, %v8204
    %v8243 = vmax.f32 %v8207, 0.0
    %v8244 = vmax.f32 %v8208, 0.0
    %v8245 = vmax.f32 %v8209, 0.0
    %v8246 = vmax.f32 %v8210, 0.0
    %v8247 = vmax.f32 %v8211, 0.0
    %v8248 = vmax.f32 %v8212, 0.0
    %v8249 = vmax.f32 %v8213, 0.0
    %v8250 = vmax.f32 %v8214, 0.0
    %v8251 = vmax.f32 %v8215, 0.0
    %v8252 = vmax.f32 %v8216, 0.0
    %v8253 = vmax.f32 %v8217, 0.0
    %v8254 = vmax.f32 %v8218, 0.0
    %v8255 = vmax.f32 %v8219, 0.0
    %v8256 = vmax.f32 %v8220, 0.0
    %v8257 = vmax.f32 %v8221, 0.0
    %v8258 = vmax.f32 %v8222, 0.0
    %v8259 = vmax.f32 %v8223, 0.0
    %v8260 = vmax.f32 %v8224, 0.0
    %v8261 = vmax.f32 %v8225, 0.0
    %v8262 = vmax.f32 %v8226, 0.0
    %v8263 = vmax.f32 %v8227, 0.0
    %v8264 = vmax.f32 %v8228, 0.0
    %v8265 = vmax.f32 %v8229, 0.0
    %v8266 = vmax.f32 %v8230, 0.0
    %v8267 = vmax.f32 %v8231, 0.0
    %v8268 = vmax.f32 %v8232, 0.0
    %v8269 = vmax.f32 %v8233, 0.0
    %v8270 = vmax.f32 %v8234, 0.0
    %v8271 = vmax.f32 %v8235, 0.0
    %v8272 = vmax.f32 %v8236, 0.0
    %v8273 = vmax.f32 %v8237, 0.0
    %v8274 = vmax.f32 %v8238, 0.0
    %v8275 = vmax.f32 %v8239, 0.0
    %v8276 = vmax.f32 %v8240, 0.0
    %v8277 = vmax.f32 %v8241, 0.0
    %v8278 = vmax.f32 %v8242, 0.0
    %v8280 = vsel %vm138, %v8243, 0
    %v8283 = vsel %vm138, %v8244, 0
    %v8286 = vsel %vm138, %v8245, 0
    %v8289 = vsel %vm138, %v8246, 0
    %v8292 = vsel %vm138, %v8247, 0
    %v8295 = vsel %vm138, %v8248, 0
    %v8298 = vsel %vm138, %v8249, 0
    %v8301 = vsel %vm138, %v8250, 0
    %v8304 = vsel %vm138, %v8251, 0
    %v8307 = vsel %vm138, %v8252, 0
    %v8310 = vsel %vm138, %v8253, 0
    %v8313 = vsel %vm138, %v8254, 0
    %v8316 = vsel %vm138, %v8255, 0
    %v8319 = vsel %vm138, %v8256, 0
    %v8322 = vsel %vm138, %v8257, 0
    %v8325 = vsel %vm138, %v8258, 0
    %v8328 = vsel %vm138, %v8259, 0
    %v8331 = vsel %vm138, %v8260, 0
    %v8334 = vsel %vm138, %v8261, 0
    %v8337 = vsel %vm138, %v8262, 0
    %v8340 = vsel %vm138, %v8263, 0
    %v8343 = vsel %vm138, %v8264, 0
    %v8346 = vsel %vm138, %v8265, 0
    %v8349 = vsel %vm138, %v8266, 0
    %v8352 = vsel %vm138, %v8267, 0
    %v8355 = vsel %vm138, %v8268, 0
    %v8358 = vsel %vm138, %v8269, 0
    %v8361 = vsel %vm138, %v8270, 0
    %v8364 = vsel %vm138, %v8271, 0
    %v8367 = vsel %vm138, %v8272, 0
    %v8370 = vsel %vm138, %v8273, 0
    %v8373 = vsel %vm138, %v8274, 0
    %v8376 = vsel %vm138, %v8275, 0
    %v8379 = vsel %vm138, %v8276, 0
    %v8382 = vsel %vm138, %v8277, 0
    %v8385 = vsel %vm138, %v8278, 0
    %8387 = vmatprep.subr.mxu0 0.0
    %8388 = vmatpush1.xpose.msra.mxu0 %v8325
    %8389 = vmatprep.subr.mxu0 0.0
    %8390 = vmatpush1.xpose.msra.mxu0 %v8322
    %8391 = vmatprep.subr.mxu0 0.0
    %8392 = vmatpush1.xpose.msra.mxu0 %v8319
    %8393 = vmatprep.subr.mxu0 0.0
    %8394 = vmatpush1.xpose.msra.mxu0 %v8316
    %8395 = vmatprep.subr.mxu0 0.0
    %8396 = vmatpush1.xpose.msra.mxu0 %v8313
    %8397 = vmatprep.subr.mxu0 0.0
    %8398 = vmatpush1.xpose.msra.mxu0 %v8310
    %8399 = vmatprep.subr.mxu0 0.0
    %8400 = vmatpush1.xpose.msra.mxu0 %v8307
    %8401 = vmatprep.subr.mxu0 0.0
    %8402 = vmatpush1.xpose.msra.mxu0 %v8304
    %8403 = vmatprep.subr.mxu0 0.0
    %8404 = vmatpush1.xpose.msra.mxu0 %v8301
    %8405 = vmatprep.subr.mxu0 0.0
    %8406 = vmatpush1.xpose.msra.mxu0 %v8298
    %8407 = vmatprep.subr.mxu0 0.0
    %8408 = vmatpush1.xpose.msra.mxu0 %v8295
    %8409 = vmatprep.subr.mxu0 0.0
    %8410 = vmatpush1.xpose.msra.mxu0 %v8292
    %8411 = vmatprep.subr.mxu0 0.0
    %8412 = vmatpush1.xpose.msra.mxu0 %v8289
    %8413 = vmatprep.subr.mxu0 0.0
    %8414 = vmatpush1.xpose.msra.mxu0 %v8286
    %8415 = vmatprep.subr.mxu0 0.0
    %8416 = vmatpush1.xpose.msra.mxu0 %v8283
    %8417 = vmatprep.subr.mxu0 0.0
    %8418 = vmatpush1.xpose.msra.mxu0 %v8280
    %8419 = vmatprep.subr.mxu0 0.0
    %8420 = vmatpush2.xpose.msra.mxu0 %v8373
    %8421 = vmatprep.subr.mxu0 0.0
    %8422 = vmatpush2.xpose.msra.mxu0 %v8370
    %8423 = vmatprep.subr.mxu0 0.0
    %8424 = vmatpush2.xpose.msra.mxu0 %v8367
    %8425 = vmatprep.subr.mxu0 0.0
    %8426 = vmatpush2.xpose.msra.mxu0 %v8364
    %8427 = vmatprep.subr.mxu0 0.0
    %8428 = vmatpush2.xpose.msra.mxu0 %v8361
    %8429 = vmatprep.subr.mxu0 0.0
    %8430 = vmatpush2.xpose.msra.mxu0 %v8358
    %8431 = vmatprep.subr.mxu0 0.0
    %8432 = vmatpush2.xpose.msra.mxu0 %v8355
    %8433 = vmatprep.subr.mxu0 0.0
    %8434 = vmatpush2.xpose.msra.mxu0 %v8352
    %8435 = vmatprep.subr.mxu0 0.0
    %8436 = vmatpush2.xpose.msra.mxu0 %v8349
    %8437 = vmatprep.subr.mxu0 0.0
    %8438 = vmatpush2.xpose.msra.mxu0 %v8346
    %8439 = vmatprep.subr.mxu0 0.0
    %8440 = vmatpush2.xpose.msra.mxu0 %v8343
    %8441 = vmatprep.subr.mxu0 0.0
    %8442 = vmatpush2.xpose.msra.mxu0 %v8340
    %8443 = vmatprep.subr.mxu0 0.0
    %8444 = vmatpush2.xpose.msra.mxu0 %v8337
    %8445 = vmatprep.subr.mxu0 0.0
    %8446 = vmatpush2.xpose.msra.mxu0 %v8334
    %8447 = vmatprep.subr.mxu0 0.0
    %8448 = vmatpush2.xpose.msra.mxu0 %v8331
    %8449 = vmatprep.subr.mxu0 0.0
    %8450 = vmatpush2.xpose.msra.mxu0 %v8328
    %8451 = vmatprep.mubr.f32.mxu0 0.0
    %8452 = vmatmul.mubr.f32.gmra.mxu0 %v3965
    %v8453 = vpop.f32.mrf.mxu0
    %v8454 = vadd.f32 %v99, %v8453
    %v8455 = vpop.f32.mrf.mxu0
    %v8456 = vadd.f32 %v100, %v8455
    %8457 = vdwg.mxu0
    %8458 = vmatprep.subr.mxu0 0.0
    %8459 = vmatpush1.xpose.msra.mxu0 0.0
    %8460 = vmatprep.subr.mxu0 0.0
    %8461 = vmatpush1.xpose.msra.mxu0 0.0
    %8462 = vmatprep.subr.mxu0 0.0
    %8463 = vmatpush1.xpose.msra.mxu0 0.0
    %8464 = vmatprep.subr.mxu0 0.0
    %8465 = vmatpush1.xpose.msra.mxu0 0.0
    %8466 = vmatprep.subr.mxu0 0.0
    %8467 = vmatpush1.xpose.msra.mxu0 0.0
    %8468 = vmatprep.subr.mxu0 0.0
    %8469 = vmatpush1.xpose.msra.mxu0 0.0
    %8470 = vmatprep.subr.mxu0 0.0
    %8471 = vmatpush1.xpose.msra.mxu0 0.0
    %8472 = vmatprep.subr.mxu0 0.0
    %8473 = vmatpush1.xpose.msra.mxu0 0.0
    %8474 = vmatprep.subr.mxu0 0.0
    %8475 = vmatpush1.xpose.msra.mxu0 0.0
    %8476 = vmatprep.subr.mxu0 0.0
    %8477 = vmatpush1.xpose.msra.mxu0 0.0
    %8478 = vmatprep.subr.mxu0 0.0
    %8479 = vmatpush1.xpose.msra.mxu0 0.0
    %8480 = vmatprep.subr.mxu0 0.0
    %8481 = vmatpush1.xpose.msra.mxu0 0.0
    %8482 = vmatprep.subr.mxu0 0.0
    %8483 = vmatpush1.xpose.msra.mxu0 %v8385
    %8484 = vmatprep.subr.mxu0 0.0
    %8485 = vmatpush1.xpose.msra.mxu0 %v8382
    %8486 = vmatprep.subr.mxu0 0.0
    %8487 = vmatpush1.xpose.msra.mxu0 %v8379
    %8488 = vmatprep.subr.mxu0 0.0
    %8489 = vmatpush1.xpose.msra.mxu0 %v8376
    %8490 = vmatprep.subr.mxu0 0.0
    %8491 = vmatpush2.xpose.msra.mxu0 0.0
    %8492 = vmatprep.subr.mxu0 0.0
    %8493 = vmatpush2.xpose.msra.mxu0 0.0
    %8494 = vmatprep.subr.mxu0 0.0
    %8495 = vmatpush2.xpose.msra.mxu0 0.0
    %8496 = vmatprep.subr.mxu0 0.0
    %8497 = vmatpush2.xpose.msra.mxu0 0.0
    %8498 = vmatprep.subr.mxu0 0.0
    %8499 = vmatpush2.xpose.msra.mxu0 0.0
    %8500 = vmatprep.subr.mxu0 0.0
    %8501 = vmatpush2.xpose.msra.mxu0 0.0
    %8502 = vmatprep.subr.mxu0 0.0
    %8503 = vmatpush2.xpose.msra.mxu0 0.0
    %8504 = vmatprep.subr.mxu0 0.0
    %8505 = vmatpush2.xpose.msra.mxu0 0.0
    %8506 = vmatprep.subr.mxu0 0.0
    %8507 = vmatpush2.xpose.msra.mxu0 0.0
    %8508 = vmatprep.subr.mxu0 0.0
    %8509 = vmatpush2.xpose.msra.mxu0 0.0
    %8510 = vmatprep.subr.mxu0 0.0
    %8511 = vmatpush2.xpose.msra.mxu0 0.0
    %8512 = vmatprep.subr.mxu0 0.0
    %8513 = vmatpush2.xpose.msra.mxu0 0.0
    %8514 = vmatprep.subr.mxu0 0.0
    %8515 = vmatpush2.xpose.msra.mxu0 0.0
    %8516 = vmatprep.subr.mxu0 0.0
    %8517 = vmatpush2.xpose.msra.mxu0 0.0
    %8518 = vmatprep.subr.mxu0 0.0
    %8519 = vmatpush2.xpose.msra.mxu0 0.0
    %8520 = vmatprep.subr.mxu0 0.0
    %8521 = vmatpush2.xpose.msra.mxu0 0.0
    %8522 = vmatprep.mubr.f32.mxu0 0.0
    %8523 = vmatmul.mubr.f32.gmra.mxu0 %v3965
    %v8524 = vpop.f32.mrf.mxu0
    %v8525 = vadd.f32 %v101, %v8524
    %v8526 = vpop.f32.mrf.mxu0
    %8527 = vdwg.mxu0
    %v8528 = vsel %vm138, %v8525, -inf
    %v8529 = vmax.f32 %v8454, %v8456
    %v8530 = vmax.f32 %v8529, %v8528
    %8531 = vmax.xlane.f32.xlu0 %v8530
    %v8532 = vpop.xlane.xlu0 %8531
    %v8533 = vsub.f32 %v8454, %v8532
    %v8534 = vsub.f32 %v8456, %v8532
    %v8535 = vsub.f32 %v8525, %v8532
    %v8536 = vmul.f32 %v8533, 1.442695
    %v8537 = vpow.pop %v8536
    %v8538 = vmul.f32 %v8534, 1.442695
    %v8539 = vpow.pop %v8538
    %v8540 = vmul.f32 %v8535, 1.442695
    %v8541 = vpow.pop %v8540
    %v8542 = vadd.f32 %v8537, %v8539
    %v8543 = vsel %vm138, %v8541, 0.0
    %v8544 = vadd.f32 %v8542, %v8543
    %8545 = vadd.xlane.f32.xlu0 %v8544
    %v8546 = vpop.xlane.xlu0 %8545
    %v8547 = vld [vmem:[%s4417 + $0x24] sm:$0xff]
    %v8548 = vld [vmem:[%s4417 + $0x2c] sm:$0xff]
    %v8549 = vld [vmem:[%s4417 + $0x34] sm:$0xff]
    %v8550 = vld [vmem:[%s4417 + $0x3c] sm:$0xff]
    %v8551 = vld [vmem:[%s4417 + $0x44] sm:$0xff]
    %v8552 = vld [vmem:[%s4417 + $0x4c] sm:$0xff]
    %v8553 = vld [vmem:[%s4417 + $0x54] sm:$0xff]
    %v8554 = vld [vmem:[%s4417 + $0x5c] sm:$0xff]
    %v8555 = vld [vmem:[%s4417 + $0x64] sm:$0xff]
    %v8556 = vld [vmem:[%s4417 + $0x6c] sm:$0xff]
    %v8557 = vld [vmem:[%s4417 + $0x74] sm:$0xff]
    %v8558 = vld [vmem:[%s4417 + $0x7c] sm:$0xff]
    %v8559 = vld [vmem:[%s4417 + $0x84] sm:$0xff]
    %v8560 = vld [vmem:[%s4417 + $0x8c] sm:$0xff]
    %v8561 = vld [vmem:[%s4417 + $0x94] sm:$0xff]
    %v8562 = vld [vmem:[%s4417 + $0x9c] sm:$0xff]
    %v8563 = vld [vmem:[%s4417 + $0xa4] sm:$0xff]
    %v8564 = vld [vmem:[%s4417 + $0xac] sm:$0xff]
    %v8565 = vld [vmem:[%s4417 + $0xb4] sm:$0xff]
    %v8566 = vld [vmem:[%s4417 + $0xbc] sm:$0xff]
    %v8567 = vld [vmem:[%s4417 + $0xc4] sm:$0xff]
    %v8568 = vld [vmem:[%s4417 + $0xcc] sm:$0xff]
    %v8569 = vld [vmem:[%s4417 + $0xd4] sm:$0xff]
    %v8570 = vld [vmem:[%s4417 + $0xdc] sm:$0xff]
    %v8571 = vld [vmem:[%s4417 + $0xe4] sm:$0xff]
    %v8572 = vld [vmem:[%s4417 + $0xec] sm:$0xff]
    %v8573 = vld [vmem:[%s4417 + $0xf4] sm:$0xff]
    %v8574 = vld [vmem:[%s4417 + $0xfc] sm:$0xff]
    %v8575 = vld [vmem:[%s4417 + $0x104] sm:$0xff]
    %v8576 = vld [vmem:[%s4417 + $0x10c] sm:$0xff]
    %v8577 = vld [vmem:[%s4417 + $0x114] sm:$0xff]
    %v8578 = vld [vmem:[%s4417 + $0x11c] sm:$0xff]
    %v8579 = vld [vmem:[%s4417 + $0x124] sm:$0xff]
    %v8580 = vld [vmem:[%s4417 + $0x12c] sm:$0xff]
    %v8581 = vld [vmem:[%s4417 + $0x134] sm:$0xff]
    %v8582 = vld [vmem:[%s4417 + $0x13c] sm:$0xff]
    %v8584 = vsel %vm138, %v8541, 0
    %8586 = vmatprep.subr.mxu0 0.0
    %8587 = vmatpush1.msra.mxu0 %v8562
    %8588 = vmatprep.subr.mxu0 0.0
    %8589 = vmatpush1.msra.mxu0 %v8561
    %8590 = vmatprep.subr.mxu0 0.0
    %8591 = vmatpush1.msra.mxu0 %v8560
    %8592 = vmatprep.subr.mxu0 0.0
    %8593 = vmatpush1.msra.mxu0 %v8559
    %8594 = vmatprep.subr.mxu0 0.0
    %8595 = vmatpush1.msra.mxu0 %v8558
    %8596 = vmatprep.subr.mxu0 0.0
    %8597 = vmatpush1.msra.mxu0 %v8557
    %8598 = vmatprep.subr.mxu0 0.0
    %8599 = vmatpush1.msra.mxu0 %v8556
    %8600 = vmatprep.subr.mxu0 0.0
    %8601 = vmatpush1.msra.mxu0 %v8555
    %8602 = vmatprep.subr.mxu0 0.0
    %8603 = vmatpush1.msra.mxu0 %v8554
    %8604 = vmatprep.subr.mxu0 0.0
    %8605 = vmatpush1.msra.mxu0 %v8553
    %8606 = vmatprep.subr.mxu0 0.0
    %8607 = vmatpush1.msra.mxu0 %v8552
    %8608 = vmatprep.subr.mxu0 0.0
    %8609 = vmatpush1.msra.mxu0 %v8551
    %8610 = vmatprep.subr.mxu0 0.0
    %8611 = vmatpush1.msra.mxu0 %v8550
    %8612 = vmatprep.subr.mxu0 0.0
    %8613 = vmatpush1.msra.mxu0 %v8549
    %8614 = vmatprep.subr.mxu0 0.0
    %8615 = vmatpush1.msra.mxu0 %v8548
    %8616 = vmatprep.subr.mxu0 0.0
    %8617 = vmatpush1.msra.mxu0 %v8547
    %8618 = vmatprep.subr.mxu0 0.0
    %8619 = vmatpush2.msra.mxu0 %v8578
    %8620 = vmatprep.subr.mxu0 0.0
    %8621 = vmatpush2.msra.mxu0 %v8577
    %8622 = vmatprep.subr.mxu0 0.0
    %8623 = vmatpush2.msra.mxu0 %v8576
    %8624 = vmatprep.subr.mxu0 0.0
    %8625 = vmatpush2.msra.mxu0 %v8575
    %8626 = vmatprep.subr.mxu0 0.0
    %8627 = vmatpush2.msra.mxu0 %v8574
    %8628 = vmatprep.subr.mxu0 0.0
    %8629 = vmatpush2.msra.mxu0 %v8573
    %8630 = vmatprep.subr.mxu0 0.0
    %8631 = vmatpush2.msra.mxu0 %v8572
    %8632 = vmatprep.subr.mxu0 0.0
    %8633 = vmatpush2.msra.mxu0 %v8571
    %8634 = vmatprep.subr.mxu0 0.0
    %8635 = vmatpush2.msra.mxu0 %v8570
    %8636 = vmatprep.subr.mxu0 0.0
    %8637 = vmatpush2.msra.mxu0 %v8569
    %8638 = vmatprep.subr.mxu0 0.0
    %8639 = vmatpush2.msra.mxu0 %v8568
    %8640 = vmatprep.subr.mxu0 0.0
    %8641 = vmatpush2.msra.mxu0 %v8567
    %8642 = vmatprep.subr.mxu0 0.0
    %8643 = vmatpush2.msra.mxu0 %v8566
    %8644 = vmatprep.subr.mxu0 0.0
    %8645 = vmatpush2.msra.mxu0 %v8565
    %8646 = vmatprep.subr.mxu0 0.0
    %8647 = vmatpush2.msra.mxu0 %v8564
    %8648 = vmatprep.subr.mxu0 0.0
    %8649 = vmatpush2.msra.mxu0 %v8563
    %8650 = vmatprep.mubr.f32.mxu0 %v8539
    %8651 = vmatmul.mubr.f32.gmra.mxu0 %v8537
    %v8652 = vpop.f32.mrf.mxu0
    %v8653 = vadd.f32 0.0, %v8652
    %v8654 = vpop.f32.mrf.mxu0
    %8655 = vdwg.mxu0
    %8656 = vmatprep.subr.mxu0 0.0
    %8657 = vmatpush1.msra.mxu0 0.0
    %8658 = vmatprep.subr.mxu0 0.0
    %8659 = vmatpush1.msra.mxu0 0.0
    %8660 = vmatprep.subr.mxu0 0.0
    %8661 = vmatpush1.msra.mxu0 0.0
    %8662 = vmatprep.subr.mxu0 0.0
    %8663 = vmatpush1.msra.mxu0 0.0
    %8664 = vmatprep.subr.mxu0 0.0
    %8665 = vmatpush1.msra.mxu0 0.0
    %8666 = vmatprep.subr.mxu0 0.0
    %8667 = vmatpush1.msra.mxu0 0.0
    %8668 = vmatprep.subr.mxu0 0.0
    %8669 = vmatpush1.msra.mxu0 0.0
    %8670 = vmatprep.subr.mxu0 0.0
    %8671 = vmatpush1.msra.mxu0 0.0
    %8672 = vmatprep.subr.mxu0 0.0
    %8673 = vmatpush1.msra.mxu0 0.0
    %8674 = vmatprep.subr.mxu0 0.0
    %8675 = vmatpush1.msra.mxu0 0.0
    %8676 = vmatprep.subr.mxu0 0.0
    %8677 = vmatpush1.msra.mxu0 0.0
    %8678 = vmatprep.subr.mxu0 0.0
    %8679 = vmatpush1.msra.mxu0 0.0
    %8680 = vmatprep.subr.mxu0 0.0
    %8681 = vmatpush1.msra.mxu0 %v8582
    %8682 = vmatprep.subr.mxu0 0.0
    %8683 = vmatpush1.msra.mxu0 %v8581
    %8684 = vmatprep.subr.mxu0 0.0
    %8685 = vmatpush1.msra.mxu0 %v8580
    %8686 = vmatprep.subr.mxu0 0.0
    %8687 = vmatpush1.msra.mxu0 %v8579
    %8688 = vmatprep.subr.mxu0 0.0
    %8689 = vmatpush2.msra.mxu0 0.0
    %8690 = vmatprep.subr.mxu0 0.0
    %8691 = vmatpush2.msra.mxu0 0.0
    %8692 = vmatprep.subr.mxu0 0.0
    %8693 = vmatpush2.msra.mxu0 0.0
    %8694 = vmatprep.subr.mxu0 0.0
    %8695 = vmatpush2.msra.mxu0 0.0
    %8696 = vmatprep.subr.mxu0 0.0
    %8697 = vmatpush2.msra.mxu0 0.0
    %8698 = vmatprep.subr.mxu0 0.0
    %8699 = vmatpush2.msra.mxu0 0.0
    %8700 = vmatprep.subr.mxu0 0.0
    %8701 = vmatpush2.msra.mxu0 0.0
    %8702 = vmatprep.subr.mxu0 0.0
    %8703 = vmatpush2.msra.mxu0 0.0
    %8704 = vmatprep.subr.mxu0 0.0
    %8705 = vmatpush2.msra.mxu0 0.0
    %8706 = vmatprep.subr.mxu0 0.0
    %8707 = vmatpush2.msra.mxu0 0.0
    %8708 = vmatprep.subr.mxu0 0.0
    %8709 = vmatpush2.msra.mxu0 0.0
    %8710 = vmatprep.subr.mxu0 0.0
    %8711 = vmatpush2.msra.mxu0 0.0
    %8712 = vmatprep.subr.mxu0 0.0
    %8713 = vmatpush2.msra.mxu0 0.0
    %8714 = vmatprep.subr.mxu0 0.0
    %8715 = vmatpush2.msra.mxu0 0.0
    %8716 = vmatprep.subr.mxu0 0.0
    %8717 = vmatpush2.msra.mxu0 0.0
    %8718 = vmatprep.subr.mxu0 0.0
    %8719 = vmatpush2.msra.mxu0 0.0
    %8720 = vmatprep.mubr.f32.mxu0 0.0
    %8721 = vmatmul.mubr.f32.gmra.mxu0 %v8584
    %v8722 = vpop.f32.mrf.mxu0
    %v8723 = vadd.f32 %v8653, %v8722
    %v8724 = vpop.f32.mrf.mxu0
    %8725 = vdwg.mxu0
    %v8726 = vrcp.pop %v8546
    %v8727 = vmul.f32 %v8723, %v8726
    %s8728 = scalar_lea.vmem [#allocation2], 8
    %8729 = vst.msk [vmem:[%s8728] sm:$0xff] %vm138, %v8727
    // Predicated region
    $region26: #{tpu_custom_call.1} parent=1 // pred_check
      _
    $region27: #{tpu_custom_call.1} parent=1 // pred_check_branch
      %8731 = sbr.rel (0) target = $region29
    $region28: #{tpu_custom_call.1} parent=1 // pred_region
      %s8733 = ssub.s32 256, 256
      %8734 = vsyncadd [#allocation3], %s8733
      %s8735 = sshll.u32 [#allocation2], 4
      %s8736 = int_to_ptr.vmem [resolvable:$true] %s8735
      %8741 = dma.vmem_to_hbm [thread:$0]  %s8736, 256, %s6, [#allocation3], 128, 128, 8
    $region29: #{tpu_custom_call.1} parent=1 // pred_fallthru
      _
    // Predicated region
    $region30: #{tpu_custom_call.1} parent=1 // pred_check
      _
    $region31: #{tpu_custom_call.1} parent=1 // pred_check_branch
      %8743 = sbr.rel (0) target = $region33
    $region32: #{tpu_custom_call.1} parent=1 // pred_region
      %8744 = dma.done [#allocation3], 256
    $region33: #{tpu_custom_call.1} parent=1 // pred_fallthru
      _
    %8745 = vsyncpa [#allocation3], 1

</llo_original>
